<compile_context>
chip_gen: v6e
topology: v6e:2x2x1
jax: 0.10.0
libtpu: 0.0.40
codegen_flags: <defaults>
</compile_context>

<pallas_src>
import functools
import math

import jax
import jax.numpy as jnp
from jax.experimental import pallas as pl
from jax.experimental.pallas import tpu as pltpu


# ----------------------------- tiling / padding helpers -----------------------------

def _round_up(x, m):
    return ((x + m - 1) // m) * m


def _tile(dim, pref, align):
    """(tile, padded_dim).  pref must be a multiple of `align` (and of 128 for lane dims).
    Small dims collapse to one aligned tile; large dims are padded to a multiple of pref.
    Tiles never exceed pref (no full-dimension fallback)."""
    t = pref if dim >= pref else _round_up(dim, align)
    return t, _round_up(dim, t)


def _pad2(a, rows, cols):
    pr, pc = rows - a.shape[0], cols - a.shape[1]
    if pr or pc:
        a = jnp.pad(a, ((0, pr), (0, pc)))
    return a


def _vmem_limit(block_bytes, scratch_bytes=0):
    """Per-call VMEM limit from the actual (double-buffered) block sizes, clamped so the
    same configuration is safe on v7x (64 MiB physical VMEM)."""
    need = 2 * block_bytes + scratch_bytes + (2 << 20)
    return int(min(max(need, 4 << 20), 48 << 20))


def _cparams(dims, vmem_bytes):
    return pltpu.CompilerParams(dimension_semantics=dims, vmem_limit_bytes=vmem_bytes)


# ----------------------------- Tiled linear (+bias, +activation) -----------------------------

def _mm_kernel(act):
    def kernel(x_ref, w_ref, b_ref, o_ref, acc_ref):
        k = pl.program_id(2)

        @pl.when(k == 0)
        def _():
            acc_ref[...] = jnp.zeros_like(acc_ref)

        acc_ref[...] += jnp.dot(x_ref[...], w_ref[...],
                                preferred_element_type=jnp.float32)

        @pl.when(k == pl.num_programs(2) - 1)
        def _():
            y = acc_ref[...] + b_ref[...]
            if act == "tanh":
                y = jnp.tanh(y)
            elif act == "relu":
                y = jnp.maximum(y, 0.0)
            elif act == "gelu":
                y = jax.nn.gelu(y, approximate=True)
            o_ref[...] = y.astype(o_ref.dtype)   # bf16 writeback (f32 accumulator kept)
    return kernel


def linear_act(x, w, b=None, act="none", tm=512, tn=512, tk=512):
    """y = act(x @ w + b).  bf16 MXU inputs, f32 accumulation, bf16 output.
    All dims padded to tile multiples; padded rows/cols sliced off on return."""
    M, K = x.shape
    N = w.shape[1]
    if b is None:
        b = jnp.zeros((N,), jnp.float32)
    tm, Mp = _tile(M, tm, 8)
    tn, Np = _tile(N, tn, 128)
    tk, Kp = _tile(K, tk, 128)
    xp = _pad2(x.astype(jnp.bfloat16), Mp, Kp)
    wp = _pad2(w.astype(jnp.bfloat16), Kp, Np)
    bp = _pad2(b.reshape(1, N).astype(jnp.float32), 1, Np)
    blk = tm * tk * 2 + tk * tn * 2 + tn * 4 + tm * tn * 2
    out = pl.pallas_call(
        _mm_kernel(act),
        out_shape=jax.ShapeDtypeStruct((Mp, Np), jnp.bfloat16),
        grid=(Mp // tm, Np // tn, Kp // tk),
        in_specs=[pl.BlockSpec((tm, tk), lambda i, j, k: (i, k)),
                  pl.BlockSpec((tk, tn), lambda i, j, k: (k, j)),
                  pl.BlockSpec((1, tn), lambda i, j, k: (0, j))],
        out_specs=pl.BlockSpec((tm, tn), lambda i, j, k: (i, j)),
        scratch_shapes=[pltpu.VMEM((tm, tn), jnp.float32)],
        compiler_params=_cparams(("parallel", "parallel", "arbitrary"),
                                 _vmem_limit(blk, tm * tn * 4)),
    )(xp, wp, bp)
    return out[:M, :N]


# ----------------------------- Tiled linear fused with residual + LayerNorm -----------------------------

def _mm_res_ln_kernel(eps, n_real):
    inv_n = 1.0 / float(n_real)

    def kernel(x_ref, w_ref, b_ref, r_ref, g_ref, bln_ref, o_ref, acc_ref):
        k = pl.program_id(1)

        @pl.when(k == 0)
        def _():
            acc_ref[...] = jnp.zeros_like(acc_ref)

        acc_ref[...] += jnp.dot(x_ref[...], w_ref[...],
                                preferred_element_type=jnp.float32)

        @pl.when(k == pl.num_programs(1) - 1)
        def _():
            # residual add + LN in f32; padded feature columns are exactly zero, so dividing
            # the (padded) sums by the real width keeps the statistics exact.
            y = acc_ref[...] + b_ref[...] + r_ref[...].astype(jnp.float32)
            mu = jnp.sum(y, axis=-1, keepdims=True) * inv_n
            ex2 = jnp.sum(y * y, axis=-1, keepdims=True) * inv_n
            var = jnp.maximum(ex2 - mu * mu, 0.0)
            o_ref[...] = ((y - mu) * jax.lax.rsqrt(var + eps) * g_ref[...]
                          + bln_ref[...]).astype(o_ref.dtype)
    return kernel


def linear_res_ln(x, w, b, res, g, beta, eps, tm=512, tk=512):
    """LayerNorm(res + x @ w + b); K-tiled matmul, N (hidden) kept whole for the LN."""
    M, K = x.shape
    N = w.shape[1]
    tm, Mp = _tile(M, tm, 8)
    tk, Kp = _tile(K, tk, 128)
    Np = _round_up(N, 128)
    xp = _pad2(x.astype(jnp.bfloat16), Mp, Kp)
    wp = _pad2(w.astype(jnp.bfloat16), Kp, Np)
    bp = _pad2(b.reshape(1, N).astype(jnp.float32), 1, Np)
    rp = _pad2(res.astype(jnp.bfloat16), Mp, Np)
    gp = _pad2(g.reshape(1, N).astype(jnp.float32), 1, Np)
    betap = _pad2(beta.reshape(1, N).astype(jnp.float32), 1, Np)
    blk = tm * tk * 2 + tk * Np * 2 + 3 * Np * 4 + tm * Np * 2 + tm * Np * 2
    out = pl.pallas_call(
        _mm_res_ln_kernel(eps, N),
        out_shape=jax.ShapeDtypeStruct((Mp, Np), jnp.bfloat16),
        grid=(Mp // tm, Kp // tk),
        in_specs=[pl.BlockSpec((tm, tk), lambda i, k: (i, k)),
                  pl.BlockSpec((tk, Np), lambda i, k: (k, 0)),
                  pl.BlockSpec((1, Np), lambda i, k: (0, 0)),
                  pl.BlockSpec((tm, Np), lambda i, k: (i, 0)),
                  pl.BlockSpec((1, Np), lambda i, k: (0, 0)),
                  pl.BlockSpec((1, Np), lambda i, k: (0, 0))],
        out_specs=pl.BlockSpec((tm, Np), lambda i, k: (i, 0)),
        scratch_shapes=[pltpu.VMEM((tm, Np), jnp.float32)],
        compiler_params=_cparams(("parallel", "arbitrary"),
                                 _vmem_limit(blk, tm * Np * 4)),
    )(xp, wp, bp, rp, gp, betap)
    return out[:M, :N]


# ----------------------------- Row-tiled LayerNorm -----------------------------

def _ln_kernel(eps, n_real):
    inv_n = 1.0 / float(n_real)

    def kernel(x_ref, g_ref, b_ref, o_ref):
        x = x_ref[...].astype(jnp.float32)
        mu = jnp.sum(x, axis=-1, keepdims=True) * inv_n
        ex2 = jnp.sum(x * x, axis=-1, keepdims=True) * inv_n
        var = jnp.maximum(ex2 - mu * mu, 0.0)
        o_ref[...] = ((x - mu) * jax.lax.rsqrt(var + eps) * g_ref[...]
                      + b_ref[...]).astype(o_ref.dtype)
    return kernel


def layer_norm(x, g, b, eps, tm=512):
    shp = x.shape
    H = shp[-1]
    x2 = x.reshape(-1, H)
    M = x2.shape[0]
    tm, Mp = _tile(M, tm, 8)
    Hp = _round_up(H, 128)
    xp = _pad2(x2.astype(jnp.float32), Mp, Hp)
    gp = _pad2(g.reshape(1, H).astype(jnp.float32), 1, Hp)
    bp = _pad2(b.reshape(1, H).astype(jnp.float32), 1, Hp)
    blk = tm * Hp * 4 + 2 * Hp * 4 + tm * Hp * 2
    out = pl.pallas_call(
        _ln_kernel(eps, H),
        out_shape=jax.ShapeDtypeStruct((Mp, Hp), jnp.bfloat16),
        grid=(Mp // tm,),
        in_specs=[pl.BlockSpec((tm, Hp), lambda i: (i, 0)),
                  pl.BlockSpec((1, Hp), lambda i: (0, 0)),
                  pl.BlockSpec((1, Hp), lambda i: (0, 0))],
        out_specs=pl.BlockSpec((tm, Hp), lambda i: (i, 0)),
        compiler_params=_cparams(("parallel",), _vmem_limit(blk)),
    )(xp, gp, bp)
    return out[:M, :H].reshape(shp)


# ----------------------------- Flash-style attention (all heads of one batch element per block) -----------------------------

def _sdpa_kernel(scale, causal, tq, tkv, has_mask):
    def kernel(*refs):
        if has_mask:
            q_ref, k_ref, v_ref, m_ref, o_ref, m_sc, l_sc, acc_sc = refs
        else:
            q_ref, k_ref, v_ref, o_ref, m_sc, l_sc, acc_sc = refs

        kv = pl.program_id(2)

        @pl.when(kv == 0)
        def _():
            m_sc[...] = jnp.full_like(m_sc, -1e30)
            l_sc[...] = jnp.zeros_like(l_sc)
            acc_sc[...] = jnp.zeros_like(acc_sc)

        q = q_ref[...].astype(jnp.bfloat16)   # (nh, tq, dh)
        k = k_ref[...].astype(jnp.bfloat16)   # (nh, tkv, dh)
        s = jnp.einsum("hqd,hkd->hqk", q, k,
                       preferred_element_type=jnp.float32) * scale
        if has_mask:
            s = s + m_ref[...]                # (1, 1, tkv) additive key-padding mask
        if causal:
            qi = pl.program_id(1)
            row = jax.lax.broadcasted_iota(jnp.int32, s.shape, 1) + qi * tq
            col = jax.lax.broadcasted_iota(jnp.int32, s.shape, 2) + kv * tkv
            s = jnp.where(col <= row, s, s - 10000.0)   # matches -10000*(1-tril)

        m_prev = m_sc[...]
        m_new = jnp.maximum(m_prev, jnp.max(s, axis=-1, keepdims=True))
        alpha = jnp.exp(m_prev - m_new)
        p = jnp.exp(s - m_new)
        l_sc[...] = alpha * l_sc[...] + jnp.sum(p, axis=-1, keepdims=True)
        acc_sc[...] = alpha * acc_sc[...] + jnp.einsum(
            "hqk,hkd->hqd", p.astype(jnp.bfloat16), v_ref[...].astype(jnp.bfloat16),
            preferred_element_type=jnp.float32)
        m_sc[...] = m_new

        @pl.when(kv == pl.num_programs(2) - 1)
        def _():
            o_ref[...] = (acc_sc[...] *
                          pl.reciprocal(l_sc[...], approx=True)).astype(o_ref.dtype)
    return kernel


def sdpa(q, k, v, mask, scale, nh, causal, tq=256, tkv=256):
    """Online-softmax attention.  q: (B*nh, Lq, dh), k/v: (B*nh, Lk, dh),
    mask: (B, 1, Lk) additive f32 or None (decoder self-attention)."""
    BH, Lq, dh = q.shape
    B = BH // nh
    Lk = k.shape[1]
    tq, Lqp = _tile(Lq, tq, 8)
    tkv, Lkp = _tile(Lk, tkv, 8)   # 256-wide kv tiles keep the v6e/v7x MXU filled

    def pad_l(a, Lp):
        return a if a.shape[1] == Lp else jnp.pad(a, ((0, 0), (0, Lp - a.shape[1]), (0, 0)))

    qp = pad_l(q.astype(jnp.bfloat16), Lqp)
    kp = pad_l(k.astype(jnp.bfloat16), Lkp)
    vp = pad_l(v.astype(jnp.bfloat16), Lkp)

    in_specs = [pl.BlockSpec((nh, tq, dh), lambda b, qi, kv: (b, qi, 0)),
                pl.BlockSpec((nh, tkv, dh), lambda b, qi, kv: (b, kv, 0)),
                pl.BlockSpec((nh, tkv, dh), lambda b, qi, kv: (b, kv, 0))]
    args = [qp, kp, vp]
    if mask is not None:
        mp = mask.astype(jnp.float32)
        if Lkp != Lk:
            mp = jnp.pad(mp, ((0, 0), (0, 0), (0, Lkp - Lk)), constant_values=-1e9)
        in_specs.append(pl.BlockSpec((1, 1, tkv), lambda b, qi, kv: (b, 0, kv)))
        args.append(mp)

    blk = 2 * nh * tq * dh * 2 + 2 * nh * tkv * dh * 2 + tkv * 4
    scratch = nh * tq * (8 + dh * 4)
    out = pl.pallas_call(
        _sdpa_kernel(scale, causal, tq, tkv, mask is not None),
        out_shape=jax.ShapeDtypeStruct((BH, Lqp, dh), jnp.bfloat16),
        grid=(B, Lqp // tq, Lkp // tkv),
        in_specs=in_specs,
        out_specs=pl.BlockSpec((nh, tq, dh), lambda b, qi, kv: (b, qi, 0)),
        scratch_shapes=[pltpu.VMEM((nh, tq, 1), jnp.float32),
                        pltpu.VMEM((nh, tq, 1), jnp.float32),
                        pltpu.VMEM((nh, tq, dh), jnp.float32)],
        compiler_params=_cparams(("parallel", "parallel", "arbitrary"),
                                 _vmem_limit(blk, scratch)),
    )(*args)
    return out[:, :Lq, :]


# ----------------------------- Fused lm_head + masked cross-entropy -----------------------------

def _lm_ce_kernel(tv, v_real):
    def kernel(h_ref, w_ref, lab_ref, act_ref, loss_ref, m_sc, l_sc, t_sc):
        vi = pl.program_id(1)

        @pl.when(vi == 0)
        def _():
            m_sc[...] = jnp.full_like(m_sc, -1e30)
            l_sc[...] = jnp.zeros_like(l_sc)
            t_sc[...] = jnp.zeros_like(t_sc)

        # logits for this (row tile, vocab tile) -- never written back to HBM
        logits = jnp.dot(h_ref[...], w_ref[...], preferred_element_type=jnp.float32)
        col = jax.lax.broadcasted_iota(jnp.int32, logits.shape, 1) + vi * tv
        logits = jnp.where(col < v_real, logits, -1e30)   # mask padded vocab columns

        m_prev = m_sc[...]
        m_new = jnp.maximum(m_prev, jnp.max(logits, axis=-1, keepdims=True))
        alpha = jnp.exp(m_prev - m_new)
        l_sc[...] = alpha * l_sc[...] + jnp.sum(jnp.exp(logits - m_new),
                                                axis=-1, keepdims=True)
        m_sc[...] = m_new
        t_sc[...] += jnp.sum(jnp.where(col == lab_ref[...], logits, 0.0),
                             axis=-1, keepdims=True)

        @pl.when(vi == pl.num_programs(1) - 1)
        def _():
            loss_ref[...] = (m_sc[...] + jnp.log(l_sc[...]) - t_sc[...]) * act_ref[...]
    return kernel


def lm_head_ce(hidden, w, labels, active, tm=512, tv=2048):
    """Fused lm_head matmul + masked cross-entropy (online LSE over vocab tiles).
    Per-ROW losses are emitted so the row axis is a "parallel" grid dim (megacore-friendly);
    summation/normalization happens in plain JAX.  Consider tv=1024 on v7x."""
    N, H = hidden.shape
    V = w.shape[1]
    tm, Mp = _tile(N, tm, 8)
    tv, Vp = _tile(V, tv, 128)
    Hp = _round_up(H, 128)
    hp = _pad2(hidden.astype(jnp.bfloat16), Mp, Hp)
    wp = _pad2(w.astype(jnp.bfloat16), Hp, Vp)
    labp = _pad2(labels.reshape(N, 1).astype(jnp.int32), Mp, 1)
    actp = _pad2(active.reshape(N, 1).astype(jnp.float32), Mp, 1)
    blk = tm * Hp * 2 + Hp * tv * 2 + tm * 4 * 2 + tm * 4
    per_row = pl.pallas_call(
        _lm_ce_kernel(tv, V),
        out_shape=jax.ShapeDtypeStruct((Mp, 1), jnp.float32),
        grid=(Mp // tm, Vp // tv),
        in_specs=[pl.BlockSpec((tm, Hp), lambda i, j: (i, 0)),
                  pl.BlockSpec((Hp, tv), lambda i, j: (0, j)),
                  pl.BlockSpec((tm, 1), lambda i, j: (i, 0)),
                  pl.BlockSpec((tm, 1), lambda i, j: (i, 0))],
        out_specs=pl.BlockSpec((tm, 1), lambda i, j: (i, 0)),
        scratch_shapes=[pltpu.VMEM((tm, 1), jnp.float32),
                        pltpu.VMEM((tm, 1), jnp.float32),
                        pltpu.VMEM((tm, 1), jnp.float32)],
        compiler_params=_cparams(("parallel", "arbitrary"),
                                 _vmem_limit(blk, 3 * tm * 4)),
    )(hp, wp, labp, actp)
    return jnp.sum(per_row)   # padded / inactive rows contribute exactly 0


# ----------------------------- Model (glue) -----------------------------

def self_mha_block(x, p, nh, mask, causal, ln_g, ln_b, eps):
    """Fused-QKV self-attention; out-projection fused with residual + LayerNorm."""
    B, L, H = x.shape
    dh = H // nh
    x2 = x.reshape(B * L, H)
    qkv = linear_act(x2, p["wqkv"], p["bqkv"]).reshape(B, L, 3, nh, dh)
    # TODO(synk): fold the head split/merge transposes into BlockSpec index maps inside sdpa
    # to drop these XLA relayout passes entirely (they are bf16-sized now, but still HBM trips).
    q = qkv[:, :, 0].transpose(0, 2, 1, 3).reshape(B * nh, L, dh)
    k = qkv[:, :, 1].transpose(0, 2, 1, 3).reshape(B * nh, L, dh)
    v = qkv[:, :, 2].transpose(0, 2, 1, 3).reshape(B * nh, L, dh)
    ctx = sdpa(q, k, v, mask, 1.0 / math.sqrt(dh), nh, causal)
    ctx2 = ctx.reshape(B, nh, L, dh).transpose(0, 2, 1, 3).reshape(B * L, H)
    y = linear_res_ln(ctx2, p["wo"], p["bo"], x2, ln_g, ln_b, eps)
    return y.reshape(B, L, H)


def cross_mha_block(q_in, kv_in, p, nh, mask, ln_g, ln_b, eps):
    B, Lq, H = q_in.shape
    Lk = kv_in.shape[1]
    dh = H // nh
    q2 = q_in.reshape(B * Lq, H)
    kv2 = kv_in.reshape(B * Lk, H)
    q = linear_act(q2, p["wq"], p["bq"]).reshape(B, Lq, nh, dh)
    kv = linear_act(kv2, p["wkv"], p["bkv"]).reshape(B, Lk, 2, nh, dh)
    q = q.transpose(0, 2, 1, 3).reshape(B * nh, Lq, dh)
    k = kv[:, :, 0].transpose(0, 2, 1, 3).reshape(B * nh, Lk, dh)
    v = kv[:, :, 1].transpose(0, 2, 1, 3).reshape(B * nh, Lk, dh)
    ctx = sdpa(q, k, v, mask, 1.0 / math.sqrt(dh), nh, False)
    ctx2 = ctx.reshape(B, nh, Lq, dh).transpose(0, 2, 1, 3).reshape(B * Lq, H)
    y = linear_res_ln(ctx2, p["wo"], p["bo"], q2, ln_g, ln_b, eps)
    return y.reshape(B, Lq, H)


def embeddings(p, ids):
    B, L = ids.shape
    emb = jnp.take(p["word_emb"], ids, axis=0) + p["pos_emb"][:L][None, :, :]
    return layer_norm(emb, p["ln_g"], p["ln_b"], 1e-12)


def encoder_layer(x, p, nh, src_mask_add):   # RoBERTa-style post-LN block
    x = self_mha_block(x, p["attn"], nh, src_mask_add, False, p["ln1_g"], p["ln1_b"], 1e-12)
    B, S, H = x.shape
    x2 = x.reshape(B * S, H)
    h = linear_act(x2, p["w1"], p["b1"], act="gelu")
    x = linear_res_ln(h, p["w2"], p["b2"], x2, p["ln2_g"], p["ln2_b"], 1e-12)
    return x.reshape(B, S, H)


def decoder_layer(tgt, memory, p, nh, mem_mask):  # nn.TransformerDecoderLayer (post-norm, relu)
    # causal mask built in-kernel; no all-zeros additive mask is DMA'd for self-attention
    x = self_mha_block(tgt, p["self_attn"], nh, None, True, p["ln1_g"], p["ln1_b"], 1e-5)
    x = cross_mha_block(x, memory, p["cross_attn"], nh, mem_mask, p["ln2_g"], p["ln2_b"], 1e-5)
    B, T, H = x.shape
    x2 = x.reshape(B * T, H)
    h = linear_act(x2, p["w1"], p["b1"], act="relu")
    x = linear_res_ln(h, p["w2"], p["b2"], x2, p["ln3_g"], p["ln3_b"], 1e-5)
    return x.reshape(B, T, H)


def seq2seq_forward(params, nh, source_ids, source_mask, target_ids, target_mask):
    """Training branch of Seq2Seq.forward -> (loss, loss*active_sum, active_sum)."""
    B, S = source_ids.shape
    T = target_ids.shape[1]
    src_f = source_mask.astype(jnp.float32)

    # ---- encoder: outputs[0] ----
    h = embeddings(params["emb"], source_ids)
    enc_mask = (-10000.0 * (1.0 - src_f)).reshape(B, 1, S)            # additive key-padding
    for lp in params["enc_layers"]:
        h = encoder_layer(h, lp, nh, enc_mask)
    encoder_output = h                                                # (B,S,H); (L,B,H) permutes elided

    # ---- decoder ----
    tgt_emb = embeddings(params["emb"], target_ids)                   # encoder.embeddings(target_ids)
    mem_mask = (-1e9 * (1.0 - src_f)).reshape(B, 1, S)                # memory_key_padding_mask
    out = tgt_emb
    for lp in params["dec_layers"]:
        out = decoder_layer(out, encoder_output, lp, nh, mem_mask)

    # ---- heads + loss (lm_head fused with masked CE) ----
    H = out.shape[-1]
    hidden = linear_act(out.reshape(B * T, H), params["dense_w"], params["dense_b"], act="tanh")
    hidden_shift = hidden.reshape(B, T, H)[:, :-1, :].reshape(B * (T - 1), H)
    shift_labels = target_ids[:, 1:].reshape(-1)
    active = (target_mask[:, 1:] != 0).reshape(-1)
    valid = jnp.logical_and(active, shift_labels != -1)               # CrossEntropyLoss(ignore_index=-1)
    loss_sum = lm_head_ce(hidden_shift, params["lm_head_w"], shift_labels, valid)
    cnt = jnp.sum(valid.astype(jnp.float32))
    active_sum = jnp.sum(active.astype(jnp.float32))
    loss = loss_sum / jnp.maximum(cnt, 1.0)                           # guard: no valid positions
    return loss, loss * active_sum, active_sum.astype(jnp.int32)

# TODO(synk): the beam-search inference branch (target_ids is None; Beam class, dynamic
# Python loop over generated tokens) has no clean static-shape Pallas equivalent and is
# not implemented here.


# ----------------------------- Parameter init -----------------------------

def init_params(seed, H, nh, ffn, vocab, dec_vocab, max_pos, n_enc, n_dec):
    ks = iter(jax.random.split(jax.random.PRNGKey(seed), 1024))

    def w(shape, scale=0.02, dtype=jnp.bfloat16):
        return (scale * jax.random.normal(next(ks), shape)).astype(dtype)

    def self_attn():
        return {"wqkv": w((H, 3 * H)), "bqkv": jnp.zeros((3 * H,), jnp.float32),
                "wo": w((H, H)), "bo": jnp.zeros((H,), jnp.float32)}

    def cross_attn():
        return {"wq": w((H, H)), "bq": jnp.zeros((H,), jnp.float32),
                "wkv": w((H, 2 * H)), "bkv": jnp.zeros((2 * H,), jnp.float32),
                "wo": w((H, H)), "bo": jnp.zeros((H,), jnp.float32)}

    def enc_layer():
        return {"attn": self_attn(),
                "ln1_g": jnp.ones((H,), jnp.float32), "ln1_b": jnp.zeros((H,), jnp.float32),
                "w1": w((H, ffn)), "b1": jnp.zeros((ffn,), jnp.float32),
                "w2": w((ffn, H)), "b2": jnp.zeros((H,), jnp.float32),
                "ln2_g": jnp.ones((H,), jnp.float32), "ln2_b": jnp.zeros((H,), jnp.float32)}

    def dec_layer():
        return {"self_attn": self_attn(), "cross_attn": cross_attn(),
                "ln1_g": jnp.ones((H,), jnp.float32), "ln1_b": jnp.zeros((H,), jnp.float32),
                "ln2_g": jnp.ones((H,), jnp.float32), "ln2_b": jnp.zeros((H,), jnp.float32),
                "w1": w((H, ffn)), "b1": jnp.zeros((ffn,), jnp.float32),
                "w2": w((ffn, H)), "b2": jnp.zeros((H,), jnp.float32),
                "ln3_g": jnp.ones((H,), jnp.float32), "ln3_b": jnp.zeros((H,), jnp.float32)}

    return {
        "emb": {"word_emb": w((vocab, H), dtype=jnp.float32),
                "pos_emb": w((max_pos, H), dtype=jnp.float32),
                "ln_g": jnp.ones((H,), jnp.float32), "ln_b": jnp.zeros((H,), jnp.float32)},
        "enc_layers": [enc_layer() for _ in range(n_enc)],
        "dec_layers": [dec_layer() for _ in range(n_dec)],
        "dense_w": w((H, H)), "dense_b": jnp.zeros((H,), jnp.float32),
        "lm_head_w": w((H, dec_vocab)),
    }


# ----------------------------- Main -----------------------------

if __name__ == "__main__":
    # Small demo config (real models: H>=768, dh=64, vocab ~50k -- tiles/padding handle both).
    H, NH, FFN, VOCAB, DEC_VOCAB = 64, 4, 128, 128, 128
    N_ENC, N_DEC = 2, 6          # decoder num_layers=6 as in the module; small encoder
    B, S, T = 2, 16, 8

    params = init_params(0, H, NH, FFN, VOCAB, DEC_VOCAB, max_pos=64,
                         n_enc=N_ENC, n_dec=N_DEC)

    key = jax.random.PRNGKey(0)
    k1, k2 = jax.random.split(key, 2)
    source_ids = jax.random.randint(k1, (B, S), 0, VOCAB, dtype=jnp.int32)
    source_mask = jnp.concatenate([jnp.ones((B, 12), jnp.int32),
                                   jnp.zeros((B, 4), jnp.int32)], axis=1)
    target_ids = jax.random.randint(k2, (B, T), 0, DEC_VOCAB, dtype=jnp.int32)
    target_mask = jnp.concatenate([jnp.ones((B, 6), jnp.int32),
                                   jnp.zeros((B, 2), jnp.int32)], axis=1)

    fwd = jax.jit(functools.partial(seq2seq_forward, params, NH))
    loss, scaled_loss, active_sum = fwd(source_ids, source_mask, target_ids, target_mask)
    jax.block_until_ready((loss, scaled_loss, active_sum))
    assert jnp.isfinite(loss)
    print("KERNEL_OK")
</pallas_src>

<mosaic_0001>
module attributes {stable_mosaic.version = 11 : i64} {
  func.func @kernel(%arg0: i32, %arg1: i32, %arg2: i32, %arg3: memref<32x128xbf16, #tpu.memory_space<vmem>>, %arg4: memref<128x256xbf16, #tpu.memory_space<vmem>>, %arg5: memref<1x256xf32, #tpu.memory_space<vmem>>, %arg6: memref<32x256xbf16, #tpu.memory_space<vmem>>, %arg7: memref<32x256xf32, #tpu.memory_space<vmem>>) attributes {dimension_semantics = [#tpu.dimension_semantics<parallel>, #tpu.dimension_semantics<parallel>, #tpu.dimension_semantics<arbitrary>], iteration_bounds = array<i64: 1, 1, 1>, scalar_prefetch = 0 : i64, scratch_operands = 1 : i64, tpu.core_type = #tpu.core_type<tc>, window_params = [{transform_indices = @transform_0, window_bounds = array<i64: 32, 128>}, {transform_indices = @transform_1, window_bounds = array<i64: 128, 256>}, {transform_indices = @transform_2, window_bounds = array<i64: 1, 256>}, {transform_indices = @transform_3, window_bounds = array<i64: 32, 256>}]} {
    %c0_i32 = arith.constant 0 : i32
    %0 = arith.cmpi eq, %arg2, %c0_i32 : i32
    %1 = arith.extui %0 : i1 to i32
    %c0_i32_0 = arith.constant 0 : i32
    %2 = arith.cmpi ne, %1, %c0_i32_0 : i32
    scf.if %2 {
      %cst_10 = arith.constant 0.000000e+00 : f32
      %12 = vector.broadcast %cst_10 : f32 to vector<32x256xf32>
      %c0_11 = arith.constant 0 : index
      %c0_12 = arith.constant 0 : index
      %13 = vector.load %arg7[%c0_11, %c0_12] : memref<32x256xf32, #tpu.memory_space<vmem>>, vector<32x256xf32>
      tpu.vector_store %arg7[%c0_11, %c0_12], %12 {strides = array<i32>} : memref<32x256xf32, #tpu.memory_space<vmem>>, vector<32x256xf32>,
    } else {
    }
    %c0 = arith.constant 0 : index
    %c0_1 = arith.constant 0 : index
    %3 = vector.load %arg7[%c0, %c0_1] : memref<32x256xf32, #tpu.memory_space<vmem>>, vector<32x256xf32>
    %c0_2 = arith.constant 0 : index
    %c0_3 = arith.constant 0 : index
    %4 = vector.load %arg3[%c0_2, %c0_3] : memref<32x128xbf16, #tpu.memory_space<vmem>>, vector<32x128xbf16>
    %c0_4 = arith.constant 0 : index
    %c0_5 = arith.constant 0 : index
    %5 = vector.load %arg4[%c0_4, %c0_5] : memref<128x256xbf16, #tpu.memory_space<vmem>>, vector<128x256xbf16>
    %cst = arith.constant dense<0.000000e+00> : vector<32x256xf32>
    %6 = tpu.matmul %4, %5, %cst {dimension_numbers = #tpu.dot_dimension_numbers<[1], [0], [0], [1], [0, 0, 1, 1], [], []>} : vector<32x128xbf16>, vector<128x256xbf16>, vector<32x256xf32> -> vector<32x256xf32>
    %7 = arith.addf %3, %6 : vector<32x256xf32>
    %c0_6 = arith.constant 0 : index
    %c0_7 = arith.constant 0 : index
    %8 = vector.load %arg7[%c0_6, %c0_7] : memref<32x256xf32, #tpu.memory_space<vmem>>, vector<32x256xf32>
    tpu.vector_store %arg7[%c0_6, %c0_7], %7 {strides = array<i32>} : memref<32x256xf32, #tpu.memory_space<vmem>>, vector<32x256xf32>,
    %c0_i32_8 = arith.constant 0 : i32
    %9 = arith.cmpi eq, %arg2, %c0_i32_8 : i32
    %10 = arith.extui %9 : i1 to i32
    %c0_i32_9 = arith.constant 0 : i32
    %11 = arith.cmpi ne, %10, %c0_i32_9 : i32
    scf.if %11 {
      %c0_10 = arith.constant 0 : index
      %c0_11 = arith.constant 0 : index
      %12 = vector.load %arg7[%c0_10, %c0_11] : memref<32x256xf32, #tpu.memory_space<vmem>>, vector<32x256xf32>
      %c0_12 = arith.constant 0 : index
      %c0_13 = arith.constant 0 : index
      %13 = vector.load %arg5[%c0_12, %c0_13] : memref<1x256xf32, #tpu.memory_space<vmem>>, vector<1x256xf32>
      %14 = vector.broadcast %13 : vector<1x256xf32> to vector<32x256xf32>
      %15 = arith.addf %12, %14 : vector<32x256xf32>
      %16 = arith.truncf %15 : vector<32x256xf32> to vector<32x256xbf16>
      %c0_14 = arith.constant 0 : index
      %c0_15 = arith.constant 0 : index
      %17 = vector.load %arg6[%c0_14, %c0_15] : memref<32x256xbf16, #tpu.memory_space<vmem>>, vector<32x256xbf16>
      tpu.vector_store %arg6[%c0_14, %c0_15], %16 {strides = array<i32>} : memref<32x256xbf16, #tpu.memory_space<vmem>>, vector<32x256xbf16>,
    } else {
    }
    return
  }
  func.func @transform_0(%arg0: i32, %arg1: i32, %arg2: i32) -> (i32, i32) {
    %c0_i32 = arith.constant 0 : i32
    return %arg0, %arg2 : i32, i32
  }
  func.func @transform_1(%arg0: i32, %arg1: i32, %arg2: i32) -> (i32, i32) {
    %c0_i32 = arith.constant 0 : i32
    return %arg2, %arg1 : i32, i32
  }
  func.func @transform_2(%arg0: i32, %arg1: i32, %arg2: i32) -> (i32, i32) {
    %c0_i32 = arith.constant 0 : i32
    %c0_i32_0 = arith.constant 0 : i32
    return %c0_i32, %arg1 : i32, i32
  }
  func.func @transform_3(%arg0: i32, %arg1: i32, %arg2: i32) -> (i32, i32) {
    %c0_i32 = arith.constant 0 : i32
    return %arg0, %arg1 : i32, i32
  }
}

module attributes {stable_mosaic.version = 11 : i64} {
  func.func @kernel(%arg0: i32, %arg1: memref<32x128xf32, #tpu.memory_space<vmem>>, %arg2: memref<1x128xf32, #tpu.memory_space<vmem>>, %arg3: memref<1x128xf32, #tpu.memory_space<vmem>>, %arg4: memref<32x128xbf16, #tpu.memory_space<vmem>>) attributes {dimension_semantics = [#tpu.dimension_semantics<parallel>], iteration_bounds = array<i64: 1>, scalar_prefetch = 0 : i64, scratch_operands = 0 : i64, tpu.core_type = #tpu.core_type<tc>, window_params = [{transform_indices = @transform_0, window_bounds = array<i64: 32, 128>}, {pipeline_mode = #tpu.pipeline_mode<synchronous>, transform_indices = @transform_1, window_bounds = array<i64: 1, 128>}, {pipeline_mode = #tpu.pipeline_mode<synchronous>, transform_indices = @transform_2, window_bounds = array<i64: 1, 128>}, {transform_indices = @transform_3, window_bounds = array<i64: 32, 128>}]} {
    %c0 = arith.constant 0 : index
    %c0_0 = arith.constant 0 : index
    %0 = vector.load %arg1[%c0, %c0_0] : memref<32x128xf32, #tpu.memory_space<vmem>>, vector<32x128xf32>
    %cst = arith.constant dense<0.000000e+00> : vector<32xf32>
    %1 = vector.multi_reduction <add>, %0, %cst [1] : vector<32x128xf32> to vector<32xf32>
    %2 = vector.shape_cast %1 : vector<32xf32> to vector<32x1xf32>
    %cst_1 = arith.constant 1.562500e-02 : f32
    %3 = vector.broadcast %cst_1 : f32 to vector<32x1xf32>
    %4 = arith.mulf %2, %3 : vector<32x1xf32>
    %5 = arith.mulf %0, %0 : vector<32x128xf32>
    %cst_2 = arith.constant dense<0.000000e+00> : vector<32xf32>
    %6 = vector.multi_reduction <add>, %5, %cst_2 [1] : vector<32x128xf32> to vector<32xf32>
    %7 = vector.shape_cast %6 : vector<32xf32> to vector<32x1xf32>
    %cst_3 = arith.constant 1.562500e-02 : f32
    %8 = vector.broadcast %cst_3 : f32 to vector<32x1xf32>
    %9 = arith.mulf %7, %8 : vector<32x1xf32>
    %10 = arith.mulf %4, %4 : vector<32x1xf32>
    %11 = arith.subf %9, %10 : vector<32x1xf32>
    %cst_4 = arith.constant 0.000000e+00 : f32
    %12 = vector.broadcast %cst_4 : f32 to vector<32x1xf32>
    %13 = arith.maximumf %11, %12 : vector<32x1xf32>
    %14 = vector.broadcast %4 : vector<32x1xf32> to vector<32x128xf32>
    %15 = arith.subf %0, %14 : vector<32x128xf32>
    %cst_5 = arith.constant 9.99999996E-13 : f32
    %16 = vector.broadcast %cst_5 : f32 to vector<32x1xf32>
    %17 = arith.addf %13, %16 : vector<32x1xf32>
    %18 = math.rsqrt %17 : vector<32x1xf32>
    %19 = vector.broadcast %18 : vector<32x1xf32> to vector<32x128xf32>
    %20 = arith.mulf %15, %19 : vector<32x128xf32>
    %c0_6 = arith.constant 0 : index
    %c0_7 = arith.constant 0 : index
    %21 = vector.load %arg2[%c0_6, %c0_7] : memref<1x128xf32, #tpu.memory_space<vmem>>, vector<1x128xf32>
    %22 = vector.broadcast %21 : vector<1x128xf32> to vector<32x128xf32>
    %23 = arith.mulf %20, %22 : vector<32x128xf32>
    %c0_8 = arith.constant 0 : index
    %c0_9 = arith.constant 0 : index
    %24 = vector.load %arg3[%c0_8, %c0_9] : memref<1x128xf32, #tpu.memory_space<vmem>>, vector<1x128xf32>
    %25 = vector.broadcast %24 : vector<1x128xf32> to vector<32x128xf32>
    %26 = arith.addf %23, %25 : vector<32x128xf32>
    %27 = arith.truncf %26 : vector<32x128xf32> to vector<32x128xbf16>
    %c0_10 = arith.constant 0 : index
    %c0_11 = arith.constant 0 : index
    %28 = vector.load %arg4[%c0_10, %c0_11] : memref<32x128xbf16, #tpu.memory_space<vmem>>, vector<32x128xbf16>
    tpu.vector_store %arg4[%c0_10, %c0_11], %27 {strides = array<i32>} : memref<32x128xbf16, #tpu.memory_space<vmem>>, vector<32x128xbf16>,
    return
  }
  func.func @transform_0(%arg0: i32) -> (i32, i32) {
    %c0_i32 = arith.constant 0 : i32
    %c0_i32_0 = arith.constant 0 : i32
    return %arg0, %c0_i32 : i32, i32
  }
  func.func @transform_1(%arg0: i32) -> (i32, i32) {
    %c0_i32 = arith.constant 0 : i32
    %c0_i32_0 = arith.constant 0 : i32
    %c0_i32_1 = arith.constant 0 : i32
    return %c0_i32, %c0_i32_0 : i32, i32
  }
  func.func @transform_2(%arg0: i32) -> (i32, i32) {
    %c0_i32 = arith.constant 0 : i32
    %c0_i32_0 = arith.constant 0 : i32
    %c0_i32_1 = arith.constant 0 : i32
    return %c0_i32, %c0_i32_0 : i32, i32
  }
  func.func @transform_3(%arg0: i32) -> (i32, i32) {
    %c0_i32 = arith.constant 0 : i32
    %c0_i32_0 = arith.constant 0 : i32
    return %arg0, %c0_i32 : i32, i32
  }
}

module attributes {stable_mosaic.version = 11 : i64} {
  func.func @kernel(%arg0: i32, %arg1: i32, %arg2: memref<32x128xbf16, #tpu.memory_space<vmem>>, %arg3: memref<128x128xbf16, #tpu.memory_space<vmem>>, %arg4: memref<1x128xf32, #tpu.memory_space<vmem>>, %arg5: memref<32x128xbf16, #tpu.memory_space<vmem>>, %arg6: memref<1x128xf32, #tpu.memory_space<vmem>>, %arg7: memref<1x128xf32, #tpu.memory_space<vmem>>, %arg8: memref<32x128xbf16, #tpu.memory_space<vmem>>, %arg9: memref<32x128xf32, #tpu.memory_space<vmem>>) attributes {dimension_semantics = [#tpu.dimension_semantics<parallel>, #tpu.dimension_semantics<arbitrary>], iteration_bounds = array<i64: 1, 1>, scalar_prefetch = 0 : i64, scratch_operands = 1 : i64, tpu.core_type = #tpu.core_type<tc>, window_params = [{transform_indices = @transform_0, window_bounds = array<i64: 32, 128>}, {transform_indices = @transform_1, window_bounds = array<i64: 128, 128>}, {pipeline_mode = #tpu.pipeline_mode<synchronous>, transform_indices = @transform_2, window_bounds = array<i64: 1, 128>}, {transform_indices = @transform_3, window_bounds = array<i64: 32, 128>}, {pipeline_mode = #tpu.pipeline_mode<synchronous>, transform_indices = @transform_4, window_bounds = array<i64: 1, 128>}, {pipeline_mode = #tpu.pipeline_mode<synchronous>, transform_indices = @transform_5, window_bounds = array<i64: 1, 128>}, {transform_indices = @transform_6, window_bounds = array<i64: 32, 128>}]} {
    %c0_i32 = arith.constant 0 : i32
    %0 = arith.cmpi eq, %arg1, %c0_i32 : i32
    %1 = arith.extui %0 : i1 to i32
    %c0_i32_0 = arith.constant 0 : i32
    %2 = arith.cmpi ne, %1, %c0_i32_0 : i32
    scf.if %2 {
      %cst_10 = arith.constant 0.000000e+00 : f32
      %12 = vector.broadcast %cst_10 : f32 to vector<32x128xf32>
      %c0_11 = arith.constant 0 : index
      %c0_12 = arith.constant 0 : index
      %13 = vector.load %arg9[%c0_11, %c0_12] : memref<32x128xf32, #tpu.memory_space<vmem>>, vector<32x128xf32>
      tpu.vector_store %arg9[%c0_11, %c0_12], %12 {strides = array<i32>} : memref<32x128xf32, #tpu.memory_space<vmem>>, vector<32x128xf32>,
    } else {
    }
    %c0 = arith.constant 0 : index
    %c0_1 = arith.constant 0 : index
    %3 = vector.load %arg9[%c0, %c0_1] : memref<32x128xf32, #tpu.memory_space<vmem>>, vector<32x128xf32>
    %c0_2 = arith.constant 0 : index
    %c0_3 = arith.constant 0 : index
    %4 = vector.load %arg2[%c0_2, %c0_3] : memref<32x128xbf16, #tpu.memory_space<vmem>>, vector<32x128xbf16>
    %c0_4 = arith.constant 0 : index
    %c0_5 = arith.constant 0 : index
    %5 = vector.load %arg3[%c0_4, %c0_5] : memref<128x128xbf16, #tpu.memory_space<vmem>>, vector<128x128xbf16>
    %cst = arith.constant dense<0.000000e+00> : vector<32x128xf32>
    %6 = tpu.matmul %4, %5, %cst {dimension_numbers = #tpu.dot_dimension_numbers<[1], [0], [0], [1], [0, 0, 1, 1], [], []>} : vector<32x128xbf16>, vector<128x128xbf16>, vector<32x128xf32> -> vector<32x128xf32>
    %7 = arith.addf %3, %6 : vector<32x128xf32>
    %c0_6 = arith.constant 0 : index
    %c0_7 = arith.constant 0 : index
    %8 = vector.load %arg9[%c0_6, %c0_7] : memref<32x128xf32, #tpu.memory_space<vmem>>, vector<32x128xf32>
    tpu.vector_store %arg9[%c0_6, %c0_7], %7 {strides = array<i32>} : memref<32x128xf32, #tpu.memory_space<vmem>>, vector<32x128xf32>,
    %c0_i32_8 = arith.constant 0 : i32
    %9 = arith.cmpi eq, %arg1, %c0_i32_8 : i32
    %10 = arith.extui %9 : i1 to i32
    %c0_i32_9 = arith.constant 0 : i32
    %11 = arith.cmpi ne, %10, %c0_i32_9 : i32
    scf.if %11 {
      %c0_10 = arith.constant 0 : index
      %c0_11 = arith.constant 0 : index
      %12 = vector.load %arg9[%c0_10, %c0_11] : memref<32x128xf32, #tpu.memory_space<vmem>>, vector<32x128xf32>
      %c0_12 = arith.constant 0 : index
      %c0_13 = arith.constant 0 : index
      %13 = vector.load %arg4[%c0_12, %c0_13] : memref<1x128xf32, #tpu.memory_space<vmem>>, vector<1x128xf32>
      %14 = vector.broadcast %13 : vector<1x128xf32> to vector<32x128xf32>
      %15 = arith.addf %12, %14 : vector<32x128xf32>
      %c0_14 = arith.constant 0 : index
      %c0_15 = arith.constant 0 : index
      %16 = vector.load %arg5[%c0_14, %c0_15] : memref<32x128xbf16, #tpu.memory_space<vmem>>, vector<32x128xbf16>
      %17 = arith.extf %16 : vector<32x128xbf16> to vector<32x128xf32>
      %18 = arith.addf %15, %17 : vector<32x128xf32>
      %cst_16 = arith.constant dense<0.000000e+00> : vector<32xf32>
      %19 = vector.multi_reduction <add>, %18, %cst_16 [1] : vector<32x128xf32> to vector<32xf32>
      %20 = vector.shape_cast %19 : vector<32xf32> to vector<32x1xf32>
      %cst_17 = arith.constant 1.562500e-02 : f32
      %21 = vector.broadcast %cst_17 : f32 to vector<32x1xf32>
      %22 = arith.mulf %20, %21 : vector<32x1xf32>
      %23 = arith.mulf %18, %18 : vector<32x128xf32>
      %cst_18 = arith.constant dense<0.000000e+00> : vector<32xf32>
      %24 = vector.multi_reduction <add>, %23, %cst_18 [1] : vector<32x128xf32> to vector<32xf32>
      %25 = vector.shape_cast %24 : vector<32xf32> to vector<32x1xf32>
      %cst_19 = arith.constant 1.562500e-02 : f32
      %26 = vector.broadcast %cst_19 : f32 to vector<32x1xf32>
      %27 = arith.mulf %25, %26 : vector<32x1xf32>
      %28 = arith.mulf %22, %22 : vector<32x1xf32>
      %29 = arith.subf %27, %28 : vector<32x1xf32>
      %cst_20 = arith.constant 0.000000e+00 : f32
      %30 = vector.broadcast %cst_20 : f32 to vector<32x1xf32>
      %31 = arith.maximumf %29, %30 : vector<32x1xf32>
      %32 = vector.broadcast %22 : vector<32x1xf32> to vector<32x128xf32>
      %33 = arith.subf %18, %32 : vector<32x128xf32>
      %cst_21 = arith.constant 9.99999996E-13 : f32
      %34 = vector.broadcast %cst_21 : f32 to vector<32x1xf32>
      %35 = arith.addf %31, %34 : vector<32x1xf32>
      %36 = math.rsqrt %35 : vector<32x1xf32>
      %37 = vector.broadcast %36 : vector<32x1xf32> to vector<32x128xf32>
      %38 = arith.mulf %33, %37 : vector<32x128xf32>
      %c0_22 = arith.constant 0 : index
      %c0_23 = arith.constant 0 : index
      %39 = vector.load %arg6[%c0_22, %c0_23] : memref<1x128xf32, #tpu.memory_space<vmem>>, vector<1x128xf32>
      %40 = vector.broadcast %39 : vector<1x128xf32> to vector<32x128xf32>
      %41 = arith.mulf %38, %40 : vector<32x128xf32>
      %c0_24 = arith.constant 0 : index
      %c0_25 = arith.constant 0 : index
      %42 = vector.load %arg7[%c0_24, %c0_25] : memref<1x128xf32, #tpu.memory_space<vmem>>, vector<1x128xf32>
      %43 = vector.broadcast %42 : vector<1x128xf32> to vector<32x128xf32>
      %44 = arith.addf %41, %43 : vector<32x128xf32>
      %45 = arith.truncf %44 : vector<32x128xf32> to vector<32x128xbf16>
      %c0_26 = arith.constant 0 : index
      %c0_27 = arith.constant 0 : index
      %46 = vector.load %arg8[%c0_26, %c0_27] : memref<32x128xbf16, #tpu.memory_space<vmem>>, vector<32x128xbf16>
      tpu.vector_store %arg8[%c0_26, %c0_27], %45 {strides = array<i32>} : memref<32x128xbf16, #tpu.memory_space<vmem>>, vector<32x128xbf16>,
    } else {
    }
    return
  }
  func.func @transform_0(%arg0: i32, %arg1: i32) -> (i32, i32) {
    %c0_i32 = arith.constant 0 : i32
    return %arg0, %arg1 : i32, i32
  }
  func.func @transform_1(%arg0: i32, %arg1: i32) -> (i32, i32) {
    %c0_i32 = arith.constant 0 : i32
    %c0_i32_0 = arith.constant 0 : i32
    return %arg1, %c0_i32 : i32, i32
  }
  func.func @transform_2(%arg0: i32, %arg1: i32) -> (i32, i32) {
    %c0_i32 = arith.constant 0 : i32
    %c0_i32_0 = arith.constant 0 : i32
    %c0_i32_1 = arith.constant 0 : i32
    return %c0_i32, %c0_i32_0 : i32, i32
  }
  func.func @transform_3(%arg0: i32, %arg1: i32) -> (i32, i32) {
    %c0_i32 = arith.constant 0 : i32
    %c0_i32_0 = arith.constant 0 : i32
    return %arg0, %c0_i32 : i32, i32
  }
  func.func @transform_4(%arg0: i32, %arg1: i32) -> (i32, i32) {
    %c0_i32 = arith.constant 0 : i32
    %c0_i32_0 = arith.constant 0 : i32
    %c0_i32_1 = arith.constant 0 : i32
    return %c0_i32, %c0_i32_0 : i32, i32
  }
  func.func @transform_5(%arg0: i32, %arg1: i32) -> (i32, i32) {
    %c0_i32 = arith.constant 0 : i32
    %c0_i32_0 = arith.constant 0 : i32
    %c0_i32_1 = arith.constant 0 : i32
    return %c0_i32, %c0_i32_0 : i32, i32
  }
  func.func @transform_6(%arg0: i32, %arg1: i32) -> (i32, i32) {
    %c0_i32 = arith.constant 0 : i32
    %c0_i32_0 = arith.constant 0 : i32
    return %arg0, %c0_i32 : i32, i32
  }
}

module attributes {stable_mosaic.version = 11 : i64} {
  func.func @kernel(%arg0: i32, %arg1: i32, %arg2: i32, %arg3: memref<4x16x16xbf16, #tpu.memory_space<vmem>>, %arg4: memref<4x16x16xbf16, #tpu.memory_space<vmem>>, %arg5: memref<4x16x16xbf16, #tpu.memory_space<vmem>>, %arg6: memref<1x1x16xf32, #tpu.memory_space<vmem>>, %arg7: memref<4x16x16xbf16, #tpu.memory_space<vmem>>, %arg8: memref<4x16x1xf32, #tpu.memory_space<vmem>>, %arg9: memref<4x16x1xf32, #tpu.memory_space<vmem>>, %arg10: memref<4x16x16xf32, #tpu.memory_space<vmem>>) attributes {dimension_semantics = [#tpu.dimension_semantics<parallel>, #tpu.dimension_semantics<parallel>, #tpu.dimension_semantics<arbitrary>], iteration_bounds = array<i64: 2, 1, 1>, scalar_prefetch = 0 : i64, scratch_operands = 3 : i64, tpu.core_type = #tpu.core_type<tc>, window_params = [{transform_indices = @transform_0, window_bounds = array<i64: 4, 16, 16>}, {transform_indices = @transform_1, window_bounds = array<i64: 4, 16, 16>}, {transform_indices = @transform_2, window_bounds = array<i64: 4, 16, 16>}, {transform_indices = @transform_3, window_bounds = array<i64: 1, 1, 16>}, {transform_indices = @transform_4, window_bounds = array<i64: 4, 16, 16>}]} {
    %c0_i32 = arith.constant 0 : i32
    %0 = arith.cmpi eq, %arg2, %c0_i32 : i32
    %1 = arith.extui %0 : i1 to i32
    %c0_i32_0 = arith.constant 0 : i32
    %2 = arith.cmpi ne, %1, %c0_i32_0 : i32
    scf.if %2 {
      %cst_36 = arith.constant -1.000000e+30 : f32
      %38 = vector.broadcast %cst_36 : f32 to vector<4x16x1xf32>
      %c0_37 = arith.constant 0 : index
      %c0_38 = arith.constant 0 : index
      %c0_39 = arith.constant 0 : index
      %39 = vector.load %arg8[%c0_37, %c0_38, %c0_39] : memref<4x16x1xf32, #tpu.memory_space<vmem>>, vector<4x16x1xf32>
      tpu.vector_store %arg8[%c0_37, %c0_38, %c0_39], %38 {strides = array<i32>} : memref<4x16x1xf32, #tpu.memory_space<vmem>>, vector<4x16x1xf32>,
      %cst_40 = arith.constant 0.000000e+00 : f32
      %40 = vector.broadcast %cst_40 : f32 to vector<4x16x1xf32>
      %c0_41 = arith.constant 0 : index
      %c0_42 = arith.constant 0 : index
      %c0_43 = arith.constant 0 : index
      %41 = vector.load %arg9[%c0_41, %c0_42, %c0_43] : memref<4x16x1xf32, #tpu.memory_space<vmem>>, vector<4x16x1xf32>
      tpu.vector_store %arg9[%c0_41, %c0_42, %c0_43], %40 {strides = array<i32>} : memref<4x16x1xf32, #tpu.memory_space<vmem>>, vector<4x16x1xf32>,
      %cst_44 = arith.constant 0.000000e+00 : f32
      %42 = vector.broadcast %cst_44 : f32 to vector<4x16x16xf32>
      %c0_45 = arith.constant 0 : index
      %c0_46 = arith.constant 0 : index
      %c0_47 = arith.constant 0 : index
      %43 = vector.load %arg10[%c0_45, %c0_46, %c0_47] : memref<4x16x16xf32, #tpu.memory_space<vmem>>, vector<4x16x16xf32>
      tpu.vector_store %arg10[%c0_45, %c0_46, %c0_47], %42 {strides = array<i32>} : memref<4x16x16xf32, #tpu.memory_space<vmem>>, vector<4x16x16xf32>,
    } else {
    }
    %c0 = arith.constant 0 : index
    %c0_1 = arith.constant 0 : index
    %c0_2 = arith.constant 0 : index
    %3 = vector.load %arg3[%c0, %c0_1, %c0_2] : memref<4x16x16xbf16, #tpu.memory_space<vmem>>, vector<4x16x16xbf16>
    %c0_3 = arith.constant 0 : index
    %c0_4 = arith.constant 0 : index
    %c0_5 = arith.constant 0 : index
    %4 = vector.load %arg4[%c0_3, %c0_4, %c0_5] : memref<4x16x16xbf16, #tpu.memory_space<vmem>>, vector<4x16x16xbf16>
    "tpu.trace_start"() <{level = 10 : i32, message = "hqd,hkd->hqk"}> : () -> ()
    %cst = arith.constant dense<0.000000e+00> : vector<4x16x16xf32>
    %5 = tpu.matmul %3, %4, %cst {dimension_numbers = #tpu.dot_dimension_numbers<[2], [2], [1], [1], [0, 0, 0, 1, 1, 1], [0], [0]>} : vector<4x16x16xbf16>, vector<4x16x16xbf16>, vector<4x16x16xf32> -> vector<4x16x16xf32>
    "tpu.trace_stop"() : () -> ()
    %cst_6 = arith.constant 2.500000e-01 : f32
    %6 = vector.broadcast %cst_6 : f32 to vector<4x16x16xf32>
    %7 = arith.mulf %5, %6 : vector<4x16x16xf32>
    %c0_7 = arith.constant 0 : index
    %c0_8 = arith.constant 0 : index
    %c0_9 = arith.constant 0 : index
    %8 = vector.load %arg6[%c0_7, %c0_8, %c0_9] : memref<1x1x16xf32, #tpu.memory_space<vmem>>, vector<1x1x16xf32>
    %9 = vector.broadcast %8 : vector<1x1x16xf32> to vector<4x16x16xf32>
    %10 = arith.addf %7, %9 : vector<4x16x16xf32>
    %c0_10 = arith.constant 0 : index
    %c0_11 = arith.constant 0 : index
    %c0_12 = arith.constant 0 : index
    %11 = vector.load %arg8[%c0_10, %c0_11, %c0_12] : memref<4x16x1xf32, #tpu.memory_space<vmem>>, vector<4x16x1xf32>
    %cst_13 = arith.constant dense<0xFF800000> : vector<4x16xf32>
    %12 = vector.multi_reduction <maximumf>, %10, %cst_13 [2] : vector<4x16x16xf32> to vector<4x16xf32>
    %13 = vector.shape_cast %12 : vector<4x16xf32> to vector<4x16x1xf32>
    %14 = arith.maximumf %11, %13 : vector<4x16x1xf32>
    %15 = arith.subf %11, %14 : vector<4x16x1xf32>
    %16 = math.exp %15 : vector<4x16x1xf32>
    %17 = vector.broadcast %14 : vector<4x16x1xf32> to vector<4x16x16xf32>
    %18 = arith.subf %10, %17 : vector<4x16x16xf32>
    %19 = math.exp %18 : vector<4x16x16xf32>
    %c0_14 = arith.constant 0 : index
    %c0_15 = arith.constant 0 : index
    %c0_16 = arith.constant 0 : index
    %20 = vector.load %arg9[%c0_14, %c0_15, %c0_16] : memref<4x16x1xf32, #tpu.memory_space<vmem>>, vector<4x16x1xf32>
    %21 = arith.mulf %16, %20 : vector<4x16x1xf32>
    %cst_17 = arith.constant dense<0.000000e+00> : vector<4x16xf32>
    %22 = vector.multi_reduction <add>, %19, %cst_17 [2] : vector<4x16x16xf32> to vector<4x16xf32>
    %23 = vector.shape_cast %22 : vector<4x16xf32> to vector<4x16x1xf32>
    %24 = arith.addf %21, %23 : vector<4x16x1xf32>
    %c0_18 = arith.constant 0 : index
    %c0_19 = arith.constant 0 : index
    %c0_20 = arith.constant 0 : index
    %25 = vector.load %arg9[%c0_18, %c0_19, %c0_20] : memref<4x16x1xf32, #tpu.memory_space<vmem>>, vector<4x16x1xf32>
    tpu.vector_store %arg9[%c0_18, %c0_19, %c0_20], %24 {strides = array<i32>} : memref<4x16x1xf32, #tpu.memory_space<vmem>>, vector<4x16x1xf32>,
    %c0_21 = arith.constant 0 : index
    %c0_22 = arith.constant 0 : index
    %c0_23 = arith.constant 0 : index
    %26 = vector.load %arg10[%c0_21, %c0_22, %c0_23] : memref<4x16x16xf32, #tpu.memory_space<vmem>>, vector<4x16x16xf32>
    %27 = vector.broadcast %16 : vector<4x16x1xf32> to vector<4x16x16xf32>
    %28 = arith.mulf %27, %26 : vector<4x16x16xf32>
    %29 = arith.truncf %19 : vector<4x16x16xf32> to vector<4x16x16xbf16>
    %c0_24 = arith.constant 0 : index
    %c0_25 = arith.constant 0 : index
    %c0_26 = arith.constant 0 : index
    %30 = vector.load %arg5[%c0_24, %c0_25, %c0_26] : memref<4x16x16xbf16, #tpu.memory_space<vmem>>, vector<4x16x16xbf16>
    "tpu.trace_start"() <{level = 10 : i32, message = "hqk,hkd->hqd"}> : () -> ()
    %cst_27 = arith.constant dense<0.000000e+00> : vector<4x16x16xf32>
    %31 = tpu.matmul %29, %30, %cst_27 {dimension_numbers = #tpu.dot_dimension_numbers<[2], [1], [1], [2], [0, 0, 0, 1, 1, 2], [0], [0]>} : vector<4x16x16xbf16>, vector<4x16x16xbf16>, vector<4x16x16xf32> -> vector<4x16x16xf32>
    "tpu.trace_stop"() : () -> ()
    %32 = arith.addf %28, %31 : vector<4x16x16xf32>
    %c0_28 = arith.constant 0 : index
    %c0_29 = arith.constant 0 : index
    %c0_30 = arith.constant 0 : index
    %33 = vector.load %arg10[%c0_28, %c0_29, %c0_30] : memref<4x16x16xf32, #tpu.memory_space<vmem>>, vector<4x16x16xf32>
    tpu.vector_store %arg10[%c0_28, %c0_29, %c0_30], %32 {strides = array<i32>} : memref<4x16x16xf32, #tpu.memory_space<vmem>>, vector<4x16x16xf32>,
    %c0_31 = arith.constant 0 : index
    %c0_32 = arith.constant 0 : index
    %c0_33 = arith.constant 0 : index
    %34 = vector.load %arg8[%c0_31, %c0_32, %c0_33] : memref<4x16x1xf32, #tpu.memory_space<vmem>>, vector<4x16x1xf32>
    tpu.vector_store %arg8[%c0_31, %c0_32, %c0_33], %14 {strides = array<i32>} : memref<4x16x1xf32, #tpu.memory_space<vmem>>, vector<4x16x1xf32>,
    %c0_i32_34 = arith.constant 0 : i32
    %35 = arith.cmpi eq, %arg2, %c0_i32_34 : i32
    %36 = arith.extui %35 : i1 to i32
    %c0_i32_35 = arith.constant 0 : i32
    %37 = arith.cmpi ne, %36, %c0_i32_35 : i32
    scf.if %37 {
      %c0_36 = arith.constant 0 : index
      %c0_37 = arith.constant 0 : index
      %c0_38 = arith.constant 0 : index
      %38 = vector.load %arg10[%c0_36, %c0_37, %c0_38] : memref<4x16x16xf32, #tpu.memory_space<vmem>>, vector<4x16x16xf32>
      %c0_39 = arith.constant 0 : index
      %c0_40 = arith.constant 0 : index
      %c0_41 = arith.constant 0 : index
      %39 = vector.load %arg9[%c0_39, %c0_40, %c0_41] : memref<4x16x1xf32, #tpu.memory_space<vmem>>, vector<4x16x1xf32>
      %40 = tpu.reciprocal %39 {approx = true} : vector<4x16x1xf32> -> vector<4x16x1xf32>
      %41 = vector.broadcast %40 : vector<4x16x1xf32> to vector<4x16x16xf32>
      %42 = arith.mulf %38, %41 : vector<4x16x16xf32>
      %43 = arith.truncf %42 : vector<4x16x16xf32> to vector<4x16x16xbf16>
      %c0_42 = arith.constant 0 : index
      %c0_43 = arith.constant 0 : index
      %c0_44 = arith.constant 0 : index
      %44 = vector.load %arg7[%c0_42, %c0_43, %c0_44] : memref<4x16x16xbf16, #tpu.memory_space<vmem>>, vector<4x16x16xbf16>
      tpu.vector_store %arg7[%c0_42, %c0_43, %c0_44], %43 {strides = array<i32>} : memref<4x16x16xbf16, #tpu.memory_space<vmem>>, vector<4x16x16xbf16>,
    } else {
    }
    return
  }
  func.func @transform_0(%arg0: i32, %arg1: i32, %arg2: i32) -> (i32, i32, i32) {
    %c0_i32 = arith.constant 0 : i32
    %c0_i32_0 = arith.constant 0 : i32
    return %arg0, %arg1, %c0_i32 : i32, i32, i32
  }
  func.func @transform_1(%arg0: i32, %arg1: i32, %arg2: i32) -> (i32, i32, i32) {
    %c0_i32 = arith.constant 0 : i32
    %c0_i32_0 = arith.constant 0 : i32
    return %arg0, %arg2, %c0_i32 : i32, i32, i32
  }
  func.func @transform_2(%arg0: i32, %arg1: i32, %arg2: i32) -> (i32, i32, i32) {
    %c0_i32 = arith.constant 0 : i32
    %c0_i32_0 = arith.constant 0 : i32
    return %arg0, %arg2, %c0_i32 : i32, i32, i32
  }
  func.func @transform_3(%arg0: i32, %arg1: i32, %arg2: i32) -> (i32, i32, i32) {
    %c0_i32 = arith.constant 0 : i32
    %c0_i32_0 = arith.constant 0 : i32
    return %arg0, %c0_i32, %arg2 : i32, i32, i32
  }
  func.func @transform_4(%arg0: i32, %arg1: i32, %arg2: i32) -> (i32, i32, i32) {
    %c0_i32 = arith.constant 0 : i32
    %c0_i32_0 = arith.constant 0 : i32
    return %arg0, %arg1, %c0_i32 : i32, i32, i32
  }
}

module attributes {stable_mosaic.version = 11 : i64} {
  func.func @kernel(%arg0: i32, %arg1: i32, %arg2: i32, %arg3: memref<32x128xbf16, #tpu.memory_space<vmem>>, %arg4: memref<128x128xbf16, #tpu.memory_space<vmem>>, %arg5: memref<1x128xf32, #tpu.memory_space<vmem>>, %arg6: memref<32x128xbf16, #tpu.memory_space<vmem>>, %arg7: memref<32x128xf32, #tpu.memory_space<vmem>>) attributes {dimension_semantics = [#tpu.dimension_semantics<parallel>, #tpu.dimension_semantics<parallel>, #tpu.dimension_semantics<arbitrary>], iteration_bounds = array<i64: 1, 1, 1>, scalar_prefetch = 0 : i64, scratch_operands = 1 : i64, tpu.core_type = #tpu.core_type<tc>, window_params = [{transform_indices = @transform_0, window_bounds = array<i64: 32, 128>}, {transform_indices = @transform_1, window_bounds = array<i64: 128, 128>}, {transform_indices = @transform_2, window_bounds = array<i64: 1, 128>}, {transform_indices = @transform_3, window_bounds = array<i64: 32, 128>}]} {
    %c0_i32 = arith.constant 0 : i32
    %0 = arith.cmpi eq, %arg2, %c0_i32 : i32
    %1 = arith.extui %0 : i1 to i32
    %c0_i32_0 = arith.constant 0 : i32
    %2 = arith.cmpi ne, %1, %c0_i32_0 : i32
    scf.if %2 {
      %cst_10 = arith.constant 0.000000e+00 : f32
      %12 = vector.broadcast %cst_10 : f32 to vector<32x128xf32>
      %c0_11 = arith.constant 0 : index
      %c0_12 = arith.constant 0 : index
      %13 = vector.load %arg7[%c0_11, %c0_12] : memref<32x128xf32, #tpu.memory_space<vmem>>, vector<32x128xf32>
      tpu.vector_store %arg7[%c0_11, %c0_12], %12 {strides = array<i32>} : memref<32x128xf32, #tpu.memory_space<vmem>>, vector<32x128xf32>,
    } else {
    }
    %c0 = arith.constant 0 : index
    %c0_1 = arith.constant 0 : index
    %3 = vector.load %arg7[%c0, %c0_1] : memref<32x128xf32, #tpu.memory_space<vmem>>, vector<32x128xf32>
    %c0_2 = arith.constant 0 : index
    %c0_3 = arith.constant 0 : index
    %4 = vector.load %arg3[%c0_2, %c0_3] : memref<32x128xbf16, #tpu.memory_space<vmem>>, vector<32x128xbf16>
    %c0_4 = arith.constant 0 : index
    %c0_5 = arith.constant 0 : index
    %5 = vector.load %arg4[%c0_4, %c0_5] : memref<128x128xbf16, #tpu.memory_space<vmem>>, vector<128x128xbf16>
    %cst = arith.constant dense<0.000000e+00> : vector<32x128xf32>
    %6 = tpu.matmul %4, %5, %cst {dimension_numbers = #tpu.dot_dimension_numbers<[1], [0], [0], [1], [0, 0, 1, 1], [], []>} : vector<32x128xbf16>, vector<128x128xbf16>, vector<32x128xf32> -> vector<32x128xf32>
    %7 = arith.addf %3, %6 : vector<32x128xf32>
    %c0_6 = arith.constant 0 : index
    %c0_7 = arith.constant 0 : index
    %8 = vector.load %arg7[%c0_6, %c0_7] : memref<32x128xf32, #tpu.memory_space<vmem>>, vector<32x128xf32>
    tpu.vector_store %arg7[%c0_6, %c0_7], %7 {strides = array<i32>} : memref<32x128xf32, #tpu.memory_space<vmem>>, vector<32x128xf32>,
    %c0_i32_8 = arith.constant 0 : i32
    %9 = arith.cmpi eq, %arg2, %c0_i32_8 : i32
    %10 = arith.extui %9 : i1 to i32
    %c0_i32_9 = arith.constant 0 : i32
    %11 = arith.cmpi ne, %10, %c0_i32_9 : i32
    scf.if %11 {
      %c0_10 = arith.constant 0 : index
      %c0_11 = arith.constant 0 : index
      %12 = vector.load %arg7[%c0_10, %c0_11] : memref<32x128xf32, #tpu.memory_space<vmem>>, vector<32x128xf32>
      %c0_12 = arith.constant 0 : index
      %c0_13 = arith.constant 0 : index
      %13 = vector.load %arg5[%c0_12, %c0_13] : memref<1x128xf32, #tpu.memory_space<vmem>>, vector<1x128xf32>
      %14 = vector.broadcast %13 : vector<1x128xf32> to vector<32x128xf32>
      %15 = arith.addf %12, %14 : vector<32x128xf32>
      %16 = arith.mulf %15, %15 : vector<32x128xf32>
      %17 = arith.mulf %15, %16 : vector<32x128xf32>
      %cst_14 = arith.constant 4.471500e-02 : f32
      %18 = vector.broadcast %cst_14 : f32 to vector<32x128xf32>
      %19 = arith.mulf %18, %17 : vector<32x128xf32>
      %20 = arith.addf %15, %19 : vector<32x128xf32>
      %cst_15 = arith.constant 0.797884583 : f32
      %21 = vector.broadcast %cst_15 : f32 to vector<32x128xf32>
      %22 = arith.mulf %21, %20 : vector<32x128xf32>
      %23 = math.tanh %22 : vector<32x128xf32>
      %cst_16 = arith.constant 1.000000e+00 : f32
      %24 = vector.broadcast %cst_16 : f32 to vector<32x128xf32>
      %25 = arith.addf %24, %23 : vector<32x128xf32>
      %cst_17 = arith.constant 5.000000e-01 : f32
      %26 = vector.broadcast %cst_17 : f32 to vector<32x128xf32>
      %27 = arith.mulf %26, %25 : vector<32x128xf32>
      %28 = arith.mulf %15, %27 : vector<32x128xf32>
      %29 = arith.truncf %28 : vector<32x128xf32> to vector<32x128xbf16>
      %c0_18 = arith.constant 0 : index
      %c0_19 = arith.constant 0 : index
      %30 = vector.load %arg6[%c0_18, %c0_19] : memref<32x128xbf16, #tpu.memory_space<vmem>>, vector<32x128xbf16>
      tpu.vector_store %arg6[%c0_18, %c0_19], %29 {strides = array<i32>} : memref<32x128xbf16, #tpu.memory_space<vmem>>, vector<32x128xbf16>,
    } else {
    }
    return
  }
  func.func @transform_0(%arg0: i32, %arg1: i32, %arg2: i32) -> (i32, i32) {
    %c0_i32 = arith.constant 0 : i32
    return %arg0, %arg2 : i32, i32
  }
  func.func @transform_1(%arg0: i32, %arg1: i32, %arg2: i32) -> (i32, i32) {
    %c0_i32 = arith.constant 0 : i32
    return %arg2, %arg1 : i32, i32
  }
  func.func @transform_2(%arg0: i32, %arg1: i32, %arg2: i32) -> (i32, i32) {
    %c0_i32 = arith.constant 0 : i32
    %c0_i32_0 = arith.constant 0 : i32
    return %c0_i32, %arg1 : i32, i32
  }
  func.func @transform_3(%arg0: i32, %arg1: i32, %arg2: i32) -> (i32, i32) {
    %c0_i32 = arith.constant 0 : i32
    return %arg0, %arg1 : i32, i32
  }
}

module attributes {stable_mosaic.version = 11 : i64} {
  func.func @kernel(%arg0: i32, %arg1: i32, %arg2: i32, %arg3: memref<32x128xbf16, #tpu.memory_space<vmem>>, %arg4: memref<128x128xbf16, #tpu.memory_space<vmem>>, %arg5: memref<1x128xf32, #tpu.memory_space<vmem>>, %arg6: memref<32x128xbf16, #tpu.memory_space<vmem>>, %arg7: memref<32x128xf32, #tpu.memory_space<vmem>>) attributes {dimension_semantics = [#tpu.dimension_semantics<parallel>, #tpu.dimension_semantics<parallel>, #tpu.dimension_semantics<arbitrary>], iteration_bounds = array<i64: 1, 1, 1>, scalar_prefetch = 0 : i64, scratch_operands = 1 : i64, tpu.core_type = #tpu.core_type<tc>, window_params = [{transform_indices = @transform_0, window_bounds = array<i64: 32, 128>}, {transform_indices = @transform_1, window_bounds = array<i64: 128, 128>}, {transform_indices = @transform_2, window_bounds = array<i64: 1, 128>}, {transform_indices = @transform_3, window_bounds = array<i64: 32, 128>}]} {
    %c0_i32 = arith.constant 0 : i32
    %0 = arith.cmpi eq, %arg2, %c0_i32 : i32
    %1 = arith.extui %0 : i1 to i32
    %c0_i32_0 = arith.constant 0 : i32
    %2 = arith.cmpi ne, %1, %c0_i32_0 : i32
    scf.if %2 {
      %cst_10 = arith.constant 0.000000e+00 : f32
      %12 = vector.broadcast %cst_10 : f32 to vector<32x128xf32>
      %c0_11 = arith.constant 0 : index
      %c0_12 = arith.constant 0 : index
      %13 = vector.load %arg7[%c0_11, %c0_12] : memref<32x128xf32, #tpu.memory_space<vmem>>, vector<32x128xf32>
      tpu.vector_store %arg7[%c0_11, %c0_12], %12 {strides = array<i32>} : memref<32x128xf32, #tpu.memory_space<vmem>>, vector<32x128xf32>,
    } else {
    }
    %c0 = arith.constant 0 : index
    %c0_1 = arith.constant 0 : index
    %3 = vector.load %arg7[%c0, %c0_1] : memref<32x128xf32, #tpu.memory_space<vmem>>, vector<32x128xf32>
    %c0_2 = arith.constant 0 : index
    %c0_3 = arith.constant 0 : index
    %4 = vector.load %arg3[%c0_2, %c0_3] : memref<32x128xbf16, #tpu.memory_space<vmem>>, vector<32x128xbf16>
    %c0_4 = arith.constant 0 : index
    %c0_5 = arith.constant 0 : index
    %5 = vector.load %arg4[%c0_4, %c0_5] : memref<128x128xbf16, #tpu.memory_space<vmem>>, vector<128x128xbf16>
    %cst = arith.constant dense<0.000000e+00> : vector<32x128xf32>
    %6 = tpu.matmul %4, %5, %cst {dimension_numbers = #tpu.dot_dimension_numbers<[1], [0], [0], [1], [0, 0, 1, 1], [], []>} : vector<32x128xbf16>, vector<128x128xbf16>, vector<32x128xf32> -> vector<32x128xf32>
    %7 = arith.addf %3, %6 : vector<32x128xf32>
    %c0_6 = arith.constant 0 : index
    %c0_7 = arith.constant 0 : index
    %8 = vector.load %arg7[%c0_6, %c0_7] : memref<32x128xf32, #tpu.memory_space<vmem>>, vector<32x128xf32>
    tpu.vector_store %arg7[%c0_6, %c0_7], %7 {strides = array<i32>} : memref<32x128xf32, #tpu.memory_space<vmem>>, vector<32x128xf32>,
    %c0_i32_8 = arith.constant 0 : i32
    %9 = arith.cmpi eq, %arg2, %c0_i32_8 : i32
    %10 = arith.extui %9 : i1 to i32
    %c0_i32_9 = arith.constant 0 : i32
    %11 = arith.cmpi ne, %10, %c0_i32_9 : i32
    scf.if %11 {
      %c0_10 = arith.constant 0 : index
      %c0_11 = arith.constant 0 : index
      %12 = vector.load %arg7[%c0_10, %c0_11] : memref<32x128xf32, #tpu.memory_space<vmem>>, vector<32x128xf32>
      %c0_12 = arith.constant 0 : index
      %c0_13 = arith.constant 0 : index
      %13 = vector.load %arg5[%c0_12, %c0_13] : memref<1x128xf32, #tpu.memory_space<vmem>>, vector<1x128xf32>
      %14 = vector.broadcast %13 : vector<1x128xf32> to vector<32x128xf32>
      %15 = arith.addf %12, %14 : vector<32x128xf32>
      %16 = arith.truncf %15 : vector<32x128xf32> to vector<32x128xbf16>
      %c0_14 = arith.constant 0 : index
      %c0_15 = arith.constant 0 : index
      %17 = vector.load %arg6[%c0_14, %c0_15] : memref<32x128xbf16, #tpu.memory_space<vmem>>, vector<32x128xbf16>
      tpu.vector_store %arg6[%c0_14, %c0_15], %16 {strides = array<i32>} : memref<32x128xbf16, #tpu.memory_space<vmem>>, vector<32x128xbf16>,
    } else {
    }
    return
  }
  func.func @transform_0(%arg0: i32, %arg1: i32, %arg2: i32) -> (i32, i32) {
    %c0_i32 = arith.constant 0 : i32
    return %arg0, %arg2 : i32, i32
  }
  func.func @transform_1(%arg0: i32, %arg1: i32, %arg2: i32) -> (i32, i32) {
    %c0_i32 = arith.constant 0 : i32
    return %arg2, %arg1 : i32, i32
  }
  func.func @transform_2(%arg0: i32, %arg1: i32, %arg2: i32) -> (i32, i32) {
    %c0_i32 = arith.constant 0 : i32
    %c0_i32_0 = arith.constant 0 : i32
    return %c0_i32, %arg1 : i32, i32
  }
  func.func @transform_3(%arg0: i32, %arg1: i32, %arg2: i32) -> (i32, i32) {
    %c0_i32 = arith.constant 0 : i32
    return %arg0, %arg1 : i32, i32
  }
}

module attributes {stable_mosaic.version = 11 : i64} {
  func.func @kernel(%arg0: i32, %arg1: i32, %arg2: i32, %arg3: memref<16x128xbf16, #tpu.memory_space<vmem>>, %arg4: memref<128x256xbf16, #tpu.memory_space<vmem>>, %arg5: memref<1x256xf32, #tpu.memory_space<vmem>>, %arg6: memref<16x256xbf16, #tpu.memory_space<vmem>>, %arg7: memref<16x256xf32, #tpu.memory_space<vmem>>) attributes {dimension_semantics = [#tpu.dimension_semantics<parallel>, #tpu.dimension_semantics<parallel>, #tpu.dimension_semantics<arbitrary>], iteration_bounds = array<i64: 1, 1, 1>, scalar_prefetch = 0 : i64, scratch_operands = 1 : i64, tpu.core_type = #tpu.core_type<tc>, window_params = [{transform_indices = @transform_0, window_bounds = array<i64: 16, 128>}, {transform_indices = @transform_1, window_bounds = array<i64: 128, 256>}, {transform_indices = @transform_2, window_bounds = array<i64: 1, 256>}, {transform_indices = @transform_3, window_bounds = array<i64: 16, 256>}]} {
    %c0_i32 = arith.constant 0 : i32
    %0 = arith.cmpi eq, %arg2, %c0_i32 : i32
    %1 = arith.extui %0 : i1 to i32
    %c0_i32_0 = arith.constant 0 : i32
    %2 = arith.cmpi ne, %1, %c0_i32_0 : i32
    scf.if %2 {
      %cst_10 = arith.constant 0.000000e+00 : f32
      %12 = vector.broadcast %cst_10 : f32 to vector<16x256xf32>
      %c0_11 = arith.constant 0 : index
      %c0_12 = arith.constant 0 : index
      %13 = vector.load %arg7[%c0_11, %c0_12] : memref<16x256xf32, #tpu.memory_space<vmem>>, vector<16x256xf32>
      tpu.vector_store %arg7[%c0_11, %c0_12], %12 {strides = array<i32>} : memref<16x256xf32, #tpu.memory_space<vmem>>, vector<16x256xf32>,
    } else {
    }
    %c0 = arith.constant 0 : index
    %c0_1 = arith.constant 0 : index
    %3 = vector.load %arg7[%c0, %c0_1] : memref<16x256xf32, #tpu.memory_space<vmem>>, vector<16x256xf32>
    %c0_2 = arith.constant 0 : index
    %c0_3 = arith.constant 0 : index
    %4 = vector.load %arg3[%c0_2, %c0_3] : memref<16x128xbf16, #tpu.memory_space<vmem>>, vector<16x128xbf16>
    %c0_4 = arith.constant 0 : index
    %c0_5 = arith.constant 0 : index
    %5 = vector.load %arg4[%c0_4, %c0_5] : memref<128x256xbf16, #tpu.memory_space<vmem>>, vector<128x256xbf16>
    %cst = arith.constant dense<0.000000e+00> : vector<16x256xf32>
    %6 = tpu.matmul %4, %5, %cst {dimension_numbers = #tpu.dot_dimension_numbers<[1], [0], [0], [1], [0, 0, 1, 1], [], []>} : vector<16x128xbf16>, vector<128x256xbf16>, vector<16x256xf32> -> vector<16x256xf32>
    %7 = arith.addf %3, %6 : vector<16x256xf32>
    %c0_6 = arith.constant 0 : index
    %c0_7 = arith.constant 0 : index
    %8 = vector.load %arg7[%c0_6, %c0_7] : memref<16x256xf32, #tpu.memory_space<vmem>>, vector<16x256xf32>
    tpu.vector_store %arg7[%c0_6, %c0_7], %7 {strides = array<i32>} : memref<16x256xf32, #tpu.memory_space<vmem>>, vector<16x256xf32>,
    %c0_i32_8 = arith.constant 0 : i32
    %9 = arith.cmpi eq, %arg2, %c0_i32_8 : i32
    %10 = arith.extui %9 : i1 to i32
    %c0_i32_9 = arith.constant 0 : i32
    %11 = arith.cmpi ne, %10, %c0_i32_9 : i32
    scf.if %11 {
      %c0_10 = arith.constant 0 : index
      %c0_11 = arith.constant 0 : index
      %12 = vector.load %arg7[%c0_10, %c0_11] : memref<16x256xf32, #tpu.memory_space<vmem>>, vector<16x256xf32>
      %c0_12 = arith.constant 0 : index
      %c0_13 = arith.constant 0 : index
      %13 = vector.load %arg5[%c0_12, %c0_13] : memref<1x256xf32, #tpu.memory_space<vmem>>, vector<1x256xf32>
      %14 = vector.broadcast %13 : vector<1x256xf32> to vector<16x256xf32>
      %15 = arith.addf %12, %14 : vector<16x256xf32>
      %16 = arith.truncf %15 : vector<16x256xf32> to vector<16x256xbf16>
      %c0_14 = arith.constant 0 : index
      %c0_15 = arith.constant 0 : index
      %17 = vector.load %arg6[%c0_14, %c0_15] : memref<16x256xbf16, #tpu.memory_space<vmem>>, vector<16x256xbf16>
      tpu.vector_store %arg6[%c0_14, %c0_15], %16 {strides = array<i32>} : memref<16x256xbf16, #tpu.memory_space<vmem>>, vector<16x256xbf16>,
    } else {
    }
    return
  }
  func.func @transform_0(%arg0: i32, %arg1: i32, %arg2: i32) -> (i32, i32) {
    %c0_i32 = arith.constant 0 : i32
    return %arg0, %arg2 : i32, i32
  }
  func.func @transform_1(%arg0: i32, %arg1: i32, %arg2: i32) -> (i32, i32) {
    %c0_i32 = arith.constant 0 : i32
    return %arg2, %arg1 : i32, i32
  }
  func.func @transform_2(%arg0: i32, %arg1: i32, %arg2: i32) -> (i32, i32) {
    %c0_i32 = arith.constant 0 : i32
    %c0_i32_0 = arith.constant 0 : i32
    return %c0_i32, %arg1 : i32, i32
  }
  func.func @transform_3(%arg0: i32, %arg1: i32, %arg2: i32) -> (i32, i32) {
    %c0_i32 = arith.constant 0 : i32
    return %arg0, %arg1 : i32, i32
  }
}

module attributes {stable_mosaic.version = 11 : i64} {
  func.func @kernel(%arg0: i32, %arg1: memref<16x128xf32, #tpu.memory_space<vmem>>, %arg2: memref<1x128xf32, #tpu.memory_space<vmem>>, %arg3: memref<1x128xf32, #tpu.memory_space<vmem>>, %arg4: memref<16x128xbf16, #tpu.memory_space<vmem>>) attributes {dimension_semantics = [#tpu.dimension_semantics<parallel>], iteration_bounds = array<i64: 1>, scalar_prefetch = 0 : i64, scratch_operands = 0 : i64, tpu.core_type = #tpu.core_type<tc>, window_params = [{transform_indices = @transform_0, window_bounds = array<i64: 16, 128>}, {pipeline_mode = #tpu.pipeline_mode<synchronous>, transform_indices = @transform_1, window_bounds = array<i64: 1, 128>}, {pipeline_mode = #tpu.pipeline_mode<synchronous>, transform_indices = @transform_2, window_bounds = array<i64: 1, 128>}, {transform_indices = @transform_3, window_bounds = array<i64: 16, 128>}]} {
    %c0 = arith.constant 0 : index
    %c0_0 = arith.constant 0 : index
    %0 = vector.load %arg1[%c0, %c0_0] : memref<16x128xf32, #tpu.memory_space<vmem>>, vector<16x128xf32>
    %cst = arith.constant dense<0.000000e+00> : vector<16xf32>
    %1 = vector.multi_reduction <add>, %0, %cst [1] : vector<16x128xf32> to vector<16xf32>
    %2 = vector.shape_cast %1 : vector<16xf32> to vector<16x1xf32>
    %cst_1 = arith.constant 1.562500e-02 : f32
    %3 = vector.broadcast %cst_1 : f32 to vector<16x1xf32>
    %4 = arith.mulf %2, %3 : vector<16x1xf32>
    %5 = arith.mulf %0, %0 : vector<16x128xf32>
    %cst_2 = arith.constant dense<0.000000e+00> : vector<16xf32>
    %6 = vector.multi_reduction <add>, %5, %cst_2 [1] : vector<16x128xf32> to vector<16xf32>
    %7 = vector.shape_cast %6 : vector<16xf32> to vector<16x1xf32>
    %cst_3 = arith.constant 1.562500e-02 : f32
    %8 = vector.broadcast %cst_3 : f32 to vector<16x1xf32>
    %9 = arith.mulf %7, %8 : vector<16x1xf32>
    %10 = arith.mulf %4, %4 : vector<16x1xf32>
    %11 = arith.subf %9, %10 : vector<16x1xf32>
    %cst_4 = arith.constant 0.000000e+00 : f32
    %12 = vector.broadcast %cst_4 : f32 to vector<16x1xf32>
    %13 = arith.maximumf %11, %12 : vector<16x1xf32>
    %14 = vector.broadcast %4 : vector<16x1xf32> to vector<16x128xf32>
    %15 = arith.subf %0, %14 : vector<16x128xf32>
    %cst_5 = arith.constant 9.99999996E-13 : f32
    %16 = vector.broadcast %cst_5 : f32 to vector<16x1xf32>
    %17 = arith.addf %13, %16 : vector<16x1xf32>
    %18 = math.rsqrt %17 : vector<16x1xf32>
    %19 = vector.broadcast %18 : vector<16x1xf32> to vector<16x128xf32>
    %20 = arith.mulf %15, %19 : vector<16x128xf32>
    %c0_6 = arith.constant 0 : index
    %c0_7 = arith.constant 0 : index
    %21 = vector.load %arg2[%c0_6, %c0_7] : memref<1x128xf32, #tpu.memory_space<vmem>>, vector<1x128xf32>
    %22 = vector.broadcast %21 : vector<1x128xf32> to vector<16x128xf32>
    %23 = arith.mulf %20, %22 : vector<16x128xf32>
    %c0_8 = arith.constant 0 : index
    %c0_9 = arith.constant 0 : index
    %24 = vector.load %arg3[%c0_8, %c0_9] : memref<1x128xf32, #tpu.memory_space<vmem>>, vector<1x128xf32>
    %25 = vector.broadcast %24 : vector<1x128xf32> to vector<16x128xf32>
    %26 = arith.addf %23, %25 : vector<16x128xf32>
    %27 = arith.truncf %26 : vector<16x128xf32> to vector<16x128xbf16>
    %c0_10 = arith.constant 0 : index
    %c0_11 = arith.constant 0 : index
    %28 = vector.load %arg4[%c0_10, %c0_11] : memref<16x128xbf16, #tpu.memory_space<vmem>>, vector<16x128xbf16>
    tpu.vector_store %arg4[%c0_10, %c0_11], %27 {strides = array<i32>} : memref<16x128xbf16, #tpu.memory_space<vmem>>, vector<16x128xbf16>,
    return
  }
  func.func @transform_0(%arg0: i32) -> (i32, i32) {
    %c0_i32 = arith.constant 0 : i32
    %c0_i32_0 = arith.constant 0 : i32
    return %arg0, %c0_i32 : i32, i32
  }
  func.func @transform_1(%arg0: i32) -> (i32, i32) {
    %c0_i32 = arith.constant 0 : i32
    %c0_i32_0 = arith.constant 0 : i32
    %c0_i32_1 = arith.constant 0 : i32
    return %c0_i32, %c0_i32_0 : i32, i32
  }
  func.func @transform_2(%arg0: i32) -> (i32, i32) {
    %c0_i32 = arith.constant 0 : i32
    %c0_i32_0 = arith.constant 0 : i32
    %c0_i32_1 = arith.constant 0 : i32
    return %c0_i32, %c0_i32_0 : i32, i32
  }
  func.func @transform_3(%arg0: i32) -> (i32, i32) {
    %c0_i32 = arith.constant 0 : i32
    %c0_i32_0 = arith.constant 0 : i32
    return %arg0, %c0_i32 : i32, i32
  }
}

module attributes {stable_mosaic.version = 11 : i64} {
  func.func @kernel(%arg0: i32, %arg1: i32, %arg2: i32, %arg3: memref<4x8x16xbf16, #tpu.memory_space<vmem>>, %arg4: memref<4x8x16xbf16, #tpu.memory_space<vmem>>, %arg5: memref<4x8x16xbf16, #tpu.memory_space<vmem>>, %arg6: memref<4x8x16xbf16, #tpu.memory_space<vmem>>, %arg7: memref<4x8x1xf32, #tpu.memory_space<vmem>>, %arg8: memref<4x8x1xf32, #tpu.memory_space<vmem>>, %arg9: memref<4x8x16xf32, #tpu.memory_space<vmem>>) attributes {dimension_semantics = [#tpu.dimension_semantics<parallel>, #tpu.dimension_semantics<parallel>, #tpu.dimension_semantics<arbitrary>], iteration_bounds = array<i64: 2, 1, 1>, scalar_prefetch = 0 : i64, scratch_operands = 3 : i64, tpu.core_type = #tpu.core_type<tc>, window_params = [{transform_indices = @transform_0, window_bounds = array<i64: 4, 8, 16>}, {transform_indices = @transform_1, window_bounds = array<i64: 4, 8, 16>}, {transform_indices = @transform_2, window_bounds = array<i64: 4, 8, 16>}, {transform_indices = @transform_3, window_bounds = array<i64: 4, 8, 16>}]} {
    %c0_i32 = arith.constant 0 : i32
    %0 = arith.cmpi eq, %arg2, %c0_i32 : i32
    %1 = arith.extui %0 : i1 to i32
    %c0_i32_0 = arith.constant 0 : i32
    %2 = arith.cmpi ne, %1, %c0_i32_0 : i32
    scf.if %2 {
      %cst_35 = arith.constant -1.000000e+30 : f32
      %47 = vector.broadcast %cst_35 : f32 to vector<4x8x1xf32>
      %c0_36 = arith.constant 0 : index
      %c0_37 = arith.constant 0 : index
      %c0_38 = arith.constant 0 : index
      %48 = vector.load %arg7[%c0_36, %c0_37, %c0_38] : memref<4x8x1xf32, #tpu.memory_space<vmem>>, vector<4x8x1xf32>
      tpu.vector_store %arg7[%c0_36, %c0_37, %c0_38], %47 {strides = array<i32>} : memref<4x8x1xf32, #tpu.memory_space<vmem>>, vector<4x8x1xf32>,
      %cst_39 = arith.constant 0.000000e+00 : f32
      %49 = vector.broadcast %cst_39 : f32 to vector<4x8x1xf32>
      %c0_40 = arith.constant 0 : index
      %c0_41 = arith.constant 0 : index
      %c0_42 = arith.constant 0 : index
      %50 = vector.load %arg8[%c0_40, %c0_41, %c0_42] : memref<4x8x1xf32, #tpu.memory_space<vmem>>, vector<4x8x1xf32>
      tpu.vector_store %arg8[%c0_40, %c0_41, %c0_42], %49 {strides = array<i32>} : memref<4x8x1xf32, #tpu.memory_space<vmem>>, vector<4x8x1xf32>,
      %cst_43 = arith.constant 0.000000e+00 : f32
      %51 = vector.broadcast %cst_43 : f32 to vector<4x8x16xf32>
      %c0_44 = arith.constant 0 : index
      %c0_45 = arith.constant 0 : index
      %c0_46 = arith.constant 0 : index
      %52 = vector.load %arg9[%c0_44, %c0_45, %c0_46] : memref<4x8x16xf32, #tpu.memory_space<vmem>>, vector<4x8x16xf32>
      tpu.vector_store %arg9[%c0_44, %c0_45, %c0_46], %51 {strides = array<i32>} : memref<4x8x16xf32, #tpu.memory_space<vmem>>, vector<4x8x16xf32>,
    } else {
    }
    %c0 = arith.constant 0 : index
    %c0_1 = arith.constant 0 : index
    %c0_2 = arith.constant 0 : index
    %3 = vector.load %arg3[%c0, %c0_1, %c0_2] : memref<4x8x16xbf16, #tpu.memory_space<vmem>>, vector<4x8x16xbf16>
    %c0_3 = arith.constant 0 : index
    %c0_4 = arith.constant 0 : index
    %c0_5 = arith.constant 0 : index
    %4 = vector.load %arg4[%c0_3, %c0_4, %c0_5] : memref<4x8x16xbf16, #tpu.memory_space<vmem>>, vector<4x8x16xbf16>
    "tpu.trace_start"() <{level = 10 : i32, message = "hqd,hkd->hqk"}> : () -> ()
    %cst = arith.constant dense<0.000000e+00> : vector<4x8x8xf32>
    %5 = tpu.matmul %3, %4, %cst {dimension_numbers = #tpu.dot_dimension_numbers<[2], [2], [1], [1], [0, 0, 0, 1, 1, 1], [0], [0]>} : vector<4x8x16xbf16>, vector<4x8x16xbf16>, vector<4x8x8xf32> -> vector<4x8x8xf32>
    "tpu.trace_stop"() : () -> ()
    %cst_6 = arith.constant 2.500000e-01 : f32
    %6 = vector.broadcast %cst_6 : f32 to vector<4x8x8xf32>
    %7 = arith.mulf %5, %6 : vector<4x8x8xf32>
    %8 = tpu.iota {dimensions = array<i32: 1>} : vector<4x8x8xi32>
    %c8_i32 = arith.constant 8 : i32
    %9 = arith.muli %arg1, %c8_i32 : i32
    %10 = vector.broadcast %9 : i32 to vector<4x8x8xi32>
    %11 = arith.addi %8, %10 : vector<4x8x8xi32>
    %12 = tpu.iota {dimensions = array<i32: 2>} : vector<4x8x8xi32>
    %c8_i32_7 = arith.constant 8 : i32
    %13 = arith.muli %arg2, %c8_i32_7 : i32
    %14 = vector.broadcast %13 : i32 to vector<4x8x8xi32>
    %15 = arith.addi %12, %14 : vector<4x8x8xi32>
    %16 = arith.cmpi sle, %15, %11 : vector<4x8x8xi32>
    %cst_8 = arith.constant 1.000000e+04 : f32
    %17 = vector.broadcast %cst_8 : f32 to vector<4x8x8xf32>
    %18 = arith.subf %7, %17 : vector<4x8x8xf32>
    %19 = arith.select %16, %7, %18 : vector<4x8x8xi1>, vector<4x8x8xf32>
    %c0_9 = arith.constant 0 : index
    %c0_10 = arith.constant 0 : index
    %c0_11 = arith.constant 0 : index
    %20 = vector.load %arg7[%c0_9, %c0_10, %c0_11] : memref<4x8x1xf32, #tpu.memory_space<vmem>>, vector<4x8x1xf32>
    %cst_12 = arith.constant dense<0xFF800000> : vector<4x8xf32>
    %21 = vector.multi_reduction <maximumf>, %19, %cst_12 [2] : vector<4x8x8xf32> to vector<4x8xf32>
    %22 = vector.shape_cast %21 : vector<4x8xf32> to vector<4x8x1xf32>
    %23 = arith.maximumf %20, %22 : vector<4x8x1xf32>
    %24 = arith.subf %20, %23 : vector<4x8x1xf32>
    %25 = math.exp %24 : vector<4x8x1xf32>
    %26 = vector.broadcast %23 : vector<4x8x1xf32> to vector<4x8x8xf32>
    %27 = arith.subf %19, %26 : vector<4x8x8xf32>
    %28 = math.exp %27 : vector<4x8x8xf32>
    %c0_13 = arith.constant 0 : index
    %c0_14 = arith.constant 0 : index
    %c0_15 = arith.constant 0 : index
    %29 = vector.load %arg8[%c0_13, %c0_14, %c0_15] : memref<4x8x1xf32, #tpu.memory_space<vmem>>, vector<4x8x1xf32>
    %30 = arith.mulf %25, %29 : vector<4x8x1xf32>
    %cst_16 = arith.constant dense<0.000000e+00> : vector<4x8xf32>
    %31 = vector.multi_reduction <add>, %28, %cst_16 [2] : vector<4x8x8xf32> to vector<4x8xf32>
    %32 = vector.shape_cast %31 : vector<4x8xf32> to vector<4x8x1xf32>
    %33 = arith.addf %30, %32 : vector<4x8x1xf32>
    %c0_17 = arith.constant 0 : index
    %c0_18 = arith.constant 0 : index
    %c0_19 = arith.constant 0 : index
    %34 = vector.load %arg8[%c0_17, %c0_18, %c0_19] : memref<4x8x1xf32, #tpu.memory_space<vmem>>, vector<4x8x1xf32>
    tpu.vector_store %arg8[%c0_17, %c0_18, %c0_19], %33 {strides = array<i32>} : memref<4x8x1xf32, #tpu.memory_space<vmem>>, vector<4x8x1xf32>,
    %c0_20 = arith.constant 0 : index
    %c0_21 = arith.constant 0 : index
    %c0_22 = arith.constant 0 : index
    %35 = vector.load %arg9[%c0_20, %c0_21, %c0_22] : memref<4x8x16xf32, #tpu.memory_space<vmem>>, vector<4x8x16xf32>
    %36 = vector.broadcast %25 : vector<4x8x1xf32> to vector<4x8x16xf32>
    %37 = arith.mulf %36, %35 : vector<4x8x16xf32>
    %38 = arith.truncf %28 : vector<4x8x8xf32> to vector<4x8x8xbf16>
    %c0_23 = arith.constant 0 : index
    %c0_24 = arith.constant 0 : index
    %c0_25 = arith.constant 0 : index
    %39 = vector.load %arg5[%c0_23, %c0_24, %c0_25] : memref<4x8x16xbf16, #tpu.memory_space<vmem>>, vector<4x8x16xbf16>
    "tpu.trace_start"() <{level = 10 : i32, message = "hqk,hkd->hqd"}> : () -> ()
    %cst_26 = arith.constant dense<0.000000e+00> : vector<4x8x16xf32>
    %40 = tpu.matmul %38, %39, %cst_26 {dimension_numbers = #tpu.dot_dimension_numbers<[2], [1], [1], [2], [0, 0, 0, 1, 1, 2], [0], [0]>} : vector<4x8x8xbf16>, vector<4x8x16xbf16>, vector<4x8x16xf32> -> vector<4x8x16xf32>
    "tpu.trace_stop"() : () -> ()
    %41 = arith.addf %37, %40 : vector<4x8x16xf32>
    %c0_27 = arith.constant 0 : index
    %c0_28 = arith.constant 0 : index
    %c0_29 = arith.constant 0 : index
    %42 = vector.load %arg9[%c0_27, %c0_28, %c0_29] : memref<4x8x16xf32, #tpu.memory_space<vmem>>, vector<4x8x16xf32>
    tpu.vector_store %arg9[%c0_27, %c0_28, %c0_29], %41 {strides = array<i32>} : memref<4x8x16xf32, #tpu.memory_space<vmem>>, vector<4x8x16xf32>,
    %c0_30 = arith.constant 0 : index
    %c0_31 = arith.constant 0 : index
    %c0_32 = arith.constant 0 : index
    %43 = vector.load %arg7[%c0_30, %c0_31, %c0_32] : memref<4x8x1xf32, #tpu.memory_space<vmem>>, vector<4x8x1xf32>
    tpu.vector_store %arg7[%c0_30, %c0_31, %c0_32], %23 {strides = array<i32>} : memref<4x8x1xf32, #tpu.memory_space<vmem>>, vector<4x8x1xf32>,
    %c0_i32_33 = arith.constant 0 : i32
    %44 = arith.cmpi eq, %arg2, %c0_i32_33 : i32
    %45 = arith.extui %44 : i1 to i32
    %c0_i32_34 = arith.constant 0 : i32
    %46 = arith.cmpi ne, %45, %c0_i32_34 : i32
    scf.if %46 {
      %c0_35 = arith.constant 0 : index
      %c0_36 = arith.constant 0 : index
      %c0_37 = arith.constant 0 : index
      %47 = vector.load %arg9[%c0_35, %c0_36, %c0_37] : memref<4x8x16xf32, #tpu.memory_space<vmem>>, vector<4x8x16xf32>
      %c0_38 = arith.constant 0 : index
      %c0_39 = arith.constant 0 : index
      %c0_40 = arith.constant 0 : index
      %48 = vector.load %arg8[%c0_38, %c0_39, %c0_40] : memref<4x8x1xf32, #tpu.memory_space<vmem>>, vector<4x8x1xf32>
      %49 = tpu.reciprocal %48 {approx = true} : vector<4x8x1xf32> -> vector<4x8x1xf32>
      %50 = vector.broadcast %49 : vector<4x8x1xf32> to vector<4x8x16xf32>
      %51 = arith.mulf %47, %50 : vector<4x8x16xf32>
      %52 = arith.truncf %51 : vector<4x8x16xf32> to vector<4x8x16xbf16>
      %c0_41 = arith.constant 0 : index
      %c0_42 = arith.constant 0 : index
      %c0_43 = arith.constant 0 : index
      %53 = vector.load %arg6[%c0_41, %c0_42, %c0_43] : memref<4x8x16xbf16, #tpu.memory_space<vmem>>, vector<4x8x16xbf16>
      tpu.vector_store %arg6[%c0_41, %c0_42, %c0_43], %52 {strides = array<i32>} : memref<4x8x16xbf16, #tpu.memory_space<vmem>>, vector<4x8x16xbf16>,
    } else {
    }
    return
  }
  func.func @transform_0(%arg0: i32, %arg1: i32, %arg2: i32) -> (i32, i32, i32) {
    %c0_i32 = arith.constant 0 : i32
    %c0_i32_0 = arith.constant 0 : i32
    return %arg0, %arg1, %c0_i32 : i32, i32, i32
  }
  func.func @transform_1(%arg0: i32, %arg1: i32, %arg2: i32) -> (i32, i32, i32) {
    %c0_i32 = arith.constant 0 : i32
    %c0_i32_0 = arith.constant 0 : i32
    return %arg0, %arg2, %c0_i32 : i32, i32, i32
  }
  func.func @transform_2(%arg0: i32, %arg1: i32, %arg2: i32) -> (i32, i32, i32) {
    %c0_i32 = arith.constant 0 : i32
    %c0_i32_0 = arith.constant 0 : i32
    return %arg0, %arg2, %c0_i32 : i32, i32, i32
  }
  func.func @transform_3(%arg0: i32, %arg1: i32, %arg2: i32) -> (i32, i32, i32) {
    %c0_i32 = arith.constant 0 : i32
    %c0_i32_0 = arith.constant 0 : i32
    return %arg0, %arg1, %c0_i32 : i32, i32, i32
  }
}

module attributes {stable_mosaic.version = 11 : i64} {
  func.func @kernel(%arg0: i32, %arg1: i32, %arg2: memref<16x128xbf16, #tpu.memory_space<vmem>>, %arg3: memref<128x128xbf16, #tpu.memory_space<vmem>>, %arg4: memref<1x128xf32, #tpu.memory_space<vmem>>, %arg5: memref<16x128xbf16, #tpu.memory_space<vmem>>, %arg6: memref<1x128xf32, #tpu.memory_space<vmem>>, %arg7: memref<1x128xf32, #tpu.memory_space<vmem>>, %arg8: memref<16x128xbf16, #tpu.memory_space<vmem>>, %arg9: memref<16x128xf32, #tpu.memory_space<vmem>>) attributes {dimension_semantics = [#tpu.dimension_semantics<parallel>, #tpu.dimension_semantics<arbitrary>], iteration_bounds = array<i64: 1, 1>, scalar_prefetch = 0 : i64, scratch_operands = 1 : i64, tpu.core_type = #tpu.core_type<tc>, window_params = [{transform_indices = @transform_0, window_bounds = array<i64: 16, 128>}, {transform_indices = @transform_1, window_bounds = array<i64: 128, 128>}, {pipeline_mode = #tpu.pipeline_mode<synchronous>, transform_indices = @transform_2, window_bounds = array<i64: 1, 128>}, {transform_indices = @transform_3, window_bounds = array<i64: 16, 128>}, {pipeline_mode = #tpu.pipeline_mode<synchronous>, transform_indices = @transform_4, window_bounds = array<i64: 1, 128>}, {pipeline_mode = #tpu.pipeline_mode<synchronous>, transform_indices = @transform_5, window_bounds = array<i64: 1, 128>}, {transform_indices = @transform_6, window_bounds = array<i64: 16, 128>}]} {
    %c0_i32 = arith.constant 0 : i32
    %0 = arith.cmpi eq, %arg1, %c0_i32 : i32
    %1 = arith.extui %0 : i1 to i32
    %c0_i32_0 = arith.constant 0 : i32
    %2 = arith.cmpi ne, %1, %c0_i32_0 : i32
    scf.if %2 {
      %cst_10 = arith.constant 0.000000e+00 : f32
      %12 = vector.broadcast %cst_10 : f32 to vector<16x128xf32>
      %c0_11 = arith.constant 0 : index
      %c0_12 = arith.constant 0 : index
      %13 = vector.load %arg9[%c0_11, %c0_12] : memref<16x128xf32, #tpu.memory_space<vmem>>, vector<16x128xf32>
      tpu.vector_store %arg9[%c0_11, %c0_12], %12 {strides = array<i32>} : memref<16x128xf32, #tpu.memory_space<vmem>>, vector<16x128xf32>,
    } else {
    }
    %c0 = arith.constant 0 : index
    %c0_1 = arith.constant 0 : index
    %3 = vector.load %arg9[%c0, %c0_1] : memref<16x128xf32, #tpu.memory_space<vmem>>, vector<16x128xf32>
    %c0_2 = arith.constant 0 : index
    %c0_3 = arith.constant 0 : index
    %4 = vector.load %arg2[%c0_2, %c0_3] : memref<16x128xbf16, #tpu.memory_space<vmem>>, vector<16x128xbf16>
    %c0_4 = arith.constant 0 : index
    %c0_5 = arith.constant 0 : index
    %5 = vector.load %arg3[%c0_4, %c0_5] : memref<128x128xbf16, #tpu.memory_space<vmem>>, vector<128x128xbf16>
    %cst = arith.constant dense<0.000000e+00> : vector<16x128xf32>
    %6 = tpu.matmul %4, %5, %cst {dimension_numbers = #tpu.dot_dimension_numbers<[1], [0], [0], [1], [0, 0, 1, 1], [], []>} : vector<16x128xbf16>, vector<128x128xbf16>, vector<16x128xf32> -> vector<16x128xf32>
    %7 = arith.addf %3, %6 : vector<16x128xf32>
    %c0_6 = arith.constant 0 : index
    %c0_7 = arith.constant 0 : index
    %8 = vector.load %arg9[%c0_6, %c0_7] : memref<16x128xf32, #tpu.memory_space<vmem>>, vector<16x128xf32>
    tpu.vector_store %arg9[%c0_6, %c0_7], %7 {strides = array<i32>} : memref<16x128xf32, #tpu.memory_space<vmem>>, vector<16x128xf32>,
    %c0_i32_8 = arith.constant 0 : i32
    %9 = arith.cmpi eq, %arg1, %c0_i32_8 : i32
    %10 = arith.extui %9 : i1 to i32
    %c0_i32_9 = arith.constant 0 : i32
    %11 = arith.cmpi ne, %10, %c0_i32_9 : i32
    scf.if %11 {
      %c0_10 = arith.constant 0 : index
      %c0_11 = arith.constant 0 : index
      %12 = vector.load %arg9[%c0_10, %c0_11] : memref<16x128xf32, #tpu.memory_space<vmem>>, vector<16x128xf32>
      %c0_12 = arith.constant 0 : index
      %c0_13 = arith.constant 0 : index
      %13 = vector.load %arg4[%c0_12, %c0_13] : memref<1x128xf32, #tpu.memory_space<vmem>>, vector<1x128xf32>
      %14 = vector.broadcast %13 : vector<1x128xf32> to vector<16x128xf32>
      %15 = arith.addf %12, %14 : vector<16x128xf32>
      %c0_14 = arith.constant 0 : index
      %c0_15 = arith.constant 0 : index
      %16 = vector.load %arg5[%c0_14, %c0_15] : memref<16x128xbf16, #tpu.memory_space<vmem>>, vector<16x128xbf16>
      %17 = arith.extf %16 : vector<16x128xbf16> to vector<16x128xf32>
      %18 = arith.addf %15, %17 : vector<16x128xf32>
      %cst_16 = arith.constant dense<0.000000e+00> : vector<16xf32>
      %19 = vector.multi_reduction <add>, %18, %cst_16 [1] : vector<16x128xf32> to vector<16xf32>
      %20 = vector.shape_cast %19 : vector<16xf32> to vector<16x1xf32>
      %cst_17 = arith.constant 1.562500e-02 : f32
      %21 = vector.broadcast %cst_17 : f32 to vector<16x1xf32>
      %22 = arith.mulf %20, %21 : vector<16x1xf32>
      %23 = arith.mulf %18, %18 : vector<16x128xf32>
      %cst_18 = arith.constant dense<0.000000e+00> : vector<16xf32>
      %24 = vector.multi_reduction <add>, %23, %cst_18 [1] : vector<16x128xf32> to vector<16xf32>
      %25 = vector.shape_cast %24 : vector<16xf32> to vector<16x1xf32>
      %cst_19 = arith.constant 1.562500e-02 : f32
      %26 = vector.broadcast %cst_19 : f32 to vector<16x1xf32>
      %27 = arith.mulf %25, %26 : vector<16x1xf32>
      %28 = arith.mulf %22, %22 : vector<16x1xf32>
      %29 = arith.subf %27, %28 : vector<16x1xf32>
      %cst_20 = arith.constant 0.000000e+00 : f32
      %30 = vector.broadcast %cst_20 : f32 to vector<16x1xf32>
      %31 = arith.maximumf %29, %30 : vector<16x1xf32>
      %32 = vector.broadcast %22 : vector<16x1xf32> to vector<16x128xf32>
      %33 = arith.subf %18, %32 : vector<16x128xf32>
      %cst_21 = arith.constant 9.99999974E-6 : f32
      %34 = vector.broadcast %cst_21 : f32 to vector<16x1xf32>
      %35 = arith.addf %31, %34 : vector<16x1xf32>
      %36 = math.rsqrt %35 : vector<16x1xf32>
      %37 = vector.broadcast %36 : vector<16x1xf32> to vector<16x128xf32>
      %38 = arith.mulf %33, %37 : vector<16x128xf32>
      %c0_22 = arith.constant 0 : index
      %c0_23 = arith.constant 0 : index
      %39 = vector.load %arg6[%c0_22, %c0_23] : memref<1x128xf32, #tpu.memory_space<vmem>>, vector<1x128xf32>
      %40 = vector.broadcast %39 : vector<1x128xf32> to vector<16x128xf32>
      %41 = arith.mulf %38, %40 : vector<16x128xf32>
      %c0_24 = arith.constant 0 : index
      %c0_25 = arith.constant 0 : index
      %42 = vector.load %arg7[%c0_24, %c0_25] : memref<1x128xf32, #tpu.memory_space<vmem>>, vector<1x128xf32>
      %43 = vector.broadcast %42 : vector<1x128xf32> to vector<16x128xf32>
      %44 = arith.addf %41, %43 : vector<16x128xf32>
      %45 = arith.truncf %44 : vector<16x128xf32> to vector<16x128xbf16>
      %c0_26 = arith.constant 0 : index
      %c0_27 = arith.constant 0 : index
      %46 = vector.load %arg8[%c0_26, %c0_27] : memref<16x128xbf16, #tpu.memory_space<vmem>>, vector<16x128xbf16>
      tpu.vector_store %arg8[%c0_26, %c0_27], %45 {strides = array<i32>} : memref<16x128xbf16, #tpu.memory_space<vmem>>, vector<16x128xbf16>,
    } else {
    }
    return
  }
  func.func @transform_0(%arg0: i32, %arg1: i32) -> (i32, i32) {
    %c0_i32 = arith.constant 0 : i32
    return %arg0, %arg1 : i32, i32
  }
  func.func @transform_1(%arg0: i32, %arg1: i32) -> (i32, i32) {
    %c0_i32 = arith.constant 0 : i32
    %c0_i32_0 = arith.constant 0 : i32
    return %arg1, %c0_i32 : i32, i32
  }
  func.func @transform_2(%arg0: i32, %arg1: i32) -> (i32, i32) {
    %c0_i32 = arith.constant 0 : i32
    %c0_i32_0 = arith.constant 0 : i32
    %c0_i32_1 = arith.constant 0 : i32
    return %c0_i32, %c0_i32_0 : i32, i32
  }
  func.func @transform_3(%arg0: i32, %arg1: i32) -> (i32, i32) {
    %c0_i32 = arith.constant 0 : i32
    %c0_i32_0 = arith.constant 0 : i32
    return %arg0, %c0_i32 : i32, i32
  }
  func.func @transform_4(%arg0: i32, %arg1: i32) -> (i32, i32) {
    %c0_i32 = arith.constant 0 : i32
    %c0_i32_0 = arith.constant 0 : i32
    %c0_i32_1 = arith.constant 0 : i32
    return %c0_i32, %c0_i32_0 : i32, i32
  }
  func.func @transform_5(%arg0: i32, %arg1: i32) -> (i32, i32) {
    %c0_i32 = arith.constant 0 : i32
    %c0_i32_0 = arith.constant 0 : i32
    %c0_i32_1 = arith.constant 0 : i32
    return %c0_i32, %c0_i32_0 : i32, i32
  }
  func.func @transform_6(%arg0: i32, %arg1: i32) -> (i32, i32) {
    %c0_i32 = arith.constant 0 : i32
    %c0_i32_0 = arith.constant 0 : i32
    return %arg0, %c0_i32 : i32, i32
  }
}

module attributes {stable_mosaic.version = 11 : i64} {
  func.func @kernel(%arg0: i32, %arg1: i32, %arg2: i32, %arg3: memref<16x128xbf16, #tpu.memory_space<vmem>>, %arg4: memref<128x128xbf16, #tpu.memory_space<vmem>>, %arg5: memref<1x128xf32, #tpu.memory_space<vmem>>, %arg6: memref<16x128xbf16, #tpu.memory_space<vmem>>, %arg7: memref<16x128xf32, #tpu.memory_space<vmem>>) attributes {dimension_semantics = [#tpu.dimension_semantics<parallel>, #tpu.dimension_semantics<parallel>, #tpu.dimension_semantics<arbitrary>], iteration_bounds = array<i64: 1, 1, 1>, scalar_prefetch = 0 : i64, scratch_operands = 1 : i64, tpu.core_type = #tpu.core_type<tc>, window_params = [{transform_indices = @transform_0, window_bounds = array<i64: 16, 128>}, {transform_indices = @transform_1, window_bounds = array<i64: 128, 128>}, {transform_indices = @transform_2, window_bounds = array<i64: 1, 128>}, {transform_indices = @transform_3, window_bounds = array<i64: 16, 128>}]} {
    %c0_i32 = arith.constant 0 : i32
    %0 = arith.cmpi eq, %arg2, %c0_i32 : i32
    %1 = arith.extui %0 : i1 to i32
    %c0_i32_0 = arith.constant 0 : i32
    %2 = arith.cmpi ne, %1, %c0_i32_0 : i32
    scf.if %2 {
      %cst_10 = arith.constant 0.000000e+00 : f32
      %12 = vector.broadcast %cst_10 : f32 to vector<16x128xf32>
      %c0_11 = arith.constant 0 : index
      %c0_12 = arith.constant 0 : index
      %13 = vector.load %arg7[%c0_11, %c0_12] : memref<16x128xf32, #tpu.memory_space<vmem>>, vector<16x128xf32>
      tpu.vector_store %arg7[%c0_11, %c0_12], %12 {strides = array<i32>} : memref<16x128xf32, #tpu.memory_space<vmem>>, vector<16x128xf32>,
    } else {
    }
    %c0 = arith.constant 0 : index
    %c0_1 = arith.constant 0 : index
    %3 = vector.load %arg7[%c0, %c0_1] : memref<16x128xf32, #tpu.memory_space<vmem>>, vector<16x128xf32>
    %c0_2 = arith.constant 0 : index
    %c0_3 = arith.constant 0 : index
    %4 = vector.load %arg3[%c0_2, %c0_3] : memref<16x128xbf16, #tpu.memory_space<vmem>>, vector<16x128xbf16>
    %c0_4 = arith.constant 0 : index
    %c0_5 = arith.constant 0 : index
    %5 = vector.load %arg4[%c0_4, %c0_5] : memref<128x128xbf16, #tpu.memory_space<vmem>>, vector<128x128xbf16>
    %cst = arith.constant dense<0.000000e+00> : vector<16x128xf32>
    %6 = tpu.matmul %4, %5, %cst {dimension_numbers = #tpu.dot_dimension_numbers<[1], [0], [0], [1], [0, 0, 1, 1], [], []>} : vector<16x128xbf16>, vector<128x128xbf16>, vector<16x128xf32> -> vector<16x128xf32>
    %7 = arith.addf %3, %6 : vector<16x128xf32>
    %c0_6 = arith.constant 0 : index
    %c0_7 = arith.constant 0 : index
    %8 = vector.load %arg7[%c0_6, %c0_7] : memref<16x128xf32, #tpu.memory_space<vmem>>, vector<16x128xf32>
    tpu.vector_store %arg7[%c0_6, %c0_7], %7 {strides = array<i32>} : memref<16x128xf32, #tpu.memory_space<vmem>>, vector<16x128xf32>,
    %c0_i32_8 = arith.constant 0 : i32
    %9 = arith.cmpi eq, %arg2, %c0_i32_8 : i32
    %10 = arith.extui %9 : i1 to i32
    %c0_i32_9 = arith.constant 0 : i32
    %11 = arith.cmpi ne, %10, %c0_i32_9 : i32
    scf.if %11 {
      %c0_10 = arith.constant 0 : index
      %c0_11 = arith.constant 0 : index
      %12 = vector.load %arg7[%c0_10, %c0_11] : memref<16x128xf32, #tpu.memory_space<vmem>>, vector<16x128xf32>
      %c0_12 = arith.constant 0 : index
      %c0_13 = arith.constant 0 : index
      %13 = vector.load %arg5[%c0_12, %c0_13] : memref<1x128xf32, #tpu.memory_space<vmem>>, vector<1x128xf32>
      %14 = vector.broadcast %13 : vector<1x128xf32> to vector<16x128xf32>
      %15 = arith.addf %12, %14 : vector<16x128xf32>
      %16 = arith.truncf %15 : vector<16x128xf32> to vector<16x128xbf16>
      %c0_14 = arith.constant 0 : index
      %c0_15 = arith.constant 0 : index
      %17 = vector.load %arg6[%c0_14, %c0_15] : memref<16x128xbf16, #tpu.memory_space<vmem>>, vector<16x128xbf16>
      tpu.vector_store %arg6[%c0_14, %c0_15], %16 {strides = array<i32>} : memref<16x128xbf16, #tpu.memory_space<vmem>>, vector<16x128xbf16>,
    } else {
    }
    return
  }
  func.func @transform_0(%arg0: i32, %arg1: i32, %arg2: i32) -> (i32, i32) {
    %c0_i32 = arith.constant 0 : i32
    return %arg0, %arg2 : i32, i32
  }
  func.func @transform_1(%arg0: i32, %arg1: i32, %arg2: i32) -> (i32, i32) {
    %c0_i32 = arith.constant 0 : i32
    return %arg2, %arg1 : i32, i32
  }
  func.func @transform_2(%arg0: i32, %arg1: i32, %arg2: i32) -> (i32, i32) {
    %c0_i32 = arith.constant 0 : i32
    %c0_i32_0 = arith.constant 0 : i32
    return %c0_i32, %arg1 : i32, i32
  }
  func.func @transform_3(%arg0: i32, %arg1: i32, %arg2: i32) -> (i32, i32) {
    %c0_i32 = arith.constant 0 : i32
    return %arg0, %arg1 : i32, i32
  }
}

module attributes {stable_mosaic.version = 11 : i64} {
  func.func @kernel(%arg0: i32, %arg1: i32, %arg2: i32, %arg3: memref<16x128xbf16, #tpu.memory_space<vmem>>, %arg4: memref<128x128xbf16, #tpu.memory_space<vmem>>, %arg5: memref<1x128xf32, #tpu.memory_space<vmem>>, %arg6: memref<16x128xbf16, #tpu.memory_space<vmem>>, %arg7: memref<16x128xf32, #tpu.memory_space<vmem>>) attributes {dimension_semantics = [#tpu.dimension_semantics<parallel>, #tpu.dimension_semantics<parallel>, #tpu.dimension_semantics<arbitrary>], iteration_bounds = array<i64: 1, 1, 1>, scalar_prefetch = 0 : i64, scratch_operands = 1 : i64, tpu.core_type = #tpu.core_type<tc>, window_params = [{transform_indices = @transform_0, window_bounds = array<i64: 16, 128>}, {transform_indices = @transform_1, window_bounds = array<i64: 128, 128>}, {transform_indices = @transform_2, window_bounds = array<i64: 1, 128>}, {transform_indices = @transform_3, window_bounds = array<i64: 16, 128>}]} {
    %c0_i32 = arith.constant 0 : i32
    %0 = arith.cmpi eq, %arg2, %c0_i32 : i32
    %1 = arith.extui %0 : i1 to i32
    %c0_i32_0 = arith.constant 0 : i32
    %2 = arith.cmpi ne, %1, %c0_i32_0 : i32
    scf.if %2 {
      %cst_10 = arith.constant 0.000000e+00 : f32
      %12 = vector.broadcast %cst_10 : f32 to vector<16x128xf32>
      %c0_11 = arith.constant 0 : index
      %c0_12 = arith.constant 0 : index
      %13 = vector.load %arg7[%c0_11, %c0_12] : memref<16x128xf32, #tpu.memory_space<vmem>>, vector<16x128xf32>
      tpu.vector_store %arg7[%c0_11, %c0_12], %12 {strides = array<i32>} : memref<16x128xf32, #tpu.memory_space<vmem>>, vector<16x128xf32>,
    } else {
    }
    %c0 = arith.constant 0 : index
    %c0_1 = arith.constant 0 : index
    %3 = vector.load %arg7[%c0, %c0_1] : memref<16x128xf32, #tpu.memory_space<vmem>>, vector<16x128xf32>
    %c0_2 = arith.constant 0 : index
    %c0_3 = arith.constant 0 : index
    %4 = vector.load %arg3[%c0_2, %c0_3] : memref<16x128xbf16, #tpu.memory_space<vmem>>, vector<16x128xbf16>
    %c0_4 = arith.constant 0 : index
    %c0_5 = arith.constant 0 : index
    %5 = vector.load %arg4[%c0_4, %c0_5] : memref<128x128xbf16, #tpu.memory_space<vmem>>, vector<128x128xbf16>
    %cst = arith.constant dense<0.000000e+00> : vector<16x128xf32>
    %6 = tpu.matmul %4, %5, %cst {dimension_numbers = #tpu.dot_dimension_numbers<[1], [0], [0], [1], [0, 0, 1, 1], [], []>} : vector<16x128xbf16>, vector<128x128xbf16>, vector<16x128xf32> -> vector<16x128xf32>
    %7 = arith.addf %3, %6 : vector<16x128xf32>
    %c0_6 = arith.constant 0 : index
    %c0_7 = arith.constant 0 : index
    %8 = vector.load %arg7[%c0_6, %c0_7] : memref<16x128xf32, #tpu.memory_space<vmem>>, vector<16x128xf32>
    tpu.vector_store %arg7[%c0_6, %c0_7], %7 {strides = array<i32>} : memref<16x128xf32, #tpu.memory_space<vmem>>, vector<16x128xf32>,
    %c0_i32_8 = arith.constant 0 : i32
    %9 = arith.cmpi eq, %arg2, %c0_i32_8 : i32
    %10 = arith.extui %9 : i1 to i32
    %c0_i32_9 = arith.constant 0 : i32
    %11 = arith.cmpi ne, %10, %c0_i32_9 : i32
    scf.if %11 {
      %c0_10 = arith.constant 0 : index
      %c0_11 = arith.constant 0 : index
      %12 = vector.load %arg7[%c0_10, %c0_11] : memref<16x128xf32, #tpu.memory_space<vmem>>, vector<16x128xf32>
      %c0_12 = arith.constant 0 : index
      %c0_13 = arith.constant 0 : index
      %13 = vector.load %arg5[%c0_12, %c0_13] : memref<1x128xf32, #tpu.memory_space<vmem>>, vector<1x128xf32>
      %14 = vector.broadcast %13 : vector<1x128xf32> to vector<16x128xf32>
      %15 = arith.addf %12, %14 : vector<16x128xf32>
      %16 = math.tanh %15 : vector<16x128xf32>
      %17 = arith.truncf %16 : vector<16x128xf32> to vector<16x128xbf16>
      %c0_14 = arith.constant 0 : index
      %c0_15 = arith.constant 0 : index
      %18 = vector.load %arg6[%c0_14, %c0_15] : memref<16x128xbf16, #tpu.memory_space<vmem>>, vector<16x128xbf16>
      tpu.vector_store %arg6[%c0_14, %c0_15], %17 {strides = array<i32>} : memref<16x128xbf16, #tpu.memory_space<vmem>>, vector<16x128xbf16>,
    } else {
    }
    return
  }
  func.func @transform_0(%arg0: i32, %arg1: i32, %arg2: i32) -> (i32, i32) {
    %c0_i32 = arith.constant 0 : i32
    return %arg0, %arg2 : i32, i32
  }
  func.func @transform_1(%arg0: i32, %arg1: i32, %arg2: i32) -> (i32, i32) {
    %c0_i32 = arith.constant 0 : i32
    return %arg2, %arg1 : i32, i32
  }
  func.func @transform_2(%arg0: i32, %arg1: i32, %arg2: i32) -> (i32, i32) {
    %c0_i32 = arith.constant 0 : i32
    %c0_i32_0 = arith.constant 0 : i32
    return %c0_i32, %arg1 : i32, i32
  }
  func.func @transform_3(%arg0: i32, %arg1: i32, %arg2: i32) -> (i32, i32) {
    %c0_i32 = arith.constant 0 : i32
    return %arg0, %arg1 : i32, i32
  }
}

module attributes {stable_mosaic.version = 11 : i64} {
  func.func @kernel(%arg0: i32, %arg1: i32, %arg2: i32, %arg3: memref<4x8x16xbf16, #tpu.memory_space<vmem>>, %arg4: memref<4x16x16xbf16, #tpu.memory_space<vmem>>, %arg5: memref<4x16x16xbf16, #tpu.memory_space<vmem>>, %arg6: memref<1x1x16xf32, #tpu.memory_space<vmem>>, %arg7: memref<4x8x16xbf16, #tpu.memory_space<vmem>>, %arg8: memref<4x8x1xf32, #tpu.memory_space<vmem>>, %arg9: memref<4x8x1xf32, #tpu.memory_space<vmem>>, %arg10: memref<4x8x16xf32, #tpu.memory_space<vmem>>) attributes {dimension_semantics = [#tpu.dimension_semantics<parallel>, #tpu.dimension_semantics<parallel>, #tpu.dimension_semantics<arbitrary>], iteration_bounds = array<i64: 2, 1, 1>, scalar_prefetch = 0 : i64, scratch_operands = 3 : i64, tpu.core_type = #tpu.core_type<tc>, window_params = [{transform_indices = @transform_0, window_bounds = array<i64: 4, 8, 16>}, {transform_indices = @transform_1, window_bounds = array<i64: 4, 16, 16>}, {transform_indices = @transform_2, window_bounds = array<i64: 4, 16, 16>}, {transform_indices = @transform_3, window_bounds = array<i64: 1, 1, 16>}, {transform_indices = @transform_4, window_bounds = array<i64: 4, 8, 16>}]} {
    %c0_i32 = arith.constant 0 : i32
    %0 = arith.cmpi eq, %arg2, %c0_i32 : i32
    %1 = arith.extui %0 : i1 to i32
    %c0_i32_0 = arith.constant 0 : i32
    %2 = arith.cmpi ne, %1, %c0_i32_0 : i32
    scf.if %2 {
      %cst_36 = arith.constant -1.000000e+30 : f32
      %38 = vector.broadcast %cst_36 : f32 to vector<4x8x1xf32>
      %c0_37 = arith.constant 0 : index
      %c0_38 = arith.constant 0 : index
      %c0_39 = arith.constant 0 : index
      %39 = vector.load %arg8[%c0_37, %c0_38, %c0_39] : memref<4x8x1xf32, #tpu.memory_space<vmem>>, vector<4x8x1xf32>
      tpu.vector_store %arg8[%c0_37, %c0_38, %c0_39], %38 {strides = array<i32>} : memref<4x8x1xf32, #tpu.memory_space<vmem>>, vector<4x8x1xf32>,
      %cst_40 = arith.constant 0.000000e+00 : f32
      %40 = vector.broadcast %cst_40 : f32 to vector<4x8x1xf32>
      %c0_41 = arith.constant 0 : index
      %c0_42 = arith.constant 0 : index
      %c0_43 = arith.constant 0 : index
      %41 = vector.load %arg9[%c0_41, %c0_42, %c0_43] : memref<4x8x1xf32, #tpu.memory_space<vmem>>, vector<4x8x1xf32>
      tpu.vector_store %arg9[%c0_41, %c0_42, %c0_43], %40 {strides = array<i32>} : memref<4x8x1xf32, #tpu.memory_space<vmem>>, vector<4x8x1xf32>,
      %cst_44 = arith.constant 0.000000e+00 : f32
      %42 = vector.broadcast %cst_44 : f32 to vector<4x8x16xf32>
      %c0_45 = arith.constant 0 : index
      %c0_46 = arith.constant 0 : index
      %c0_47 = arith.constant 0 : index
      %43 = vector.load %arg10[%c0_45, %c0_46, %c0_47] : memref<4x8x16xf32, #tpu.memory_space<vmem>>, vector<4x8x16xf32>
      tpu.vector_store %arg10[%c0_45, %c0_46, %c0_47], %42 {strides = array<i32>} : memref<4x8x16xf32, #tpu.memory_space<vmem>>, vector<4x8x16xf32>,
    } else {
    }
    %c0 = arith.constant 0 : index
    %c0_1 = arith.constant 0 : index
    %c0_2 = arith.constant 0 : index
    %3 = vector.load %arg3[%c0, %c0_1, %c0_2] : memref<4x8x16xbf16, #tpu.memory_space<vmem>>, vector<4x8x16xbf16>
    %c0_3 = arith.constant 0 : index
    %c0_4 = arith.constant 0 : index
    %c0_5 = arith.constant 0 : index
    %4 = vector.load %arg4[%c0_3, %c0_4, %c0_5] : memref<4x16x16xbf16, #tpu.memory_space<vmem>>, vector<4x16x16xbf16>
    "tpu.trace_start"() <{level = 10 : i32, message = "hqd,hkd->hqk"}> : () -> ()
    %cst = arith.constant dense<0.000000e+00> : vector<4x8x16xf32>
    %5 = tpu.matmul %3, %4, %cst {dimension_numbers = #tpu.dot_dimension_numbers<[2], [2], [1], [1], [0, 0, 0, 1, 1, 1], [0], [0]>} : vector<4x8x16xbf16>, vector<4x16x16xbf16>, vector<4x8x16xf32> -> vector<4x8x16xf32>
    "tpu.trace_stop"() : () -> ()
    %cst_6 = arith.constant 2.500000e-01 : f32
    %6 = vector.broadcast %cst_6 : f32 to vector<4x8x16xf32>
    %7 = arith.mulf %5, %6 : vector<4x8x16xf32>
    %c0_7 = arith.constant 0 : index
    %c0_8 = arith.constant 0 : index
    %c0_9 = arith.constant 0 : index
    %8 = vector.load %arg6[%c0_7, %c0_8, %c0_9] : memref<1x1x16xf32, #tpu.memory_space<vmem>>, vector<1x1x16xf32>
    %9 = vector.broadcast %8 : vector<1x1x16xf32> to vector<4x8x16xf32>
    %10 = arith.addf %7, %9 : vector<4x8x16xf32>
    %c0_10 = arith.constant 0 : index
    %c0_11 = arith.constant 0 : index
    %c0_12 = arith.constant 0 : index
    %11 = vector.load %arg8[%c0_10, %c0_11, %c0_12] : memref<4x8x1xf32, #tpu.memory_space<vmem>>, vector<4x8x1xf32>
    %cst_13 = arith.constant dense<0xFF800000> : vector<4x8xf32>
    %12 = vector.multi_reduction <maximumf>, %10, %cst_13 [2] : vector<4x8x16xf32> to vector<4x8xf32>
    %13 = vector.shape_cast %12 : vector<4x8xf32> to vector<4x8x1xf32>
    %14 = arith.maximumf %11, %13 : vector<4x8x1xf32>
    %15 = arith.subf %11, %14 : vector<4x8x1xf32>
    %16 = math.exp %15 : vector<4x8x1xf32>
    %17 = vector.broadcast %14 : vector<4x8x1xf32> to vector<4x8x16xf32>
    %18 = arith.subf %10, %17 : vector<4x8x16xf32>
    %19 = math.exp %18 : vector<4x8x16xf32>
    %c0_14 = arith.constant 0 : index
    %c0_15 = arith.constant 0 : index
    %c0_16 = arith.constant 0 : index
    %20 = vector.load %arg9[%c0_14, %c0_15, %c0_16] : memref<4x8x1xf32, #tpu.memory_space<vmem>>, vector<4x8x1xf32>
    %21 = arith.mulf %16, %20 : vector<4x8x1xf32>
    %cst_17 = arith.constant dense<0.000000e+00> : vector<4x8xf32>
    %22 = vector.multi_reduction <add>, %19, %cst_17 [2] : vector<4x8x16xf32> to vector<4x8xf32>
    %23 = vector.shape_cast %22 : vector<4x8xf32> to vector<4x8x1xf32>
    %24 = arith.addf %21, %23 : vector<4x8x1xf32>
    %c0_18 = arith.constant 0 : index
    %c0_19 = arith.constant 0 : index
    %c0_20 = arith.constant 0 : index
    %25 = vector.load %arg9[%c0_18, %c0_19, %c0_20] : memref<4x8x1xf32, #tpu.memory_space<vmem>>, vector<4x8x1xf32>
    tpu.vector_store %arg9[%c0_18, %c0_19, %c0_20], %24 {strides = array<i32>} : memref<4x8x1xf32, #tpu.memory_space<vmem>>, vector<4x8x1xf32>,
    %c0_21 = arith.constant 0 : index
    %c0_22 = arith.constant 0 : index
    %c0_23 = arith.constant 0 : index
    %26 = vector.load %arg10[%c0_21, %c0_22, %c0_23] : memref<4x8x16xf32, #tpu.memory_space<vmem>>, vector<4x8x16xf32>
    %27 = vector.broadcast %16 : vector<4x8x1xf32> to vector<4x8x16xf32>
    %28 = arith.mulf %27, %26 : vector<4x8x16xf32>
    %29 = arith.truncf %19 : vector<4x8x16xf32> to vector<4x8x16xbf16>
    %c0_24 = arith.constant 0 : index
    %c0_25 = arith.constant 0 : index
    %c0_26 = arith.constant 0 : index
    %30 = vector.load %arg5[%c0_24, %c0_25, %c0_26] : memref<4x16x16xbf16, #tpu.memory_space<vmem>>, vector<4x16x16xbf16>
    "tpu.trace_start"() <{level = 10 : i32, message = "hqk,hkd->hqd"}> : () -> ()
    %cst_27 = arith.constant dense<0.000000e+00> : vector<4x8x16xf32>
    %31 = tpu.matmul %29, %30, %cst_27 {dimension_numbers = #tpu.dot_dimension_numbers<[2], [1], [1], [2], [0, 0, 0, 1, 1, 2], [0], [0]>} : vector<4x8x16xbf16>, vector<4x16x16xbf16>, vector<4x8x16xf32> -> vector<4x8x16xf32>
    "tpu.trace_stop"() : () -> ()
    %32 = arith.addf %28, %31 : vector<4x8x16xf32>
    %c0_28 = arith.constant 0 : index
    %c0_29 = arith.constant 0 : index
    %c0_30 = arith.constant 0 : index
    %33 = vector.load %arg10[%c0_28, %c0_29, %c0_30] : memref<4x8x16xf32, #tpu.memory_space<vmem>>, vector<4x8x16xf32>
    tpu.vector_store %arg10[%c0_28, %c0_29, %c0_30], %32 {strides = array<i32>} : memref<4x8x16xf32, #tpu.memory_space<vmem>>, vector<4x8x16xf32>,
    %c0_31 = arith.constant 0 : index
    %c0_32 = arith.constant 0 : index
    %c0_33 = arith.constant 0 : index
    %34 = vector.load %arg8[%c0_31, %c0_32, %c0_33] : memref<4x8x1xf32, #tpu.memory_space<vmem>>, vector<4x8x1xf32>
    tpu.vector_store %arg8[%c0_31, %c0_32, %c0_33], %14 {strides = array<i32>} : memref<4x8x1xf32, #tpu.memory_space<vmem>>, vector<4x8x1xf32>,
    %c0_i32_34 = arith.constant 0 : i32
    %35 = arith.cmpi eq, %arg2, %c0_i32_34 : i32
    %36 = arith.extui %35 : i1 to i32
    %c0_i32_35 = arith.constant 0 : i32
    %37 = arith.cmpi ne, %36, %c0_i32_35 : i32
    scf.if %37 {
      %c0_36 = arith.constant 0 : index
      %c0_37 = arith.constant 0 : index
      %c0_38 = arith.constant 0 : index
      %38 = vector.load %arg10[%c0_36, %c0_37, %c0_38] : memref<4x8x16xf32, #tpu.memory_space<vmem>>, vector<4x8x16xf32>
      %c0_39 = arith.constant 0 : index
      %c0_40 = arith.constant 0 : index
      %c0_41 = arith.constant 0 : index
      %39 = vector.load %arg9[%c0_39, %c0_40, %c0_41] : memref<4x8x1xf32, #tpu.memory_space<vmem>>, vector<4x8x1xf32>
      %40 = tpu.reciprocal %39 {approx = true} : vector<4x8x1xf32> -> vector<4x8x1xf32>
      %41 = vector.broadcast %40 : vector<4x8x1xf32> to vector<4x8x16xf32>
      %42 = arith.mulf %38, %41 : vector<4x8x16xf32>
      %43 = arith.truncf %42 : vector<4x8x16xf32> to vector<4x8x16xbf16>
      %c0_42 = arith.constant 0 : index
      %c0_43 = arith.constant 0 : index
      %c0_44 = arith.constant 0 : index
      %44 = vector.load %arg7[%c0_42, %c0_43, %c0_44] : memref<4x8x16xbf16, #tpu.memory_space<vmem>>, vector<4x8x16xbf16>
      tpu.vector_store %arg7[%c0_42, %c0_43, %c0_44], %43 {strides = array<i32>} : memref<4x8x16xbf16, #tpu.memory_space<vmem>>, vector<4x8x16xbf16>,
    } else {
    }
    return
  }
  func.func @transform_0(%arg0: i32, %arg1: i32, %arg2: i32) -> (i32, i32, i32) {
    %c0_i32 = arith.constant 0 : i32
    %c0_i32_0 = arith.constant 0 : i32
    return %arg0, %arg1, %c0_i32 : i32, i32, i32
  }
  func.func @transform_1(%arg0: i32, %arg1: i32, %arg2: i32) -> (i32, i32, i32) {
    %c0_i32 = arith.constant 0 : i32
    %c0_i32_0 = arith.constant 0 : i32
    return %arg0, %arg2, %c0_i32 : i32, i32, i32
  }
  func.func @transform_2(%arg0: i32, %arg1: i32, %arg2: i32) -> (i32, i32, i32) {
    %c0_i32 = arith.constant 0 : i32
    %c0_i32_0 = arith.constant 0 : i32
    return %arg0, %arg2, %c0_i32 : i32, i32, i32
  }
  func.func @transform_3(%arg0: i32, %arg1: i32, %arg2: i32) -> (i32, i32, i32) {
    %c0_i32 = arith.constant 0 : i32
    %c0_i32_0 = arith.constant 0 : i32
    return %arg0, %c0_i32, %arg2 : i32, i32, i32
  }
  func.func @transform_4(%arg0: i32, %arg1: i32, %arg2: i32) -> (i32, i32, i32) {
    %c0_i32 = arith.constant 0 : i32
    %c0_i32_0 = arith.constant 0 : i32
    return %arg0, %arg1, %c0_i32 : i32, i32, i32
  }
}

module attributes {stable_mosaic.version = 11 : i64} {
  func.func @kernel(%arg0: i32, %arg1: i32, %arg2: i32, %arg3: memref<16x128xbf16, #tpu.memory_space<vmem>>, %arg4: memref<128x128xbf16, #tpu.memory_space<vmem>>, %arg5: memref<1x128xf32, #tpu.memory_space<vmem>>, %arg6: memref<16x128xbf16, #tpu.memory_space<vmem>>, %arg7: memref<16x128xf32, #tpu.memory_space<vmem>>) attributes {dimension_semantics = [#tpu.dimension_semantics<parallel>, #tpu.dimension_semantics<parallel>, #tpu.dimension_semantics<arbitrary>], iteration_bounds = array<i64: 1, 1, 1>, scalar_prefetch = 0 : i64, scratch_operands = 1 : i64, tpu.core_type = #tpu.core_type<tc>, window_params = [{transform_indices = @transform_0, window_bounds = array<i64: 16, 128>}, {transform_indices = @transform_1, window_bounds = array<i64: 128, 128>}, {transform_indices = @transform_2, window_bounds = array<i64: 1, 128>}, {transform_indices = @transform_3, window_bounds = array<i64: 16, 128>}]} {
    %c0_i32 = arith.constant 0 : i32
    %0 = arith.cmpi eq, %arg2, %c0_i32 : i32
    %1 = arith.extui %0 : i1 to i32
    %c0_i32_0 = arith.constant 0 : i32
    %2 = arith.cmpi ne, %1, %c0_i32_0 : i32
    scf.if %2 {
      %cst_10 = arith.constant 0.000000e+00 : f32
      %12 = vector.broadcast %cst_10 : f32 to vector<16x128xf32>
      %c0_11 = arith.constant 0 : index
      %c0_12 = arith.constant 0 : index
      %13 = vector.load %arg7[%c0_11, %c0_12] : memref<16x128xf32, #tpu.memory_space<vmem>>, vector<16x128xf32>
      tpu.vector_store %arg7[%c0_11, %c0_12], %12 {strides = array<i32>} : memref<16x128xf32, #tpu.memory_space<vmem>>, vector<16x128xf32>,
    } else {
    }
    %c0 = arith.constant 0 : index
    %c0_1 = arith.constant 0 : index
    %3 = vector.load %arg7[%c0, %c0_1] : memref<16x128xf32, #tpu.memory_space<vmem>>, vector<16x128xf32>
    %c0_2 = arith.constant 0 : index
    %c0_3 = arith.constant 0 : index
    %4 = vector.load %arg3[%c0_2, %c0_3] : memref<16x128xbf16, #tpu.memory_space<vmem>>, vector<16x128xbf16>
    %c0_4 = arith.constant 0 : index
    %c0_5 = arith.constant 0 : index
    %5 = vector.load %arg4[%c0_4, %c0_5] : memref<128x128xbf16, #tpu.memory_space<vmem>>, vector<128x128xbf16>
    %cst = arith.constant dense<0.000000e+00> : vector<16x128xf32>
    %6 = tpu.matmul %4, %5, %cst {dimension_numbers = #tpu.dot_dimension_numbers<[1], [0], [0], [1], [0, 0, 1, 1], [], []>} : vector<16x128xbf16>, vector<128x128xbf16>, vector<16x128xf32> -> vector<16x128xf32>
    %7 = arith.addf %3, %6 : vector<16x128xf32>
    %c0_6 = arith.constant 0 : index
    %c0_7 = arith.constant 0 : index
    %8 = vector.load %arg7[%c0_6, %c0_7] : memref<16x128xf32, #tpu.memory_space<vmem>>, vector<16x128xf32>
    tpu.vector_store %arg7[%c0_6, %c0_7], %7 {strides = array<i32>} : memref<16x128xf32, #tpu.memory_space<vmem>>, vector<16x128xf32>,
    %c0_i32_8 = arith.constant 0 : i32
    %9 = arith.cmpi eq, %arg2, %c0_i32_8 : i32
    %10 = arith.extui %9 : i1 to i32
    %c0_i32_9 = arith.constant 0 : i32
    %11 = arith.cmpi ne, %10, %c0_i32_9 : i32
    scf.if %11 {
      %c0_10 = arith.constant 0 : index
      %c0_11 = arith.constant 0 : index
      %12 = vector.load %arg7[%c0_10, %c0_11] : memref<16x128xf32, #tpu.memory_space<vmem>>, vector<16x128xf32>
      %c0_12 = arith.constant 0 : index
      %c0_13 = arith.constant 0 : index
      %13 = vector.load %arg5[%c0_12, %c0_13] : memref<1x128xf32, #tpu.memory_space<vmem>>, vector<1x128xf32>
      %14 = vector.broadcast %13 : vector<1x128xf32> to vector<16x128xf32>
      %15 = arith.addf %12, %14 : vector<16x128xf32>
      %cst_14 = arith.constant 0.000000e+00 : f32
      %16 = vector.broadcast %cst_14 : f32 to vector<16x128xf32>
      %17 = arith.maximumf %15, %16 : vector<16x128xf32>
      %18 = arith.truncf %17 : vector<16x128xf32> to vector<16x128xbf16>
      %c0_15 = arith.constant 0 : index
      %c0_16 = arith.constant 0 : index
      %19 = vector.load %arg6[%c0_15, %c0_16] : memref<16x128xbf16, #tpu.memory_space<vmem>>, vector<16x128xbf16>
      tpu.vector_store %arg6[%c0_15, %c0_16], %18 {strides = array<i32>} : memref<16x128xbf16, #tpu.memory_space<vmem>>, vector<16x128xbf16>,
    } else {
    }
    return
  }
  func.func @transform_0(%arg0: i32, %arg1: i32, %arg2: i32) -> (i32, i32) {
    %c0_i32 = arith.constant 0 : i32
    return %arg0, %arg2 : i32, i32
  }
  func.func @transform_1(%arg0: i32, %arg1: i32, %arg2: i32) -> (i32, i32) {
    %c0_i32 = arith.constant 0 : i32
    return %arg2, %arg1 : i32, i32
  }
  func.func @transform_2(%arg0: i32, %arg1: i32, %arg2: i32) -> (i32, i32) {
    %c0_i32 = arith.constant 0 : i32
    %c0_i32_0 = arith.constant 0 : i32
    return %c0_i32, %arg1 : i32, i32
  }
  func.func @transform_3(%arg0: i32, %arg1: i32, %arg2: i32) -> (i32, i32) {
    %c0_i32 = arith.constant 0 : i32
    return %arg0, %arg1 : i32, i32
  }
}

module attributes {stable_mosaic.version = 11 : i64} {
  func.func @kernel(%arg0: i32, %arg1: i32, %arg2: memref<16x128xbf16, #tpu.memory_space<vmem>>, %arg3: memref<128x128xbf16, #tpu.memory_space<vmem>>, %arg4: memref<16x1xi32, #tpu.memory_space<vmem>>, %arg5: memref<16x1xf32, #tpu.memory_space<vmem>>, %arg6: memref<16x1xf32, #tpu.memory_space<vmem>>, %arg7: memref<16x1xf32, #tpu.memory_space<vmem>>, %arg8: memref<16x1xf32, #tpu.memory_space<vmem>>, %arg9: memref<16x1xf32, #tpu.memory_space<vmem>>) attributes {dimension_semantics = [#tpu.dimension_semantics<parallel>, #tpu.dimension_semantics<arbitrary>], iteration_bounds = array<i64: 1, 1>, scalar_prefetch = 0 : i64, scratch_operands = 3 : i64, tpu.core_type = #tpu.core_type<tc>, window_params = [{transform_indices = @transform_0, window_bounds = array<i64: 16, 128>}, {transform_indices = @transform_1, window_bounds = array<i64: 128, 128>}, {transform_indices = @transform_2, window_bounds = array<i64: 16, 1>}, {transform_indices = @transform_3, window_bounds = array<i64: 16, 1>}, {transform_indices = @transform_4, window_bounds = array<i64: 16, 1>}]} {
    %c0_i32 = arith.constant 0 : i32
    %0 = arith.cmpi eq, %arg1, %c0_i32 : i32
    %1 = arith.extui %0 : i1 to i32
    %c0_i32_0 = arith.constant 0 : i32
    %2 = arith.cmpi ne, %1, %c0_i32_0 : i32
    scf.if %2 {
      %cst_26 = arith.constant -1.000000e+30 : f32
      %43 = vector.broadcast %cst_26 : f32 to vector<16x1xf32>
      %c0_27 = arith.constant 0 : index
      %c0_28 = arith.constant 0 : index
      %44 = vector.load %arg7[%c0_27, %c0_28] : memref<16x1xf32, #tpu.memory_space<vmem>>, vector<16x1xf32>
      tpu.vector_store %arg7[%c0_27, %c0_28], %43 {strides = array<i32>} : memref<16x1xf32, #tpu.memory_space<vmem>>, vector<16x1xf32>,
      %cst_29 = arith.constant 0.000000e+00 : f32
      %45 = vector.broadcast %cst_29 : f32 to vector<16x1xf32>
      %c0_30 = arith.constant 0 : index
      %c0_31 = arith.constant 0 : index
      %46 = vector.load %arg8[%c0_30, %c0_31] : memref<16x1xf32, #tpu.memory_space<vmem>>, vector<16x1xf32>
      tpu.vector_store %arg8[%c0_30, %c0_31], %45 {strides = array<i32>} : memref<16x1xf32, #tpu.memory_space<vmem>>, vector<16x1xf32>,
      %cst_32 = arith.constant 0.000000e+00 : f32
      %47 = vector.broadcast %cst_32 : f32 to vector<16x1xf32>
      %c0_33 = arith.constant 0 : index
      %c0_34 = arith.constant 0 : index
      %48 = vector.load %arg9[%c0_33, %c0_34] : memref<16x1xf32, #tpu.memory_space<vmem>>, vector<16x1xf32>
      tpu.vector_store %arg9[%c0_33, %c0_34], %47 {strides = array<i32>} : memref<16x1xf32, #tpu.memory_space<vmem>>, vector<16x1xf32>,
    } else {
    }
    %c0 = arith.constant 0 : index
    %c0_1 = arith.constant 0 : index
    %3 = vector.load %arg2[%c0, %c0_1] : memref<16x128xbf16, #tpu.memory_space<vmem>>, vector<16x128xbf16>
    %c0_2 = arith.constant 0 : index
    %c0_3 = arith.constant 0 : index
    %4 = vector.load %arg3[%c0_2, %c0_3] : memref<128x128xbf16, #tpu.memory_space<vmem>>, vector<128x128xbf16>
    %cst = arith.constant dense<0.000000e+00> : vector<16x128xf32>
    %5 = tpu.matmul %3, %4, %cst {dimension_numbers = #tpu.dot_dimension_numbers<[1], [0], [0], [1], [0, 0, 1, 1], [], []>} : vector<16x128xbf16>, vector<128x128xbf16>, vector<16x128xf32> -> vector<16x128xf32>
    %6 = tpu.iota {dimensions = array<i32: 1>} : vector<16x128xi32>
    %c128_i32 = arith.constant 128 : i32
    %7 = arith.muli %arg1, %c128_i32 : i32
    %8 = vector.broadcast %7 : i32 to vector<16x128xi32>
    %9 = arith.addi %6, %8 : vector<16x128xi32>
    %c128_i32_4 = arith.constant 128 : i32
    %10 = vector.broadcast %c128_i32_4 : i32 to vector<16x128xi32>
    %11 = arith.cmpi slt, %9, %10 : vector<16x128xi32>
    %cst_5 = arith.constant -1.000000e+30 : f32
    %12 = vector.broadcast %cst_5 : f32 to vector<16x128xf32>
    %13 = arith.select %11, %5, %12 : vector<16x128xi1>, vector<16x128xf32>
    %c0_6 = arith.constant 0 : index
    %c0_7 = arith.constant 0 : index
    %14 = vector.load %arg7[%c0_6, %c0_7] : memref<16x1xf32, #tpu.memory_space<vmem>>, vector<16x1xf32>
    %cst_8 = arith.constant dense<0xFF800000> : vector<16xf32>
    %15 = vector.multi_reduction <maximumf>, %13, %cst_8 [1] : vector<16x128xf32> to vector<16xf32>
    %16 = vector.shape_cast %15 : vector<16xf32> to vector<16x1xf32>
    %17 = arith.maximumf %14, %16 : vector<16x1xf32>
    %18 = arith.subf %14, %17 : vector<16x1xf32>
    %19 = math.exp %18 : vector<16x1xf32>
    %c0_9 = arith.constant 0 : index
    %c0_10 = arith.constant 0 : index
    %20 = vector.load %arg8[%c0_9, %c0_10] : memref<16x1xf32, #tpu.memory_space<vmem>>, vector<16x1xf32>
    %21 = arith.mulf %19, %20 : vector<16x1xf32>
    %22 = vector.broadcast %17 : vector<16x1xf32> to vector<16x128xf32>
    %23 = arith.subf %13, %22 : vector<16x128xf32>
    %24 = math.exp %23 : vector<16x128xf32>
    %cst_11 = arith.constant dense<0.000000e+00> : vector<16xf32>
    %25 = vector.multi_reduction <add>, %24, %cst_11 [1] : vector<16x128xf32> to vector<16xf32>
    %26 = vector.shape_cast %25 : vector<16xf32> to vector<16x1xf32>
    %27 = arith.addf %21, %26 : vector<16x1xf32>
    %c0_12 = arith.constant 0 : index
    %c0_13 = arith.constant 0 : index
    %28 = vector.load %arg8[%c0_12, %c0_13] : memref<16x1xf32, #tpu.memory_space<vmem>>, vector<16x1xf32>
    tpu.vector_store %arg8[%c0_12, %c0_13], %27 {strides = array<i32>} : memref<16x1xf32, #tpu.memory_space<vmem>>, vector<16x1xf32>,
    %c0_14 = arith.constant 0 : index
    %c0_15 = arith.constant 0 : index
    %29 = vector.load %arg7[%c0_14, %c0_15] : memref<16x1xf32, #tpu.memory_space<vmem>>, vector<16x1xf32>
    tpu.vector_store %arg7[%c0_14, %c0_15], %17 {strides = array<i32>} : memref<16x1xf32, #tpu.memory_space<vmem>>, vector<16x1xf32>,
    %c0_16 = arith.constant 0 : index
    %c0_17 = arith.constant 0 : index
    %30 = vector.load %arg9[%c0_16, %c0_17] : memref<16x1xf32, #tpu.memory_space<vmem>>, vector<16x1xf32>
    %c0_18 = arith.constant 0 : index
    %c0_19 = arith.constant 0 : index
    %31 = vector.load %arg4[%c0_18, %c0_19] : memref<16x1xi32, #tpu.memory_space<vmem>>, vector<16x1xi32>
    %32 = vector.broadcast %31 : vector<16x1xi32> to vector<16x128xi32>
    %33 = arith.cmpi eq, %9, %32 : vector<16x128xi32>
    %cst_20 = arith.constant 0.000000e+00 : f32
    %34 = vector.broadcast %cst_20 : f32 to vector<16x128xf32>
    %35 = arith.select %33, %13, %34 : vector<16x128xi1>, vector<16x128xf32>
    %cst_21 = arith.constant dense<0.000000e+00> : vector<16xf32>
    %36 = vector.multi_reduction <add>, %35, %cst_21 [1] : vector<16x128xf32> to vector<16xf32>
    %37 = vector.shape_cast %36 : vector<16xf32> to vector<16x1xf32>
    %38 = arith.addf %30, %37 : vector<16x1xf32>
    %c0_22 = arith.constant 0 : index
    %c0_23 = arith.constant 0 : index
    %39 = vector.load %arg9[%c0_22, %c0_23] : memref<16x1xf32, #tpu.memory_space<vmem>>, vector<16x1xf32>
    tpu.vector_store %arg9[%c0_22, %c0_23], %38 {strides = array<i32>} : memref<16x1xf32, #tpu.memory_space<vmem>>, vector<16x1xf32>,
    %c0_i32_24 = arith.constant 0 : i32
    %40 = arith.cmpi eq, %arg1, %c0_i32_24 : i32
    %41 = arith.extui %40 : i1 to i32
    %c0_i32_25 = arith.constant 0 : i32
    %42 = arith.cmpi ne, %41, %c0_i32_25 : i32
    scf.if %42 {
      %c0_26 = arith.constant 0 : index
      %c0_27 = arith.constant 0 : index
      %43 = vector.load %arg7[%c0_26, %c0_27] : memref<16x1xf32, #tpu.memory_space<vmem>>, vector<16x1xf32>
      %c0_28 = arith.constant 0 : index
      %c0_29 = arith.constant 0 : index
      %44 = vector.load %arg8[%c0_28, %c0_29] : memref<16x1xf32, #tpu.memory_space<vmem>>, vector<16x1xf32>
      %45 = math.log %44 : vector<16x1xf32>
      %46 = arith.addf %43, %45 : vector<16x1xf32>
      %c0_30 = arith.constant 0 : index
      %c0_31 = arith.constant 0 : index
      %47 = vector.load %arg9[%c0_30, %c0_31] : memref<16x1xf32, #tpu.memory_space<vmem>>, vector<16x1xf32>
      %48 = arith.subf %46, %47 : vector<16x1xf32>
      %c0_32 = arith.constant 0 : index
      %c0_33 = arith.constant 0 : index
      %49 = vector.load %arg5[%c0_32, %c0_33] : memref<16x1xf32, #tpu.memory_space<vmem>>, vector<16x1xf32>
      %50 = arith.mulf %48, %49 : vector<16x1xf32>
      %c0_34 = arith.constant 0 : index
      %c0_35 = arith.constant 0 : index
      %51 = vector.load %arg6[%c0_34, %c0_35] : memref<16x1xf32, #tpu.memory_space<vmem>>, vector<16x1xf32>
      tpu.vector_store %arg6[%c0_34, %c0_35], %50 {strides = array<i32>} : memref<16x1xf32, #tpu.memory_space<vmem>>, vector<16x1xf32>,
    } else {
    }
    return
  }
  func.func @transform_0(%arg0: i32, %arg1: i32) -> (i32, i32) {
    %c0_i32 = arith.constant 0 : i32
    %c0_i32_0 = arith.constant 0 : i32
    return %arg0, %c0_i32 : i32, i32
  }
  func.func @transform_1(%arg0: i32, %arg1: i32) -> (i32, i32) {
    %c0_i32 = arith.constant 0 : i32
    %c0_i32_0 = arith.constant 0 : i32
    return %c0_i32, %arg1 : i32, i32
  }
  func.func @transform_2(%arg0: i32, %arg1: i32) -> (i32, i32) {
    %c0_i32 = arith.constant 0 : i32
    %c0_i32_0 = arith.constant 0 : i32
    return %arg0, %c0_i32 : i32, i32
  }
  func.func @transform_3(%arg0: i32, %arg1: i32) -> (i32, i32) {
    %c0_i32 = arith.constant 0 : i32
    %c0_i32_0 = arith.constant 0 : i32
    return %arg0, %c0_i32 : i32, i32
  }
  func.func @transform_4(%arg0: i32, %arg1: i32) -> (i32, i32) {
    %c0_i32 = arith.constant 0 : i32
    %c0_i32_0 = arith.constant 0 : i32
    return %arg0, %c0_i32 : i32, i32
  }
}

</mosaic_0001>

<llo_original>
// kernel: seq2seq_forward.69
$region0: #{seq2seq_forward.69}
  #allocation0 [shape = 'u32[]', space=smem, size = 0x4, offset = 0x4, fixed_abs, tag = 'smem constant byte address 0x4 - core index']
  #allocation1 [shape = 'u32[144,128]{1,0:T(1,128)}', space=vmem, size = 0x12000, scoped, tag = 'internal scratch']
  #allocation2 [shape = 'f32[32,256]{1,0:T(8,128)}', space=vmem, size = 0x8000, scoped, tag = 'scratch operand']
  %s0 = inlined_call_operand.vmem [shape: bf16[32,128], index: 0, kind: input, shape index: {}]
  %s1 = inlined_call_operand.vmem [shape: bf16[128,256], index: 1, kind: input, shape index: {}]
  %s2 = inlined_call_operand.vmem [shape: f32[1,256], index: 2, kind: input, shape index: {}]
  %s3 = inlined_call_operand.vmem [shape: bf16[32,256], index: 3, kind: output, shape index: {}]
  %s4 = sld [smem:[#allocation0]]
  $region30: #{seq2seq_forward.69} parent=0
    _
  %s6 = ssub.s32 1, %s4
  %s7 = scalar_select 0, %s6, %s4
  // Predicated region
  $region2: #{seq2seq_forward.69} parent=0 // pred_check
    _
  $region3: #{seq2seq_forward.69} parent=0 // pred_check_branch
    %9 = sbr.rel (0) target = $region5
  $region4: #{seq2seq_forward.69} parent=0 // pred_region
    _
  $region5: #{seq2seq_forward.69} parent=0 // pred_fallthru
    _
  // Predicated region
  $region6: #{seq2seq_forward.69} parent=0 // pred_check
    _
  $region7: #{seq2seq_forward.69} parent=0 // pred_check_branch
    %11 = sbr.rel (0) target = $region9
  $region8: #{seq2seq_forward.69} parent=0 // pred_region
    _
  $region9: #{seq2seq_forward.69} parent=0 // pred_fallthru
    _
  // Predicated region
  $region10: #{seq2seq_forward.69} parent=0 // pred_check
    _
  $region11: #{seq2seq_forward.69} parent=0 // pred_check_branch
    %13 = sbr.rel (0) target = $region13
  $region12: #{seq2seq_forward.69} parent=0 // pred_region
    _
  $region13: #{seq2seq_forward.69} parent=0 // pred_fallthru
    _
  %p15 = scmp.eq.s32.totalorder 0, 0
  // Predicated region
  $region14: #{seq2seq_forward.69} parent=0 // pred_check
    %p16 = pneg %p15
  $region15: #{seq2seq_forward.69} parent=0 // pred_check_branch
    %18 = sbr.rel (%p16) target = $region17
  $region16: #{seq2seq_forward.69} parent=0 // pred_region
    %19 = vst [vmem:[#allocation2] sm:$0xff] 0.0
    %20 = vst [vmem:[#allocation2 + $0x8] sm:$0xff] 0.0
    %21 = vst [vmem:[#allocation2 + $0x10] sm:$0xff] 0.0
    %22 = vst [vmem:[#allocation2 + $0x18] sm:$0xff] 0.0
    %23 = vst [vmem:[#allocation2 + $0x20] sm:$0xff] 0.0
    %24 = vst [vmem:[#allocation2 + $0x28] sm:$0xff] 0.0
    %25 = vst [vmem:[#allocation2 + $0x30] sm:$0xff] 0.0
    %26 = vst [vmem:[#allocation2 + $0x38] sm:$0xff] 0.0
  $region17: #{seq2seq_forward.69} parent=0 // pred_fallthru
    _
  %v27 = vld [vmem:[#allocation2] sm:$0xff]
  %v28 = vld [vmem:[#allocation2 + $0x8] sm:$0xff]
  %v29 = vld [vmem:[#allocation2 + $0x10] sm:$0xff]
  %v30 = vld [vmem:[#allocation2 + $0x18] sm:$0xff]
  %v31 = vld [vmem:[#allocation2 + $0x20] sm:$0xff]
  %v32 = vld [vmem:[#allocation2 + $0x28] sm:$0xff]
  %v33 = vld [vmem:[#allocation2 + $0x30] sm:$0xff]
  %v34 = vld [vmem:[#allocation2 + $0x38] sm:$0xff]
  %v35 = vld [vmem:[%s0] sm:$0xf]
  %v36 = vld [vmem:[%s0 + $0x4] sm:$0xf]
  %v37 = vld [vmem:[%s0 + $0x8] sm:$0xf]
  %v38 = vld [vmem:[%s0 + $0xc] sm:$0xf]
  %v39 = vld [vmem:[%s1] sm:$0xff]
  %v40 = vld [vmem:[%s1 + $0x8] sm:$0xff]
  %v41 = vld [vmem:[%s1 + $0x10] sm:$0xff]
  %v42 = vld [vmem:[%s1 + $0x18] sm:$0xff]
  %v43 = vld [vmem:[%s1 + $0x20] sm:$0xff]
  %v44 = vld [vmem:[%s1 + $0x28] sm:$0xff]
  %v45 = vld [vmem:[%s1 + $0x30] sm:$0xff]
  %v46 = vld [vmem:[%s1 + $0x38] sm:$0xff]
  %v47 = vld [vmem:[%s1 + $0x40] sm:$0xff]
  %v48 = vld [vmem:[%s1 + $0x48] sm:$0xff]
  %v49 = vld [vmem:[%s1 + $0x50] sm:$0xff]
  %v50 = vld [vmem:[%s1 + $0x58] sm:$0xff]
  %v51 = vld [vmem:[%s1 + $0x60] sm:$0xff]
  %v52 = vld [vmem:[%s1 + $0x68] sm:$0xff]
  %v53 = vld [vmem:[%s1 + $0x70] sm:$0xff]
  %v54 = vld [vmem:[%s1 + $0x78] sm:$0xff]
  %v59 = vunpack.c.l.b16 %v35
  %v60 = vunpack.c.l.b16 %v36
  %v61 = vunpack.c.l.b16 %v37
  %v62 = vunpack.c.l.b16 %v38
  %v63 = vpack.c.b16 %v60, %v59
  %v64 = vpack.c.b16 %v62, %v61
  %v83 = vunpack.c.l.b16 %v39
  %v84 = vunpack.c.h.b16 %v39
  %v85 = vunpack.c.l.b16 %v40
  %v86 = vunpack.c.h.b16 %v40
  %v87 = vunpack.c.l.b16 %v41
  %v88 = vunpack.c.h.b16 %v41
  %v89 = vunpack.c.l.b16 %v42
  %v90 = vunpack.c.h.b16 %v42
  %v91 = vunpack.c.l.b16 %v43
  %v92 = vunpack.c.h.b16 %v43
  %v93 = vunpack.c.l.b16 %v44
  %v94 = vunpack.c.h.b16 %v44
  %v95 = vunpack.c.l.b16 %v45
  %v96 = vunpack.c.h.b16 %v45
  %v97 = vunpack.c.l.b16 %v46
  %v98 = vunpack.c.h.b16 %v46
  %v99 = vunpack.c.l.b16 %v47
  %v100 = vunpack.c.h.b16 %v47
  %v101 = vunpack.c.l.b16 %v48
  %v102 = vunpack.c.h.b16 %v48
  %v103 = vunpack.c.l.b16 %v49
  %v104 = vunpack.c.h.b16 %v49
  %v105 = vunpack.c.l.b16 %v50
  %v106 = vunpack.c.h.b16 %v50
  %v107 = vunpack.c.l.b16 %v51
  %v108 = vunpack.c.h.b16 %v51
  %v109 = vunpack.c.l.b16 %v52
  %v110 = vunpack.c.h.b16 %v52
  %v111 = vunpack.c.l.b16 %v53
  %v112 = vunpack.c.h.b16 %v53
  %v113 = vunpack.c.l.b16 %v54
  %v114 = vunpack.c.h.b16 %v54
  %v115 = vpack.c.b16 %v85, %v83
  %v116 = vpack.c.b16 %v86, %v84
  %v117 = vpack.c.b16 %v89, %v87
  %v118 = vpack.c.b16 %v90, %v88
  %v119 = vpack.c.b16 %v93, %v91
  %v120 = vpack.c.b16 %v94, %v92
  %v121 = vpack.c.b16 %v97, %v95
  %v122 = vpack.c.b16 %v98, %v96
  %v123 = vpack.c.b16 %v101, %v99
  %v124 = vpack.c.b16 %v102, %v100
  %v125 = vpack.c.b16 %v105, %v103
  %v126 = vpack.c.b16 %v106, %v104
  %v127 = vpack.c.b16 %v109, %v107
  %v128 = vpack.c.b16 %v110, %v108
  %v129 = vpack.c.b16 %v113, %v111
  %v130 = vpack.c.b16 %v114, %v112
  %147 = vmatprep.subr.bf16.mxu0 %v130
  %148 = vmatpush1.bf16.msra.mxu0 %v129
  %149 = vmatprep.subr.bf16.mxu0 %v128
  %150 = vmatpush1.bf16.msra.mxu0 %v127
  %151 = vmatprep.subr.bf16.mxu0 %v126
  %152 = vmatpush1.bf16.msra.mxu0 %v125
  %153 = vmatprep.subr.bf16.mxu0 %v124
  %154 = vmatpush1.bf16.msra.mxu0 %v123
  %155 = vmatprep.subr.bf16.mxu0 %v122
  %156 = vmatpush1.bf16.msra.mxu0 %v121
  %157 = vmatprep.subr.bf16.mxu0 %v120
  %158 = vmatpush1.bf16.msra.mxu0 %v119
  %159 = vmatprep.subr.bf16.mxu0 %v118
  %160 = vmatpush1.bf16.msra.mxu0 %v117
  %161 = vmatprep.subr.bf16.mxu0 %v116
  %162 = vmatpush1.bf16.msra.mxu0 %v115
  %163 = vmatprep.subr.bf16.mxu0 0
  %164 = vmatpush2.bf16.msra.mxu0 0
  %165 = vmatprep.subr.bf16.mxu0 0
  %166 = vmatpush2.bf16.msra.mxu0 0
  %167 = vmatprep.subr.bf16.mxu0 0
  %168 = vmatpush2.bf16.msra.mxu0 0
  %169 = vmatprep.subr.bf16.mxu0 0
  %170 = vmatpush2.bf16.msra.mxu0 0
  %171 = vmatprep.subr.bf16.mxu0 0
  %172 = vmatpush2.bf16.msra.mxu0 0
  %173 = vmatprep.subr.bf16.mxu0 0
  %174 = vmatpush2.bf16.msra.mxu0 0
  %175 = vmatprep.subr.bf16.mxu0 0
  %176 = vmatpush2.bf16.msra.mxu0 0
  %177 = vmatprep.subr.bf16.mxu0 0
  %178 = vmatpush2.bf16.msra.mxu0 0
  %179 = vmatprep.mubr.bf16.mxu0 0
  %180 = vmatmul.mubr.bf16.gmra.mxu0 %v63
  %v181 = vpop.f32.mrf.mxu0
  %v182 = vadd.f32 0.0, %v181
  %v183 = vpop.f32.mrf.mxu0
  %v184 = vadd.f32 0.0, %v183
  %v185 = vpop.f32.mrf.mxu0
  %v186 = vadd.f32 0.0, %v185
  %v187 = vpop.f32.mrf.mxu0
  %v188 = vadd.f32 0.0, %v187
  %189 = vmatprep.mubr.bf16.mxu0 0
  %190 = vmatmul.mubr.bf16.gmra.mxu0 %v64
  %v191 = vpop.f32.mrf.mxu0
  %v192 = vadd.f32 0.0, %v191
  %v193 = vpop.f32.mrf.mxu0
  %v194 = vadd.f32 0.0, %v193
  %v195 = vpop.f32.mrf.mxu0
  %v196 = vadd.f32 0.0, %v195
  %v197 = vpop.f32.mrf.mxu0
  %v198 = vadd.f32 0.0, %v197
  %199 = vdwg.mxu0
  %v200 = vadd.f32 %v27, %v182
  %v201 = vadd.f32 %v28, %v184
  %v202 = vadd.f32 %v29, %v186
  %v203 = vadd.f32 %v30, %v188
  %v204 = vadd.f32 %v31, %v192
  %v205 = vadd.f32 %v32, %v194
  %v206 = vadd.f32 %v33, %v196
  %v207 = vadd.f32 %v34, %v198
  %208 = vst [vmem:[#allocation2] sm:$0xff] %v200
  %209 = vst [vmem:[#allocation2 + $0x8] sm:$0xff] %v201
  %210 = vst [vmem:[#allocation2 + $0x10] sm:$0xff] %v202
  %211 = vst [vmem:[#allocation2 + $0x18] sm:$0xff] %v203
  %212 = vst [vmem:[#allocation2 + $0x20] sm:$0xff] %v204
  %213 = vst [vmem:[#allocation2 + $0x28] sm:$0xff] %v205
  %214 = vst [vmem:[#allocation2 + $0x30] sm:$0xff] %v206
  %215 = vst [vmem:[#allocation2 + $0x38] sm:$0xff] %v207
  // Predicated region
  $region18: #{seq2seq_forward.69} parent=0 // pred_check
    %p216 = pneg %p15
  $region19: #{seq2seq_forward.69} parent=0 // pred_check_branch
    %218 = sbr.rel (%p216) target = $region21
  $region20: #{seq2seq_forward.69} parent=0 // pred_region
    %v219 = vld [vmem:[#allocation2] sm:$0xff]
    %v220 = vld [vmem:[#allocation2 + $0x8] sm:$0xff]
    %v221 = vld [vmem:[#allocation2 + $0x10] sm:$0xff]
    %v222 = vld [vmem:[#allocation2 + $0x18] sm:$0xff]
    %v223 = vld [vmem:[#allocation2 + $0x20] sm:$0xff]
    %v224 = vld [vmem:[#allocation2 + $0x28] sm:$0xff]
    %v225 = vld [vmem:[#allocation2 + $0x30] sm:$0xff]
    %v226 = vld [vmem:[#allocation2 + $0x38] sm:$0xff]
    %v227 = vld [vmem:[%s2] sm:$0x3]
    %v229 = vlaneseq
    %v230 = vshrl.u32 %v229, 7
    %v231 = vsub.s32 0, %v230
    %v232 = vrot.slane %v227, %v231
    %v233 = vlaneseq
    %v234 = vshrl.u32 %v233, 7
    %v235 = vsub.s32 1, %v234
    %v236 = vrot.slane %v227, %v235
    %v239 = vadd.f32 %v219, %v232
    %v240 = vadd.f32 %v220, %v236
    %v241 = vadd.f32 %v221, %v232
    %v242 = vadd.f32 %v222, %v236
    %v243 = vadd.f32 %v223, %v232
    %v244 = vadd.f32 %v224, %v236
    %v245 = vadd.f32 %v225, %v232
    %v246 = vadd.f32 %v226, %v236
    %v247 = vpack.c.bf16 %v241, %v239
    %v248 = vpack.c.bf16 %v242, %v240
    %v249 = vpack.c.bf16 %v245, %v243
    %v250 = vpack.c.bf16 %v246, %v244
    %v255 = vunpack.c.l.b16 %v247
    %v256 = vunpack.c.l.b16 %v248
    %v257 = vunpack.c.h.b16 %v247
    %v258 = vunpack.c.h.b16 %v248
    %v259 = vunpack.c.l.b16 %v249
    %v260 = vunpack.c.l.b16 %v250
    %v261 = vunpack.c.h.b16 %v249
    %v262 = vunpack.c.h.b16 %v250
    %v263 = vpack.c.b16 %v256, %v255
    %v264 = vpack.c.b16 %v258, %v257
    %v265 = vpack.c.b16 %v260, %v259
    %v266 = vpack.c.b16 %v262, %v261
    %271 = vst [vmem:[%s3] sm:$0xff] %v263
    %272 = vst [vmem:[%s3 + $0x8] sm:$0xff] %v264
    %273 = vst [vmem:[%s3 + $0x10] sm:$0xff] %v265
    %274 = vst [vmem:[%s3 + $0x18] sm:$0xff] %v266
  $region21: #{seq2seq_forward.69} parent=0 // pred_fallthru
    _
  // Predicated region
  $region22: #{seq2seq_forward.69} parent=0 // pred_check
    _
  $region23: #{seq2seq_forward.69} parent=0 // pred_check_branch
    %276 = sbr.rel (0) target = $region25
  $region24: #{seq2seq_forward.69} parent=0 // pred_region
    _
  $region25: #{seq2seq_forward.69} parent=0 // pred_fallthru
    _
  // Predicated region
  $region26: #{seq2seq_forward.69} parent=0 // pred_check
    _
  $region27: #{seq2seq_forward.69} parent=0 // pred_check_branch
    %278 = sbr.rel (0) target = $region29
  $region28: #{seq2seq_forward.69} parent=0 // pred_region
    _
  $region29: #{seq2seq_forward.69} parent=0 // pred_fallthru
    _

// kernel: seq2seq_forward.68
$region0: #{seq2seq_forward.68}
  #allocation0 [shape = 'u32[]', space=smem, size = 0x4, offset = 0x4, fixed_abs, tag = 'smem constant byte address 0x4 - core index']
  #allocation1 [shape = 'u32[144,128]{1,0:T(1,128)}', space=vmem, size = 0x12000, scoped, tag = 'internal scratch']
  %s0 = inlined_call_operand.vmem [shape: f32[32,128], index: 0, kind: input, shape index: {}]
  %s1 = inlined_call_operand.vmem [shape: f32[1,128], index: 1, kind: input, shape index: {}]
  %s2 = inlined_call_operand.vmem [shape: f32[1,128], index: 2, kind: input, shape index: {}]
  %s3 = inlined_call_operand.vmem [shape: bf16[32,128], index: 3, kind: output, shape index: {}]
  %s4 = sld [smem:[#allocation0]]
  $region22: #{seq2seq_forward.68} parent=0
    _
  %s6 = ssub.s32 1, %s4
  %s7 = scalar_select 0, %s6, %s4
  // Predicated region
  $region2: #{seq2seq_forward.68} parent=0 // pred_check
    _
  $region3: #{seq2seq_forward.68} parent=0 // pred_check_branch
    %9 = sbr.rel (0) target = $region5
  $region4: #{seq2seq_forward.68} parent=0 // pred_region
    _
  $region5: #{seq2seq_forward.68} parent=0 // pred_fallthru
    _
  // Predicated region
  $region6: #{seq2seq_forward.68} parent=0 // pred_check
    _
  $region7: #{seq2seq_forward.68} parent=0 // pred_check_branch
    %11 = sbr.rel (0) target = $region9
  $region8: #{seq2seq_forward.68} parent=0 // pred_region
    _
  $region9: #{seq2seq_forward.68} parent=0 // pred_fallthru
    _
  // Predicated region
  $region10: #{seq2seq_forward.68} parent=0 // pred_check
    _
  $region11: #{seq2seq_forward.68} parent=0 // pred_check_branch
    %13 = sbr.rel (0) target = $region13
  $region12: #{seq2seq_forward.68} parent=0 // pred_region
    _
  $region13: #{seq2seq_forward.68} parent=0 // pred_fallthru
    _
  %v14 = vld [vmem:[%s0] sm:$0xff]
  %v15 = vld [vmem:[%s0 + $0x8] sm:$0xff]
  %v16 = vld [vmem:[%s0 + $0x10] sm:$0xff]
  %v17 = vld [vmem:[%s0 + $0x18] sm:$0xff]
  %18 = vadd.xlane.f32.xlu0 %v14
  %v19 = vpop.xlane.xlu0 %18
  %20 = vadd.xlane.f32.xlu0 %v15
  %v21 = vpop.xlane.xlu0 %20
  %22 = vadd.xlane.f32.xlu0 %v16
  %v23 = vpop.xlane.xlu0 %22
  %24 = vadd.xlane.f32.xlu0 %v17
  %v25 = vpop.xlane.xlu0 %24
  %v26 = vmul.f32 %v19, 0.015625
  %v27 = vmul.f32 %v21, 0.015625
  %v28 = vmul.f32 %v23, 0.015625
  %v29 = vmul.f32 %v25, 0.015625
  %v30 = vmul.f32 %v14, %v14
  %v31 = vmul.f32 %v15, %v15
  %v32 = vmul.f32 %v16, %v16
  %v33 = vmul.f32 %v17, %v17
  %34 = vadd.xlane.f32.xlu0 %v30
  %v35 = vpop.xlane.xlu0 %34
  %36 = vadd.xlane.f32.xlu0 %v31
  %v37 = vpop.xlane.xlu0 %36
  %38 = vadd.xlane.f32.xlu0 %v32
  %v39 = vpop.xlane.xlu0 %38
  %40 = vadd.xlane.f32.xlu0 %v33
  %v41 = vpop.xlane.xlu0 %40
  %v42 = vmul.f32 %v35, 0.015625
  %v43 = vmul.f32 %v37, 0.015625
  %v44 = vmul.f32 %v39, 0.015625
  %v45 = vmul.f32 %v41, 0.015625
  %v46 = vmul.f32 %v26, %v26
  %v47 = vmul.f32 %v27, %v27
  %v48 = vmul.f32 %v28, %v28
  %v49 = vmul.f32 %v29, %v29
  %v50 = vsub.f32 %v42, %v46
  %v51 = vsub.f32 %v43, %v47
  %v52 = vsub.f32 %v44, %v48
  %v53 = vsub.f32 %v45, %v49
  %v54 = vmax.f32 %v50, 0.0
  %v55 = vmax.f32 %v51, 0.0
  %v56 = vmax.f32 %v52, 0.0
  %v57 = vmax.f32 %v53, 0.0
  %v58 = vsub.f32 %v14, %v26
  %v59 = vsub.f32 %v15, %v27
  %v60 = vsub.f32 %v16, %v28
  %v61 = vsub.f32 %v17, %v29
  %v62 = vadd.f32 %v54, 1e-12
  %v63 = vadd.f32 %v55, 1e-12
  %v64 = vadd.f32 %v56, 1e-12
  %v65 = vadd.f32 %v57, 1e-12
  %v66 = vrsqrt.pop %v62
  %v67 = vrsqrt.pop %v63
  %v68 = vrsqrt.pop %v64
  %v69 = vrsqrt.pop %v65
  %v70 = vmul.f32 %v58, %v66
  %v71 = vmul.f32 %v59, %v67
  %v72 = vmul.f32 %v60, %v68
  %v73 = vmul.f32 %v61, %v69
  %v74 = vld [vmem:[%s1] sm:$0x1]
  %v76 = vlaneseq
  %v77 = vshrl.u32 %v76, 7
  %v78 = vsub.s32 0, %v77
  %v79 = vrot.slane %v74, %v78
  %v81 = vmul.f32 %v70, %v79
  %v82 = vmul.f32 %v71, %v79
  %v83 = vmul.f32 %v72, %v79
  %v84 = vmul.f32 %v73, %v79
  %v85 = vld [vmem:[%s2] sm:$0x1]
  %v87 = vlaneseq
  %v88 = vshrl.u32 %v87, 7
  %v89 = vsub.s32 0, %v88
  %v90 = vrot.slane %v85, %v89
  %v92 = vadd.f32 %v81, %v90
  %v93 = vadd.f32 %v82, %v90
  %v94 = vadd.f32 %v83, %v90
  %v95 = vadd.f32 %v84, %v90
  %v96 = vpack.c.bf16 %v93, %v92
  %v97 = vpack.c.bf16 %v95, %v94
  %v100 = vunpack.c.l.b16 %v96
  %v101 = vunpack.c.h.b16 %v96
  %v102 = vunpack.c.l.b16 %v97
  %v103 = vunpack.c.h.b16 %v97
  %v104 = vpack.c.b16 %v100, %v100
  %v105 = vpack.c.b16 %v101, %v101
  %v106 = vpack.c.b16 %v102, %v102
  %v107 = vpack.c.b16 %v103, %v103
  %112 = vst [vmem:[%s3] sm:$0xf] %v104
  %113 = vst [vmem:[%s3 + $0x4] sm:$0xf] %v105
  %114 = vst [vmem:[%s3 + $0x8] sm:$0xf] %v106
  %115 = vst [vmem:[%s3 + $0xc] sm:$0xf] %v107
  // Predicated region
  $region14: #{seq2seq_forward.68} parent=0 // pred_check
    _
  $region15: #{seq2seq_forward.68} parent=0 // pred_check_branch
    %117 = sbr.rel (0) target = $region17
  $region16: #{seq2seq_forward.68} parent=0 // pred_region
    _
  $region17: #{seq2seq_forward.68} parent=0 // pred_fallthru
    _
  // Predicated region
  $region18: #{seq2seq_forward.68} parent=0 // pred_check
    _
  $region19: #{seq2seq_forward.68} parent=0 // pred_check_branch
    %119 = sbr.rel (0) target = $region21
  $region20: #{seq2seq_forward.68} parent=0 // pred_region
    _
  $region21: #{seq2seq_forward.68} parent=0 // pred_fallthru
    _

// kernel: seq2seq_forward.71
$region0: #{seq2seq_forward.71}
  #allocation0 [shape = 'u32[]', space=smem, size = 0x4, offset = 0x4, fixed_abs, tag = 'smem constant byte address 0x4 - core index']
  #allocation1 [shape = 'u32[144,128]{1,0:T(1,128)}', space=vmem, size = 0x12000, scoped, tag = 'internal scratch']
  #allocation2 [shape = 'f32[32,128]{1,0:T(8,128)}', space=vmem, size = 0x4000, scoped, tag = 'scratch operand']
  %s0 = inlined_call_operand.vmem [shape: bf16[32,128], index: 0, kind: input, shape index: {}]
  %s1 = inlined_call_operand.vmem [shape: bf16[128,128], index: 1, kind: input, shape index: {}]
  %s2 = inlined_call_operand.vmem [shape: f32[1,128], index: 2, kind: input, shape index: {}, may-alias: {2,5}]
  %s3 = inlined_call_operand.vmem [shape: bf16[32,128], index: 3, kind: input, shape index: {}]
  %s4 = inlined_call_operand.vmem [shape: f32[1,128], index: 4, kind: input, shape index: {}]
  %s5 = inlined_call_operand.vmem [shape: f32[1,128], index: 5, kind: input, shape index: {}, may-alias: {2,5}]
  %s6 = inlined_call_operand.vmem [shape: bf16[32,128], index: 6, kind: output, shape index: {}]
  %s7 = sld [smem:[#allocation0]]
  $region42: #{seq2seq_forward.71} parent=0
    _
  %s9 = ssub.s32 1, %s7
  %s10 = scalar_select 0, %s9, %s7
  // Predicated region
  $region2: #{seq2seq_forward.71} parent=0 // pred_check
    _
  $region3: #{seq2seq_forward.71} parent=0 // pred_check_branch
    %12 = sbr.rel (0) target = $region5
  $region4: #{seq2seq_forward.71} parent=0 // pred_region
    _
  $region5: #{seq2seq_forward.71} parent=0 // pred_fallthru
    _
  // Predicated region
  $region6: #{seq2seq_forward.71} parent=0 // pred_check
    _
  $region7: #{seq2seq_forward.71} parent=0 // pred_check_branch
    %14 = sbr.rel (0) target = $region9
  $region8: #{seq2seq_forward.71} parent=0 // pred_region
    _
  $region9: #{seq2seq_forward.71} parent=0 // pred_fallthru
    _
  // Predicated region
  $region10: #{seq2seq_forward.71} parent=0 // pred_check
    _
  $region11: #{seq2seq_forward.71} parent=0 // pred_check_branch
    %16 = sbr.rel (0) target = $region13
  $region12: #{seq2seq_forward.71} parent=0 // pred_region
    _
  $region13: #{seq2seq_forward.71} parent=0 // pred_fallthru
    _
  // Predicated region
  $region14: #{seq2seq_forward.71} parent=0 // pred_check
    _
  $region15: #{seq2seq_forward.71} parent=0 // pred_check_branch
    %18 = sbr.rel (0) target = $region17
  $region16: #{seq2seq_forward.71} parent=0 // pred_region
    _
  $region17: #{seq2seq_forward.71} parent=0 // pred_fallthru
    _
  // Predicated region
  $region18: #{seq2seq_forward.71} parent=0 // pred_check
    _
  $region19: #{seq2seq_forward.71} parent=0 // pred_check_branch
    %20 = sbr.rel (0) target = $region21
  $region20: #{seq2seq_forward.71} parent=0 // pred_region
    _
  $region21: #{seq2seq_forward.71} parent=0 // pred_fallthru
    _
  // Predicated region
  $region22: #{seq2seq_forward.71} parent=0 // pred_check
    _
  $region23: #{seq2seq_forward.71} parent=0 // pred_check_branch
    %22 = sbr.rel (0) target = $region25
  $region24: #{seq2seq_forward.71} parent=0 // pred_region
    _
  $region25: #{seq2seq_forward.71} parent=0 // pred_fallthru
    _
  %p24 = scmp.eq.s32.totalorder 0, 0
  // Predicated region
  $region26: #{seq2seq_forward.71} parent=0 // pred_check
    %p25 = pneg %p24
  $region27: #{seq2seq_forward.71} parent=0 // pred_check_branch
    %27 = sbr.rel (%p25) target = $region29
  $region28: #{seq2seq_forward.71} parent=0 // pred_region
    %28 = vst [vmem:[#allocation2] sm:$0xff] 0.0
    %29 = vst [vmem:[#allocation2 + $0x8] sm:$0xff] 0.0
    %30 = vst [vmem:[#allocation2 + $0x10] sm:$0xff] 0.0
    %31 = vst [vmem:[#allocation2 + $0x18] sm:$0xff] 0.0
  $region29: #{seq2seq_forward.71} parent=0 // pred_fallthru
    _
  %v32 = vld [vmem:[#allocation2] sm:$0xff]
  %v33 = vld [vmem:[#allocation2 + $0x8] sm:$0xff]
  %v34 = vld [vmem:[#allocation2 + $0x10] sm:$0xff]
  %v35 = vld [vmem:[#allocation2 + $0x18] sm:$0xff]
  %v36 = vld [vmem:[%s0] sm:$0xf]
  %v37 = vld [vmem:[%s0 + $0x4] sm:$0xf]
  %v38 = vld [vmem:[%s0 + $0x8] sm:$0xf]
  %v39 = vld [vmem:[%s0 + $0xc] sm:$0xf]
  %v40 = vld [vmem:[%s1] sm:$0xf]
  %v41 = vld [vmem:[%s1 + $0x4] sm:$0xf]
  %v42 = vld [vmem:[%s1 + $0x8] sm:$0xf]
  %v43 = vld [vmem:[%s1 + $0xc] sm:$0xf]
  %v44 = vld [vmem:[%s1 + $0x10] sm:$0xf]
  %v45 = vld [vmem:[%s1 + $0x14] sm:$0xf]
  %v46 = vld [vmem:[%s1 + $0x18] sm:$0xf]
  %v47 = vld [vmem:[%s1 + $0x1c] sm:$0xf]
  %v48 = vld [vmem:[%s1 + $0x20] sm:$0xf]
  %v49 = vld [vmem:[%s1 + $0x24] sm:$0xf]
  %v50 = vld [vmem:[%s1 + $0x28] sm:$0xf]
  %v51 = vld [vmem:[%s1 + $0x2c] sm:$0xf]
  %v52 = vld [vmem:[%s1 + $0x30] sm:$0xf]
  %v53 = vld [vmem:[%s1 + $0x34] sm:$0xf]
  %v54 = vld [vmem:[%s1 + $0x38] sm:$0xf]
  %v55 = vld [vmem:[%s1 + $0x3c] sm:$0xf]
  %v60 = vunpack.c.l.b16 %v36
  %v61 = vunpack.c.l.b16 %v37
  %v62 = vunpack.c.l.b16 %v38
  %v63 = vunpack.c.l.b16 %v39
  %v64 = vpack.c.b16 %v61, %v60
  %v65 = vpack.c.b16 %v63, %v62
  %v84 = vunpack.c.l.b16 %v40
  %v85 = vunpack.c.l.b16 %v41
  %v86 = vunpack.c.l.b16 %v42
  %v87 = vunpack.c.l.b16 %v43
  %v88 = vunpack.c.l.b16 %v44
  %v89 = vunpack.c.l.b16 %v45
  %v90 = vunpack.c.l.b16 %v46
  %v91 = vunpack.c.l.b16 %v47
  %v92 = vunpack.c.l.b16 %v48
  %v93 = vunpack.c.l.b16 %v49
  %v94 = vunpack.c.l.b16 %v50
  %v95 = vunpack.c.l.b16 %v51
  %v96 = vunpack.c.l.b16 %v52
  %v97 = vunpack.c.l.b16 %v53
  %v98 = vunpack.c.l.b16 %v54
  %v99 = vunpack.c.l.b16 %v55
  %v100 = vpack.c.b16 %v85, %v84
  %v101 = vpack.c.b16 %v87, %v86
  %v102 = vpack.c.b16 %v89, %v88
  %v103 = vpack.c.b16 %v91, %v90
  %v104 = vpack.c.b16 %v93, %v92
  %v105 = vpack.c.b16 %v95, %v94
  %v106 = vpack.c.b16 %v97, %v96
  %v107 = vpack.c.b16 %v99, %v98
  %116 = vmatprep.subr.bf16.mxu0 0
  %117 = vmatpush1.bf16.msra.mxu0 %v107
  %118 = vmatprep.subr.bf16.mxu0 0
  %119 = vmatpush1.bf16.msra.mxu0 %v106
  %120 = vmatprep.subr.bf16.mxu0 0
  %121 = vmatpush1.bf16.msra.mxu0 %v105
  %122 = vmatprep.subr.bf16.mxu0 0
  %123 = vmatpush1.bf16.msra.mxu0 %v104
  %124 = vmatprep.subr.bf16.mxu0 0
  %125 = vmatpush1.bf16.msra.mxu0 %v103
  %126 = vmatprep.subr.bf16.mxu0 0
  %127 = vmatpush1.bf16.msra.mxu0 %v102
  %128 = vmatprep.subr.bf16.mxu0 0
  %129 = vmatpush1.bf16.msra.mxu0 %v101
  %130 = vmatprep.subr.bf16.mxu0 0
  %131 = vmatpush1.bf16.msra.mxu0 %v100
  %132 = vmatprep.subr.bf16.mxu0 0
  %133 = vmatpush2.bf16.msra.mxu0 0
  %134 = vmatprep.subr.bf16.mxu0 0
  %135 = vmatpush2.bf16.msra.mxu0 0
  %136 = vmatprep.subr.bf16.mxu0 0
  %137 = vmatpush2.bf16.msra.mxu0 0
  %138 = vmatprep.subr.bf16.mxu0 0
  %139 = vmatpush2.bf16.msra.mxu0 0
  %140 = vmatprep.subr.bf16.mxu0 0
  %141 = vmatpush2.bf16.msra.mxu0 0
  %142 = vmatprep.subr.bf16.mxu0 0
  %143 = vmatpush2.bf16.msra.mxu0 0
  %144 = vmatprep.subr.bf16.mxu0 0
  %145 = vmatpush2.bf16.msra.mxu0 0
  %146 = vmatprep.subr.bf16.mxu0 0
  %147 = vmatpush2.bf16.msra.mxu0 0
  %148 = vmatprep.mubr.bf16.mxu0 0
  %149 = vmatmul.mubr.bf16.gmra.mxu0 %v64
  %v150 = vpop.f32.mrf.mxu0
  %v151 = vadd.f32 0.0, %v150
  %v152 = vpop.f32.mrf.mxu0
  %v153 = vpop.f32.mrf.mxu0
  %v154 = vadd.f32 0.0, %v153
  %v155 = vpop.f32.mrf.mxu0
  %156 = vmatprep.mubr.bf16.mxu0 0
  %157 = vmatmul.mubr.bf16.gmra.mxu0 %v65
  %v158 = vpop.f32.mrf.mxu0
  %v159 = vadd.f32 0.0, %v158
  %v160 = vpop.f32.mrf.mxu0
  %v161 = vpop.f32.mrf.mxu0
  %v162 = vadd.f32 0.0, %v161
  %v163 = vpop.f32.mrf.mxu0
  %164 = vdwg.mxu0
  %v165 = vadd.f32 %v32, %v151
  %v166 = vadd.f32 %v33, %v154
  %v167 = vadd.f32 %v34, %v159
  %v168 = vadd.f32 %v35, %v162
  %169 = vst [vmem:[#allocation2] sm:$0xff] %v165
  %170 = vst [vmem:[#allocation2 + $0x8] sm:$0xff] %v166
  %171 = vst [vmem:[#allocation2 + $0x10] sm:$0xff] %v167
  %172 = vst [vmem:[#allocation2 + $0x18] sm:$0xff] %v168
  // Predicated region
  $region30: #{seq2seq_forward.71} parent=0 // pred_check
    %p173 = pneg %p24
  $region31: #{seq2seq_forward.71} parent=0 // pred_check_branch
    %175 = sbr.rel (%p173) target = $region33
  $region32: #{seq2seq_forward.71} parent=0 // pred_region
    %v176 = vld [vmem:[#allocation2] sm:$0xff]
    %v177 = vld [vmem:[#allocation2 + $0x8] sm:$0xff]
    %v178 = vld [vmem:[#allocation2 + $0x10] sm:$0xff]
    %v179 = vld [vmem:[#allocation2 + $0x18] sm:$0xff]
    %v180 = vld [vmem:[%s2] sm:$0x1]
    %v182 = vlaneseq
    %v183 = vshrl.u32 %v182, 7
    %v184 = vsub.s32 0, %v183
    %v185 = vrot.slane %v180, %v184
    %v187 = vadd.f32 %v176, %v185
    %v188 = vadd.f32 %v177, %v185
    %v189 = vadd.f32 %v178, %v185
    %v190 = vadd.f32 %v179, %v185
    %v191 = vld [vmem:[%s3] sm:$0xf]
    %v192 = vld [vmem:[%s3 + $0x4] sm:$0xf]
    %v193 = vld [vmem:[%s3 + $0x8] sm:$0xf]
    %v194 = vld [vmem:[%s3 + $0xc] sm:$0xf]
    %v195 = vunpack.c.l.bf16 %v191
    %v196 = vunpack.c.l.bf16 %v192
    %v197 = vunpack.c.l.bf16 %v193
    %v198 = vunpack.c.l.bf16 %v194
    %v199 = vadd.f32 %v187, %v195
    %v200 = vadd.f32 %v188, %v196
    %v201 = vadd.f32 %v189, %v197
    %v202 = vadd.f32 %v190, %v198
    %203 = vadd.xlane.f32.xlu0 %v199
    %v204 = vpop.xlane.xlu0 %203
    %205 = vadd.xlane.f32.xlu0 %v200
    %v206 = vpop.xlane.xlu0 %205
    %207 = vadd.xlane.f32.xlu0 %v201
    %v208 = vpop.xlane.xlu0 %207
    %209 = vadd.xlane.f32.xlu0 %v202
    %v210 = vpop.xlane.xlu0 %209
    %v211 = vmul.f32 %v204, 0.015625
    %v212 = vmul.f32 %v206, 0.015625
    %v213 = vmul.f32 %v208, 0.015625
    %v214 = vmul.f32 %v210, 0.015625
    %v215 = vmul.f32 %v199, %v199
    %v216 = vmul.f32 %v200, %v200
    %v217 = vmul.f32 %v201, %v201
    %v218 = vmul.f32 %v202, %v202
    %219 = vadd.xlane.f32.xlu0 %v215
    %v220 = vpop.xlane.xlu0 %219
    %221 = vadd.xlane.f32.xlu0 %v216
    %v222 = vpop.xlane.xlu0 %221
    %223 = vadd.xlane.f32.xlu0 %v217
    %v224 = vpop.xlane.xlu0 %223
    %225 = vadd.xlane.f32.xlu0 %v218
    %v226 = vpop.xlane.xlu0 %225
    %v227 = vmul.f32 %v220, 0.015625
    %v228 = vmul.f32 %v222, 0.015625
    %v229 = vmul.f32 %v224, 0.015625
    %v230 = vmul.f32 %v226, 0.015625
    %v231 = vmul.f32 %v211, %v211
    %v232 = vmul.f32 %v212, %v212
    %v233 = vmul.f32 %v213, %v213
    %v234 = vmul.f32 %v214, %v214
    %v235 = vsub.f32 %v227, %v231
    %v236 = vsub.f32 %v228, %v232
    %v237 = vsub.f32 %v229, %v233
    %v238 = vsub.f32 %v230, %v234
    %v239 = vmax.f32 %v235, 0.0
    %v240 = vmax.f32 %v236, 0.0
    %v241 = vmax.f32 %v237, 0.0
    %v242 = vmax.f32 %v238, 0.0
    %v243 = vsub.f32 %v199, %v211
    %v244 = vsub.f32 %v200, %v212
    %v245 = vsub.f32 %v201, %v213
    %v246 = vsub.f32 %v202, %v214
    %v247 = vadd.f32 %v239, 1e-12
    %v248 = vadd.f32 %v240, 1e-12
    %v249 = vadd.f32 %v241, 1e-12
    %v250 = vadd.f32 %v242, 1e-12
    %v251 = vrsqrt.pop %v247
    %v252 = vrsqrt.pop %v248
    %v253 = vrsqrt.pop %v249
    %v254 = vrsqrt.pop %v250
    %v255 = vmul.f32 %v243, %v251
    %v256 = vmul.f32 %v244, %v252
    %v257 = vmul.f32 %v245, %v253
    %v258 = vmul.f32 %v246, %v254
    %v259 = vld [vmem:[%s4] sm:$0x1]
    %v261 = vlaneseq
    %v262 = vshrl.u32 %v261, 7
    %v263 = vsub.s32 0, %v262
    %v264 = vrot.slane %v259, %v263
    %v266 = vmul.f32 %v255, %v264
    %v267 = vmul.f32 %v256, %v264
    %v268 = vmul.f32 %v257, %v264
    %v269 = vmul.f32 %v258, %v264
    %v270 = vld [vmem:[%s5] sm:$0x1]
    %v272 = vlaneseq
    %v273 = vshrl.u32 %v272, 7
    %v274 = vsub.s32 0, %v273
    %v275 = vrot.slane %v270, %v274
    %v277 = vadd.f32 %v266, %v275
    %v278 = vadd.f32 %v267, %v275
    %v279 = vadd.f32 %v268, %v275
    %v280 = vadd.f32 %v269, %v275
    %v281 = vpack.c.bf16 %v278, %v277
    %v282 = vpack.c.bf16 %v280, %v279
    %v285 = vunpack.c.l.b16 %v281
    %v286 = vunpack.c.h.b16 %v281
    %v287 = vunpack.c.l.b16 %v282
    %v288 = vunpack.c.h.b16 %v282
    %v289 = vpack.c.b16 %v285, %v285
    %v290 = vpack.c.b16 %v286, %v286
    %v291 = vpack.c.b16 %v287, %v287
    %v292 = vpack.c.b16 %v288, %v288
    %297 = vst [vmem:[%s6] sm:$0xf] %v289
    %298 = vst [vmem:[%s6 + $0x4] sm:$0xf] %v290
    %299 = vst [vmem:[%s6 + $0x8] sm:$0xf] %v291
    %300 = vst [vmem:[%s6 + $0xc] sm:$0xf] %v292
  $region33: #{seq2seq_forward.71} parent=0 // pred_fallthru
    _
  // Predicated region
  $region34: #{seq2seq_forward.71} parent=0 // pred_check
    _
  $region35: #{seq2seq_forward.71} parent=0 // pred_check_branch
    %302 = sbr.rel (0) target = $region37
  $region36: #{seq2seq_forward.71} parent=0 // pred_region
    _
  $region37: #{seq2seq_forward.71} parent=0 // pred_fallthru
    _
  // Predicated region
  $region38: #{seq2seq_forward.71} parent=0 // pred_check
    _
  $region39: #{seq2seq_forward.71} parent=0 // pred_check_branch
    %304 = sbr.rel (0) target = $region41
  $region40: #{seq2seq_forward.71} parent=0 // pred_region
    _
  $region41: #{seq2seq_forward.71} parent=0 // pred_fallthru
    _

// kernel: seq2seq_forward.84
$region0: #{seq2seq_forward.84}
  #allocation0 [shape = 'u32[]', space=smem, size = 0x4, offset = 0x4, fixed_abs, tag = 'smem constant byte address 0x4 - core index']
  #allocation1 [shape = 'u32[144,128]{1,0:T(1,128)}', space=vmem, size = 0x12000, scoped, tag = 'internal scratch']
  #allocation2 [shape = 'f32[32,128]{1,0:T(8,128)}', space=vmem, size = 0x4000, scoped, tag = 'scratch operand']
  %s0 = inlined_call_operand.vmem [shape: bf16[32,128], index: 0, kind: input, shape index: {}]
  %s1 = inlined_call_operand.vmem [shape: bf16[128,128], index: 1, kind: input, shape index: {}]
  %s2 = inlined_call_operand.vmem [shape: f32[1,128], index: 2, kind: input, shape index: {}]
  %s3 = inlined_call_operand.vmem [shape: bf16[32,128], index: 3, kind: output, shape index: {}]
  %s4 = sld [smem:[#allocation0]]
  $region30: #{seq2seq_forward.84} parent=0
    _
  %s6 = ssub.s32 1, %s4
  %s7 = scalar_select 0, %s6, %s4
  // Predicated region
  $region2: #{seq2seq_forward.84} parent=0 // pred_check
    _
  $region3: #{seq2seq_forward.84} parent=0 // pred_check_branch
    %9 = sbr.rel (0) target = $region5
  $region4: #{seq2seq_forward.84} parent=0 // pred_region
    _
  $region5: #{seq2seq_forward.84} parent=0 // pred_fallthru
    _
  // Predicated region
  $region6: #{seq2seq_forward.84} parent=0 // pred_check
    _
  $region7: #{seq2seq_forward.84} parent=0 // pred_check_branch
    %11 = sbr.rel (0) target = $region9
  $region8: #{seq2seq_forward.84} parent=0 // pred_region
    _
  $region9: #{seq2seq_forward.84} parent=0 // pred_fallthru
    _
  // Predicated region
  $region10: #{seq2seq_forward.84} parent=0 // pred_check
    _
  $region11: #{seq2seq_forward.84} parent=0 // pred_check_branch
    %13 = sbr.rel (0) target = $region13
  $region12: #{seq2seq_forward.84} parent=0 // pred_region
    _
  $region13: #{seq2seq_forward.84} parent=0 // pred_fallthru
    _
  %p15 = scmp.eq.s32.totalorder 0, 0
  // Predicated region
  $region14: #{seq2seq_forward.84} parent=0 // pred_check
    %p16 = pneg %p15
  $region15: #{seq2seq_forward.84} parent=0 // pred_check_branch
    %18 = sbr.rel (%p16) target = $region17
  $region16: #{seq2seq_forward.84} parent=0 // pred_region
    %19 = vst [vmem:[#allocation2] sm:$0xff] 0.0
    %20 = vst [vmem:[#allocation2 + $0x8] sm:$0xff] 0.0
    %21 = vst [vmem:[#allocation2 + $0x10] sm:$0xff] 0.0
    %22 = vst [vmem:[#allocation2 + $0x18] sm:$0xff] 0.0
  $region17: #{seq2seq_forward.84} parent=0 // pred_fallthru
    _
  %v23 = vld [vmem:[#allocation2] sm:$0xff]
  %v24 = vld [vmem:[#allocation2 + $0x8] sm:$0xff]
  %v25 = vld [vmem:[#allocation2 + $0x10] sm:$0xff]
  %v26 = vld [vmem:[#allocation2 + $0x18] sm:$0xff]
  %v27 = vld [vmem:[%s0] sm:$0xf]
  %v28 = vld [vmem:[%s0 + $0x4] sm:$0xf]
  %v29 = vld [vmem:[%s0 + $0x8] sm:$0xf]
  %v30 = vld [vmem:[%s0 + $0xc] sm:$0xf]
  %v31 = vld [vmem:[%s1] sm:$0xf]
  %v32 = vld [vmem:[%s1 + $0x4] sm:$0xf]
  %v33 = vld [vmem:[%s1 + $0x8] sm:$0xf]
  %v34 = vld [vmem:[%s1 + $0xc] sm:$0xf]
  %v35 = vld [vmem:[%s1 + $0x10] sm:$0xf]
  %v36 = vld [vmem:[%s1 + $0x14] sm:$0xf]
  %v37 = vld [vmem:[%s1 + $0x18] sm:$0xf]
  %v38 = vld [vmem:[%s1 + $0x1c] sm:$0xf]
  %v39 = vld [vmem:[%s1 + $0x20] sm:$0xf]
  %v40 = vld [vmem:[%s1 + $0x24] sm:$0xf]
  %v41 = vld [vmem:[%s1 + $0x28] sm:$0xf]
  %v42 = vld [vmem:[%s1 + $0x2c] sm:$0xf]
  %v43 = vld [vmem:[%s1 + $0x30] sm:$0xf]
  %v44 = vld [vmem:[%s1 + $0x34] sm:$0xf]
  %v45 = vld [vmem:[%s1 + $0x38] sm:$0xf]
  %v46 = vld [vmem:[%s1 + $0x3c] sm:$0xf]
  %v51 = vunpack.c.l.b16 %v27
  %v52 = vunpack.c.l.b16 %v28
  %v53 = vunpack.c.l.b16 %v29
  %v54 = vunpack.c.l.b16 %v30
  %v55 = vpack.c.b16 %v52, %v51
  %v56 = vpack.c.b16 %v54, %v53
  %v75 = vunpack.c.l.b16 %v31
  %v76 = vunpack.c.l.b16 %v32
  %v77 = vunpack.c.l.b16 %v33
  %v78 = vunpack.c.l.b16 %v34
  %v79 = vunpack.c.l.b16 %v35
  %v80 = vunpack.c.l.b16 %v36
  %v81 = vunpack.c.l.b16 %v37
  %v82 = vunpack.c.l.b16 %v38
  %v83 = vunpack.c.l.b16 %v39
  %v84 = vunpack.c.l.b16 %v40
  %v85 = vunpack.c.l.b16 %v41
  %v86 = vunpack.c.l.b16 %v42
  %v87 = vunpack.c.l.b16 %v43
  %v88 = vunpack.c.l.b16 %v44
  %v89 = vunpack.c.l.b16 %v45
  %v90 = vunpack.c.l.b16 %v46
  %v91 = vpack.c.b16 %v76, %v75
  %v92 = vpack.c.b16 %v78, %v77
  %v93 = vpack.c.b16 %v80, %v79
  %v94 = vpack.c.b16 %v82, %v81
  %v95 = vpack.c.b16 %v84, %v83
  %v96 = vpack.c.b16 %v86, %v85
  %v97 = vpack.c.b16 %v88, %v87
  %v98 = vpack.c.b16 %v90, %v89
  %107 = vmatprep.subr.bf16.mxu0 0
  %108 = vmatpush1.bf16.msra.mxu0 %v98
  %109 = vmatprep.subr.bf16.mxu0 0
  %110 = vmatpush1.bf16.msra.mxu0 %v97
  %111 = vmatprep.subr.bf16.mxu0 0
  %112 = vmatpush1.bf16.msra.mxu0 %v96
  %113 = vmatprep.subr.bf16.mxu0 0
  %114 = vmatpush1.bf16.msra.mxu0 %v95
  %115 = vmatprep.subr.bf16.mxu0 0
  %116 = vmatpush1.bf16.msra.mxu0 %v94
  %117 = vmatprep.subr.bf16.mxu0 0
  %118 = vmatpush1.bf16.msra.mxu0 %v93
  %119 = vmatprep.subr.bf16.mxu0 0
  %120 = vmatpush1.bf16.msra.mxu0 %v92
  %121 = vmatprep.subr.bf16.mxu0 0
  %122 = vmatpush1.bf16.msra.mxu0 %v91
  %123 = vmatprep.subr.bf16.mxu0 0
  %124 = vmatpush2.bf16.msra.mxu0 0
  %125 = vmatprep.subr.bf16.mxu0 0
  %126 = vmatpush2.bf16.msra.mxu0 0
  %127 = vmatprep.subr.bf16.mxu0 0
  %128 = vmatpush2.bf16.msra.mxu0 0
  %129 = vmatprep.subr.bf16.mxu0 0
  %130 = vmatpush2.bf16.msra.mxu0 0
  %131 = vmatprep.subr.bf16.mxu0 0
  %132 = vmatpush2.bf16.msra.mxu0 0
  %133 = vmatprep.subr.bf16.mxu0 0
  %134 = vmatpush2.bf16.msra.mxu0 0
  %135 = vmatprep.subr.bf16.mxu0 0
  %136 = vmatpush2.bf16.msra.mxu0 0
  %137 = vmatprep.subr.bf16.mxu0 0
  %138 = vmatpush2.bf16.msra.mxu0 0
  %139 = vmatprep.mubr.bf16.mxu0 0
  %140 = vmatmul.mubr.bf16.gmra.mxu0 %v55
  %v141 = vpop.f32.mrf.mxu0
  %v142 = vadd.f32 0.0, %v141
  %v143 = vpop.f32.mrf.mxu0
  %v144 = vpop.f32.mrf.mxu0
  %v145 = vadd.f32 0.0, %v144
  %v146 = vpop.f32.mrf.mxu0
  %147 = vmatprep.mubr.bf16.mxu0 0
  %148 = vmatmul.mubr.bf16.gmra.mxu0 %v56
  %v149 = vpop.f32.mrf.mxu0
  %v150 = vadd.f32 0.0, %v149
  %v151 = vpop.f32.mrf.mxu0
  %v152 = vpop.f32.mrf.mxu0
  %v153 = vadd.f32 0.0, %v152
  %v154 = vpop.f32.mrf.mxu0
  %155 = vdwg.mxu0
  %v156 = vadd.f32 %v23, %v142
  %v157 = vadd.f32 %v24, %v145
  %v158 = vadd.f32 %v25, %v150
  %v159 = vadd.f32 %v26, %v153
  %160 = vst [vmem:[#allocation2] sm:$0xff] %v156
  %161 = vst [vmem:[#allocation2 + $0x8] sm:$0xff] %v157
  %162 = vst [vmem:[#allocation2 + $0x10] sm:$0xff] %v158
  %163 = vst [vmem:[#allocation2 + $0x18] sm:$0xff] %v159
  // Predicated region
  $region18: #{seq2seq_forward.84} parent=0 // pred_check
    %p164 = pneg %p15
  $region19: #{seq2seq_forward.84} parent=0 // pred_check_branch
    %166 = sbr.rel (%p164) target = $region21
  $region20: #{seq2seq_forward.84} parent=0 // pred_region
    %v167 = vld [vmem:[#allocation2] sm:$0xff]
    %v168 = vld [vmem:[#allocation2 + $0x8] sm:$0xff]
    %v169 = vld [vmem:[#allocation2 + $0x10] sm:$0xff]
    %v170 = vld [vmem:[#allocation2 + $0x18] sm:$0xff]
    %v171 = vld [vmem:[%s2] sm:$0x1]
    %v173 = vlaneseq
    %v174 = vshrl.u32 %v173, 7
    %v175 = vsub.s32 0, %v174
    %v176 = vrot.slane %v171, %v175
    %v178 = vadd.f32 %v167, %v176
    %v179 = vadd.f32 %v168, %v176
    %v180 = vadd.f32 %v169, %v176
    %v181 = vadd.f32 %v170, %v176
    %v182 = vpack.c.bf16 %v179, %v178
    %v183 = vpack.c.bf16 %v181, %v180
    %v186 = vunpack.c.l.b16 %v182
    %v187 = vunpack.c.h.b16 %v182
    %v188 = vunpack.c.l.b16 %v183
    %v189 = vunpack.c.h.b16 %v183
    %v190 = vpack.c.b16 %v186, %v186
    %v191 = vpack.c.b16 %v187, %v187
    %v192 = vpack.c.b16 %v188, %v188
    %v193 = vpack.c.b16 %v189, %v189
    %198 = vst [vmem:[%s3] sm:$0xf] %v190
    %199 = vst [vmem:[%s3 + $0x4] sm:$0xf] %v191
    %200 = vst [vmem:[%s3 + $0x8] sm:$0xf] %v192
    %201 = vst [vmem:[%s3 + $0xc] sm:$0xf] %v193
  $region21: #{seq2seq_forward.84} parent=0 // pred_fallthru
    _
  // Predicated region
  $region22: #{seq2seq_forward.84} parent=0 // pred_check
    _
  $region23: #{seq2seq_forward.84} parent=0 // pred_check_branch
    %203 = sbr.rel (0) target = $region25
  $region24: #{seq2seq_forward.84} parent=0 // pred_region
    _
  $region25: #{seq2seq_forward.84} parent=0 // pred_fallthru
    _
  // Predicated region
  $region26: #{seq2seq_forward.84} parent=0 // pred_check
    _
  $region27: #{seq2seq_forward.84} parent=0 // pred_check_branch
    %205 = sbr.rel (0) target = $region29
  $region28: #{seq2seq_forward.84} parent=0 // pred_region
    _
  $region29: #{seq2seq_forward.84} parent=0 // pred_fallthru
    _

// kernel: seq2seq_forward.70
$region0: #{seq2seq_forward.70}
  #allocation0 [shape = 'u32[]', space=smem, size = 0x4, offset = 0x4, fixed_abs, tag = 'smem constant byte address 0x4 - core index']
  #allocation1 [shape = 'u32[144,128]{1,0:T(1,128)}', space=vmem, size = 0x12000, scoped, tag = 'internal scratch']
  #allocation2 [shape = 'f32[4,16,1]{2,1,0:T(8,128)}', space=vmem, size = 0x8000, scoped, tag = 'scratch operand']
  #allocation3 [shape = 'f32[4,16,1]{2,1,0:T(8,128)}', space=vmem, size = 0x8000, scoped, tag = 'scratch operand']
  #allocation4 [shape = 'f32[4,16,16]{2,1,0:T(8,128)}', space=vmem, size = 0x8000, scoped, tag = 'scratch operand']
  %s0 = inlined_call_operand.vmem [shape: bf16[8,16,16], index: 0, kind: input, shape index: {}]
  %s1 = inlined_call_operand.vmem [shape: bf16[8,16,16], index: 1, kind: input, shape index: {}]
  %s2 = inlined_call_operand.vmem [shape: bf16[8,16,16], index: 2, kind: input, shape index: {}]
  %s3 = inlined_call_operand.vmem [shape: f32[2,1,16], index: 3, kind: input, shape index: {}]
  %s4 = inlined_call_operand.vmem [shape: bf16[8,16,16], index: 4, kind: output, shape index: {}]
  %s5 = sld [smem:[#allocation0]]
  $region57: #{seq2seq_forward.70} parent=0
    _
  %s7 = ssub.s32 1, %s5
  %s8 = scalar_select 0, %s7, %s5
  loop: start=0, step=1, limit=4
  $region2: #{seq2seq_forward.70} parent=0 // loop_pre_header
    _
  $region3: #{seq2seq_forward.70} parent=0 // loop_header
    %s10 = sphi 0, %s14
    %p11 = scmp.ge.s32.totalorder %s10, 4
    %s17 = sphi 0, %s36
    %s18 = sphi 0, %s32
    %s19 = sphi 0, %s28
    %s20 = sphi 0, %s17
    %s21 = sphi 0, %s18
    %s22 = sphi 0, %s19
    %s23 = sphi 0, %s20
    %s24 = sphi 0, %s21
    %s25 = sphi 0, %s22
    %s41 = sphi 0, %s43
    %s44 = sphi 0, %s41
    %s45 = sphi 0, %s44
    %s61 = sphi 0, %s45
    %s69 = sphi 0, %s71
    %s72 = sphi 0, %s69
    %s73 = sphi 0, %s72
    %s89 = sphi 0, %s73
    %s97 = sphi 0, %s99
    %s100 = sphi 0, %s97
    %s101 = sphi 0, %s100
    %s117 = sphi 0, %s101
    %s125 = sphi 0, %s127
    %s128 = sphi 0, %s125
    %s129 = sphi 0, %s128
    %s145 = sphi 0, %s129
    %s153 = sphi 0, %s155
    %s156 = sphi 0, %s153
    %s157 = sphi 0, %s156
    %s173 = sphi 0, %s157
  $region4: #{seq2seq_forward.70} parent=0 // loop_header_branch
    %13 = sbr.rel (%p11) target = $region8
  $region5: #{seq2seq_forward.70} parent=0 // loop_body
    %s15 = ssub.s32 %s10, 1
    %s16 = ssub.s32 %s10, 2
    %s26 = sadd.s32 1, %s19
    %p27 = scmp.ge.s32.totalorder %s26, 1
    %s28 = scalar_select %p27, 0, %s26
    %s29 = sadd.s32 1, %s18
    %s30 = scalar_select %p27, %s29, %s18
    %p31 = scmp.ge.s32.totalorder %s30, 1
    %s32 = scalar_select %p31, 0, %s30
    %s33 = sadd.s32 1, %s17
    %s34 = scalar_select %p31, %s33, %s17
    %p35 = scmp.ge.s32.totalorder %s34, 2
    %s36 = scalar_select %p35, 0, %s34
    %s37 = ssub.s32 %s17, %s36
    %s38 = ssub.s32 %s18, %s32
    %s39 = sor.u32 %s37, %s38
    %p40 = scmp.eq.s32.totalorder %s39, 0
    %s42 = sadd.s32 %s41, 1
    %s43 = scalar_select %p40, %s41, %s42
    %p46 = pneg %p40
    %p47 = scmp.eq.s32.totalorder %s10, 1
    %p48 = por %p46, %p47
    %p49 = scmp.ne.s32.totalorder %s41, %s44
    %p50 = scmp.eq.s32.totalorder %s10, 0
    %p51 = por %p49, %p50
    %p52 = scmp.ne.s32.totalorder %s41, %s44
    %p53 = scmp.eq.s32.totalorder %s15, 1
    %p54 = por %p52, %p53
    %p55 = scmp.ne.s32.totalorder %s44, %s45
    %p56 = scmp.eq.s32.totalorder %s15, 0
    %p57 = por %p55, %p56
    %p58 = scmp.ne.s32.totalorder %s44, %s45
    %p59 = scmp.eq.s32.totalorder %s16, 1
    %p60 = por %p58, %p59
    %p62 = scmp.ne.s32.totalorder %s45, %s61
    %p63 = scmp.eq.s32.totalorder %s16, 0
    %p64 = por %p62, %p63
    %s65 = ssub.s32 %s17, %s36
    %s66 = ssub.s32 %s19, %s28
    %s67 = sor.u32 %s65, %s66
    %p68 = scmp.eq.s32.totalorder %s67, 0
    %s70 = sadd.s32 %s69, 1
    %s71 = scalar_select %p68, %s69, %s70
    %p74 = pneg %p68
    %p75 = scmp.eq.s32.totalorder %s10, 1
    %p76 = por %p74, %p75
    %p77 = scmp.ne.s32.totalorder %s69, %s72
    %p78 = scmp.eq.s32.totalorder %s10, 0
    %p79 = por %p77, %p78
    %p80 = scmp.ne.s32.totalorder %s69, %s72
    %p81 = scmp.eq.s32.totalorder %s15, 1
    %p82 = por %p80, %p81
    %p83 = scmp.ne.s32.totalorder %s72, %s73
    %p84 = scmp.eq.s32.totalorder %s15, 0
    %p85 = por %p83, %p84
    %p86 = scmp.ne.s32.totalorder %s72, %s73
    %p87 = scmp.eq.s32.totalorder %s16, 1
    %p88 = por %p86, %p87
    %p90 = scmp.ne.s32.totalorder %s73, %s89
    %p91 = scmp.eq.s32.totalorder %s16, 0
    %p92 = por %p90, %p91
    %s93 = ssub.s32 %s17, %s36
    %s94 = ssub.s32 %s19, %s28
    %s95 = sor.u32 %s93, %s94
    %p96 = scmp.eq.s32.totalorder %s95, 0
    %s98 = sadd.s32 %s97, 1
    %s99 = scalar_select %p96, %s97, %s98
    %p102 = pneg %p96
    %p103 = scmp.eq.s32.totalorder %s10, 1
    %p104 = por %p102, %p103
    %p105 = scmp.ne.s32.totalorder %s97, %s100
    %p106 = scmp.eq.s32.totalorder %s10, 0
    %p107 = por %p105, %p106
    %p108 = scmp.ne.s32.totalorder %s97, %s100
    %p109 = scmp.eq.s32.totalorder %s15, 1
    %p110 = por %p108, %p109
    %p111 = scmp.ne.s32.totalorder %s100, %s101
    %p112 = scmp.eq.s32.totalorder %s15, 0
    %p113 = por %p111, %p112
    %p114 = scmp.ne.s32.totalorder %s100, %s101
    %p115 = scmp.eq.s32.totalorder %s16, 1
    %p116 = por %p114, %p115
    %p118 = scmp.ne.s32.totalorder %s101, %s117
    %p119 = scmp.eq.s32.totalorder %s16, 0
    %p120 = por %p118, %p119
    %s121 = ssub.s32 %s17, %s36
    %s122 = ssub.s32 %s19, %s28
    %s123 = sor.u32 %s121, %s122
    %p124 = scmp.eq.s32.totalorder %s123, 0
    %s126 = sadd.s32 %s125, 1
    %s127 = scalar_select %p124, %s125, %s126
    %p130 = pneg %p124
    %p131 = scmp.eq.s32.totalorder %s10, 1
    %p132 = por %p130, %p131
    %p133 = scmp.ne.s32.totalorder %s125, %s128
    %p134 = scmp.eq.s32.totalorder %s10, 0
    %p135 = por %p133, %p134
    %p136 = scmp.ne.s32.totalorder %s125, %s128
    %p137 = scmp.eq.s32.totalorder %s15, 1
    %p138 = por %p136, %p137
    %p139 = scmp.ne.s32.totalorder %s128, %s129
    %p140 = scmp.eq.s32.totalorder %s15, 0
    %p141 = por %p139, %p140
    %p142 = scmp.ne.s32.totalorder %s128, %s129
    %p143 = scmp.eq.s32.totalorder %s16, 1
    %p144 = por %p142, %p143
    %p146 = scmp.ne.s32.totalorder %s129, %s145
    %p147 = scmp.eq.s32.totalorder %s16, 0
    %p148 = por %p146, %p147
    %s149 = ssub.s32 %s17, %s36
    %s150 = ssub.s32 %s18, %s32
    %s151 = sor.u32 %s149, %s150
    %p152 = scmp.eq.s32.totalorder %s151, 0
    %s154 = sadd.s32 %s153, 1
    %s155 = scalar_select %p152, %s153, %s154
    %p158 = pneg %p152
    %p159 = scmp.eq.s32.totalorder %s10, 1
    %p160 = por %p158, %p159
    %p161 = scmp.ne.s32.totalorder %s153, %s156
    %p162 = scmp.eq.s32.totalorder %s10, 0
    %p163 = por %p161, %p162
    %p164 = scmp.ne.s32.totalorder %s153, %s156
    %p165 = scmp.eq.s32.totalorder %s15, 1
    %p166 = por %p164, %p165
    %p167 = scmp.ne.s32.totalorder %s156, %s157
    %p168 = scmp.eq.s32.totalorder %s15, 0
    %p169 = por %p167, %p168
    %p170 = scmp.ne.s32.totalorder %s156, %s157
    %p171 = scmp.eq.s32.totalorder %s16, 1
    %p172 = por %p170, %p171
    %p174 = scmp.ne.s32.totalorder %s157, %s173
    %p175 = scmp.eq.s32.totalorder %s16, 0
    %p176 = por %p174, %p175
    %p177 = scmp.le.s32.totalorder 1, %s10
    %p178 = scmp.lt.s32.totalorder %s10, 3
    %p179 = pnand %p177, %p178
    %p180 = pneg %p179
    // Predicated region
    $region9: #{seq2seq_forward.70} parent=5 // pred_check
      _
    $region10: #{seq2seq_forward.70} parent=5 // pred_check_branch
      %182 = sbr.rel (%p179) target = $region12
    $region11: #{seq2seq_forward.70} parent=5 // pred_region
      %s183 = ssub.s32 %s10, 1
    $region12: #{seq2seq_forward.70} parent=5 // pred_fallthru
      _
    %p184 = scmp.lt.s32.totalorder %s10, 2
    // Predicated region
    $region13: #{seq2seq_forward.70} parent=5 // pred_check
      %p185 = pneg %p184
    $region14: #{seq2seq_forward.70} parent=5 // pred_check_branch
      %187 = sbr.rel (%p185) target = $region16
    $region15: #{seq2seq_forward.70} parent=5 // pred_region
      // Predicated region
      $region17: #{seq2seq_forward.70} parent=15 // pred_check
        %p188 = pneg %p51
      $region18: #{seq2seq_forward.70} parent=15 // pred_check_branch
        %190 = sbr.rel (%p188) target = $region20
      $region19: #{seq2seq_forward.70} parent=15 // pred_region
        %s191 = smul.u32 4, %s17
        %s192 = smul.u32 2, %s18
        %p193 = scmp.lt.s32.totalorder %s191, 7
        %s194 = scalar_select %p193, %s191, 7
        %p195 = scmp.lt.s32.totalorder %s192, 1
        %s196 = scalar_select %p195, %s192, 1
        %s197 = smul.addr %s194, 2
        %s198 = sadd.s32 %s196, %s197
        %s199 = smul.addr %s198, 4
        %s200 = scalar_lea.vmem %s0, %s199
        %s201 = smul.u32 4, %s17
        %s202 = smul.u32 2, %s18
      $region20: #{seq2seq_forward.70} parent=15 // pred_fallthru
        _
      // Predicated region
      $region21: #{seq2seq_forward.70} parent=15 // pred_check
        %p203 = pneg %p79
      $region22: #{seq2seq_forward.70} parent=15 // pred_check_branch
        %205 = sbr.rel (%p203) target = $region24
      $region23: #{seq2seq_forward.70} parent=15 // pred_region
        %s206 = smul.u32 4, %s17
        %s207 = smul.u32 2, %s19
        %p208 = scmp.lt.s32.totalorder %s206, 7
        %s209 = scalar_select %p208, %s206, 7
        %p210 = scmp.lt.s32.totalorder %s207, 1
        %s211 = scalar_select %p210, %s207, 1
        %s212 = smul.addr %s209, 2
        %s213 = sadd.s32 %s211, %s212
        %s214 = smul.addr %s213, 4
        %s215 = scalar_lea.vmem %s1, %s214
        %s216 = smul.u32 4, %s17
        %s217 = smul.u32 2, %s19
      $region24: #{seq2seq_forward.70} parent=15 // pred_fallthru
        _
      // Predicated region
      $region25: #{seq2seq_forward.70} parent=15 // pred_check
        %p218 = pneg %p107
      $region26: #{seq2seq_forward.70} parent=15 // pred_check_branch
        %220 = sbr.rel (%p218) target = $region28
      $region27: #{seq2seq_forward.70} parent=15 // pred_region
        %s221 = smul.u32 4, %s17
        %s222 = smul.u32 2, %s19
        %p223 = scmp.lt.s32.totalorder %s221, 7
        %s224 = scalar_select %p223, %s221, 7
        %p225 = scmp.lt.s32.totalorder %s222, 1
        %s226 = scalar_select %p225, %s222, 1
        %s227 = smul.addr %s224, 2
        %s228 = sadd.s32 %s226, %s227
        %s229 = smul.addr %s228, 4
        %s230 = scalar_lea.vmem %s2, %s229
        %s231 = smul.u32 4, %s17
        %s232 = smul.u32 2, %s19
      $region28: #{seq2seq_forward.70} parent=15 // pred_fallthru
        _
      // Predicated region
      $region29: #{seq2seq_forward.70} parent=15 // pred_check
        %p233 = pneg %p135
      $region30: #{seq2seq_forward.70} parent=15 // pred_check_branch
        %235 = sbr.rel (%p233) target = $region32
      $region31: #{seq2seq_forward.70} parent=15 // pred_region
        %p236 = scmp.lt.s32.totalorder %s17, 1
        %s237 = scalar_select %p236, %s17, 1
        %p238 = scmp.lt.s32.totalorder %s19, 0
        %s239 = scalar_select %p238, %s19, 0
        %s240 = sadd.s32 %s239, %s237
        %s241 = scalar_lea.vmem %s3, %s240
      $region32: #{seq2seq_forward.70} parent=15 // pred_fallthru
        _
    $region16: #{seq2seq_forward.70} parent=5 // pred_fallthru
      _
    %p242 = scmp.le.s32.totalorder 1, %s10
    %p243 = scmp.lt.s32.totalorder %s10, 3
    %p244 = pnand %p242, %p243
    %p245 = pneg %p244
    // Predicated region
    $region33: #{seq2seq_forward.70} parent=5 // pred_check
      _
    $region34: #{seq2seq_forward.70} parent=5 // pred_check_branch
      %247 = sbr.rel (%p244) target = $region36
    $region35: #{seq2seq_forward.70} parent=5 // pred_region
      %s248 = ssub.s32 %s10, 1
      %s249 = smul.u32 4, %s20
      %s250 = smul.u32 2, %s21
      %p251 = scmp.lt.s32.totalorder %s249, 7
      %s252 = scalar_select %p251, %s249, 7
      %p253 = scmp.lt.s32.totalorder %s250, 1
      %s254 = scalar_select %p253, %s250, 1
      %s255 = smul.addr %s252, 2
      %s256 = sadd.s32 %s254, %s255
      %s257 = smul.addr %s256, 4
      %s258 = scalar_lea.vmem %s0, %s257
      %p259 = pneg %p57
      %p260 = pneg %p54
      %s261 = smul.u32 4, %s20
      %s262 = smul.u32 2, %s22
      %p263 = scmp.lt.s32.totalorder %s261, 7
      %s264 = scalar_select %p263, %s261, 7
      %p265 = scmp.lt.s32.totalorder %s262, 1
      %s266 = scalar_select %p265, %s262, 1
      %s267 = smul.addr %s264, 2
      %s268 = sadd.s32 %s266, %s267
      %s269 = smul.addr %s268, 4
      %s270 = scalar_lea.vmem %s1, %s269
      %p271 = pneg %p85
      %p272 = pneg %p82
      %s273 = smul.u32 4, %s20
      %s274 = smul.u32 2, %s22
      %p275 = scmp.lt.s32.totalorder %s273, 7
      %s276 = scalar_select %p275, %s273, 7
      %p277 = scmp.lt.s32.totalorder %s274, 1
      %s278 = scalar_select %p277, %s274, 1
      %s279 = smul.addr %s276, 2
      %s280 = sadd.s32 %s278, %s279
      %s281 = smul.addr %s280, 4
      %s282 = scalar_lea.vmem %s2, %s281
      %p283 = pneg %p113
      %p284 = pneg %p110
      %p285 = scmp.lt.s32.totalorder %s20, 1
      %s286 = scalar_select %p285, %s20, 1
      %p287 = scmp.lt.s32.totalorder %s22, 0
      %s288 = scalar_select %p287, %s22, 0
      %s289 = sadd.s32 %s288, %s286
      %s290 = scalar_lea.vmem %s3, %s289
      %p291 = pneg %p141
      %p292 = pneg %p138
      %p293 = pneg %p169
      %p294 = pneg %p166
      %s295 = smul.u32 4, %s20
      %s296 = smul.u32 2, %s21
      %p297 = scmp.lt.s32.totalorder %s295, 7
      %s298 = scalar_select %p297, %s295, 7
      %p299 = scmp.lt.s32.totalorder %s296, 1
      %s300 = scalar_select %p299, %s296, 1
      %s301 = smul.addr %s298, 2
      %s302 = sadd.s32 %s300, %s301
      %s303 = smul.addr %s302, 4
      %s304 = scalar_lea.vmem %s4, %s303
      %s305 = smul.u32 4, %s20
      %s306 = smul.u32 2, %s21
      %p307 = scmp.lt.s32.totalorder %s305, 7
      %s308 = scalar_select %p307, %s305, 7
      %p309 = scmp.lt.s32.totalorder %s306, 1
      %s310 = scalar_select %p309, %s306, 1
      %s311 = smul.addr %s308, 2
      %s312 = sadd.s32 %s310, %s311
      %s313 = smul.addr %s312, 4
      %s314 = scalar_lea.vmem %s0, %s313
      %s315 = smul.u32 4, %s20
      %s316 = smul.u32 2, %s21
      %s317 = smul.u32 4, %s20
      %s318 = smul.u32 2, %s22
      %p319 = scmp.lt.s32.totalorder %s317, 7
      %s320 = scalar_select %p319, %s317, 7
      %p321 = scmp.lt.s32.totalorder %s318, 1
      %s322 = scalar_select %p321, %s318, 1
      %s323 = smul.addr %s320, 2
      %s324 = sadd.s32 %s322, %s323
      %s325 = smul.addr %s324, 4
      %s326 = scalar_lea.vmem %s1, %s325
      %s327 = smul.u32 4, %s20
      %s328 = smul.u32 2, %s22
      %s329 = smul.u32 4, %s20
      %s330 = smul.u32 2, %s22
      %p331 = scmp.lt.s32.totalorder %s329, 7
      %s332 = scalar_select %p331, %s329, 7
      %p333 = scmp.lt.s32.totalorder %s330, 1
      %s334 = scalar_select %p333, %s330, 1
      %s335 = smul.addr %s332, 2
      %s336 = sadd.s32 %s334, %s335
      %s337 = smul.addr %s336, 4
      %s338 = scalar_lea.vmem %s2, %s337
      %s339 = smul.u32 4, %s20
      %s340 = smul.u32 2, %s22
      %p341 = scmp.lt.s32.totalorder %s20, 1
      %s342 = scalar_select %p341, %s20, 1
      %p343 = scmp.lt.s32.totalorder %s22, 0
      %s344 = scalar_select %p343, %s22, 0
      %s345 = sadd.s32 %s344, %s342
      %s346 = scalar_lea.vmem %s3, %s345
      %s347 = smul.u32 4, %s20
      %s348 = smul.u32 2, %s21
      %p349 = scmp.lt.s32.totalorder %s347, 7
      %s350 = scalar_select %p349, %s347, 7
      %p351 = scmp.lt.s32.totalorder %s348, 1
      %s352 = scalar_select %p351, %s348, 1
      %s353 = smul.addr %s350, 2
      %s354 = sadd.s32 %s352, %s353
      %s355 = smul.addr %s354, 4
      %s356 = scalar_lea.vmem %s4, %s355
      %s357 = smul.u32 4, %s20
      %s358 = smul.u32 2, %s21
      %p360 = scmp.eq.s32.totalorder %s22, 0
      // Predicated region
      $region37: #{seq2seq_forward.70} parent=35 // pred_check
        %p361 = pneg %p360
      $region38: #{seq2seq_forward.70} parent=35 // pred_check_branch
        %363 = sbr.rel (%p361) target = $region40
      $region39: #{seq2seq_forward.70} parent=35 // pred_region
        %vm364 = vcmask 7168
        %365 = vst.msk [vmem:[#allocation2] sm:$0xff] %vm364, -1e+30
        %366 = vst.msk [vmem:[#allocation2 + $0x8] sm:$0xff] %vm364, -1e+30
        %367 = vst.msk [vmem:[#allocation2 + $0x10] sm:$0xff] %vm364, -1e+30
        %368 = vst.msk [vmem:[#allocation2 + $0x18] sm:$0xff] %vm364, -1e+30
        %369 = vst.msk [vmem:[#allocation2 + $0x20] sm:$0xff] %vm364, -1e+30
        %370 = vst.msk [vmem:[#allocation2 + $0x28] sm:$0xff] %vm364, -1e+30
        %371 = vst.msk [vmem:[#allocation2 + $0x30] sm:$0xff] %vm364, -1e+30
        %372 = vst.msk [vmem:[#allocation2 + $0x38] sm:$0xff] %vm364, -1e+30
        %373 = vst.msk [vmem:[#allocation3] sm:$0xff] %vm364, 0.0
        %374 = vst.msk [vmem:[#allocation3 + $0x8] sm:$0xff] %vm364, 0.0
        %375 = vst.msk [vmem:[#allocation3 + $0x10] sm:$0xff] %vm364, 0.0
        %376 = vst.msk [vmem:[#allocation3 + $0x18] sm:$0xff] %vm364, 0.0
        %377 = vst.msk [vmem:[#allocation3 + $0x20] sm:$0xff] %vm364, 0.0
        %378 = vst.msk [vmem:[#allocation3 + $0x28] sm:$0xff] %vm364, 0.0
        %379 = vst.msk [vmem:[#allocation3 + $0x30] sm:$0xff] %vm364, 0.0
        %380 = vst.msk [vmem:[#allocation3 + $0x38] sm:$0xff] %vm364, 0.0
        %vm381 = vcmask 130048
        %382 = vst.msk [vmem:[#allocation4] sm:$0xff] %vm381, 0.0
        %383 = vst.msk [vmem:[#allocation4 + $0x8] sm:$0xff] %vm381, 0.0
        %384 = vst.msk [vmem:[#allocation4 + $0x10] sm:$0xff] %vm381, 0.0
        %385 = vst.msk [vmem:[#allocation4 + $0x18] sm:$0xff] %vm381, 0.0
        %386 = vst.msk [vmem:[#allocation4 + $0x20] sm:$0xff] %vm381, 0.0
        %387 = vst.msk [vmem:[#allocation4 + $0x28] sm:$0xff] %vm381, 0.0
        %388 = vst.msk [vmem:[#allocation4 + $0x30] sm:$0xff] %vm381, 0.0
        %389 = vst.msk [vmem:[#allocation4 + $0x38] sm:$0xff] %vm381, 0.0
      $region40: #{seq2seq_forward.70} parent=35 // pred_fallthru
        _
      %v390 = vld [vmem:[%s314] sm:$0xf]
      %v391 = vld [vmem:[%s314 + $0x4] sm:$0xf]
      %v392 = vld [vmem:[%s314 + $0x8] sm:$0xf]
      %v393 = vld [vmem:[%s314 + $0xc] sm:$0xf]
      %v394 = vld [vmem:[%s314 + $0x10] sm:$0xf]
      %v395 = vld [vmem:[%s314 + $0x14] sm:$0xf]
      %v396 = vld [vmem:[%s314 + $0x18] sm:$0xf]
      %v397 = vld [vmem:[%s314 + $0x1c] sm:$0xf]
      %v398 = vld [vmem:[%s326] sm:$0xf]
      %v399 = vld [vmem:[%s326 + $0x4] sm:$0xf]
      %v400 = vld [vmem:[%s326 + $0x8] sm:$0xf]
      %v401 = vld [vmem:[%s326 + $0xc] sm:$0xf]
      %v402 = vld [vmem:[%s326 + $0x10] sm:$0xf]
      %v403 = vld [vmem:[%s326 + $0x14] sm:$0xf]
      %v404 = vld [vmem:[%s326 + $0x18] sm:$0xf]
      %v405 = vld [vmem:[%s326 + $0x1c] sm:$0xf]
      %v408 = vunpack.c.l.b16 %v390
      %v409 = vunpack.c.l.b16 %v391
      %v410 = vpack.c.b16 %v409, %v408
      %v413 = vunpack.c.l.b16 %v398
      %v414 = vunpack.c.l.b16 %v399
      %v415 = vpack.c.b16 %v414, %v413
      %vm416 = vcmask 130048
      %v418 = vsel %vm416, %v410, 0
      %v421 = vsel %vm416, %v415, 0
      %423 = vmatprep.subr.bf16.mxu0 0
      %424 = vmatpush1.bf16.xpose.msra.mxu0 0
      %425 = vmatprep.subr.bf16.mxu0 0
      %426 = vmatpush1.bf16.xpose.msra.mxu0 0
      %427 = vmatprep.subr.bf16.mxu0 0
      %428 = vmatpush1.bf16.xpose.msra.mxu0 0
      %429 = vmatprep.subr.bf16.mxu0 0
      %430 = vmatpush1.bf16.xpose.msra.mxu0 0
      %431 = vmatprep.subr.bf16.mxu0 0
      %432 = vmatpush1.bf16.xpose.msra.mxu0 0
      %433 = vmatprep.subr.bf16.mxu0 0
      %434 = vmatpush1.bf16.xpose.msra.mxu0 0
      %435 = vmatprep.subr.bf16.mxu0 0
      %436 = vmatpush1.bf16.xpose.msra.mxu0 0
      %437 = vmatprep.subr.bf16.mxu0 0
      %438 = vmatpush1.bf16.xpose.msra.mxu0 %v421
      %439 = vmatprep.subr.bf16.mxu0 0
      %440 = vmatpush2.bf16.xpose.msra.mxu0 0
      %441 = vmatprep.subr.bf16.mxu0 0
      %442 = vmatpush2.bf16.xpose.msra.mxu0 0
      %443 = vmatprep.subr.bf16.mxu0 0
      %444 = vmatpush2.bf16.xpose.msra.mxu0 0
      %445 = vmatprep.subr.bf16.mxu0 0
      %446 = vmatpush2.bf16.xpose.msra.mxu0 0
      %447 = vmatprep.subr.bf16.mxu0 0
      %448 = vmatpush2.bf16.xpose.msra.mxu0 0
      %449 = vmatprep.subr.bf16.mxu0 0
      %450 = vmatpush2.bf16.xpose.msra.mxu0 0
      %451 = vmatprep.subr.bf16.mxu0 0
      %452 = vmatpush2.bf16.xpose.msra.mxu0 0
      %453 = vmatprep.subr.bf16.mxu0 0
      %454 = vmatpush2.bf16.xpose.msra.mxu0 0
      %455 = vmatprep.mubr.bf16.mxu0 0
      %456 = vmatmul.mubr.bf16.gmra.mxu0 %v418
      %v457 = vpop.f32.mrf.mxu0
      %v458 = vadd.f32 0.0, %v457
      %v459 = vpop.f32.mrf.mxu0
      %v460 = vpop.f32.mrf.mxu0
      %v461 = vadd.f32 0.0, %v460
      %v462 = vpop.f32.mrf.mxu0
      %463 = vdwg.mxu0
      %v466 = vunpack.c.l.b16 %v392
      %v467 = vunpack.c.l.b16 %v393
      %v468 = vpack.c.b16 %v467, %v466
      %v471 = vunpack.c.l.b16 %v400
      %v472 = vunpack.c.l.b16 %v401
      %v473 = vpack.c.b16 %v472, %v471
      %v475 = vsel %vm416, %v468, 0
      %v478 = vsel %vm416, %v473, 0
      %480 = vmatprep.subr.bf16.mxu0 0
      %481 = vmatpush1.bf16.xpose.msra.mxu0 0
      %482 = vmatprep.subr.bf16.mxu0 0
      %483 = vmatpush1.bf16.xpose.msra.mxu0 0
      %484 = vmatprep.subr.bf16.mxu0 0
      %485 = vmatpush1.bf16.xpose.msra.mxu0 0
      %486 = vmatprep.subr.bf16.mxu0 0
      %487 = vmatpush1.bf16.xpose.msra.mxu0 0
      %488 = vmatprep.subr.bf16.mxu0 0
      %489 = vmatpush1.bf16.xpose.msra.mxu0 0
      %490 = vmatprep.subr.bf16.mxu0 0
      %491 = vmatpush1.bf16.xpose.msra.mxu0 0
      %492 = vmatprep.subr.bf16.mxu0 0
      %493 = vmatpush1.bf16.xpose.msra.mxu0 0
      %494 = vmatprep.subr.bf16.mxu0 0
      %495 = vmatpush1.bf16.xpose.msra.mxu0 %v478
      %496 = vmatprep.subr.bf16.mxu0 0
      %497 = vmatpush2.bf16.xpose.msra.mxu0 0
      %498 = vmatprep.subr.bf16.mxu0 0
      %499 = vmatpush2.bf16.xpose.msra.mxu0 0
      %500 = vmatprep.subr.bf16.mxu0 0
      %501 = vmatpush2.bf16.xpose.msra.mxu0 0
      %502 = vmatprep.subr.bf16.mxu0 0
      %503 = vmatpush2.bf16.xpose.msra.mxu0 0
      %504 = vmatprep.subr.bf16.mxu0 0
      %505 = vmatpush2.bf16.xpose.msra.mxu0 0
      %506 = vmatprep.subr.bf16.mxu0 0
      %507 = vmatpush2.bf16.xpose.msra.mxu0 0
      %508 = vmatprep.subr.bf16.mxu0 0
      %509 = vmatpush2.bf16.xpose.msra.mxu0 0
      %510 = vmatprep.subr.bf16.mxu0 0
      %511 = vmatpush2.bf16.xpose.msra.mxu0 0
      %512 = vmatprep.mubr.bf16.mxu0 0
      %513 = vmatmul.mubr.bf16.gmra.mxu0 %v475
      %v514 = vpop.f32.mrf.mxu0
      %v515 = vadd.f32 0.0, %v514
      %v516 = vpop.f32.mrf.mxu0
      %v517 = vpop.f32.mrf.mxu0
      %v518 = vadd.f32 0.0, %v517
      %v519 = vpop.f32.mrf.mxu0
      %520 = vdwg.mxu0
      %v523 = vunpack.c.l.b16 %v394
      %v524 = vunpack.c.l.b16 %v395
      %v525 = vpack.c.b16 %v524, %v523
      %v528 = vunpack.c.l.b16 %v402
      %v529 = vunpack.c.l.b16 %v403
      %v530 = vpack.c.b16 %v529, %v528
      %v532 = vsel %vm416, %v525, 0
      %v535 = vsel %vm416, %v530, 0
      %537 = vmatprep.subr.bf16.mxu0 0
      %538 = vmatpush1.bf16.xpose.msra.mxu0 0
      %539 = vmatprep.subr.bf16.mxu0 0
      %540 = vmatpush1.bf16.xpose.msra.mxu0 0
      %541 = vmatprep.subr.bf16.mxu0 0
      %542 = vmatpush1.bf16.xpose.msra.mxu0 0
      %543 = vmatprep.subr.bf16.mxu0 0
      %544 = vmatpush1.bf16.xpose.msra.mxu0 0
      %545 = vmatprep.subr.bf16.mxu0 0
      %546 = vmatpush1.bf16.xpose.msra.mxu0 0
      %547 = vmatprep.subr.bf16.mxu0 0
      %548 = vmatpush1.bf16.xpose.msra.mxu0 0
      %549 = vmatprep.subr.bf16.mxu0 0
      %550 = vmatpush1.bf16.xpose.msra.mxu0 0
      %551 = vmatprep.subr.bf16.mxu0 0
      %552 = vmatpush1.bf16.xpose.msra.mxu0 %v535
      %553 = vmatprep.subr.bf16.mxu0 0
      %554 = vmatpush2.bf16.xpose.msra.mxu0 0
      %555 = vmatprep.subr.bf16.mxu0 0
      %556 = vmatpush2.bf16.xpose.msra.mxu0 0
      %557 = vmatprep.subr.bf16.mxu0 0
      %558 = vmatpush2.bf16.xpose.msra.mxu0 0
      %559 = vmatprep.subr.bf16.mxu0 0
      %560 = vmatpush2.bf16.xpose.msra.mxu0 0
      %561 = vmatprep.subr.bf16.mxu0 0
      %562 = vmatpush2.bf16.xpose.msra.mxu0 0
      %563 = vmatprep.subr.bf16.mxu0 0
      %564 = vmatpush2.bf16.xpose.msra.mxu0 0
      %565 = vmatprep.subr.bf16.mxu0 0
      %566 = vmatpush2.bf16.xpose.msra.mxu0 0
      %567 = vmatprep.subr.bf16.mxu0 0
      %568 = vmatpush2.bf16.xpose.msra.mxu0 0
      %569 = vmatprep.mubr.bf16.mxu0 0
      %570 = vmatmul.mubr.bf16.gmra.mxu0 %v532
      %v571 = vpop.f32.mrf.mxu0
      %v572 = vadd.f32 0.0, %v571
      %v573 = vpop.f32.mrf.mxu0
      %v574 = vpop.f32.mrf.mxu0
      %v575 = vadd.f32 0.0, %v574
      %v576 = vpop.f32.mrf.mxu0
      %577 = vdwg.mxu0
      %v580 = vunpack.c.l.b16 %v396
      %v581 = vunpack.c.l.b16 %v397
      %v582 = vpack.c.b16 %v581, %v580
      %v585 = vunpack.c.l.b16 %v404
      %v586 = vunpack.c.l.b16 %v405
      %v587 = vpack.c.b16 %v586, %v585
      %v589 = vsel %vm416, %v582, 0
      %v592 = vsel %vm416, %v587, 0
      %594 = vmatprep.subr.bf16.mxu0 0
      %595 = vmatpush1.bf16.xpose.msra.mxu0 0
      %596 = vmatprep.subr.bf16.mxu0 0
      %597 = vmatpush1.bf16.xpose.msra.mxu0 0
      %598 = vmatprep.subr.bf16.mxu0 0
      %599 = vmatpush1.bf16.xpose.msra.mxu0 0
      %600 = vmatprep.subr.bf16.mxu0 0
      %601 = vmatpush1.bf16.xpose.msra.mxu0 0
      %602 = vmatprep.subr.bf16.mxu0 0
      %603 = vmatpush1.bf16.xpose.msra.mxu0 0
      %604 = vmatprep.subr.bf16.mxu0 0
      %605 = vmatpush1.bf16.xpose.msra.mxu0 0
      %606 = vmatprep.subr.bf16.mxu0 0
      %607 = vmatpush1.bf16.xpose.msra.mxu0 0
      %608 = vmatprep.subr.bf16.mxu0 0
      %609 = vmatpush1.bf16.xpose.msra.mxu0 %v592
      %610 = vmatprep.subr.bf16.mxu0 0
      %611 = vmatpush2.bf16.xpose.msra.mxu0 0
      %612 = vmatprep.subr.bf16.mxu0 0
      %613 = vmatpush2.bf16.xpose.msra.mxu0 0
      %614 = vmatprep.subr.bf16.mxu0 0
      %615 = vmatpush2.bf16.xpose.msra.mxu0 0
      %616 = vmatprep.subr.bf16.mxu0 0
      %617 = vmatpush2.bf16.xpose.msra.mxu0 0
      %618 = vmatprep.subr.bf16.mxu0 0
      %619 = vmatpush2.bf16.xpose.msra.mxu0 0
      %620 = vmatprep.subr.bf16.mxu0 0
      %621 = vmatpush2.bf16.xpose.msra.mxu0 0
      %622 = vmatprep.subr.bf16.mxu0 0
      %623 = vmatpush2.bf16.xpose.msra.mxu0 0
      %624 = vmatprep.subr.bf16.mxu0 0
      %625 = vmatpush2.bf16.xpose.msra.mxu0 0
      %626 = vmatprep.mubr.bf16.mxu0 0
      %627 = vmatmul.mubr.bf16.gmra.mxu0 %v589
      %v628 = vpop.f32.mrf.mxu0
      %v629 = vadd.f32 0.0, %v628
      %v630 = vpop.f32.mrf.mxu0
      %v631 = vpop.f32.mrf.mxu0
      %v632 = vadd.f32 0.0, %v631
      %v633 = vpop.f32.mrf.mxu0
      %634 = vdwg.mxu0
      %v635 = vmul.f32 %v458, 0.25
      %v636 = vmul.f32 %v461, 0.25
      %v637 = vmul.f32 %v515, 0.25
      %v638 = vmul.f32 %v518, 0.25
      %v639 = vmul.f32 %v572, 0.25
      %v640 = vmul.f32 %v575, 0.25
      %v641 = vmul.f32 %v629, 0.25
      %v642 = vmul.f32 %v632, 0.25
      %v643 = vld [vmem:[%s346] sm:$0x1]
      %v645 = vlaneseq
      %v646 = vshrl.u32 %v645, 7
      %v647 = vsub.s32 0, %v646
      %v648 = vrot.slane %v643, %v647
      %v650 = vadd.f32 %v635, %v648
      %v651 = vadd.f32 %v636, %v648
      %v652 = vadd.f32 %v637, %v648
      %v653 = vadd.f32 %v638, %v648
      %v654 = vadd.f32 %v639, %v648
      %v655 = vadd.f32 %v640, %v648
      %v656 = vadd.f32 %v641, %v648
      %v657 = vadd.f32 %v642, %v648
      %v658 = vld [vmem:[#allocation2] sm:$0xff]
      %v659 = vld [vmem:[#allocation2 + $0x8] sm:$0xff]
      %v660 = vld [vmem:[#allocation2 + $0x10] sm:$0xff]
      %v661 = vld [vmem:[#allocation2 + $0x18] sm:$0xff]
      %v662 = vld [vmem:[#allocation2 + $0x20] sm:$0xff]
      %v663 = vld [vmem:[#allocation2 + $0x28] sm:$0xff]
      %v664 = vld [vmem:[#allocation2 + $0x30] sm:$0xff]
      %v665 = vld [vmem:[#allocation2 + $0x38] sm:$0xff]
      %v666 = vsel %vm416, %v650, -inf
      %667 = vmax.xlane.f32.xlu0 %v666
      %v668 = vpop.xlane.xlu0 %667
      %v669 = vsel %vm416, %v651, -inf
      %670 = vmax.xlane.f32.xlu0 %v669
      %v671 = vpop.xlane.xlu0 %670
      %v672 = vsel %vm416, %v652, -inf
      %673 = vmax.xlane.f32.xlu0 %v672
      %v674 = vpop.xlane.xlu0 %673
      %v675 = vsel %vm416, %v653, -inf
      %676 = vmax.xlane.f32.xlu0 %v675
      %v677 = vpop.xlane.xlu0 %676
      %v678 = vsel %vm416, %v654, -inf
      %679 = vmax.xlane.f32.xlu0 %v678
      %v680 = vpop.xlane.xlu0 %679
      %v681 = vsel %vm416, %v655, -inf
      %682 = vmax.xlane.f32.xlu0 %v681
      %v683 = vpop.xlane.xlu0 %682
      %v684 = vsel %vm416, %v656, -inf
      %685 = vmax.xlane.f32.xlu0 %v684
      %v686 = vpop.xlane.xlu0 %685
      %v687 = vsel %vm416, %v657, -inf
      %688 = vmax.xlane.f32.xlu0 %v687
      %v689 = vpop.xlane.xlu0 %688
      %v690 = vmax.f32 %v658, %v668
      %v691 = vmax.f32 %v659, %v671
      %v692 = vmax.f32 %v660, %v674
      %v693 = vmax.f32 %v661, %v677
      %v694 = vmax.f32 %v662, %v680
      %v695 = vmax.f32 %v663, %v683
      %v696 = vmax.f32 %v664, %v686
      %v697 = vmax.f32 %v665, %v689
      %v698 = vsub.f32 %v658, %v690
      %v699 = vsub.f32 %v659, %v691
      %v700 = vsub.f32 %v660, %v692
      %v701 = vsub.f32 %v661, %v693
      %v702 = vsub.f32 %v662, %v694
      %v703 = vsub.f32 %v663, %v695
      %v704 = vsub.f32 %v664, %v696
      %v705 = vsub.f32 %v665, %v697
      %v706 = vmul.f32 %v698, 1.442695
      %v707 = vpow.pop %v706
      %v708 = vmul.f32 %v699, 1.442695
      %v709 = vpow.pop %v708
      %v710 = vmul.f32 %v700, 1.442695
      %v711 = vpow.pop %v710
      %v712 = vmul.f32 %v701, 1.442695
      %v713 = vpow.pop %v712
      %v714 = vmul.f32 %v702, 1.442695
      %v715 = vpow.pop %v714
      %v716 = vmul.f32 %v703, 1.442695
      %v717 = vpow.pop %v716
      %v718 = vmul.f32 %v704, 1.442695
      %v719 = vpow.pop %v718
      %v720 = vmul.f32 %v705, 1.442695
      %v721 = vpow.pop %v720
      %723 = vset.pattern.permute.xlu0 0
      %724 = vperm.xlu0 %723, %v690
      %v725 = vpop.permute.xlu0 %724
      %728 = vset.pattern.permute.xlu0 0
      %729 = vperm.xlu0 %728, %v691
      %v730 = vpop.permute.xlu0 %729
      %733 = vset.pattern.permute.xlu0 0
      %734 = vperm.xlu0 %733, %v692
      %v735 = vpop.permute.xlu0 %734
      %738 = vset.pattern.permute.xlu0 0
      %739 = vperm.xlu0 %738, %v693
      %v740 = vpop.permute.xlu0 %739
      %743 = vset.pattern.permute.xlu0 0
      %744 = vperm.xlu0 %743, %v694
      %v745 = vpop.permute.xlu0 %744
      %748 = vset.pattern.permute.xlu0 0
      %749 = vperm.xlu0 %748, %v695
      %v750 = vpop.permute.xlu0 %749
      %753 = vset.pattern.permute.xlu0 0
      %754 = vperm.xlu0 %753, %v696
      %v755 = vpop.permute.xlu0 %754
      %758 = vset.pattern.permute.xlu0 0
      %759 = vperm.xlu0 %758, %v697
      %v760 = vpop.permute.xlu0 %759
      %v762 = vsub.f32 %v650, %v725
      %v763 = vsub.f32 %v651, %v730
      %v764 = vsub.f32 %v652, %v735
      %v765 = vsub.f32 %v653, %v740
      %v766 = vsub.f32 %v654, %v745
      %v767 = vsub.f32 %v655, %v750
      %v768 = vsub.f32 %v656, %v755
      %v769 = vsub.f32 %v657, %v760
      %v770 = vmul.f32 %v762, 1.442695
      %v771 = vpow.pop %v770
      %v772 = vmul.f32 %v763, 1.442695
      %v773 = vpow.pop %v772
      %v774 = vmul.f32 %v764, 1.442695
      %v775 = vpow.pop %v774
      %v776 = vmul.f32 %v765, 1.442695
      %v777 = vpow.pop %v776
      %v778 = vmul.f32 %v766, 1.442695
      %v779 = vpow.pop %v778
      %v780 = vmul.f32 %v767, 1.442695
      %v781 = vpow.pop %v780
      %v782 = vmul.f32 %v768, 1.442695
      %v783 = vpow.pop %v782
      %v784 = vmul.f32 %v769, 1.442695
      %v785 = vpow.pop %v784
      %v786 = vld [vmem:[#allocation3] sm:$0xff]
      %v787 = vld [vmem:[#allocation3 + $0x8] sm:$0xff]
      %v788 = vld [vmem:[#allocation3 + $0x10] sm:$0xff]
      %v789 = vld [vmem:[#allocation3 + $0x18] sm:$0xff]
      %v790 = vld [vmem:[#allocation3 + $0x20] sm:$0xff]
      %v791 = vld [vmem:[#allocation3 + $0x28] sm:$0xff]
      %v792 = vld [vmem:[#allocation3 + $0x30] sm:$0xff]
      %v793 = vld [vmem:[#allocation3 + $0x38] sm:$0xff]
      %v794 = vmul.f32 %v707, %v786
      %v795 = vmul.f32 %v709, %v787
      %v796 = vmul.f32 %v711, %v788
      %v797 = vmul.f32 %v713, %v789
      %v798 = vmul.f32 %v715, %v790
      %v799 = vmul.f32 %v717, %v791
      %v800 = vmul.f32 %v719, %v792
      %v801 = vmul.f32 %v721, %v793
      %v802 = vsel %vm416, %v771, 0.0
      %803 = vadd.xlane.f32.xlu0 %v802
      %v804 = vpop.xlane.xlu0 %803
      %v805 = vsel %vm416, %v773, 0.0
      %806 = vadd.xlane.f32.xlu0 %v805
      %v807 = vpop.xlane.xlu0 %806
      %v808 = vsel %vm416, %v775, 0.0
      %809 = vadd.xlane.f32.xlu0 %v808
      %v810 = vpop.xlane.xlu0 %809
      %v811 = vsel %vm416, %v777, 0.0
      %812 = vadd.xlane.f32.xlu0 %v811
      %v813 = vpop.xlane.xlu0 %812
      %v814 = vsel %vm416, %v779, 0.0
      %815 = vadd.xlane.f32.xlu0 %v814
      %v816 = vpop.xlane.xlu0 %815
      %v817 = vsel %vm416, %v781, 0.0
      %818 = vadd.xlane.f32.xlu0 %v817
      %v819 = vpop.xlane.xlu0 %818
      %v820 = vsel %vm416, %v783, 0.0
      %821 = vadd.xlane.f32.xlu0 %v820
      %v822 = vpop.xlane.xlu0 %821
      %v823 = vsel %vm416, %v785, 0.0
      %824 = vadd.xlane.f32.xlu0 %v823
      %v825 = vpop.xlane.xlu0 %824
      %v826 = vadd.f32 %v794, %v804
      %v827 = vadd.f32 %v795, %v807
      %v828 = vadd.f32 %v796, %v810
      %v829 = vadd.f32 %v797, %v813
      %v830 = vadd.f32 %v798, %v816
      %v831 = vadd.f32 %v799, %v819
      %v832 = vadd.f32 %v800, %v822
      %v833 = vadd.f32 %v801, %v825
      %vm834 = vcmask 7168
      %835 = vst.msk [vmem:[#allocation3] sm:$0xff] %vm834, %v826
      %836 = vst.msk [vmem:[#allocation3 + $0x8] sm:$0xff] %vm834, %v827
      %837 = vst.msk [vmem:[#allocation3 + $0x10] sm:$0xff] %vm834, %v828
      %838 = vst.msk [vmem:[#allocation3 + $0x18] sm:$0xff] %vm834, %v829
      %839 = vst.msk [vmem:[#allocation3 + $0x20] sm:$0xff] %vm834, %v830
      %840 = vst.msk [vmem:[#allocation3 + $0x28] sm:$0xff] %vm834, %v831
      %841 = vst.msk [vmem:[#allocation3 + $0x30] sm:$0xff] %vm834, %v832
      %842 = vst.msk [vmem:[#allocation3 + $0x38] sm:$0xff] %vm834, %v833
      %v843 = vld [vmem:[#allocation4] sm:$0xff]
      %v844 = vld [vmem:[#allocation4 + $0x8] sm:$0xff]
      %v845 = vld [vmem:[#allocation4 + $0x10] sm:$0xff]
      %v846 = vld [vmem:[#allocation4 + $0x18] sm:$0xff]
      %v847 = vld [vmem:[#allocation4 + $0x20] sm:$0xff]
      %v848 = vld [vmem:[#allocation4 + $0x28] sm:$0xff]
      %v849 = vld [vmem:[#allocation4 + $0x30] sm:$0xff]
      %v850 = vld [vmem:[#allocation4 + $0x38] sm:$0xff]
      %852 = vset.pattern.permute.xlu0 0
      %853 = vperm.xlu0 %852, %v707
      %v854 = vpop.permute.xlu0 %853
      %857 = vset.pattern.permute.xlu0 0
      %858 = vperm.xlu0 %857, %v709
      %v859 = vpop.permute.xlu0 %858
      %862 = vset.pattern.permute.xlu0 0
      %863 = vperm.xlu0 %862, %v711
      %v864 = vpop.permute.xlu0 %863
      %867 = vset.pattern.permute.xlu0 0
      %868 = vperm.xlu0 %867, %v713
      %v869 = vpop.permute.xlu0 %868
      %872 = vset.pattern.permute.xlu0 0
      %873 = vperm.xlu0 %872, %v715
      %v874 = vpop.permute.xlu0 %873
      %877 = vset.pattern.permute.xlu0 0
      %878 = vperm.xlu0 %877, %v717
      %v879 = vpop.permute.xlu0 %878
      %882 = vset.pattern.permute.xlu0 0
      %883 = vperm.xlu0 %882, %v719
      %v884 = vpop.permute.xlu0 %883
      %887 = vset.pattern.permute.xlu0 0
      %888 = vperm.xlu0 %887, %v721
      %v889 = vpop.permute.xlu0 %888
      %v891 = vmul.f32 %v854, %v843
      %v892 = vmul.f32 %v859, %v844
      %v893 = vmul.f32 %v864, %v845
      %v894 = vmul.f32 %v869, %v846
      %v895 = vmul.f32 %v874, %v847
      %v896 = vmul.f32 %v879, %v848
      %v897 = vmul.f32 %v884, %v849
      %v898 = vmul.f32 %v889, %v850
      %v899 = vpack.c.bf16 %v773, %v771
      %v900 = vpack.c.bf16 %v777, %v775
      %v901 = vpack.c.bf16 %v781, %v779
      %v902 = vpack.c.bf16 %v785, %v783
      %v903 = vld [vmem:[%s338] sm:$0xf]
      %v904 = vld [vmem:[%s338 + $0x4] sm:$0xf]
      %v905 = vld [vmem:[%s338 + $0x8] sm:$0xf]
      %v906 = vld [vmem:[%s338 + $0xc] sm:$0xf]
      %v907 = vld [vmem:[%s338 + $0x10] sm:$0xf]
      %v908 = vld [vmem:[%s338 + $0x14] sm:$0xf]
      %v909 = vld [vmem:[%s338 + $0x18] sm:$0xf]
      %v910 = vld [vmem:[%s338 + $0x1c] sm:$0xf]
      %v913 = vunpack.c.l.b16 %v903
      %v914 = vunpack.c.l.b16 %v904
      %v915 = vpack.c.b16 %v914, %v913
      %v918 = vsel %vm416, %v899, 0
      %920 = vmatprep.subr.bf16.mxu0 0
      %921 = vmatpush1.bf16.msra.mxu0 0
      %922 = vmatprep.subr.bf16.mxu0 0
      %923 = vmatpush1.bf16.msra.mxu0 0
      %924 = vmatprep.subr.bf16.mxu0 0
      %925 = vmatpush1.bf16.msra.mxu0 0
      %926 = vmatprep.subr.bf16.mxu0 0
      %927 = vmatpush1.bf16.msra.mxu0 0
      %928 = vmatprep.subr.bf16.mxu0 0
      %929 = vmatpush1.bf16.msra.mxu0 0
      %930 = vmatprep.subr.bf16.mxu0 0
      %931 = vmatpush1.bf16.msra.mxu0 0
      %932 = vmatprep.subr.bf16.mxu0 0
      %933 = vmatpush1.bf16.msra.mxu0 0
      %934 = vmatprep.subr.bf16.mxu0 0
      %935 = vmatpush1.bf16.msra.mxu0 %v915
      %936 = vmatprep.subr.bf16.mxu0 0
      %937 = vmatpush2.bf16.msra.mxu0 0
      %938 = vmatprep.subr.bf16.mxu0 0
      %939 = vmatpush2.bf16.msra.mxu0 0
      %940 = vmatprep.subr.bf16.mxu0 0
      %941 = vmatpush2.bf16.msra.mxu0 0
      %942 = vmatprep.subr.bf16.mxu0 0
      %943 = vmatpush2.bf16.msra.mxu0 0
      %944 = vmatprep.subr.bf16.mxu0 0
      %945 = vmatpush2.bf16.msra.mxu0 0
      %946 = vmatprep.subr.bf16.mxu0 0
      %947 = vmatpush2.bf16.msra.mxu0 0
      %948 = vmatprep.subr.bf16.mxu0 0
      %949 = vmatpush2.bf16.msra.mxu0 0
      %950 = vmatprep.subr.bf16.mxu0 0
      %951 = vmatpush2.bf16.msra.mxu0 0
      %952 = vmatprep.mubr.bf16.mxu0 0
      %953 = vmatmul.mubr.bf16.gmra.mxu0 %v918
      %v954 = vpop.f32.mrf.mxu0
      %v955 = vadd.f32 0.0, %v954
      %v956 = vpop.f32.mrf.mxu0
      %v957 = vpop.f32.mrf.mxu0
      %v958 = vadd.f32 0.0, %v957
      %v959 = vpop.f32.mrf.mxu0
      %960 = vdwg.mxu0
      %v963 = vunpack.c.l.b16 %v905
      %v964 = vunpack.c.l.b16 %v906
      %v965 = vpack.c.b16 %v964, %v963
      %v968 = vsel %vm416, %v900, 0
      %970 = vmatprep.subr.bf16.mxu0 0
      %971 = vmatpush1.bf16.msra.mxu0 0
      %972 = vmatprep.subr.bf16.mxu0 0
      %973 = vmatpush1.bf16.msra.mxu0 0
      %974 = vmatprep.subr.bf16.mxu0 0
      %975 = vmatpush1.bf16.msra.mxu0 0
      %976 = vmatprep.subr.bf16.mxu0 0
      %977 = vmatpush1.bf16.msra.mxu0 0
      %978 = vmatprep.subr.bf16.mxu0 0
      %979 = vmatpush1.bf16.msra.mxu0 0
      %980 = vmatprep.subr.bf16.mxu0 0
      %981 = vmatpush1.bf16.msra.mxu0 0
      %982 = vmatprep.subr.bf16.mxu0 0
      %983 = vmatpush1.bf16.msra.mxu0 0
      %984 = vmatprep.subr.bf16.mxu0 0
      %985 = vmatpush1.bf16.msra.mxu0 %v965
      %986 = vmatprep.subr.bf16.mxu0 0
      %987 = vmatpush2.bf16.msra.mxu0 0
      %988 = vmatprep.subr.bf16.mxu0 0
      %989 = vmatpush2.bf16.msra.mxu0 0
      %990 = vmatprep.subr.bf16.mxu0 0
      %991 = vmatpush2.bf16.msra.mxu0 0
      %992 = vmatprep.subr.bf16.mxu0 0
      %993 = vmatpush2.bf16.msra.mxu0 0
      %994 = vmatprep.subr.bf16.mxu0 0
      %995 = vmatpush2.bf16.msra.mxu0 0
      %996 = vmatprep.subr.bf16.mxu0 0
      %997 = vmatpush2.bf16.msra.mxu0 0
      %998 = vmatprep.subr.bf16.mxu0 0
      %999 = vmatpush2.bf16.msra.mxu0 0
      %1000 = vmatprep.subr.bf16.mxu0 0
      %1001 = vmatpush2.bf16.msra.mxu0 0
      %1002 = vmatprep.mubr.bf16.mxu0 0
      %1003 = vmatmul.mubr.bf16.gmra.mxu0 %v968
      %v1004 = vpop.f32.mrf.mxu0
      %v1005 = vadd.f32 0.0, %v1004
      %v1006 = vpop.f32.mrf.mxu0
      %v1007 = vpop.f32.mrf.mxu0
      %v1008 = vadd.f32 0.0, %v1007
      %v1009 = vpop.f32.mrf.mxu0
      %1010 = vdwg.mxu0
      %v1013 = vunpack.c.l.b16 %v907
      %v1014 = vunpack.c.l.b16 %v908
      %v1015 = vpack.c.b16 %v1014, %v1013
      %v1018 = vsel %vm416, %v901, 0
      %1020 = vmatprep.subr.bf16.mxu0 0
      %1021 = vmatpush1.bf16.msra.mxu0 0
      %1022 = vmatprep.subr.bf16.mxu0 0
      %1023 = vmatpush1.bf16.msra.mxu0 0
      %1024 = vmatprep.subr.bf16.mxu0 0
      %1025 = vmatpush1.bf16.msra.mxu0 0
      %1026 = vmatprep.subr.bf16.mxu0 0
      %1027 = vmatpush1.bf16.msra.mxu0 0
      %1028 = vmatprep.subr.bf16.mxu0 0
      %1029 = vmatpush1.bf16.msra.mxu0 0
      %1030 = vmatprep.subr.bf16.mxu0 0
      %1031 = vmatpush1.bf16.msra.mxu0 0
      %1032 = vmatprep.subr.bf16.mxu0 0
      %1033 = vmatpush1.bf16.msra.mxu0 0
      %1034 = vmatprep.subr.bf16.mxu0 0
      %1035 = vmatpush1.bf16.msra.mxu0 %v1015
      %1036 = vmatprep.subr.bf16.mxu0 0
      %1037 = vmatpush2.bf16.msra.mxu0 0
      %1038 = vmatprep.subr.bf16.mxu0 0
      %1039 = vmatpush2.bf16.msra.mxu0 0
      %1040 = vmatprep.subr.bf16.mxu0 0
      %1041 = vmatpush2.bf16.msra.mxu0 0
      %1042 = vmatprep.subr.bf16.mxu0 0
      %1043 = vmatpush2.bf16.msra.mxu0 0
      %1044 = vmatprep.subr.bf16.mxu0 0
      %1045 = vmatpush2.bf16.msra.mxu0 0
      %1046 = vmatprep.subr.bf16.mxu0 0
      %1047 = vmatpush2.bf16.msra.mxu0 0
      %1048 = vmatprep.subr.bf16.mxu0 0
      %1049 = vmatpush2.bf16.msra.mxu0 0
      %1050 = vmatprep.subr.bf16.mxu0 0
      %1051 = vmatpush2.bf16.msra.mxu0 0
      %1052 = vmatprep.mubr.bf16.mxu0 0
      %1053 = vmatmul.mubr.bf16.gmra.mxu0 %v1018
      %v1054 = vpop.f32.mrf.mxu0
      %v1055 = vadd.f32 0.0, %v1054
      %v1056 = vpop.f32.mrf.mxu0
      %v1057 = vpop.f32.mrf.mxu0
      %v1058 = vadd.f32 0.0, %v1057
      %v1059 = vpop.f32.mrf.mxu0
      %1060 = vdwg.mxu0
      %v1063 = vunpack.c.l.b16 %v909
      %v1064 = vunpack.c.l.b16 %v910
      %v1065 = vpack.c.b16 %v1064, %v1063
      %v1068 = vsel %vm416, %v902, 0
      %1070 = vmatprep.subr.bf16.mxu0 0
      %1071 = vmatpush1.bf16.msra.mxu0 0
      %1072 = vmatprep.subr.bf16.mxu0 0
      %1073 = vmatpush1.bf16.msra.mxu0 0
      %1074 = vmatprep.subr.bf16.mxu0 0
      %1075 = vmatpush1.bf16.msra.mxu0 0
      %1076 = vmatprep.subr.bf16.mxu0 0
      %1077 = vmatpush1.bf16.msra.mxu0 0
      %1078 = vmatprep.subr.bf16.mxu0 0
      %1079 = vmatpush1.bf16.msra.mxu0 0
      %1080 = vmatprep.subr.bf16.mxu0 0
      %1081 = vmatpush1.bf16.msra.mxu0 0
      %1082 = vmatprep.subr.bf16.mxu0 0
      %1083 = vmatpush1.bf16.msra.mxu0 0
      %1084 = vmatprep.subr.bf16.mxu0 0
      %1085 = vmatpush1.bf16.msra.mxu0 %v1065
      %1086 = vmatprep.subr.bf16.mxu0 0
      %1087 = vmatpush2.bf16.msra.mxu0 0
      %1088 = vmatprep.subr.bf16.mxu0 0
      %1089 = vmatpush2.bf16.msra.mxu0 0
      %1090 = vmatprep.subr.bf16.mxu0 0
      %1091 = vmatpush2.bf16.msra.mxu0 0
      %1092 = vmatprep.subr.bf16.mxu0 0
      %1093 = vmatpush2.bf16.msra.mxu0 0
      %1094 = vmatprep.subr.bf16.mxu0 0
      %1095 = vmatpush2.bf16.msra.mxu0 0
      %1096 = vmatprep.subr.bf16.mxu0 0
      %1097 = vmatpush2.bf16.msra.mxu0 0
      %1098 = vmatprep.subr.bf16.mxu0 0
      %1099 = vmatpush2.bf16.msra.mxu0 0
      %1100 = vmatprep.subr.bf16.mxu0 0
      %1101 = vmatpush2.bf16.msra.mxu0 0
      %1102 = vmatprep.mubr.bf16.mxu0 0
      %1103 = vmatmul.mubr.bf16.gmra.mxu0 %v1068
      %v1104 = vpop.f32.mrf.mxu0
      %v1105 = vadd.f32 0.0, %v1104
      %v1106 = vpop.f32.mrf.mxu0
      %v1107 = vpop.f32.mrf.mxu0
      %v1108 = vadd.f32 0.0, %v1107
      %v1109 = vpop.f32.mrf.mxu0
      %1110 = vdwg.mxu0
      %v1111 = vadd.f32 %v891, %v955
      %v1112 = vadd.f32 %v892, %v958
      %v1113 = vadd.f32 %v893, %v1005
      %v1114 = vadd.f32 %v894, %v1008
      %v1115 = vadd.f32 %v895, %v1055
      %v1116 = vadd.f32 %v896, %v1058
      %v1117 = vadd.f32 %v897, %v1105
      %v1118 = vadd.f32 %v898, %v1108
      %1119 = vst.msk [vmem:[#allocation4] sm:$0xff] %vm416, %v1111
      %1120 = vst.msk [vmem:[#allocation4 + $0x8] sm:$0xff] %vm416, %v1112
      %1121 = vst.msk [vmem:[#allocation4 + $0x10] sm:$0xff] %vm416, %v1113
      %1122 = vst.msk [vmem:[#allocation4 + $0x18] sm:$0xff] %vm416, %v1114
      %1123 = vst.msk [vmem:[#allocation4 + $0x20] sm:$0xff] %vm416, %v1115
      %1124 = vst.msk [vmem:[#allocation4 + $0x28] sm:$0xff] %vm416, %v1116
      %1125 = vst.msk [vmem:[#allocation4 + $0x30] sm:$0xff] %vm416, %v1117
      %1126 = vst.msk [vmem:[#allocation4 + $0x38] sm:$0xff] %vm416, %v1118
      %1127 = vst.msk [vmem:[#allocation2] sm:$0xff] %vm834, %v690
      %1128 = vst.msk [vmem:[#allocation2 + $0x8] sm:$0xff] %vm834, %v691
      %1129 = vst.msk [vmem:[#allocation2 + $0x10] sm:$0xff] %vm834, %v692
      %1130 = vst.msk [vmem:[#allocation2 + $0x18] sm:$0xff] %vm834, %v693
      %1131 = vst.msk [vmem:[#allocation2 + $0x20] sm:$0xff] %vm834, %v694
      %1132 = vst.msk [vmem:[#allocation2 + $0x28] sm:$0xff] %vm834, %v695
      %1133 = vst.msk [vmem:[#allocation2 + $0x30] sm:$0xff] %vm834, %v696
      %1134 = vst.msk [vmem:[#allocation2 + $0x38] sm:$0xff] %vm834, %v697
      // Predicated region
      $region41: #{seq2seq_forward.70} parent=35 // pred_check
        %p1135 = pneg %p360
      $region42: #{seq2seq_forward.70} parent=35 // pred_check_branch
        %1137 = sbr.rel (%p1135) target = $region44
      $region43: #{seq2seq_forward.70} parent=35 // pred_region
        %v1138 = vld [vmem:[#allocation4] sm:$0xff]
        %v1139 = vld [vmem:[#allocation4 + $0x8] sm:$0xff]
        %v1140 = vld [vmem:[#allocation4 + $0x10] sm:$0xff]
        %v1141 = vld [vmem:[#allocation4 + $0x18] sm:$0xff]
        %v1142 = vld [vmem:[#allocation4 + $0x20] sm:$0xff]
        %v1143 = vld [vmem:[#allocation4 + $0x28] sm:$0xff]
        %v1144 = vld [vmem:[#allocation4 + $0x30] sm:$0xff]
        %v1145 = vld [vmem:[#allocation4 + $0x38] sm:$0xff]
        %v1146 = vld [vmem:[#allocation3] sm:$0xff]
        %v1147 = vld [vmem:[#allocation3 + $0x8] sm:$0xff]
        %v1148 = vld [vmem:[#allocation3 + $0x10] sm:$0xff]
        %v1149 = vld [vmem:[#allocation3 + $0x18] sm:$0xff]
        %v1150 = vld [vmem:[#allocation3 + $0x20] sm:$0xff]
        %v1151 = vld [vmem:[#allocation3 + $0x28] sm:$0xff]
        %v1152 = vld [vmem:[#allocation3 + $0x30] sm:$0xff]
        %v1153 = vld [vmem:[#allocation3 + $0x38] sm:$0xff]
        %v1154 = vrcp.pop %v1146
        %v1155 = vrcp.pop %v1147
        %v1156 = vrcp.pop %v1148
        %v1157 = vrcp.pop %v1149
        %v1158 = vrcp.pop %v1150
        %v1159 = vrcp.pop %v1151
        %v1160 = vrcp.pop %v1152
        %v1161 = vrcp.pop %v1153
        %1163 = vset.pattern.permute.xlu0 0
        %1164 = vperm.xlu0 %1163, %v1154
        %v1165 = vpop.permute.xlu0 %1164
        %1168 = vset.pattern.permute.xlu0 0
        %1169 = vperm.xlu0 %1168, %v1155
        %v1170 = vpop.permute.xlu0 %1169
        %1173 = vset.pattern.permute.xlu0 0
        %1174 = vperm.xlu0 %1173, %v1156
        %v1175 = vpop.permute.xlu0 %1174
        %1178 = vset.pattern.permute.xlu0 0
        %1179 = vperm.xlu0 %1178, %v1157
        %v1180 = vpop.permute.xlu0 %1179
        %1183 = vset.pattern.permute.xlu0 0
        %1184 = vperm.xlu0 %1183, %v1158
        %v1185 = vpop.permute.xlu0 %1184
        %1188 = vset.pattern.permute.xlu0 0
        %1189 = vperm.xlu0 %1188, %v1159
        %v1190 = vpop.permute.xlu0 %1189
        %1193 = vset.pattern.permute.xlu0 0
        %1194 = vperm.xlu0 %1193, %v1160
        %v1195 = vpop.permute.xlu0 %1194
        %1198 = vset.pattern.permute.xlu0 0
        %1199 = vperm.xlu0 %1198, %v1161
        %v1200 = vpop.permute.xlu0 %1199
        %v1202 = vmul.f32 %v1138, %v1165
        %v1203 = vmul.f32 %v1139, %v1170
        %v1204 = vmul.f32 %v1140, %v1175
        %v1205 = vmul.f32 %v1141, %v1180
        %v1206 = vmul.f32 %v1142, %v1185
        %v1207 = vmul.f32 %v1143, %v1190
        %v1208 = vmul.f32 %v1144, %v1195
        %v1209 = vmul.f32 %v1145, %v1200
        %v1210 = vpack.c.bf16 %v1203, %v1202
        %v1211 = vpack.c.bf16 %v1205, %v1204
        %v1212 = vpack.c.bf16 %v1207, %v1206
        %v1213 = vpack.c.bf16 %v1209, %v1208
        %v1218 = vunpack.c.l.b16 %v1210
        %v1219 = vunpack.c.h.b16 %v1210
        %v1220 = vunpack.c.l.b16 %v1211
        %v1221 = vunpack.c.h.b16 %v1211
        %v1222 = vunpack.c.l.b16 %v1212
        %v1223 = vunpack.c.h.b16 %v1212
        %v1224 = vunpack.c.l.b16 %v1213
        %v1225 = vunpack.c.h.b16 %v1213
        %v1226 = vpack.c.b16 %v1218, %v1218
        %v1227 = vpack.c.b16 %v1219, %v1219
        %v1228 = vpack.c.b16 %v1220, %v1220
        %v1229 = vpack.c.b16 %v1221, %v1221
        %v1230 = vpack.c.b16 %v1222, %v1222
        %v1231 = vpack.c.b16 %v1223, %v1223
        %v1232 = vpack.c.b16 %v1224, %v1224
        %v1233 = vpack.c.b16 %v1225, %v1225
        %vm1242 = vcmask 125952
        %1243 = vst.msk [vmem:[%s356] sm:$0xf] %vm1242, %v1226
        %1244 = vst.msk [vmem:[%s356 + $0x4] sm:$0xf] %vm1242, %v1227
        %1245 = vst.msk [vmem:[%s356 + $0x8] sm:$0xf] %vm1242, %v1228
        %1246 = vst.msk [vmem:[%s356 + $0xc] sm:$0xf] %vm1242, %v1229
        %1247 = vst.msk [vmem:[%s356 + $0x10] sm:$0xf] %vm1242, %v1230
        %1248 = vst.msk [vmem:[%s356 + $0x14] sm:$0xf] %vm1242, %v1231
        %1249 = vst.msk [vmem:[%s356 + $0x18] sm:$0xf] %vm1242, %v1232
        %1250 = vst.msk [vmem:[%s356 + $0x1c] sm:$0xf] %vm1242, %v1233
      $region44: #{seq2seq_forward.70} parent=35 // pred_fallthru
        _
      %s1251 = smul.u32 4, %s20
      %s1252 = smul.u32 2, %s21
      %p1253 = scmp.lt.s32.totalorder %s1251, 7
      %s1254 = scalar_select %p1253, %s1251, 7
      %p1255 = scmp.lt.s32.totalorder %s1252, 1
      %s1256 = scalar_select %p1255, %s1252, 1
      %s1257 = smul.addr %s1254, 2
      %s1258 = sadd.s32 %s1256, %s1257
      %s1259 = smul.addr %s1258, 4
      %s1260 = scalar_lea.vmem %s4, %s1259
      // Predicated region
      $region45: #{seq2seq_forward.70} parent=35 // pred_check
        %p1261 = pneg %p166
      $region46: #{seq2seq_forward.70} parent=35 // pred_check_branch
        %1263 = sbr.rel (%p1261) target = $region48
      $region47: #{seq2seq_forward.70} parent=35 // pred_region
        %s1264 = smul.u32 4, %s20
        %s1265 = smul.u32 2, %s21
      $region48: #{seq2seq_forward.70} parent=35 // pred_fallthru
        _
    $region36: #{seq2seq_forward.70} parent=5 // pred_fallthru
      _
    %p1266 = scmp.le.s32.totalorder 2, %s10
    // Predicated region
    $region49: #{seq2seq_forward.70} parent=5 // pred_check
      %p1267 = pneg %p1266
    $region50: #{seq2seq_forward.70} parent=5 // pred_check_branch
      %1269 = sbr.rel (%p1267) target = $region52
    $region51: #{seq2seq_forward.70} parent=5 // pred_region
      %s1270 = ssub.s32 %s10, 2
      // Predicated region
      $region53: #{seq2seq_forward.70} parent=51 // pred_check
        %p1271 = pneg %p172
      $region54: #{seq2seq_forward.70} parent=51 // pred_check_branch
        %1273 = sbr.rel (%p1271) target = $region56
      $region55: #{seq2seq_forward.70} parent=51 // pred_region
        %s1274 = smul.u32 4, %s23
        %s1275 = smul.u32 2, %s24
        %p1276 = scmp.lt.s32.totalorder %s1274, 7
        %s1277 = scalar_select %p1276, %s1274, 7
        %p1278 = scmp.lt.s32.totalorder %s1275, 1
        %s1279 = scalar_select %p1278, %s1275, 1
        %s1280 = smul.addr %s1277, 2
        %s1281 = sadd.s32 %s1279, %s1280
        %s1282 = smul.addr %s1281, 4
        %s1283 = scalar_lea.vmem %s4, %s1282
      $region56: #{seq2seq_forward.70} parent=51 // pred_fallthru
        _
    $region52: #{seq2seq_forward.70} parent=5 // pred_fallthru
      _
  $region6: #{seq2seq_forward.70} parent=0 // loop_footer
    %s14 = sadd.s32 1, %s10
  $region7: #{seq2seq_forward.70} parent=0 // loop_footer_branch
    %9 = sbr.rel target = $region3
  $region8: #{seq2seq_forward.70} parent=0 // loop_exit
    _

// kernel: seq2seq_forward.72
$region0: #{seq2seq_forward.72}
  #allocation0 [shape = 'u32[]', space=smem, size = 0x4, offset = 0x4, fixed_abs, tag = 'smem constant byte address 0x4 - core index']
  #allocation1 [shape = 'u32[144,128]{1,0:T(1,128)}', space=vmem, size = 0x12000, scoped, tag = 'internal scratch']
  #allocation2 [shape = 'f32[32,128]{1,0:T(8,128)}', space=vmem, size = 0x4000, scoped, tag = 'scratch operand']
  %s0 = inlined_call_operand.vmem [shape: bf16[32,128], index: 0, kind: input, shape index: {}]
  %s1 = inlined_call_operand.vmem [shape: bf16[128,128], index: 1, kind: input, shape index: {}]
  %s2 = inlined_call_operand.vmem [shape: f32[1,128], index: 2, kind: input, shape index: {}]
  %s3 = inlined_call_operand.vmem [shape: bf16[32,128], index: 3, kind: output, shape index: {}]
  %s4 = sld [smem:[#allocation0]]
  $region30: #{seq2seq_forward.72} parent=0
    _
  %s6 = ssub.s32 1, %s4
  %s7 = scalar_select 0, %s6, %s4
  // Predicated region
  $region2: #{seq2seq_forward.72} parent=0 // pred_check
    _
  $region3: #{seq2seq_forward.72} parent=0 // pred_check_branch
    %9 = sbr.rel (0) target = $region5
  $region4: #{seq2seq_forward.72} parent=0 // pred_region
    _
  $region5: #{seq2seq_forward.72} parent=0 // pred_fallthru
    _
  // Predicated region
  $region6: #{seq2seq_forward.72} parent=0 // pred_check
    _
  $region7: #{seq2seq_forward.72} parent=0 // pred_check_branch
    %11 = sbr.rel (0) target = $region9
  $region8: #{seq2seq_forward.72} parent=0 // pred_region
    _
  $region9: #{seq2seq_forward.72} parent=0 // pred_fallthru
    _
  // Predicated region
  $region10: #{seq2seq_forward.72} parent=0 // pred_check
    _
  $region11: #{seq2seq_forward.72} parent=0 // pred_check_branch
    %13 = sbr.rel (0) target = $region13
  $region12: #{seq2seq_forward.72} parent=0 // pred_region
    _
  $region13: #{seq2seq_forward.72} parent=0 // pred_fallthru
    _
  %p15 = scmp.eq.s32.totalorder 0, 0
  // Predicated region
  $region14: #{seq2seq_forward.72} parent=0 // pred_check
    %p16 = pneg %p15
  $region15: #{seq2seq_forward.72} parent=0 // pred_check_branch
    %18 = sbr.rel (%p16) target = $region17
  $region16: #{seq2seq_forward.72} parent=0 // pred_region
    %19 = vst [vmem:[#allocation2] sm:$0xff] 0.0
    %20 = vst [vmem:[#allocation2 + $0x8] sm:$0xff] 0.0
    %21 = vst [vmem:[#allocation2 + $0x10] sm:$0xff] 0.0
    %22 = vst [vmem:[#allocation2 + $0x18] sm:$0xff] 0.0
  $region17: #{seq2seq_forward.72} parent=0 // pred_fallthru
    _
  %v23 = vld [vmem:[#allocation2] sm:$0xff]
  %v24 = vld [vmem:[#allocation2 + $0x8] sm:$0xff]
  %v25 = vld [vmem:[#allocation2 + $0x10] sm:$0xff]
  %v26 = vld [vmem:[#allocation2 + $0x18] sm:$0xff]
  %v27 = vld [vmem:[%s0] sm:$0xf]
  %v28 = vld [vmem:[%s0 + $0x4] sm:$0xf]
  %v29 = vld [vmem:[%s0 + $0x8] sm:$0xf]
  %v30 = vld [vmem:[%s0 + $0xc] sm:$0xf]
  %v31 = vld [vmem:[%s1] sm:$0xf]
  %v32 = vld [vmem:[%s1 + $0x4] sm:$0xf]
  %v33 = vld [vmem:[%s1 + $0x8] sm:$0xf]
  %v34 = vld [vmem:[%s1 + $0xc] sm:$0xf]
  %v35 = vld [vmem:[%s1 + $0x10] sm:$0xf]
  %v36 = vld [vmem:[%s1 + $0x14] sm:$0xf]
  %v37 = vld [vmem:[%s1 + $0x18] sm:$0xf]
  %v38 = vld [vmem:[%s1 + $0x1c] sm:$0xf]
  %v39 = vld [vmem:[%s1 + $0x20] sm:$0xf]
  %v40 = vld [vmem:[%s1 + $0x24] sm:$0xf]
  %v41 = vld [vmem:[%s1 + $0x28] sm:$0xf]
  %v42 = vld [vmem:[%s1 + $0x2c] sm:$0xf]
  %v43 = vld [vmem:[%s1 + $0x30] sm:$0xf]
  %v44 = vld [vmem:[%s1 + $0x34] sm:$0xf]
  %v45 = vld [vmem:[%s1 + $0x38] sm:$0xf]
  %v46 = vld [vmem:[%s1 + $0x3c] sm:$0xf]
  %v51 = vunpack.c.l.b16 %v27
  %v52 = vunpack.c.l.b16 %v28
  %v53 = vunpack.c.l.b16 %v29
  %v54 = vunpack.c.l.b16 %v30
  %v55 = vpack.c.b16 %v52, %v51
  %v56 = vpack.c.b16 %v54, %v53
  %v75 = vunpack.c.l.b16 %v31
  %v76 = vunpack.c.l.b16 %v32
  %v77 = vunpack.c.l.b16 %v33
  %v78 = vunpack.c.l.b16 %v34
  %v79 = vunpack.c.l.b16 %v35
  %v80 = vunpack.c.l.b16 %v36
  %v81 = vunpack.c.l.b16 %v37
  %v82 = vunpack.c.l.b16 %v38
  %v83 = vunpack.c.l.b16 %v39
  %v84 = vunpack.c.l.b16 %v40
  %v85 = vunpack.c.l.b16 %v41
  %v86 = vunpack.c.l.b16 %v42
  %v87 = vunpack.c.l.b16 %v43
  %v88 = vunpack.c.l.b16 %v44
  %v89 = vunpack.c.l.b16 %v45
  %v90 = vunpack.c.l.b16 %v46
  %v91 = vpack.c.b16 %v76, %v75
  %v92 = vpack.c.b16 %v78, %v77
  %v93 = vpack.c.b16 %v80, %v79
  %v94 = vpack.c.b16 %v82, %v81
  %v95 = vpack.c.b16 %v84, %v83
  %v96 = vpack.c.b16 %v86, %v85
  %v97 = vpack.c.b16 %v88, %v87
  %v98 = vpack.c.b16 %v90, %v89
  %107 = vmatprep.subr.bf16.mxu0 0
  %108 = vmatpush1.bf16.msra.mxu0 %v98
  %109 = vmatprep.subr.bf16.mxu0 0
  %110 = vmatpush1.bf16.msra.mxu0 %v97
  %111 = vmatprep.subr.bf16.mxu0 0
  %112 = vmatpush1.bf16.msra.mxu0 %v96
  %113 = vmatprep.subr.bf16.mxu0 0
  %114 = vmatpush1.bf16.msra.mxu0 %v95
  %115 = vmatprep.subr.bf16.mxu0 0
  %116 = vmatpush1.bf16.msra.mxu0 %v94
  %117 = vmatprep.subr.bf16.mxu0 0
  %118 = vmatpush1.bf16.msra.mxu0 %v93
  %119 = vmatprep.subr.bf16.mxu0 0
  %120 = vmatpush1.bf16.msra.mxu0 %v92
  %121 = vmatprep.subr.bf16.mxu0 0
  %122 = vmatpush1.bf16.msra.mxu0 %v91
  %123 = vmatprep.subr.bf16.mxu0 0
  %124 = vmatpush2.bf16.msra.mxu0 0
  %125 = vmatprep.subr.bf16.mxu0 0
  %126 = vmatpush2.bf16.msra.mxu0 0
  %127 = vmatprep.subr.bf16.mxu0 0
  %128 = vmatpush2.bf16.msra.mxu0 0
  %129 = vmatprep.subr.bf16.mxu0 0
  %130 = vmatpush2.bf16.msra.mxu0 0
  %131 = vmatprep.subr.bf16.mxu0 0
  %132 = vmatpush2.bf16.msra.mxu0 0
  %133 = vmatprep.subr.bf16.mxu0 0
  %134 = vmatpush2.bf16.msra.mxu0 0
  %135 = vmatprep.subr.bf16.mxu0 0
  %136 = vmatpush2.bf16.msra.mxu0 0
  %137 = vmatprep.subr.bf16.mxu0 0
  %138 = vmatpush2.bf16.msra.mxu0 0
  %139 = vmatprep.mubr.bf16.mxu0 0
  %140 = vmatmul.mubr.bf16.gmra.mxu0 %v55
  %v141 = vpop.f32.mrf.mxu0
  %v142 = vadd.f32 0.0, %v141
  %v143 = vpop.f32.mrf.mxu0
  %v144 = vpop.f32.mrf.mxu0
  %v145 = vadd.f32 0.0, %v144
  %v146 = vpop.f32.mrf.mxu0
  %147 = vmatprep.mubr.bf16.mxu0 0
  %148 = vmatmul.mubr.bf16.gmra.mxu0 %v56
  %v149 = vpop.f32.mrf.mxu0
  %v150 = vadd.f32 0.0, %v149
  %v151 = vpop.f32.mrf.mxu0
  %v152 = vpop.f32.mrf.mxu0
  %v153 = vadd.f32 0.0, %v152
  %v154 = vpop.f32.mrf.mxu0
  %155 = vdwg.mxu0
  %v156 = vadd.f32 %v23, %v142
  %v157 = vadd.f32 %v24, %v145
  %v158 = vadd.f32 %v25, %v150
  %v159 = vadd.f32 %v26, %v153
  %160 = vst [vmem:[#allocation2] sm:$0xff] %v156
  %161 = vst [vmem:[#allocation2 + $0x8] sm:$0xff] %v157
  %162 = vst [vmem:[#allocation2 + $0x10] sm:$0xff] %v158
  %163 = vst [vmem:[#allocation2 + $0x18] sm:$0xff] %v159
  // Predicated region
  $region18: #{seq2seq_forward.72} parent=0 // pred_check
    %p164 = pneg %p15
  $region19: #{seq2seq_forward.72} parent=0 // pred_check_branch
    %166 = sbr.rel (%p164) target = $region21
  $region20: #{seq2seq_forward.72} parent=0 // pred_region
    %v167 = vld [vmem:[#allocation2] sm:$0xff]
    %v168 = vld [vmem:[#allocation2 + $0x8] sm:$0xff]
    %v169 = vld [vmem:[#allocation2 + $0x10] sm:$0xff]
    %v170 = vld [vmem:[#allocation2 + $0x18] sm:$0xff]
    %v171 = vld [vmem:[%s2] sm:$0x1]
    %v173 = vlaneseq
    %v174 = vshrl.u32 %v173, 7
    %v175 = vsub.s32 0, %v174
    %v176 = vrot.slane %v171, %v175
    %v178 = vadd.f32 %v167, %v176
    %v179 = vadd.f32 %v168, %v176
    %v180 = vadd.f32 %v169, %v176
    %v181 = vadd.f32 %v170, %v176
    %v182 = vmul.f32 %v178, %v178
    %v183 = vmul.f32 %v179, %v179
    %v184 = vmul.f32 %v180, %v180
    %v185 = vmul.f32 %v181, %v181
    %v186 = vmul.f32 %v178, %v182
    %v187 = vmul.f32 %v179, %v183
    %v188 = vmul.f32 %v180, %v184
    %v189 = vmul.f32 %v181, %v185
    %v190 = vmul.f32 %v186, 0.044715
    %v191 = vmul.f32 %v187, 0.044715
    %v192 = vmul.f32 %v188, 0.044715
    %v193 = vmul.f32 %v189, 0.044715
    %v194 = vadd.f32 %v178, %v190
    %v195 = vadd.f32 %v179, %v191
    %v196 = vadd.f32 %v180, %v192
    %v197 = vadd.f32 %v181, %v193
    %v198 = vmul.f32 %v194, 0.7978846
    %v199 = vmul.f32 %v195, 0.7978846
    %v200 = vmul.f32 %v196, 0.7978846
    %v201 = vmul.f32 %v197, 0.7978846
    %v202 = vtanh.pop %v198
    %v203 = vtanh.pop %v199
    %v204 = vtanh.pop %v200
    %v205 = vtanh.pop %v201
    %v206 = vadd.f32 %v202, 1.0
    %v207 = vadd.f32 %v203, 1.0
    %v208 = vadd.f32 %v204, 1.0
    %v209 = vadd.f32 %v205, 1.0
    %v210 = vmul.f32 %v206, 0.5
    %v211 = vmul.f32 %v207, 0.5
    %v212 = vmul.f32 %v208, 0.5
    %v213 = vmul.f32 %v209, 0.5
    %v214 = vmul.f32 %v178, %v210
    %v215 = vmul.f32 %v179, %v211
    %v216 = vmul.f32 %v180, %v212
    %v217 = vmul.f32 %v181, %v213
    %v218 = vpack.c.bf16 %v215, %v214
    %v219 = vpack.c.bf16 %v217, %v216
    %v222 = vunpack.c.l.b16 %v218
    %v223 = vunpack.c.h.b16 %v218
    %v224 = vunpack.c.l.b16 %v219
    %v225 = vunpack.c.h.b16 %v219
    %v226 = vpack.c.b16 %v222, %v222
    %v227 = vpack.c.b16 %v223, %v223
    %v228 = vpack.c.b16 %v224, %v224
    %v229 = vpack.c.b16 %v225, %v225
    %234 = vst [vmem:[%s3] sm:$0xf] %v226
    %235 = vst [vmem:[%s3 + $0x4] sm:$0xf] %v227
    %236 = vst [vmem:[%s3 + $0x8] sm:$0xf] %v228
    %237 = vst [vmem:[%s3 + $0xc] sm:$0xf] %v229
  $region21: #{seq2seq_forward.72} parent=0 // pred_fallthru
    _
  // Predicated region
  $region22: #{seq2seq_forward.72} parent=0 // pred_check
    _
  $region23: #{seq2seq_forward.72} parent=0 // pred_check_branch
    %239 = sbr.rel (0) target = $region25
  $region24: #{seq2seq_forward.72} parent=0 // pred_region
    _
  $region25: #{seq2seq_forward.72} parent=0 // pred_fallthru
    _
  // Predicated region
  $region26: #{seq2seq_forward.72} parent=0 // pred_check
    _
  $region27: #{seq2seq_forward.72} parent=0 // pred_check_branch
    %241 = sbr.rel (0) target = $region29
  $region28: #{seq2seq_forward.72} parent=0 // pred_region
    _
  $region29: #{seq2seq_forward.72} parent=0 // pred_fallthru
    _

// kernel: seq2seq_forward.80
$region0: #{seq2seq_forward.80}
  #allocation0 [shape = 'u32[]', space=smem, size = 0x4, offset = 0x4, fixed_abs, tag = 'smem constant byte address 0x4 - core index']
  #allocation1 [shape = 'u32[144,128]{1,0:T(1,128)}', space=vmem, size = 0x12000, scoped, tag = 'internal scratch']
  #allocation2 [shape = 'f32[16,256]{1,0:T(8,128)}', space=vmem, size = 0x4000, scoped, tag = 'scratch operand']
  %s0 = inlined_call_operand.vmem [shape: bf16[16,128], index: 0, kind: input, shape index: {}]
  %s1 = inlined_call_operand.vmem [shape: bf16[128,256], index: 1, kind: input, shape index: {}]
  %s2 = inlined_call_operand.vmem [shape: f32[1,256], index: 2, kind: input, shape index: {}]
  %s3 = inlined_call_operand.vmem [shape: bf16[16,256], index: 3, kind: output, shape index: {}]
  %s4 = sld [smem:[#allocation0]]
  $region30: #{seq2seq_forward.80} parent=0
    _
  %s6 = ssub.s32 1, %s4
  %s7 = scalar_select 0, %s6, %s4
  // Predicated region
  $region2: #{seq2seq_forward.80} parent=0 // pred_check
    _
  $region3: #{seq2seq_forward.80} parent=0 // pred_check_branch
    %9 = sbr.rel (0) target = $region5
  $region4: #{seq2seq_forward.80} parent=0 // pred_region
    _
  $region5: #{seq2seq_forward.80} parent=0 // pred_fallthru
    _
  // Predicated region
  $region6: #{seq2seq_forward.80} parent=0 // pred_check
    _
  $region7: #{seq2seq_forward.80} parent=0 // pred_check_branch
    %11 = sbr.rel (0) target = $region9
  $region8: #{seq2seq_forward.80} parent=0 // pred_region
    _
  $region9: #{seq2seq_forward.80} parent=0 // pred_fallthru
    _
  // Predicated region
  $region10: #{seq2seq_forward.80} parent=0 // pred_check
    _
  $region11: #{seq2seq_forward.80} parent=0 // pred_check_branch
    %13 = sbr.rel (0) target = $region13
  $region12: #{seq2seq_forward.80} parent=0 // pred_region
    _
  $region13: #{seq2seq_forward.80} parent=0 // pred_fallthru
    _
  %p15 = scmp.eq.s32.totalorder 0, 0
  // Predicated region
  $region14: #{seq2seq_forward.80} parent=0 // pred_check
    %p16 = pneg %p15
  $region15: #{seq2seq_forward.80} parent=0 // pred_check_branch
    %18 = sbr.rel (%p16) target = $region17
  $region16: #{seq2seq_forward.80} parent=0 // pred_region
    %19 = vst [vmem:[#allocation2] sm:$0xff] 0.0
    %20 = vst [vmem:[#allocation2 + $0x8] sm:$0xff] 0.0
    %21 = vst [vmem:[#allocation2 + $0x10] sm:$0xff] 0.0
    %22 = vst [vmem:[#allocation2 + $0x18] sm:$0xff] 0.0
  $region17: #{seq2seq_forward.80} parent=0 // pred_fallthru
    _
  %v23 = vld [vmem:[#allocation2] sm:$0xff]
  %v24 = vld [vmem:[#allocation2 + $0x8] sm:$0xff]
  %v25 = vld [vmem:[#allocation2 + $0x10] sm:$0xff]
  %v26 = vld [vmem:[#allocation2 + $0x18] sm:$0xff]
  %v27 = vld [vmem:[%s0] sm:$0xf]
  %v28 = vld [vmem:[%s0 + $0x4] sm:$0xf]
  %v29 = vld [vmem:[%s1] sm:$0xff]
  %v30 = vld [vmem:[%s1 + $0x8] sm:$0xff]
  %v31 = vld [vmem:[%s1 + $0x10] sm:$0xff]
  %v32 = vld [vmem:[%s1 + $0x18] sm:$0xff]
  %v33 = vld [vmem:[%s1 + $0x20] sm:$0xff]
  %v34 = vld [vmem:[%s1 + $0x28] sm:$0xff]
  %v35 = vld [vmem:[%s1 + $0x30] sm:$0xff]
  %v36 = vld [vmem:[%s1 + $0x38] sm:$0xff]
  %v37 = vld [vmem:[%s1 + $0x40] sm:$0xff]
  %v38 = vld [vmem:[%s1 + $0x48] sm:$0xff]
  %v39 = vld [vmem:[%s1 + $0x50] sm:$0xff]
  %v40 = vld [vmem:[%s1 + $0x58] sm:$0xff]
  %v41 = vld [vmem:[%s1 + $0x60] sm:$0xff]
  %v42 = vld [vmem:[%s1 + $0x68] sm:$0xff]
  %v43 = vld [vmem:[%s1 + $0x70] sm:$0xff]
  %v44 = vld [vmem:[%s1 + $0x78] sm:$0xff]
  %v47 = vunpack.c.l.b16 %v27
  %v48 = vunpack.c.l.b16 %v28
  %v49 = vpack.c.b16 %v48, %v47
  %v67 = vunpack.c.l.b16 %v29
  %v68 = vunpack.c.h.b16 %v29
  %v69 = vunpack.c.l.b16 %v30
  %v70 = vunpack.c.h.b16 %v30
  %v71 = vunpack.c.l.b16 %v31
  %v72 = vunpack.c.h.b16 %v31
  %v73 = vunpack.c.l.b16 %v32
  %v74 = vunpack.c.h.b16 %v32
  %v75 = vunpack.c.l.b16 %v33
  %v76 = vunpack.c.h.b16 %v33
  %v77 = vunpack.c.l.b16 %v34
  %v78 = vunpack.c.h.b16 %v34
  %v79 = vunpack.c.l.b16 %v35
  %v80 = vunpack.c.h.b16 %v35
  %v81 = vunpack.c.l.b16 %v36
  %v82 = vunpack.c.h.b16 %v36
  %v83 = vunpack.c.l.b16 %v37
  %v84 = vunpack.c.h.b16 %v37
  %v85 = vunpack.c.l.b16 %v38
  %v86 = vunpack.c.h.b16 %v38
  %v87 = vunpack.c.l.b16 %v39
  %v88 = vunpack.c.h.b16 %v39
  %v89 = vunpack.c.l.b16 %v40
  %v90 = vunpack.c.h.b16 %v40
  %v91 = vunpack.c.l.b16 %v41
  %v92 = vunpack.c.h.b16 %v41
  %v93 = vunpack.c.l.b16 %v42
  %v94 = vunpack.c.h.b16 %v42
  %v95 = vunpack.c.l.b16 %v43
  %v96 = vunpack.c.h.b16 %v43
  %v97 = vunpack.c.l.b16 %v44
  %v98 = vunpack.c.h.b16 %v44
  %v99 = vpack.c.b16 %v69, %v67
  %v100 = vpack.c.b16 %v70, %v68
  %v101 = vpack.c.b16 %v73, %v71
  %v102 = vpack.c.b16 %v74, %v72
  %v103 = vpack.c.b16 %v77, %v75
  %v104 = vpack.c.b16 %v78, %v76
  %v105 = vpack.c.b16 %v81, %v79
  %v106 = vpack.c.b16 %v82, %v80
  %v107 = vpack.c.b16 %v85, %v83
  %v108 = vpack.c.b16 %v86, %v84
  %v109 = vpack.c.b16 %v89, %v87
  %v110 = vpack.c.b16 %v90, %v88
  %v111 = vpack.c.b16 %v93, %v91
  %v112 = vpack.c.b16 %v94, %v92
  %v113 = vpack.c.b16 %v97, %v95
  %v114 = vpack.c.b16 %v98, %v96
  %131 = vmatprep.subr.bf16.mxu0 %v114
  %132 = vmatpush1.bf16.msra.mxu0 %v113
  %133 = vmatprep.subr.bf16.mxu0 %v112
  %134 = vmatpush1.bf16.msra.mxu0 %v111
  %135 = vmatprep.subr.bf16.mxu0 %v110
  %136 = vmatpush1.bf16.msra.mxu0 %v109
  %137 = vmatprep.subr.bf16.mxu0 %v108
  %138 = vmatpush1.bf16.msra.mxu0 %v107
  %139 = vmatprep.subr.bf16.mxu0 %v106
  %140 = vmatpush1.bf16.msra.mxu0 %v105
  %141 = vmatprep.subr.bf16.mxu0 %v104
  %142 = vmatpush1.bf16.msra.mxu0 %v103
  %143 = vmatprep.subr.bf16.mxu0 %v102
  %144 = vmatpush1.bf16.msra.mxu0 %v101
  %145 = vmatprep.subr.bf16.mxu0 %v100
  %146 = vmatpush1.bf16.msra.mxu0 %v99
  %147 = vmatprep.subr.bf16.mxu0 0
  %148 = vmatpush2.bf16.msra.mxu0 0
  %149 = vmatprep.subr.bf16.mxu0 0
  %150 = vmatpush2.bf16.msra.mxu0 0
  %151 = vmatprep.subr.bf16.mxu0 0
  %152 = vmatpush2.bf16.msra.mxu0 0
  %153 = vmatprep.subr.bf16.mxu0 0
  %154 = vmatpush2.bf16.msra.mxu0 0
  %155 = vmatprep.subr.bf16.mxu0 0
  %156 = vmatpush2.bf16.msra.mxu0 0
  %157 = vmatprep.subr.bf16.mxu0 0
  %158 = vmatpush2.bf16.msra.mxu0 0
  %159 = vmatprep.subr.bf16.mxu0 0
  %160 = vmatpush2.bf16.msra.mxu0 0
  %161 = vmatprep.subr.bf16.mxu0 0
  %162 = vmatpush2.bf16.msra.mxu0 0
  %163 = vmatprep.mubr.bf16.mxu0 0
  %164 = vmatmul.mubr.bf16.gmra.mxu0 %v49
  %v165 = vpop.f32.mrf.mxu0
  %v166 = vadd.f32 0.0, %v165
  %v167 = vpop.f32.mrf.mxu0
  %v168 = vadd.f32 0.0, %v167
  %v169 = vpop.f32.mrf.mxu0
  %v170 = vadd.f32 0.0, %v169
  %v171 = vpop.f32.mrf.mxu0
  %v172 = vadd.f32 0.0, %v171
  %173 = vdwg.mxu0
  %v174 = vadd.f32 %v23, %v166
  %v175 = vadd.f32 %v24, %v168
  %v176 = vadd.f32 %v25, %v170
  %v177 = vadd.f32 %v26, %v172
  %178 = vst [vmem:[#allocation2] sm:$0xff] %v174
  %179 = vst [vmem:[#allocation2 + $0x8] sm:$0xff] %v175
  %180 = vst [vmem:[#allocation2 + $0x10] sm:$0xff] %v176
  %181 = vst [vmem:[#allocation2 + $0x18] sm:$0xff] %v177
  // Predicated region
  $region18: #{seq2seq_forward.80} parent=0 // pred_check
    %p182 = pneg %p15
  $region19: #{seq2seq_forward.80} parent=0 // pred_check_branch
    %184 = sbr.rel (%p182) target = $region21
  $region20: #{seq2seq_forward.80} parent=0 // pred_region
    %v185 = vld [vmem:[#allocation2] sm:$0xff]
    %v186 = vld [vmem:[#allocation2 + $0x8] sm:$0xff]
    %v187 = vld [vmem:[#allocation2 + $0x10] sm:$0xff]
    %v188 = vld [vmem:[#allocation2 + $0x18] sm:$0xff]
    %v189 = vld [vmem:[%s2] sm:$0x3]
    %v191 = vlaneseq
    %v192 = vshrl.u32 %v191, 7
    %v193 = vsub.s32 0, %v192
    %v194 = vrot.slane %v189, %v193
    %v195 = vlaneseq
    %v196 = vshrl.u32 %v195, 7
    %v197 = vsub.s32 1, %v196
    %v198 = vrot.slane %v189, %v197
    %v201 = vadd.f32 %v185, %v194
    %v202 = vadd.f32 %v186, %v198
    %v203 = vadd.f32 %v187, %v194
    %v204 = vadd.f32 %v188, %v198
    %v205 = vpack.c.bf16 %v203, %v201
    %v206 = vpack.c.bf16 %v204, %v202
    %v209 = vunpack.c.l.b16 %v205
    %v210 = vunpack.c.l.b16 %v206
    %v211 = vunpack.c.h.b16 %v205
    %v212 = vunpack.c.h.b16 %v206
    %v213 = vpack.c.b16 %v210, %v209
    %v214 = vpack.c.b16 %v212, %v211
    %217 = vst [vmem:[%s3] sm:$0xff] %v213
    %218 = vst [vmem:[%s3 + $0x8] sm:$0xff] %v214
  $region21: #{seq2seq_forward.80} parent=0 // pred_fallthru
    _
  // Predicated region
  $region22: #{seq2seq_forward.80} parent=0 // pred_check
    _
  $region23: #{seq2seq_forward.80} parent=0 // pred_check_branch
    %220 = sbr.rel (0) target = $region25
  $region24: #{seq2seq_forward.80} parent=0 // pred_region
    _
  $region25: #{seq2seq_forward.80} parent=0 // pred_fallthru
    _
  // Predicated region
  $region26: #{seq2seq_forward.80} parent=0 // pred_check
    _
  $region27: #{seq2seq_forward.80} parent=0 // pred_check_branch
    %222 = sbr.rel (0) target = $region29
  $region28: #{seq2seq_forward.80} parent=0 // pred_region
    _
  $region29: #{seq2seq_forward.80} parent=0 // pred_fallthru
    _

// kernel: seq2seq_forward.79
$region0: #{seq2seq_forward.79}
  #allocation0 [shape = 'u32[]', space=smem, size = 0x4, offset = 0x4, fixed_abs, tag = 'smem constant byte address 0x4 - core index']
  #allocation1 [shape = 'u32[144,128]{1,0:T(1,128)}', space=vmem, size = 0x12000, scoped, tag = 'internal scratch']
  %s0 = inlined_call_operand.vmem [shape: f32[16,128], index: 0, kind: input, shape index: {}]
  %s1 = inlined_call_operand.vmem [shape: f32[1,128], index: 1, kind: input, shape index: {}]
  %s2 = inlined_call_operand.vmem [shape: f32[1,128], index: 2, kind: input, shape index: {}]
  %s3 = inlined_call_operand.vmem [shape: bf16[16,128], index: 3, kind: output, shape index: {}]
  %s4 = sld [smem:[#allocation0]]
  $region22: #{seq2seq_forward.79} parent=0
    _
  %s6 = ssub.s32 1, %s4
  %s7 = scalar_select 0, %s6, %s4
  // Predicated region
  $region2: #{seq2seq_forward.79} parent=0 // pred_check
    _
  $region3: #{seq2seq_forward.79} parent=0 // pred_check_branch
    %9 = sbr.rel (0) target = $region5
  $region4: #{seq2seq_forward.79} parent=0 // pred_region
    _
  $region5: #{seq2seq_forward.79} parent=0 // pred_fallthru
    _
  // Predicated region
  $region6: #{seq2seq_forward.79} parent=0 // pred_check
    _
  $region7: #{seq2seq_forward.79} parent=0 // pred_check_branch
    %11 = sbr.rel (0) target = $region9
  $region8: #{seq2seq_forward.79} parent=0 // pred_region
    _
  $region9: #{seq2seq_forward.79} parent=0 // pred_fallthru
    _
  // Predicated region
  $region10: #{seq2seq_forward.79} parent=0 // pred_check
    _
  $region11: #{seq2seq_forward.79} parent=0 // pred_check_branch
    %13 = sbr.rel (0) target = $region13
  $region12: #{seq2seq_forward.79} parent=0 // pred_region
    _
  $region13: #{seq2seq_forward.79} parent=0 // pred_fallthru
    _
  %v14 = vld [vmem:[%s0] sm:$0xff]
  %v15 = vld [vmem:[%s0 + $0x8] sm:$0xff]
  %16 = vadd.xlane.f32.xlu0 %v14
  %v17 = vpop.xlane.xlu0 %16
  %18 = vadd.xlane.f32.xlu0 %v15
  %v19 = vpop.xlane.xlu0 %18
  %v20 = vmul.f32 %v17, 0.015625
  %v21 = vmul.f32 %v19, 0.015625
  %v22 = vmul.f32 %v14, %v14
  %v23 = vmul.f32 %v15, %v15
  %24 = vadd.xlane.f32.xlu0 %v22
  %v25 = vpop.xlane.xlu0 %24
  %26 = vadd.xlane.f32.xlu0 %v23
  %v27 = vpop.xlane.xlu0 %26
  %v28 = vmul.f32 %v25, 0.015625
  %v29 = vmul.f32 %v27, 0.015625
  %v30 = vmul.f32 %v20, %v20
  %v31 = vmul.f32 %v21, %v21
  %v32 = vsub.f32 %v28, %v30
  %v33 = vsub.f32 %v29, %v31
  %v34 = vmax.f32 %v32, 0.0
  %v35 = vmax.f32 %v33, 0.0
  %v36 = vsub.f32 %v14, %v20
  %v37 = vsub.f32 %v15, %v21
  %v38 = vadd.f32 %v34, 1e-12
  %v39 = vadd.f32 %v35, 1e-12
  %v40 = vrsqrt.pop %v38
  %v41 = vrsqrt.pop %v39
  %v42 = vmul.f32 %v36, %v40
  %v43 = vmul.f32 %v37, %v41
  %v44 = vld [vmem:[%s1] sm:$0x1]
  %v46 = vlaneseq
  %v47 = vshrl.u32 %v46, 7
  %v48 = vsub.s32 0, %v47
  %v49 = vrot.slane %v44, %v48
  %v51 = vmul.f32 %v42, %v49
  %v52 = vmul.f32 %v43, %v49
  %v53 = vld [vmem:[%s2] sm:$0x1]
  %v55 = vlaneseq
  %v56 = vshrl.u32 %v55, 7
  %v57 = vsub.s32 0, %v56
  %v58 = vrot.slane %v53, %v57
  %v60 = vadd.f32 %v51, %v58
  %v61 = vadd.f32 %v52, %v58
  %v62 = vpack.c.bf16 %v61, %v60
  %v64 = vunpack.c.l.b16 %v62
  %v65 = vunpack.c.h.b16 %v62
  %v66 = vpack.c.b16 %v64, %v64
  %v67 = vpack.c.b16 %v65, %v65
  %70 = vst [vmem:[%s3] sm:$0xf] %v66
  %71 = vst [vmem:[%s3 + $0x4] sm:$0xf] %v67
  // Predicated region
  $region14: #{seq2seq_forward.79} parent=0 // pred_check
    _
  $region15: #{seq2seq_forward.79} parent=0 // pred_check_branch
    %73 = sbr.rel (0) target = $region17
  $region16: #{seq2seq_forward.79} parent=0 // pred_region
    _
  $region17: #{seq2seq_forward.79} parent=0 // pred_fallthru
    _
  // Predicated region
  $region18: #{seq2seq_forward.79} parent=0 // pred_check
    _
  $region19: #{seq2seq_forward.79} parent=0 // pred_check_branch
    %75 = sbr.rel (0) target = $region21
  $region20: #{seq2seq_forward.79} parent=0 // pred_region
    _
  $region21: #{seq2seq_forward.79} parent=0 // pred_fallthru
    _

// kernel: seq2seq_forward.82
$region0: #{seq2seq_forward.82}
  #allocation0 [shape = 'u32[]', space=smem, size = 0x4, offset = 0x4, fixed_abs, tag = 'smem constant byte address 0x4 - core index']
  #allocation1 [shape = 'u32[144,128]{1,0:T(1,128)}', space=vmem, size = 0x12000, scoped, tag = 'internal scratch']
  #allocation2 [shape = 'f32[16,128]{1,0:T(8,128)}', space=vmem, size = 0x2000, scoped, tag = 'scratch operand']
  %s0 = inlined_call_operand.vmem [shape: bf16[16,128], index: 0, kind: input, shape index: {}]
  %s1 = inlined_call_operand.vmem [shape: bf16[128,128], index: 1, kind: input, shape index: {}]
  %s2 = inlined_call_operand.vmem [shape: f32[1,128], index: 2, kind: input, shape index: {}, may-alias: {2,5}]
  %s3 = inlined_call_operand.vmem [shape: bf16[16,128], index: 3, kind: input, shape index: {}]
  %s4 = inlined_call_operand.vmem [shape: f32[1,128], index: 4, kind: input, shape index: {}]
  %s5 = inlined_call_operand.vmem [shape: f32[1,128], index: 5, kind: input, shape index: {}, may-alias: {2,5}]
  %s6 = inlined_call_operand.vmem [shape: bf16[16,128], index: 6, kind: output, shape index: {}]
  %s7 = sld [smem:[#allocation0]]
  $region42: #{seq2seq_forward.82} parent=0
    _
  %s9 = ssub.s32 1, %s7
  %s10 = scalar_select 0, %s9, %s7
  // Predicated region
  $region2: #{seq2seq_forward.82} parent=0 // pred_check
    _
  $region3: #{seq2seq_forward.82} parent=0 // pred_check_branch
    %12 = sbr.rel (0) target = $region5
  $region4: #{seq2seq_forward.82} parent=0 // pred_region
    _
  $region5: #{seq2seq_forward.82} parent=0 // pred_fallthru
    _
  // Predicated region
  $region6: #{seq2seq_forward.82} parent=0 // pred_check
    _
  $region7: #{seq2seq_forward.82} parent=0 // pred_check_branch
    %14 = sbr.rel (0) target = $region9
  $region8: #{seq2seq_forward.82} parent=0 // pred_region
    _
  $region9: #{seq2seq_forward.82} parent=0 // pred_fallthru
    _
  // Predicated region
  $region10: #{seq2seq_forward.82} parent=0 // pred_check
    _
  $region11: #{seq2seq_forward.82} parent=0 // pred_check_branch
    %16 = sbr.rel (0) target = $region13
  $region12: #{seq2seq_forward.82} parent=0 // pred_region
    _
  $region13: #{seq2seq_forward.82} parent=0 // pred_fallthru
    _
  // Predicated region
  $region14: #{seq2seq_forward.82} parent=0 // pred_check
    _
  $region15: #{seq2seq_forward.82} parent=0 // pred_check_branch
    %18 = sbr.rel (0) target = $region17
  $region16: #{seq2seq_forward.82} parent=0 // pred_region
    _
  $region17: #{seq2seq_forward.82} parent=0 // pred_fallthru
    _
  // Predicated region
  $region18: #{seq2seq_forward.82} parent=0 // pred_check
    _
  $region19: #{seq2seq_forward.82} parent=0 // pred_check_branch
    %20 = sbr.rel (0) target = $region21
  $region20: #{seq2seq_forward.82} parent=0 // pred_region
    _
  $region21: #{seq2seq_forward.82} parent=0 // pred_fallthru
    _
  // Predicated region
  $region22: #{seq2seq_forward.82} parent=0 // pred_check
    _
  $region23: #{seq2seq_forward.82} parent=0 // pred_check_branch
    %22 = sbr.rel (0) target = $region25
  $region24: #{seq2seq_forward.82} parent=0 // pred_region
    _
  $region25: #{seq2seq_forward.82} parent=0 // pred_fallthru
    _
  %p24 = scmp.eq.s32.totalorder 0, 0
  // Predicated region
  $region26: #{seq2seq_forward.82} parent=0 // pred_check
    %p25 = pneg %p24
  $region27: #{seq2seq_forward.82} parent=0 // pred_check_branch
    %27 = sbr.rel (%p25) target = $region29
  $region28: #{seq2seq_forward.82} parent=0 // pred_region
    %28 = vst [vmem:[#allocation2] sm:$0xff] 0.0
    %29 = vst [vmem:[#allocation2 + $0x8] sm:$0xff] 0.0
  $region29: #{seq2seq_forward.82} parent=0 // pred_fallthru
    _
  %v30 = vld [vmem:[#allocation2] sm:$0xff]
  %v31 = vld [vmem:[#allocation2 + $0x8] sm:$0xff]
  %v32 = vld [vmem:[%s0] sm:$0xf]
  %v33 = vld [vmem:[%s0 + $0x4] sm:$0xf]
  %v34 = vld [vmem:[%s1] sm:$0xf]
  %v35 = vld [vmem:[%s1 + $0x4] sm:$0xf]
  %v36 = vld [vmem:[%s1 + $0x8] sm:$0xf]
  %v37 = vld [vmem:[%s1 + $0xc] sm:$0xf]
  %v38 = vld [vmem:[%s1 + $0x10] sm:$0xf]
  %v39 = vld [vmem:[%s1 + $0x14] sm:$0xf]
  %v40 = vld [vmem:[%s1 + $0x18] sm:$0xf]
  %v41 = vld [vmem:[%s1 + $0x1c] sm:$0xf]
  %v42 = vld [vmem:[%s1 + $0x20] sm:$0xf]
  %v43 = vld [vmem:[%s1 + $0x24] sm:$0xf]
  %v44 = vld [vmem:[%s1 + $0x28] sm:$0xf]
  %v45 = vld [vmem:[%s1 + $0x2c] sm:$0xf]
  %v46 = vld [vmem:[%s1 + $0x30] sm:$0xf]
  %v47 = vld [vmem:[%s1 + $0x34] sm:$0xf]
  %v48 = vld [vmem:[%s1 + $0x38] sm:$0xf]
  %v49 = vld [vmem:[%s1 + $0x3c] sm:$0xf]
  %v52 = vunpack.c.l.b16 %v32
  %v53 = vunpack.c.l.b16 %v33
  %v54 = vpack.c.b16 %v53, %v52
  %v72 = vunpack.c.l.b16 %v34
  %v73 = vunpack.c.l.b16 %v35
  %v74 = vunpack.c.l.b16 %v36
  %v75 = vunpack.c.l.b16 %v37
  %v76 = vunpack.c.l.b16 %v38
  %v77 = vunpack.c.l.b16 %v39
  %v78 = vunpack.c.l.b16 %v40
  %v79 = vunpack.c.l.b16 %v41
  %v80 = vunpack.c.l.b16 %v42
  %v81 = vunpack.c.l.b16 %v43
  %v82 = vunpack.c.l.b16 %v44
  %v83 = vunpack.c.l.b16 %v45
  %v84 = vunpack.c.l.b16 %v46
  %v85 = vunpack.c.l.b16 %v47
  %v86 = vunpack.c.l.b16 %v48
  %v87 = vunpack.c.l.b16 %v49
  %v88 = vpack.c.b16 %v73, %v72
  %v89 = vpack.c.b16 %v75, %v74
  %v90 = vpack.c.b16 %v77, %v76
  %v91 = vpack.c.b16 %v79, %v78
  %v92 = vpack.c.b16 %v81, %v80
  %v93 = vpack.c.b16 %v83, %v82
  %v94 = vpack.c.b16 %v85, %v84
  %v95 = vpack.c.b16 %v87, %v86
  %104 = vmatprep.subr.bf16.mxu0 0
  %105 = vmatpush1.bf16.msra.mxu0 %v95
  %106 = vmatprep.subr.bf16.mxu0 0
  %107 = vmatpush1.bf16.msra.mxu0 %v94
  %108 = vmatprep.subr.bf16.mxu0 0
  %109 = vmatpush1.bf16.msra.mxu0 %v93
  %110 = vmatprep.subr.bf16.mxu0 0
  %111 = vmatpush1.bf16.msra.mxu0 %v92
  %112 = vmatprep.subr.bf16.mxu0 0
  %113 = vmatpush1.bf16.msra.mxu0 %v91
  %114 = vmatprep.subr.bf16.mxu0 0
  %115 = vmatpush1.bf16.msra.mxu0 %v90
  %116 = vmatprep.subr.bf16.mxu0 0
  %117 = vmatpush1.bf16.msra.mxu0 %v89
  %118 = vmatprep.subr.bf16.mxu0 0
  %119 = vmatpush1.bf16.msra.mxu0 %v88
  %120 = vmatprep.subr.bf16.mxu0 0
  %121 = vmatpush2.bf16.msra.mxu0 0
  %122 = vmatprep.subr.bf16.mxu0 0
  %123 = vmatpush2.bf16.msra.mxu0 0
  %124 = vmatprep.subr.bf16.mxu0 0
  %125 = vmatpush2.bf16.msra.mxu0 0
  %126 = vmatprep.subr.bf16.mxu0 0
  %127 = vmatpush2.bf16.msra.mxu0 0
  %128 = vmatprep.subr.bf16.mxu0 0
  %129 = vmatpush2.bf16.msra.mxu0 0
  %130 = vmatprep.subr.bf16.mxu0 0
  %131 = vmatpush2.bf16.msra.mxu0 0
  %132 = vmatprep.subr.bf16.mxu0 0
  %133 = vmatpush2.bf16.msra.mxu0 0
  %134 = vmatprep.subr.bf16.mxu0 0
  %135 = vmatpush2.bf16.msra.mxu0 0
  %136 = vmatprep.mubr.bf16.mxu0 0
  %137 = vmatmul.mubr.bf16.gmra.mxu0 %v54
  %v138 = vpop.f32.mrf.mxu0
  %v139 = vadd.f32 0.0, %v138
  %v140 = vpop.f32.mrf.mxu0
  %v141 = vpop.f32.mrf.mxu0
  %v142 = vadd.f32 0.0, %v141
  %v143 = vpop.f32.mrf.mxu0
  %144 = vdwg.mxu0
  %v145 = vadd.f32 %v30, %v139
  %v146 = vadd.f32 %v31, %v142
  %147 = vst [vmem:[#allocation2] sm:$0xff] %v145
  %148 = vst [vmem:[#allocation2 + $0x8] sm:$0xff] %v146
  // Predicated region
  $region30: #{seq2seq_forward.82} parent=0 // pred_check
    %p149 = pneg %p24
  $region31: #{seq2seq_forward.82} parent=0 // pred_check_branch
    %151 = sbr.rel (%p149) target = $region33
  $region32: #{seq2seq_forward.82} parent=0 // pred_region
    %v152 = vld [vmem:[#allocation2] sm:$0xff]
    %v153 = vld [vmem:[#allocation2 + $0x8] sm:$0xff]
    %v154 = vld [vmem:[%s2] sm:$0x1]
    %v156 = vlaneseq
    %v157 = vshrl.u32 %v156, 7
    %v158 = vsub.s32 0, %v157
    %v159 = vrot.slane %v154, %v158
    %v161 = vadd.f32 %v152, %v159
    %v162 = vadd.f32 %v153, %v159
    %v163 = vld [vmem:[%s3] sm:$0xf]
    %v164 = vld [vmem:[%s3 + $0x4] sm:$0xf]
    %v165 = vunpack.c.l.bf16 %v163
    %v166 = vunpack.c.l.bf16 %v164
    %v167 = vadd.f32 %v161, %v165
    %v168 = vadd.f32 %v162, %v166
    %169 = vadd.xlane.f32.xlu0 %v167
    %v170 = vpop.xlane.xlu0 %169
    %171 = vadd.xlane.f32.xlu0 %v168
    %v172 = vpop.xlane.xlu0 %171
    %v173 = vmul.f32 %v170, 0.015625
    %v174 = vmul.f32 %v172, 0.015625
    %v175 = vmul.f32 %v167, %v167
    %v176 = vmul.f32 %v168, %v168
    %177 = vadd.xlane.f32.xlu0 %v175
    %v178 = vpop.xlane.xlu0 %177
    %179 = vadd.xlane.f32.xlu0 %v176
    %v180 = vpop.xlane.xlu0 %179
    %v181 = vmul.f32 %v178, 0.015625
    %v182 = vmul.f32 %v180, 0.015625
    %v183 = vmul.f32 %v173, %v173
    %v184 = vmul.f32 %v174, %v174
    %v185 = vsub.f32 %v181, %v183
    %v186 = vsub.f32 %v182, %v184
    %v187 = vmax.f32 %v185, 0.0
    %v188 = vmax.f32 %v186, 0.0
    %v189 = vsub.f32 %v167, %v173
    %v190 = vsub.f32 %v168, %v174
    %v191 = vadd.f32 %v187, 1e-05
    %v192 = vadd.f32 %v188, 1e-05
    %v193 = vrsqrt.pop %v191
    %v194 = vrsqrt.pop %v192
    %v195 = vmul.f32 %v189, %v193
    %v196 = vmul.f32 %v190, %v194
    %v197 = vld [vmem:[%s4] sm:$0x1]
    %v199 = vlaneseq
    %v200 = vshrl.u32 %v199, 7
    %v201 = vsub.s32 0, %v200
    %v202 = vrot.slane %v197, %v201
    %v204 = vmul.f32 %v195, %v202
    %v205 = vmul.f32 %v196, %v202
    %v206 = vld [vmem:[%s5] sm:$0x1]
    %v208 = vlaneseq
    %v209 = vshrl.u32 %v208, 7
    %v210 = vsub.s32 0, %v209
    %v211 = vrot.slane %v206, %v210
    %v213 = vadd.f32 %v204, %v211
    %v214 = vadd.f32 %v205, %v211
    %v215 = vpack.c.bf16 %v214, %v213
    %v217 = vunpack.c.l.b16 %v215
    %v218 = vunpack.c.h.b16 %v215
    %v219 = vpack.c.b16 %v217, %v217
    %v220 = vpack.c.b16 %v218, %v218
    %223 = vst [vmem:[%s6] sm:$0xf] %v219
    %224 = vst [vmem:[%s6 + $0x4] sm:$0xf] %v220
  $region33: #{seq2seq_forward.82} parent=0 // pred_fallthru
    _
  // Predicated region
  $region34: #{seq2seq_forward.82} parent=0 // pred_check
    _
  $region35: #{seq2seq_forward.82} parent=0 // pred_check_branch
    %226 = sbr.rel (0) target = $region37
  $region36: #{seq2seq_forward.82} parent=0 // pred_region
    _
  $region37: #{seq2seq_forward.82} parent=0 // pred_fallthru
    _
  // Predicated region
  $region38: #{seq2seq_forward.82} parent=0 // pred_check
    _
  $region39: #{seq2seq_forward.82} parent=0 // pred_check_branch
    %228 = sbr.rel (0) target = $region41
  $region40: #{seq2seq_forward.82} parent=0 // pred_region
    _
  $region41: #{seq2seq_forward.82} parent=0 // pred_fallthru
    _

// kernel: seq2seq_forward.81
$region0: #{seq2seq_forward.81}
  #allocation0 [shape = 'u32[]', space=smem, size = 0x4, offset = 0x4, fixed_abs, tag = 'smem constant byte address 0x4 - core index']
  #allocation1 [shape = 'u32[144,128]{1,0:T(1,128)}', space=vmem, size = 0x12000, scoped, tag = 'internal scratch']
  #allocation2 [shape = 'f32[4,8,1]{2,1,0:T(8,128)}', space=vmem, size = 0x4000, scoped, tag = 'scratch operand']
  #allocation3 [shape = 'f32[4,8,1]{2,1,0:T(8,128)}', space=vmem, size = 0x4000, scoped, tag = 'scratch operand']
  #allocation4 [shape = 'f32[4,8,16]{2,1,0:T(8,128)}', space=vmem, size = 0x4000, scoped, tag = 'scratch operand']
  %s0 = inlined_call_operand.vmem [shape: bf16[8,8,16], index: 0, kind: input, shape index: {}]
  %s1 = inlined_call_operand.vmem [shape: bf16[8,8,16], index: 1, kind: input, shape index: {}]
  %s2 = inlined_call_operand.vmem [shape: bf16[8,8,16], index: 2, kind: input, shape index: {}]
  %s3 = inlined_call_operand.vmem [shape: bf16[8,8,16], index: 3, kind: output, shape index: {}]
  %s4 = sld [smem:[#allocation0]]
  $region53: #{seq2seq_forward.81} parent=0
    _
  %s6 = ssub.s32 1, %s4
  %s7 = scalar_select 0, %s6, %s4
  loop: start=0, step=1, limit=4
  $region2: #{seq2seq_forward.81} parent=0 // loop_pre_header
    _
  $region3: #{seq2seq_forward.81} parent=0 // loop_header
    %s9 = sphi 0, %s13
    %p10 = scmp.ge.s32.totalorder %s9, 4
    %s16 = sphi 0, %s35
    %s17 = sphi 0, %s31
    %s18 = sphi 0, %s27
    %s19 = sphi 0, %s16
    %s20 = sphi 0, %s17
    %s21 = sphi 0, %s18
    %s22 = sphi 0, %s19
    %s23 = sphi 0, %s20
    %s24 = sphi 0, %s21
    %s40 = sphi 0, %s42
    %s43 = sphi 0, %s40
    %s44 = sphi 0, %s43
    %s60 = sphi 0, %s44
    %s68 = sphi 0, %s70
    %s71 = sphi 0, %s68
    %s72 = sphi 0, %s71
    %s88 = sphi 0, %s72
    %s96 = sphi 0, %s98
    %s99 = sphi 0, %s96
    %s100 = sphi 0, %s99
    %s116 = sphi 0, %s100
    %s124 = sphi 0, %s126
    %s127 = sphi 0, %s124
    %s128 = sphi 0, %s127
    %s144 = sphi 0, %s128
  $region4: #{seq2seq_forward.81} parent=0 // loop_header_branch
    %12 = sbr.rel (%p10) target = $region8
  $region5: #{seq2seq_forward.81} parent=0 // loop_body
    %s14 = ssub.s32 %s9, 1
    %s15 = ssub.s32 %s9, 2
    %s25 = sadd.s32 1, %s18
    %p26 = scmp.ge.s32.totalorder %s25, 1
    %s27 = scalar_select %p26, 0, %s25
    %s28 = sadd.s32 1, %s17
    %s29 = scalar_select %p26, %s28, %s17
    %p30 = scmp.ge.s32.totalorder %s29, 1
    %s31 = scalar_select %p30, 0, %s29
    %s32 = sadd.s32 1, %s16
    %s33 = scalar_select %p30, %s32, %s16
    %p34 = scmp.ge.s32.totalorder %s33, 2
    %s35 = scalar_select %p34, 0, %s33
    %s36 = ssub.s32 %s16, %s35
    %s37 = ssub.s32 %s17, %s31
    %s38 = sor.u32 %s36, %s37
    %p39 = scmp.eq.s32.totalorder %s38, 0
    %s41 = sadd.s32 %s40, 1
    %s42 = scalar_select %p39, %s40, %s41
    %p45 = pneg %p39
    %p46 = scmp.eq.s32.totalorder %s9, 1
    %p47 = por %p45, %p46
    %p48 = scmp.ne.s32.totalorder %s40, %s43
    %p49 = scmp.eq.s32.totalorder %s9, 0
    %p50 = por %p48, %p49
    %p51 = scmp.ne.s32.totalorder %s40, %s43
    %p52 = scmp.eq.s32.totalorder %s14, 1
    %p53 = por %p51, %p52
    %p54 = scmp.ne.s32.totalorder %s43, %s44
    %p55 = scmp.eq.s32.totalorder %s14, 0
    %p56 = por %p54, %p55
    %p57 = scmp.ne.s32.totalorder %s43, %s44
    %p58 = scmp.eq.s32.totalorder %s15, 1
    %p59 = por %p57, %p58
    %p61 = scmp.ne.s32.totalorder %s44, %s60
    %p62 = scmp.eq.s32.totalorder %s15, 0
    %p63 = por %p61, %p62
    %s64 = ssub.s32 %s16, %s35
    %s65 = ssub.s32 %s18, %s27
    %s66 = sor.u32 %s64, %s65
    %p67 = scmp.eq.s32.totalorder %s66, 0
    %s69 = sadd.s32 %s68, 1
    %s70 = scalar_select %p67, %s68, %s69
    %p73 = pneg %p67
    %p74 = scmp.eq.s32.totalorder %s9, 1
    %p75 = por %p73, %p74
    %p76 = scmp.ne.s32.totalorder %s68, %s71
    %p77 = scmp.eq.s32.totalorder %s9, 0
    %p78 = por %p76, %p77
    %p79 = scmp.ne.s32.totalorder %s68, %s71
    %p80 = scmp.eq.s32.totalorder %s14, 1
    %p81 = por %p79, %p80
    %p82 = scmp.ne.s32.totalorder %s71, %s72
    %p83 = scmp.eq.s32.totalorder %s14, 0
    %p84 = por %p82, %p83
    %p85 = scmp.ne.s32.totalorder %s71, %s72
    %p86 = scmp.eq.s32.totalorder %s15, 1
    %p87 = por %p85, %p86
    %p89 = scmp.ne.s32.totalorder %s72, %s88
    %p90 = scmp.eq.s32.totalorder %s15, 0
    %p91 = por %p89, %p90
    %s92 = ssub.s32 %s16, %s35
    %s93 = ssub.s32 %s18, %s27
    %s94 = sor.u32 %s92, %s93
    %p95 = scmp.eq.s32.totalorder %s94, 0
    %s97 = sadd.s32 %s96, 1
    %s98 = scalar_select %p95, %s96, %s97
    %p101 = pneg %p95
    %p102 = scmp.eq.s32.totalorder %s9, 1
    %p103 = por %p101, %p102
    %p104 = scmp.ne.s32.totalorder %s96, %s99
    %p105 = scmp.eq.s32.totalorder %s9, 0
    %p106 = por %p104, %p105
    %p107 = scmp.ne.s32.totalorder %s96, %s99
    %p108 = scmp.eq.s32.totalorder %s14, 1
    %p109 = por %p107, %p108
    %p110 = scmp.ne.s32.totalorder %s99, %s100
    %p111 = scmp.eq.s32.totalorder %s14, 0
    %p112 = por %p110, %p111
    %p113 = scmp.ne.s32.totalorder %s99, %s100
    %p114 = scmp.eq.s32.totalorder %s15, 1
    %p115 = por %p113, %p114
    %p117 = scmp.ne.s32.totalorder %s100, %s116
    %p118 = scmp.eq.s32.totalorder %s15, 0
    %p119 = por %p117, %p118
    %s120 = ssub.s32 %s16, %s35
    %s121 = ssub.s32 %s17, %s31
    %s122 = sor.u32 %s120, %s121
    %p123 = scmp.eq.s32.totalorder %s122, 0
    %s125 = sadd.s32 %s124, 1
    %s126 = scalar_select %p123, %s124, %s125
    %p129 = pneg %p123
    %p130 = scmp.eq.s32.totalorder %s9, 1
    %p131 = por %p129, %p130
    %p132 = scmp.ne.s32.totalorder %s124, %s127
    %p133 = scmp.eq.s32.totalorder %s9, 0
    %p134 = por %p132, %p133
    %p135 = scmp.ne.s32.totalorder %s124, %s127
    %p136 = scmp.eq.s32.totalorder %s14, 1
    %p137 = por %p135, %p136
    %p138 = scmp.ne.s32.totalorder %s127, %s128
    %p139 = scmp.eq.s32.totalorder %s14, 0
    %p140 = por %p138, %p139
    %p141 = scmp.ne.s32.totalorder %s127, %s128
    %p142 = scmp.eq.s32.totalorder %s15, 1
    %p143 = por %p141, %p142
    %p145 = scmp.ne.s32.totalorder %s128, %s144
    %p146 = scmp.eq.s32.totalorder %s15, 0
    %p147 = por %p145, %p146
    %p148 = scmp.le.s32.totalorder 1, %s9
    %p149 = scmp.lt.s32.totalorder %s9, 3
    %p150 = pnand %p148, %p149
    %p151 = pneg %p150
    // Predicated region
    $region9: #{seq2seq_forward.81} parent=5 // pred_check
      _
    $region10: #{seq2seq_forward.81} parent=5 // pred_check_branch
      %153 = sbr.rel (%p150) target = $region12
    $region11: #{seq2seq_forward.81} parent=5 // pred_region
      %s154 = ssub.s32 %s9, 1
    $region12: #{seq2seq_forward.81} parent=5 // pred_fallthru
      _
    %p155 = scmp.lt.s32.totalorder %s9, 2
    // Predicated region
    $region13: #{seq2seq_forward.81} parent=5 // pred_check
      %p156 = pneg %p155
    $region14: #{seq2seq_forward.81} parent=5 // pred_check_branch
      %158 = sbr.rel (%p156) target = $region16
    $region15: #{seq2seq_forward.81} parent=5 // pred_region
      // Predicated region
      $region17: #{seq2seq_forward.81} parent=15 // pred_check
        %p159 = pneg %p50
      $region18: #{seq2seq_forward.81} parent=15 // pred_check_branch
        %161 = sbr.rel (%p159) target = $region20
      $region19: #{seq2seq_forward.81} parent=15 // pred_region
        %s162 = smul.u32 4, %s16
        %p163 = scmp.lt.s32.totalorder %s162, 7
        %s164 = scalar_select %p163, %s162, 7
        %p165 = scmp.lt.s32.totalorder %s17, 0
        %s166 = scalar_select %p165, %s17, 0
        %s167 = sadd.s32 %s166, %s164
        %s168 = smul.addr %s167, 4
        %s169 = scalar_lea.vmem %s0, %s168
        %s170 = smul.u32 4, %s16
      $region20: #{seq2seq_forward.81} parent=15 // pred_fallthru
        _
      // Predicated region
      $region21: #{seq2seq_forward.81} parent=15 // pred_check
        %p171 = pneg %p78
      $region22: #{seq2seq_forward.81} parent=15 // pred_check_branch
        %173 = sbr.rel (%p171) target = $region24
      $region23: #{seq2seq_forward.81} parent=15 // pred_region
        %s174 = smul.u32 4, %s16
        %p175 = scmp.lt.s32.totalorder %s174, 7
        %s176 = scalar_select %p175, %s174, 7
        %p177 = scmp.lt.s32.totalorder %s18, 0
        %s178 = scalar_select %p177, %s18, 0
        %s179 = sadd.s32 %s178, %s176
        %s180 = smul.addr %s179, 4
        %s181 = scalar_lea.vmem %s1, %s180
        %s182 = smul.u32 4, %s16
      $region24: #{seq2seq_forward.81} parent=15 // pred_fallthru
        _
      // Predicated region
      $region25: #{seq2seq_forward.81} parent=15 // pred_check
        %p183 = pneg %p106
      $region26: #{seq2seq_forward.81} parent=15 // pred_check_branch
        %185 = sbr.rel (%p183) target = $region28
      $region27: #{seq2seq_forward.81} parent=15 // pred_region
        %s186 = smul.u32 4, %s16
        %p187 = scmp.lt.s32.totalorder %s186, 7
        %s188 = scalar_select %p187, %s186, 7
        %p189 = scmp.lt.s32.totalorder %s18, 0
        %s190 = scalar_select %p189, %s18, 0
        %s191 = sadd.s32 %s190, %s188
        %s192 = smul.addr %s191, 4
        %s193 = scalar_lea.vmem %s2, %s192
        %s194 = smul.u32 4, %s16
      $region28: #{seq2seq_forward.81} parent=15 // pred_fallthru
        _
    $region16: #{seq2seq_forward.81} parent=5 // pred_fallthru
      _
    %p195 = scmp.le.s32.totalorder 1, %s9
    %p196 = scmp.lt.s32.totalorder %s9, 3
    %p197 = pnand %p195, %p196
    %p198 = pneg %p197
    // Predicated region
    $region29: #{seq2seq_forward.81} parent=5 // pred_check
      _
    $region30: #{seq2seq_forward.81} parent=5 // pred_check_branch
      %200 = sbr.rel (%p197) target = $region32
    $region31: #{seq2seq_forward.81} parent=5 // pred_region
      %s201 = ssub.s32 %s9, 1
      %s202 = smul.u32 4, %s19
      %p203 = scmp.lt.s32.totalorder %s202, 7
      %s204 = scalar_select %p203, %s202, 7
      %p205 = scmp.lt.s32.totalorder %s20, 0
      %s206 = scalar_select %p205, %s20, 0
      %s207 = sadd.s32 %s206, %s204
      %s208 = smul.addr %s207, 4
      %s209 = scalar_lea.vmem %s0, %s208
      %p210 = pneg %p56
      %p211 = pneg %p53
      %s212 = smul.u32 4, %s19
      %p213 = scmp.lt.s32.totalorder %s212, 7
      %s214 = scalar_select %p213, %s212, 7
      %p215 = scmp.lt.s32.totalorder %s21, 0
      %s216 = scalar_select %p215, %s21, 0
      %s217 = sadd.s32 %s216, %s214
      %s218 = smul.addr %s217, 4
      %s219 = scalar_lea.vmem %s1, %s218
      %p220 = pneg %p84
      %p221 = pneg %p81
      %s222 = smul.u32 4, %s19
      %p223 = scmp.lt.s32.totalorder %s222, 7
      %s224 = scalar_select %p223, %s222, 7
      %p225 = scmp.lt.s32.totalorder %s21, 0
      %s226 = scalar_select %p225, %s21, 0
      %s227 = sadd.s32 %s226, %s224
      %s228 = smul.addr %s227, 4
      %s229 = scalar_lea.vmem %s2, %s228
      %p230 = pneg %p112
      %p231 = pneg %p109
      %p232 = pneg %p140
      %p233 = pneg %p137
      %s234 = smul.u32 4, %s19
      %p235 = scmp.lt.s32.totalorder %s234, 7
      %s236 = scalar_select %p235, %s234, 7
      %p237 = scmp.lt.s32.totalorder %s20, 0
      %s238 = scalar_select %p237, %s20, 0
      %s239 = sadd.s32 %s238, %s236
      %s240 = smul.addr %s239, 4
      %s241 = scalar_lea.vmem %s3, %s240
      %s242 = smul.u32 4, %s19
      %p243 = scmp.lt.s32.totalorder %s242, 7
      %s244 = scalar_select %p243, %s242, 7
      %p245 = scmp.lt.s32.totalorder %s20, 0
      %s246 = scalar_select %p245, %s20, 0
      %s247 = sadd.s32 %s246, %s244
      %s248 = smul.addr %s247, 4
      %s249 = scalar_lea.vmem %s0, %s248
      %s250 = smul.u32 4, %s19
      %s251 = smul.u32 4, %s19
      %p252 = scmp.lt.s32.totalorder %s251, 7
      %s253 = scalar_select %p252, %s251, 7
      %p254 = scmp.lt.s32.totalorder %s21, 0
      %s255 = scalar_select %p254, %s21, 0
      %s256 = sadd.s32 %s255, %s253
      %s257 = smul.addr %s256, 4
      %s258 = scalar_lea.vmem %s1, %s257
      %s259 = smul.u32 4, %s19
      %s260 = smul.u32 4, %s19
      %p261 = scmp.lt.s32.totalorder %s260, 7
      %s262 = scalar_select %p261, %s260, 7
      %p263 = scmp.lt.s32.totalorder %s21, 0
      %s264 = scalar_select %p263, %s21, 0
      %s265 = sadd.s32 %s264, %s262
      %s266 = smul.addr %s265, 4
      %s267 = scalar_lea.vmem %s2, %s266
      %s268 = smul.u32 4, %s19
      %s269 = smul.u32 4, %s19
      %p270 = scmp.lt.s32.totalorder %s269, 7
      %s271 = scalar_select %p270, %s269, 7
      %p272 = scmp.lt.s32.totalorder %s20, 0
      %s273 = scalar_select %p272, %s20, 0
      %s274 = sadd.s32 %s273, %s271
      %s275 = smul.addr %s274, 4
      %s276 = scalar_lea.vmem %s3, %s275
      %s277 = smul.u32 4, %s19
      %p279 = scmp.eq.s32.totalorder %s21, 0
      // Predicated region
      $region33: #{seq2seq_forward.81} parent=31 // pred_check
        %p280 = pneg %p279
      $region34: #{seq2seq_forward.81} parent=31 // pred_check_branch
        %282 = sbr.rel (%p280) target = $region36
      $region35: #{seq2seq_forward.81} parent=31 // pred_region
        %vm283 = vcmask 7168
        %284 = vst.msk [vmem:[#allocation2] sm:$0xff] %vm283, -1e+30
        %285 = vst.msk [vmem:[#allocation2 + $0x8] sm:$0xff] %vm283, -1e+30
        %286 = vst.msk [vmem:[#allocation2 + $0x10] sm:$0xff] %vm283, -1e+30
        %287 = vst.msk [vmem:[#allocation2 + $0x18] sm:$0xff] %vm283, -1e+30
        %288 = vst.msk [vmem:[#allocation3] sm:$0xff] %vm283, 0.0
        %289 = vst.msk [vmem:[#allocation3 + $0x8] sm:$0xff] %vm283, 0.0
        %290 = vst.msk [vmem:[#allocation3 + $0x10] sm:$0xff] %vm283, 0.0
        %291 = vst.msk [vmem:[#allocation3 + $0x18] sm:$0xff] %vm283, 0.0
        %vm292 = vcmask 130048
        %293 = vst.msk [vmem:[#allocation4] sm:$0xff] %vm292, 0.0
        %294 = vst.msk [vmem:[#allocation4 + $0x8] sm:$0xff] %vm292, 0.0
        %295 = vst.msk [vmem:[#allocation4 + $0x10] sm:$0xff] %vm292, 0.0
        %296 = vst.msk [vmem:[#allocation4 + $0x18] sm:$0xff] %vm292, 0.0
      $region36: #{seq2seq_forward.81} parent=31 // pred_fallthru
        _
      %v297 = vld [vmem:[%s249] sm:$0xf]
      %v298 = vld [vmem:[%s249 + $0x4] sm:$0xf]
      %v299 = vld [vmem:[%s249 + $0x8] sm:$0xf]
      %v300 = vld [vmem:[%s249 + $0xc] sm:$0xf]
      %v301 = vld [vmem:[%s258] sm:$0xf]
      %v302 = vld [vmem:[%s258 + $0x4] sm:$0xf]
      %v303 = vld [vmem:[%s258 + $0x8] sm:$0xf]
      %v304 = vld [vmem:[%s258 + $0xc] sm:$0xf]
      %vm305 = vcmask 130048
      %v307 = vsel %vm305, %v297, 0
      %v310 = vsel %vm305, %v301, 0
      %312 = vmatprep.subr.bf16.mxu0 0
      %313 = vmatpush1.bf16.xpose.msra.mxu0 0
      %314 = vmatprep.subr.bf16.mxu0 0
      %315 = vmatpush1.bf16.xpose.msra.mxu0 0
      %316 = vmatprep.subr.bf16.mxu0 0
      %317 = vmatpush1.bf16.xpose.msra.mxu0 0
      %318 = vmatprep.subr.bf16.mxu0 0
      %319 = vmatpush1.bf16.xpose.msra.mxu0 0
      %320 = vmatprep.subr.bf16.mxu0 0
      %321 = vmatpush1.bf16.xpose.msra.mxu0 0
      %322 = vmatprep.subr.bf16.mxu0 0
      %323 = vmatpush1.bf16.xpose.msra.mxu0 0
      %324 = vmatprep.subr.bf16.mxu0 0
      %325 = vmatpush1.bf16.xpose.msra.mxu0 0
      %326 = vmatprep.subr.bf16.mxu0 0
      %327 = vmatpush1.bf16.xpose.msra.mxu0 %v310
      %328 = vmatprep.subr.bf16.mxu0 0
      %329 = vmatpush2.bf16.xpose.msra.mxu0 0
      %330 = vmatprep.subr.bf16.mxu0 0
      %331 = vmatpush2.bf16.xpose.msra.mxu0 0
      %332 = vmatprep.subr.bf16.mxu0 0
      %333 = vmatpush2.bf16.xpose.msra.mxu0 0
      %334 = vmatprep.subr.bf16.mxu0 0
      %335 = vmatpush2.bf16.xpose.msra.mxu0 0
      %336 = vmatprep.subr.bf16.mxu0 0
      %337 = vmatpush2.bf16.xpose.msra.mxu0 0
      %338 = vmatprep.subr.bf16.mxu0 0
      %339 = vmatpush2.bf16.xpose.msra.mxu0 0
      %340 = vmatprep.subr.bf16.mxu0 0
      %341 = vmatpush2.bf16.xpose.msra.mxu0 0
      %342 = vmatprep.subr.bf16.mxu0 0
      %343 = vmatpush2.bf16.xpose.msra.mxu0 0
      %344 = vmatprep.mubr.bf16.mxu0 0
      %345 = vmatmul.mubr.bf16.gmra.mxu0 %v307
      %v346 = vpop.f32.mrf.mxu0
      %v347 = vadd.f32 0.0, %v346
      %v348 = vpop.f32.mrf.mxu0
      %v349 = vpop.f32.mrf.mxu0
      %v350 = vpop.f32.mrf.mxu0
      %351 = vdwg.mxu0
      %v353 = vsel %vm305, %v298, 0
      %v356 = vsel %vm305, %v302, 0
      %358 = vmatprep.subr.bf16.mxu0 0
      %359 = vmatpush1.bf16.xpose.msra.mxu0 0
      %360 = vmatprep.subr.bf16.mxu0 0
      %361 = vmatpush1.bf16.xpose.msra.mxu0 0
      %362 = vmatprep.subr.bf16.mxu0 0
      %363 = vmatpush1.bf16.xpose.msra.mxu0 0
      %364 = vmatprep.subr.bf16.mxu0 0
      %365 = vmatpush1.bf16.xpose.msra.mxu0 0
      %366 = vmatprep.subr.bf16.mxu0 0
      %367 = vmatpush1.bf16.xpose.msra.mxu0 0
      %368 = vmatprep.subr.bf16.mxu0 0
      %369 = vmatpush1.bf16.xpose.msra.mxu0 0
      %370 = vmatprep.subr.bf16.mxu0 0
      %371 = vmatpush1.bf16.xpose.msra.mxu0 0
      %372 = vmatprep.subr.bf16.mxu0 0
      %373 = vmatpush1.bf16.xpose.msra.mxu0 %v356
      %374 = vmatprep.subr.bf16.mxu0 0
      %375 = vmatpush2.bf16.xpose.msra.mxu0 0
      %376 = vmatprep.subr.bf16.mxu0 0
      %377 = vmatpush2.bf16.xpose.msra.mxu0 0
      %378 = vmatprep.subr.bf16.mxu0 0
      %379 = vmatpush2.bf16.xpose.msra.mxu0 0
      %380 = vmatprep.subr.bf16.mxu0 0
      %381 = vmatpush2.bf16.xpose.msra.mxu0 0
      %382 = vmatprep.subr.bf16.mxu0 0
      %383 = vmatpush2.bf16.xpose.msra.mxu0 0
      %384 = vmatprep.subr.bf16.mxu0 0
      %385 = vmatpush2.bf16.xpose.msra.mxu0 0
      %386 = vmatprep.subr.bf16.mxu0 0
      %387 = vmatpush2.bf16.xpose.msra.mxu0 0
      %388 = vmatprep.subr.bf16.mxu0 0
      %389 = vmatpush2.bf16.xpose.msra.mxu0 0
      %390 = vmatprep.mubr.bf16.mxu0 0
      %391 = vmatmul.mubr.bf16.gmra.mxu0 %v353
      %v392 = vpop.f32.mrf.mxu0
      %v393 = vadd.f32 0.0, %v392
      %v394 = vpop.f32.mrf.mxu0
      %v395 = vpop.f32.mrf.mxu0
      %v396 = vpop.f32.mrf.mxu0
      %397 = vdwg.mxu0
      %v399 = vsel %vm305, %v299, 0
      %v402 = vsel %vm305, %v303, 0
      %404 = vmatprep.subr.bf16.mxu0 0
      %405 = vmatpush1.bf16.xpose.msra.mxu0 0
      %406 = vmatprep.subr.bf16.mxu0 0
      %407 = vmatpush1.bf16.xpose.msra.mxu0 0
      %408 = vmatprep.subr.bf16.mxu0 0
      %409 = vmatpush1.bf16.xpose.msra.mxu0 0
      %410 = vmatprep.subr.bf16.mxu0 0
      %411 = vmatpush1.bf16.xpose.msra.mxu0 0
      %412 = vmatprep.subr.bf16.mxu0 0
      %413 = vmatpush1.bf16.xpose.msra.mxu0 0
      %414 = vmatprep.subr.bf16.mxu0 0
      %415 = vmatpush1.bf16.xpose.msra.mxu0 0
      %416 = vmatprep.subr.bf16.mxu0 0
      %417 = vmatpush1.bf16.xpose.msra.mxu0 0
      %418 = vmatprep.subr.bf16.mxu0 0
      %419 = vmatpush1.bf16.xpose.msra.mxu0 %v402
      %420 = vmatprep.subr.bf16.mxu0 0
      %421 = vmatpush2.bf16.xpose.msra.mxu0 0
      %422 = vmatprep.subr.bf16.mxu0 0
      %423 = vmatpush2.bf16.xpose.msra.mxu0 0
      %424 = vmatprep.subr.bf16.mxu0 0
      %425 = vmatpush2.bf16.xpose.msra.mxu0 0
      %426 = vmatprep.subr.bf16.mxu0 0
      %427 = vmatpush2.bf16.xpose.msra.mxu0 0
      %428 = vmatprep.subr.bf16.mxu0 0
      %429 = vmatpush2.bf16.xpose.msra.mxu0 0
      %430 = vmatprep.subr.bf16.mxu0 0
      %431 = vmatpush2.bf16.xpose.msra.mxu0 0
      %432 = vmatprep.subr.bf16.mxu0 0
      %433 = vmatpush2.bf16.xpose.msra.mxu0 0
      %434 = vmatprep.subr.bf16.mxu0 0
      %435 = vmatpush2.bf16.xpose.msra.mxu0 0
      %436 = vmatprep.mubr.bf16.mxu0 0
      %437 = vmatmul.mubr.bf16.gmra.mxu0 %v399
      %v438 = vpop.f32.mrf.mxu0
      %v439 = vadd.f32 0.0, %v438
      %v440 = vpop.f32.mrf.mxu0
      %v441 = vpop.f32.mrf.mxu0
      %v442 = vpop.f32.mrf.mxu0
      %443 = vdwg.mxu0
      %v445 = vsel %vm305, %v300, 0
      %v448 = vsel %vm305, %v304, 0
      %450 = vmatprep.subr.bf16.mxu0 0
      %451 = vmatpush1.bf16.xpose.msra.mxu0 0
      %452 = vmatprep.subr.bf16.mxu0 0
      %453 = vmatpush1.bf16.xpose.msra.mxu0 0
      %454 = vmatprep.subr.bf16.mxu0 0
      %455 = vmatpush1.bf16.xpose.msra.mxu0 0
      %456 = vmatprep.subr.bf16.mxu0 0
      %457 = vmatpush1.bf16.xpose.msra.mxu0 0
      %458 = vmatprep.subr.bf16.mxu0 0
      %459 = vmatpush1.bf16.xpose.msra.mxu0 0
      %460 = vmatprep.subr.bf16.mxu0 0
      %461 = vmatpush1.bf16.xpose.msra.mxu0 0
      %462 = vmatprep.subr.bf16.mxu0 0
      %463 = vmatpush1.bf16.xpose.msra.mxu0 0
      %464 = vmatprep.subr.bf16.mxu0 0
      %465 = vmatpush1.bf16.xpose.msra.mxu0 %v448
      %466 = vmatprep.subr.bf16.mxu0 0
      %467 = vmatpush2.bf16.xpose.msra.mxu0 0
      %468 = vmatprep.subr.bf16.mxu0 0
      %469 = vmatpush2.bf16.xpose.msra.mxu0 0
      %470 = vmatprep.subr.bf16.mxu0 0
      %471 = vmatpush2.bf16.xpose.msra.mxu0 0
      %472 = vmatprep.subr.bf16.mxu0 0
      %473 = vmatpush2.bf16.xpose.msra.mxu0 0
      %474 = vmatprep.subr.bf16.mxu0 0
      %475 = vmatpush2.bf16.xpose.msra.mxu0 0
      %476 = vmatprep.subr.bf16.mxu0 0
      %477 = vmatpush2.bf16.xpose.msra.mxu0 0
      %478 = vmatprep.subr.bf16.mxu0 0
      %479 = vmatpush2.bf16.xpose.msra.mxu0 0
      %480 = vmatprep.subr.bf16.mxu0 0
      %481 = vmatpush2.bf16.xpose.msra.mxu0 0
      %482 = vmatprep.mubr.bf16.mxu0 0
      %483 = vmatmul.mubr.bf16.gmra.mxu0 %v445
      %v484 = vpop.f32.mrf.mxu0
      %v485 = vadd.f32 0.0, %v484
      %v486 = vpop.f32.mrf.mxu0
      %v487 = vpop.f32.mrf.mxu0
      %v488 = vpop.f32.mrf.mxu0
      %489 = vdwg.mxu0
      %v490 = vmul.f32 %v347, 0.25
      %v491 = vmul.f32 %v393, 0.25
      %v492 = vmul.f32 %v439, 0.25
      %v493 = vmul.f32 %v485, 0.25
      %v494 = vlaneseq
      %v495 = vshrl.u32 %v494, 7
      %s496 = smul.u32 %s20, 8
      %v497 = vstv %s496
      %v498 = vadd.s32 %v495, %v497
      %v499 = vlaneseq
      %v500 = vand.u32 %v499, 127
      %s501 = smul.u32 %s21, 8
      %v502 = vstv %s501
      %v503 = vadd.s32 %v500, %v502
      %vm504 = vcmp.le.s32.totalorder %v503, %v498
      %v505 = vsub.f32 %v490, 10000.0
      %v506 = vsub.f32 %v491, 10000.0
      %v507 = vsub.f32 %v492, 10000.0
      %v508 = vsub.f32 %v493, 10000.0
      %v509 = vsel %vm504, %v490, %v505
      %v510 = vsel %vm504, %v491, %v506
      %v511 = vsel %vm504, %v492, %v507
      %v512 = vsel %vm504, %v493, %v508
      %v513 = vld [vmem:[#allocation2] sm:$0xff]
      %v514 = vld [vmem:[#allocation2 + $0x8] sm:$0xff]
      %v515 = vld [vmem:[#allocation2 + $0x10] sm:$0xff]
      %v516 = vld [vmem:[#allocation2 + $0x18] sm:$0xff]
      %vm517 = vcmask 64512
      %v518 = vsel %vm517, %v509, -inf
      %519 = vmax.xlane.f32.xlu0 %v518
      %v520 = vpop.xlane.xlu0 %519
      %v521 = vsel %vm517, %v510, -inf
      %522 = vmax.xlane.f32.xlu0 %v521
      %v523 = vpop.xlane.xlu0 %522
      %v524 = vsel %vm517, %v511, -inf
      %525 = vmax.xlane.f32.xlu0 %v524
      %v526 = vpop.xlane.xlu0 %525
      %v527 = vsel %vm517, %v512, -inf
      %528 = vmax.xlane.f32.xlu0 %v527
      %v529 = vpop.xlane.xlu0 %528
      %v530 = vmax.f32 %v513, %v520
      %v531 = vmax.f32 %v514, %v523
      %v532 = vmax.f32 %v515, %v526
      %v533 = vmax.f32 %v516, %v529
      %v534 = vsub.f32 %v513, %v530
      %v535 = vsub.f32 %v514, %v531
      %v536 = vsub.f32 %v515, %v532
      %v537 = vsub.f32 %v516, %v533
      %v538 = vmul.f32 %v534, 1.442695
      %v539 = vpow.pop %v538
      %v540 = vmul.f32 %v535, 1.442695
      %v541 = vpow.pop %v540
      %v542 = vmul.f32 %v536, 1.442695
      %v543 = vpow.pop %v542
      %v544 = vmul.f32 %v537, 1.442695
      %v545 = vpow.pop %v544
      %547 = vset.pattern.permute.xlu0 0
      %548 = vperm.xlu0 %547, %v530
      %v549 = vpop.permute.xlu0 %548
      %552 = vset.pattern.permute.xlu0 0
      %553 = vperm.xlu0 %552, %v531
      %v554 = vpop.permute.xlu0 %553
      %557 = vset.pattern.permute.xlu0 0
      %558 = vperm.xlu0 %557, %v532
      %v559 = vpop.permute.xlu0 %558
      %562 = vset.pattern.permute.xlu0 0
      %563 = vperm.xlu0 %562, %v533
      %v564 = vpop.permute.xlu0 %563
      %v566 = vsub.f32 %v509, %v549
      %v567 = vsub.f32 %v510, %v554
      %v568 = vsub.f32 %v511, %v559
      %v569 = vsub.f32 %v512, %v564
      %v570 = vmul.f32 %v566, 1.442695
      %v571 = vpow.pop %v570
      %v572 = vmul.f32 %v567, 1.442695
      %v573 = vpow.pop %v572
      %v574 = vmul.f32 %v568, 1.442695
      %v575 = vpow.pop %v574
      %v576 = vmul.f32 %v569, 1.442695
      %v577 = vpow.pop %v576
      %v578 = vld [vmem:[#allocation3] sm:$0xff]
      %v579 = vld [vmem:[#allocation3 + $0x8] sm:$0xff]
      %v580 = vld [vmem:[#allocation3 + $0x10] sm:$0xff]
      %v581 = vld [vmem:[#allocation3 + $0x18] sm:$0xff]
      %v582 = vmul.f32 %v539, %v578
      %v583 = vmul.f32 %v541, %v579
      %v584 = vmul.f32 %v543, %v580
      %v585 = vmul.f32 %v545, %v581
      %v586 = vsel %vm517, %v571, 0.0
      %587 = vadd.xlane.f32.xlu0 %v586
      %v588 = vpop.xlane.xlu0 %587
      %v589 = vsel %vm517, %v573, 0.0
      %590 = vadd.xlane.f32.xlu0 %v589
      %v591 = vpop.xlane.xlu0 %590
      %v592 = vsel %vm517, %v575, 0.0
      %593 = vadd.xlane.f32.xlu0 %v592
      %v594 = vpop.xlane.xlu0 %593
      %v595 = vsel %vm517, %v577, 0.0
      %596 = vadd.xlane.f32.xlu0 %v595
      %v597 = vpop.xlane.xlu0 %596
      %v598 = vadd.f32 %v582, %v588
      %v599 = vadd.f32 %v583, %v591
      %v600 = vadd.f32 %v584, %v594
      %v601 = vadd.f32 %v585, %v597
      %vm602 = vcmask 7168
      %603 = vst.msk [vmem:[#allocation3] sm:$0xff] %vm602, %v598
      %604 = vst.msk [vmem:[#allocation3 + $0x8] sm:$0xff] %vm602, %v599
      %605 = vst.msk [vmem:[#allocation3 + $0x10] sm:$0xff] %vm602, %v600
      %606 = vst.msk [vmem:[#allocation3 + $0x18] sm:$0xff] %vm602, %v601
      %v607 = vld [vmem:[#allocation4] sm:$0xff]
      %v608 = vld [vmem:[#allocation4 + $0x8] sm:$0xff]
      %v609 = vld [vmem:[#allocation4 + $0x10] sm:$0xff]
      %v610 = vld [vmem:[#allocation4 + $0x18] sm:$0xff]
      %612 = vset.pattern.permute.xlu0 0
      %613 = vperm.xlu0 %612, %v539
      %v614 = vpop.permute.xlu0 %613
      %617 = vset.pattern.permute.xlu0 0
      %618 = vperm.xlu0 %617, %v541
      %v619 = vpop.permute.xlu0 %618
      %622 = vset.pattern.permute.xlu0 0
      %623 = vperm.xlu0 %622, %v543
      %v624 = vpop.permute.xlu0 %623
      %627 = vset.pattern.permute.xlu0 0
      %628 = vperm.xlu0 %627, %v545
      %v629 = vpop.permute.xlu0 %628
      %v631 = vmul.f32 %v614, %v607
      %v632 = vmul.f32 %v619, %v608
      %v633 = vmul.f32 %v624, %v609
      %v634 = vmul.f32 %v629, %v610
      %v635 = vpack.c.bf16 %v571, %v571
      %v636 = vpack.c.bf16 %v573, %v573
      %v637 = vpack.c.bf16 %v575, %v575
      %v638 = vpack.c.bf16 %v577, %v577
      %v639 = vld [vmem:[%s267] sm:$0xf]
      %v640 = vld [vmem:[%s267 + $0x4] sm:$0xf]
      %v641 = vld [vmem:[%s267 + $0x8] sm:$0xf]
      %v642 = vld [vmem:[%s267 + $0xc] sm:$0xf]
      %v644 = vsel %vm517, %v635, 0
      %vm646 = vcmask 1043456
      %v648 = vsel %vm646, %v639, 0
      %650 = vmatprep.subr.bf16.mxu0 0
      %651 = vmatpush1.bf16.msra.mxu0 0
      %652 = vmatprep.subr.bf16.mxu0 0
      %653 = vmatpush1.bf16.msra.mxu0 0
      %654 = vmatprep.subr.bf16.mxu0 0
      %655 = vmatpush1.bf16.msra.mxu0 0
      %656 = vmatprep.subr.bf16.mxu0 0
      %657 = vmatpush1.bf16.msra.mxu0 0
      %658 = vmatprep.subr.bf16.mxu0 0
      %659 = vmatpush1.bf16.msra.mxu0 0
      %660 = vmatprep.subr.bf16.mxu0 0
      %661 = vmatpush1.bf16.msra.mxu0 0
      %662 = vmatprep.subr.bf16.mxu0 0
      %663 = vmatpush1.bf16.msra.mxu0 0
      %664 = vmatprep.subr.bf16.mxu0 0
      %665 = vmatpush1.bf16.msra.mxu0 %v648
      %666 = vmatprep.subr.bf16.mxu0 0
      %667 = vmatpush2.bf16.msra.mxu0 0
      %668 = vmatprep.subr.bf16.mxu0 0
      %669 = vmatpush2.bf16.msra.mxu0 0
      %670 = vmatprep.subr.bf16.mxu0 0
      %671 = vmatpush2.bf16.msra.mxu0 0
      %672 = vmatprep.subr.bf16.mxu0 0
      %673 = vmatpush2.bf16.msra.mxu0 0
      %674 = vmatprep.subr.bf16.mxu0 0
      %675 = vmatpush2.bf16.msra.mxu0 0
      %676 = vmatprep.subr.bf16.mxu0 0
      %677 = vmatpush2.bf16.msra.mxu0 0
      %678 = vmatprep.subr.bf16.mxu0 0
      %679 = vmatpush2.bf16.msra.mxu0 0
      %680 = vmatprep.subr.bf16.mxu0 0
      %681 = vmatpush2.bf16.msra.mxu0 0
      %682 = vmatprep.mubr.bf16.mxu0 0
      %683 = vmatmul.mubr.bf16.gmra.mxu0 %v644
      %v684 = vpop.f32.mrf.mxu0
      %v685 = vadd.f32 0.0, %v684
      %v686 = vpop.f32.mrf.mxu0
      %v687 = vpop.f32.mrf.mxu0
      %v688 = vpop.f32.mrf.mxu0
      %689 = vdwg.mxu0
      %v691 = vsel %vm517, %v636, 0
      %v694 = vsel %vm646, %v640, 0
      %696 = vmatprep.subr.bf16.mxu0 0
      %697 = vmatpush1.bf16.msra.mxu0 0
      %698 = vmatprep.subr.bf16.mxu0 0
      %699 = vmatpush1.bf16.msra.mxu0 0
      %700 = vmatprep.subr.bf16.mxu0 0
      %701 = vmatpush1.bf16.msra.mxu0 0
      %702 = vmatprep.subr.bf16.mxu0 0
      %703 = vmatpush1.bf16.msra.mxu0 0
      %704 = vmatprep.subr.bf16.mxu0 0
      %705 = vmatpush1.bf16.msra.mxu0 0
      %706 = vmatprep.subr.bf16.mxu0 0
      %707 = vmatpush1.bf16.msra.mxu0 0
      %708 = vmatprep.subr.bf16.mxu0 0
      %709 = vmatpush1.bf16.msra.mxu0 0
      %710 = vmatprep.subr.bf16.mxu0 0
      %711 = vmatpush1.bf16.msra.mxu0 %v694
      %712 = vmatprep.subr.bf16.mxu0 0
      %713 = vmatpush2.bf16.msra.mxu0 0
      %714 = vmatprep.subr.bf16.mxu0 0
      %715 = vmatpush2.bf16.msra.mxu0 0
      %716 = vmatprep.subr.bf16.mxu0 0
      %717 = vmatpush2.bf16.msra.mxu0 0
      %718 = vmatprep.subr.bf16.mxu0 0
      %719 = vmatpush2.bf16.msra.mxu0 0
      %720 = vmatprep.subr.bf16.mxu0 0
      %721 = vmatpush2.bf16.msra.mxu0 0
      %722 = vmatprep.subr.bf16.mxu0 0
      %723 = vmatpush2.bf16.msra.mxu0 0
      %724 = vmatprep.subr.bf16.mxu0 0
      %725 = vmatpush2.bf16.msra.mxu0 0
      %726 = vmatprep.subr.bf16.mxu0 0
      %727 = vmatpush2.bf16.msra.mxu0 0
      %728 = vmatprep.mubr.bf16.mxu0 0
      %729 = vmatmul.mubr.bf16.gmra.mxu0 %v691
      %v730 = vpop.f32.mrf.mxu0
      %v731 = vadd.f32 0.0, %v730
      %v732 = vpop.f32.mrf.mxu0
      %v733 = vpop.f32.mrf.mxu0
      %v734 = vpop.f32.mrf.mxu0
      %735 = vdwg.mxu0
      %v737 = vsel %vm517, %v637, 0
      %v740 = vsel %vm646, %v641, 0
      %742 = vmatprep.subr.bf16.mxu0 0
      %743 = vmatpush1.bf16.msra.mxu0 0
      %744 = vmatprep.subr.bf16.mxu0 0
      %745 = vmatpush1.bf16.msra.mxu0 0
      %746 = vmatprep.subr.bf16.mxu0 0
      %747 = vmatpush1.bf16.msra.mxu0 0
      %748 = vmatprep.subr.bf16.mxu0 0
      %749 = vmatpush1.bf16.msra.mxu0 0
      %750 = vmatprep.subr.bf16.mxu0 0
      %751 = vmatpush1.bf16.msra.mxu0 0
      %752 = vmatprep.subr.bf16.mxu0 0
      %753 = vmatpush1.bf16.msra.mxu0 0
      %754 = vmatprep.subr.bf16.mxu0 0
      %755 = vmatpush1.bf16.msra.mxu0 0
      %756 = vmatprep.subr.bf16.mxu0 0
      %757 = vmatpush1.bf16.msra.mxu0 %v740
      %758 = vmatprep.subr.bf16.mxu0 0
      %759 = vmatpush2.bf16.msra.mxu0 0
      %760 = vmatprep.subr.bf16.mxu0 0
      %761 = vmatpush2.bf16.msra.mxu0 0
      %762 = vmatprep.subr.bf16.mxu0 0
      %763 = vmatpush2.bf16.msra.mxu0 0
      %764 = vmatprep.subr.bf16.mxu0 0
      %765 = vmatpush2.bf16.msra.mxu0 0
      %766 = vmatprep.subr.bf16.mxu0 0
      %767 = vmatpush2.bf16.msra.mxu0 0
      %768 = vmatprep.subr.bf16.mxu0 0
      %769 = vmatpush2.bf16.msra.mxu0 0
      %770 = vmatprep.subr.bf16.mxu0 0
      %771 = vmatpush2.bf16.msra.mxu0 0
      %772 = vmatprep.subr.bf16.mxu0 0
      %773 = vmatpush2.bf16.msra.mxu0 0
      %774 = vmatprep.mubr.bf16.mxu0 0
      %775 = vmatmul.mubr.bf16.gmra.mxu0 %v737
      %v776 = vpop.f32.mrf.mxu0
      %v777 = vadd.f32 0.0, %v776
      %v778 = vpop.f32.mrf.mxu0
      %v779 = vpop.f32.mrf.mxu0
      %v780 = vpop.f32.mrf.mxu0
      %781 = vdwg.mxu0
      %v783 = vsel %vm517, %v638, 0
      %v786 = vsel %vm646, %v642, 0
      %788 = vmatprep.subr.bf16.mxu0 0
      %789 = vmatpush1.bf16.msra.mxu0 0
      %790 = vmatprep.subr.bf16.mxu0 0
      %791 = vmatpush1.bf16.msra.mxu0 0
      %792 = vmatprep.subr.bf16.mxu0 0
      %793 = vmatpush1.bf16.msra.mxu0 0
      %794 = vmatprep.subr.bf16.mxu0 0
      %795 = vmatpush1.bf16.msra.mxu0 0
      %796 = vmatprep.subr.bf16.mxu0 0
      %797 = vmatpush1.bf16.msra.mxu0 0
      %798 = vmatprep.subr.bf16.mxu0 0
      %799 = vmatpush1.bf16.msra.mxu0 0
      %800 = vmatprep.subr.bf16.mxu0 0
      %801 = vmatpush1.bf16.msra.mxu0 0
      %802 = vmatprep.subr.bf16.mxu0 0
      %803 = vmatpush1.bf16.msra.mxu0 %v786
      %804 = vmatprep.subr.bf16.mxu0 0
      %805 = vmatpush2.bf16.msra.mxu0 0
      %806 = vmatprep.subr.bf16.mxu0 0
      %807 = vmatpush2.bf16.msra.mxu0 0
      %808 = vmatprep.subr.bf16.mxu0 0
      %809 = vmatpush2.bf16.msra.mxu0 0
      %810 = vmatprep.subr.bf16.mxu0 0
      %811 = vmatpush2.bf16.msra.mxu0 0
      %812 = vmatprep.subr.bf16.mxu0 0
      %813 = vmatpush2.bf16.msra.mxu0 0
      %814 = vmatprep.subr.bf16.mxu0 0
      %815 = vmatpush2.bf16.msra.mxu0 0
      %816 = vmatprep.subr.bf16.mxu0 0
      %817 = vmatpush2.bf16.msra.mxu0 0
      %818 = vmatprep.subr.bf16.mxu0 0
      %819 = vmatpush2.bf16.msra.mxu0 0
      %820 = vmatprep.mubr.bf16.mxu0 0
      %821 = vmatmul.mubr.bf16.gmra.mxu0 %v783
      %v822 = vpop.f32.mrf.mxu0
      %v823 = vadd.f32 0.0, %v822
      %v824 = vpop.f32.mrf.mxu0
      %v825 = vpop.f32.mrf.mxu0
      %v826 = vpop.f32.mrf.mxu0
      %827 = vdwg.mxu0
      %v828 = vadd.f32 %v631, %v685
      %v829 = vadd.f32 %v632, %v731
      %v830 = vadd.f32 %v633, %v777
      %v831 = vadd.f32 %v634, %v823
      %832 = vst.msk [vmem:[#allocation4] sm:$0xff] %vm305, %v828
      %833 = vst.msk [vmem:[#allocation4 + $0x8] sm:$0xff] %vm305, %v829
      %834 = vst.msk [vmem:[#allocation4 + $0x10] sm:$0xff] %vm305, %v830
      %835 = vst.msk [vmem:[#allocation4 + $0x18] sm:$0xff] %vm305, %v831
      %836 = vst.msk [vmem:[#allocation2] sm:$0xff] %vm602, %v530
      %837 = vst.msk [vmem:[#allocation2 + $0x8] sm:$0xff] %vm602, %v531
      %838 = vst.msk [vmem:[#allocation2 + $0x10] sm:$0xff] %vm602, %v532
      %839 = vst.msk [vmem:[#allocation2 + $0x18] sm:$0xff] %vm602, %v533
      // Predicated region
      $region37: #{seq2seq_forward.81} parent=31 // pred_check
        %p840 = pneg %p279
      $region38: #{seq2seq_forward.81} parent=31 // pred_check_branch
        %842 = sbr.rel (%p840) target = $region40
      $region39: #{seq2seq_forward.81} parent=31 // pred_region
        %v843 = vld [vmem:[#allocation4] sm:$0xff]
        %v844 = vld [vmem:[#allocation4 + $0x8] sm:$0xff]
        %v845 = vld [vmem:[#allocation4 + $0x10] sm:$0xff]
        %v846 = vld [vmem:[#allocation4 + $0x18] sm:$0xff]
        %v847 = vld [vmem:[#allocation3] sm:$0xff]
        %v848 = vld [vmem:[#allocation3 + $0x8] sm:$0xff]
        %v849 = vld [vmem:[#allocation3 + $0x10] sm:$0xff]
        %v850 = vld [vmem:[#allocation3 + $0x18] sm:$0xff]
        %v851 = vrcp.pop %v847
        %v852 = vrcp.pop %v848
        %v853 = vrcp.pop %v849
        %v854 = vrcp.pop %v850
        %856 = vset.pattern.permute.xlu0 0
        %857 = vperm.xlu0 %856, %v851
        %v858 = vpop.permute.xlu0 %857
        %861 = vset.pattern.permute.xlu0 0
        %862 = vperm.xlu0 %861, %v852
        %v863 = vpop.permute.xlu0 %862
        %866 = vset.pattern.permute.xlu0 0
        %867 = vperm.xlu0 %866, %v853
        %v868 = vpop.permute.xlu0 %867
        %871 = vset.pattern.permute.xlu0 0
        %872 = vperm.xlu0 %871, %v854
        %v873 = vpop.permute.xlu0 %872
        %v875 = vmul.f32 %v843, %v858
        %v876 = vmul.f32 %v844, %v863
        %v877 = vmul.f32 %v845, %v868
        %v878 = vmul.f32 %v846, %v873
        %v879 = vpack.c.bf16 %v875, %v875
        %v880 = vpack.c.bf16 %v876, %v876
        %v881 = vpack.c.bf16 %v877, %v877
        %v882 = vpack.c.bf16 %v878, %v878
        %vm883 = vcmask 125952
        %884 = vst.msk [vmem:[%s276] sm:$0xf] %vm883, %v879
        %885 = vst.msk [vmem:[%s276 + $0x4] sm:$0xf] %vm883, %v880
        %886 = vst.msk [vmem:[%s276 + $0x8] sm:$0xf] %vm883, %v881
        %887 = vst.msk [vmem:[%s276 + $0xc] sm:$0xf] %vm883, %v882
      $region40: #{seq2seq_forward.81} parent=31 // pred_fallthru
        _
      %s888 = smul.u32 4, %s19
      %p889 = scmp.lt.s32.totalorder %s888, 7
      %s890 = scalar_select %p889, %s888, 7
      %p891 = scmp.lt.s32.totalorder %s20, 0
      %s892 = scalar_select %p891, %s20, 0
      %s893 = sadd.s32 %s892, %s890
      %s894 = smul.addr %s893, 4
      %s895 = scalar_lea.vmem %s3, %s894
      // Predicated region
      $region41: #{seq2seq_forward.81} parent=31 // pred_check
        %p896 = pneg %p137
      $region42: #{seq2seq_forward.81} parent=31 // pred_check_branch
        %898 = sbr.rel (%p896) target = $region44
      $region43: #{seq2seq_forward.81} parent=31 // pred_region
        %s899 = smul.u32 4, %s19
      $region44: #{seq2seq_forward.81} parent=31 // pred_fallthru
        _
    $region32: #{seq2seq_forward.81} parent=5 // pred_fallthru
      _
    %p900 = scmp.le.s32.totalorder 2, %s9
    // Predicated region
    $region45: #{seq2seq_forward.81} parent=5 // pred_check
      %p901 = pneg %p900
    $region46: #{seq2seq_forward.81} parent=5 // pred_check_branch
      %903 = sbr.rel (%p901) target = $region48
    $region47: #{seq2seq_forward.81} parent=5 // pred_region
      %s904 = ssub.s32 %s9, 2
      // Predicated region
      $region49: #{seq2seq_forward.81} parent=47 // pred_check
        %p905 = pneg %p143
      $region50: #{seq2seq_forward.81} parent=47 // pred_check_branch
        %907 = sbr.rel (%p905) target = $region52
      $region51: #{seq2seq_forward.81} parent=47 // pred_region
        %s908 = smul.u32 4, %s22
        %p909 = scmp.lt.s32.totalorder %s908, 7
        %s910 = scalar_select %p909, %s908, 7
        %p911 = scmp.lt.s32.totalorder %s23, 0
        %s912 = scalar_select %p911, %s23, 0
        %s913 = sadd.s32 %s912, %s910
        %s914 = smul.addr %s913, 4
        %s915 = scalar_lea.vmem %s3, %s914
      $region52: #{seq2seq_forward.81} parent=47 // pred_fallthru
        _
    $region48: #{seq2seq_forward.81} parent=5 // pred_fallthru
      _
  $region6: #{seq2seq_forward.81} parent=0 // loop_footer
    %s13 = sadd.s32 1, %s9
  $region7: #{seq2seq_forward.81} parent=0 // loop_footer_branch
    %8 = sbr.rel target = $region3
  $region8: #{seq2seq_forward.81} parent=0 // loop_exit
    _

// kernel: seq2seq_forward.83
$region0: #{seq2seq_forward.83}
  #allocation0 [shape = 'u32[]', space=smem, size = 0x4, offset = 0x4, fixed_abs, tag = 'smem constant byte address 0x4 - core index']
  #allocation1 [shape = 'u32[144,128]{1,0:T(1,128)}', space=vmem, size = 0x12000, scoped, tag = 'internal scratch']
  #allocation2 [shape = 'f32[16,128]{1,0:T(8,128)}', space=vmem, size = 0x2000, scoped, tag = 'scratch operand']
  %s0 = inlined_call_operand.vmem [shape: bf16[16,128], index: 0, kind: input, shape index: {}]
  %s1 = inlined_call_operand.vmem [shape: bf16[128,128], index: 1, kind: input, shape index: {}]
  %s2 = inlined_call_operand.vmem [shape: f32[1,128], index: 2, kind: input, shape index: {}]
  %s3 = inlined_call_operand.vmem [shape: bf16[16,128], index: 3, kind: output, shape index: {}]
  %s4 = sld [smem:[#allocation0]]
  $region30: #{seq2seq_forward.83} parent=0
    _
  %s6 = ssub.s32 1, %s4
  %s7 = scalar_select 0, %s6, %s4
  // Predicated region
  $region2: #{seq2seq_forward.83} parent=0 // pred_check
    _
  $region3: #{seq2seq_forward.83} parent=0 // pred_check_branch
    %9 = sbr.rel (0) target = $region5
  $region4: #{seq2seq_forward.83} parent=0 // pred_region
    _
  $region5: #{seq2seq_forward.83} parent=0 // pred_fallthru
    _
  // Predicated region
  $region6: #{seq2seq_forward.83} parent=0 // pred_check
    _
  $region7: #{seq2seq_forward.83} parent=0 // pred_check_branch
    %11 = sbr.rel (0) target = $region9
  $region8: #{seq2seq_forward.83} parent=0 // pred_region
    _
  $region9: #{seq2seq_forward.83} parent=0 // pred_fallthru
    _
  // Predicated region
  $region10: #{seq2seq_forward.83} parent=0 // pred_check
    _
  $region11: #{seq2seq_forward.83} parent=0 // pred_check_branch
    %13 = sbr.rel (0) target = $region13
  $region12: #{seq2seq_forward.83} parent=0 // pred_region
    _
  $region13: #{seq2seq_forward.83} parent=0 // pred_fallthru
    _
  %p15 = scmp.eq.s32.totalorder 0, 0
  // Predicated region
  $region14: #{seq2seq_forward.83} parent=0 // pred_check
    %p16 = pneg %p15
  $region15: #{seq2seq_forward.83} parent=0 // pred_check_branch
    %18 = sbr.rel (%p16) target = $region17
  $region16: #{seq2seq_forward.83} parent=0 // pred_region
    %19 = vst [vmem:[#allocation2] sm:$0xff] 0.0
    %20 = vst [vmem:[#allocation2 + $0x8] sm:$0xff] 0.0
  $region17: #{seq2seq_forward.83} parent=0 // pred_fallthru
    _
  %v21 = vld [vmem:[#allocation2] sm:$0xff]
  %v22 = vld [vmem:[#allocation2 + $0x8] sm:$0xff]
  %v23 = vld [vmem:[%s0] sm:$0xf]
  %v24 = vld [vmem:[%s0 + $0x4] sm:$0xf]
  %v25 = vld [vmem:[%s1] sm:$0xf]
  %v26 = vld [vmem:[%s1 + $0x4] sm:$0xf]
  %v27 = vld [vmem:[%s1 + $0x8] sm:$0xf]
  %v28 = vld [vmem:[%s1 + $0xc] sm:$0xf]
  %v29 = vld [vmem:[%s1 + $0x10] sm:$0xf]
  %v30 = vld [vmem:[%s1 + $0x14] sm:$0xf]
  %v31 = vld [vmem:[%s1 + $0x18] sm:$0xf]
  %v32 = vld [vmem:[%s1 + $0x1c] sm:$0xf]
  %v33 = vld [vmem:[%s1 + $0x20] sm:$0xf]
  %v34 = vld [vmem:[%s1 + $0x24] sm:$0xf]
  %v35 = vld [vmem:[%s1 + $0x28] sm:$0xf]
  %v36 = vld [vmem:[%s1 + $0x2c] sm:$0xf]
  %v37 = vld [vmem:[%s1 + $0x30] sm:$0xf]
  %v38 = vld [vmem:[%s1 + $0x34] sm:$0xf]
  %v39 = vld [vmem:[%s1 + $0x38] sm:$0xf]
  %v40 = vld [vmem:[%s1 + $0x3c] sm:$0xf]
  %v43 = vunpack.c.l.b16 %v23
  %v44 = vunpack.c.l.b16 %v24
  %v45 = vpack.c.b16 %v44, %v43
  %v63 = vunpack.c.l.b16 %v25
  %v64 = vunpack.c.l.b16 %v26
  %v65 = vunpack.c.l.b16 %v27
  %v66 = vunpack.c.l.b16 %v28
  %v67 = vunpack.c.l.b16 %v29
  %v68 = vunpack.c.l.b16 %v30
  %v69 = vunpack.c.l.b16 %v31
  %v70 = vunpack.c.l.b16 %v32
  %v71 = vunpack.c.l.b16 %v33
  %v72 = vunpack.c.l.b16 %v34
  %v73 = vunpack.c.l.b16 %v35
  %v74 = vunpack.c.l.b16 %v36
  %v75 = vunpack.c.l.b16 %v37
  %v76 = vunpack.c.l.b16 %v38
  %v77 = vunpack.c.l.b16 %v39
  %v78 = vunpack.c.l.b16 %v40
  %v79 = vpack.c.b16 %v64, %v63
  %v80 = vpack.c.b16 %v66, %v65
  %v81 = vpack.c.b16 %v68, %v67
  %v82 = vpack.c.b16 %v70, %v69
  %v83 = vpack.c.b16 %v72, %v71
  %v84 = vpack.c.b16 %v74, %v73
  %v85 = vpack.c.b16 %v76, %v75
  %v86 = vpack.c.b16 %v78, %v77
  %95 = vmatprep.subr.bf16.mxu0 0
  %96 = vmatpush1.bf16.msra.mxu0 %v86
  %97 = vmatprep.subr.bf16.mxu0 0
  %98 = vmatpush1.bf16.msra.mxu0 %v85
  %99 = vmatprep.subr.bf16.mxu0 0
  %100 = vmatpush1.bf16.msra.mxu0 %v84
  %101 = vmatprep.subr.bf16.mxu0 0
  %102 = vmatpush1.bf16.msra.mxu0 %v83
  %103 = vmatprep.subr.bf16.mxu0 0
  %104 = vmatpush1.bf16.msra.mxu0 %v82
  %105 = vmatprep.subr.bf16.mxu0 0
  %106 = vmatpush1.bf16.msra.mxu0 %v81
  %107 = vmatprep.subr.bf16.mxu0 0
  %108 = vmatpush1.bf16.msra.mxu0 %v80
  %109 = vmatprep.subr.bf16.mxu0 0
  %110 = vmatpush1.bf16.msra.mxu0 %v79
  %111 = vmatprep.subr.bf16.mxu0 0
  %112 = vmatpush2.bf16.msra.mxu0 0
  %113 = vmatprep.subr.bf16.mxu0 0
  %114 = vmatpush2.bf16.msra.mxu0 0
  %115 = vmatprep.subr.bf16.mxu0 0
  %116 = vmatpush2.bf16.msra.mxu0 0
  %117 = vmatprep.subr.bf16.mxu0 0
  %118 = vmatpush2.bf16.msra.mxu0 0
  %119 = vmatprep.subr.bf16.mxu0 0
  %120 = vmatpush2.bf16.msra.mxu0 0
  %121 = vmatprep.subr.bf16.mxu0 0
  %122 = vmatpush2.bf16.msra.mxu0 0
  %123 = vmatprep.subr.bf16.mxu0 0
  %124 = vmatpush2.bf16.msra.mxu0 0
  %125 = vmatprep.subr.bf16.mxu0 0
  %126 = vmatpush2.bf16.msra.mxu0 0
  %127 = vmatprep.mubr.bf16.mxu0 0
  %128 = vmatmul.mubr.bf16.gmra.mxu0 %v45
  %v129 = vpop.f32.mrf.mxu0
  %v130 = vadd.f32 0.0, %v129
  %v131 = vpop.f32.mrf.mxu0
  %v132 = vpop.f32.mrf.mxu0
  %v133 = vadd.f32 0.0, %v132
  %v134 = vpop.f32.mrf.mxu0
  %135 = vdwg.mxu0
  %v136 = vadd.f32 %v21, %v130
  %v137 = vadd.f32 %v22, %v133
  %138 = vst [vmem:[#allocation2] sm:$0xff] %v136
  %139 = vst [vmem:[#allocation2 + $0x8] sm:$0xff] %v137
  // Predicated region
  $region18: #{seq2seq_forward.83} parent=0 // pred_check
    %p140 = pneg %p15
  $region19: #{seq2seq_forward.83} parent=0 // pred_check_branch
    %142 = sbr.rel (%p140) target = $region21
  $region20: #{seq2seq_forward.83} parent=0 // pred_region
    %v143 = vld [vmem:[#allocation2] sm:$0xff]
    %v144 = vld [vmem:[#allocation2 + $0x8] sm:$0xff]
    %v145 = vld [vmem:[%s2] sm:$0x1]
    %v147 = vlaneseq
    %v148 = vshrl.u32 %v147, 7
    %v149 = vsub.s32 0, %v148
    %v150 = vrot.slane %v145, %v149
    %v152 = vadd.f32 %v143, %v150
    %v153 = vadd.f32 %v144, %v150
    %v154 = vpack.c.bf16 %v153, %v152
    %v156 = vunpack.c.l.b16 %v154
    %v157 = vunpack.c.h.b16 %v154
    %v158 = vpack.c.b16 %v156, %v156
    %v159 = vpack.c.b16 %v157, %v157
    %162 = vst [vmem:[%s3] sm:$0xf] %v158
    %163 = vst [vmem:[%s3 + $0x4] sm:$0xf] %v159
  $region21: #{seq2seq_forward.83} parent=0 // pred_fallthru
    _
  // Predicated region
  $region22: #{seq2seq_forward.83} parent=0 // pred_check
    _
  $region23: #{seq2seq_forward.83} parent=0 // pred_check_branch
    %165 = sbr.rel (0) target = $region25
  $region24: #{seq2seq_forward.83} parent=0 // pred_region
    _
  $region25: #{seq2seq_forward.83} parent=0 // pred_fallthru
    _
  // Predicated region
  $region26: #{seq2seq_forward.83} parent=0 // pred_check
    _
  $region27: #{seq2seq_forward.83} parent=0 // pred_check_branch
    %167 = sbr.rel (0) target = $region29
  $region28: #{seq2seq_forward.83} parent=0 // pred_region
    _
  $region29: #{seq2seq_forward.83} parent=0 // pred_fallthru
    _

// kernel: seq2seq_forward.134
$region0: #{seq2seq_forward.134}
  #allocation0 [shape = 'u32[]', space=smem, size = 0x4, offset = 0x4, fixed_abs, tag = 'smem constant byte address 0x4 - core index']
  #allocation1 [shape = 'u32[144,128]{1,0:T(1,128)}', space=vmem, size = 0x12000, scoped, tag = 'internal scratch']
  #allocation2 [shape = 'f32[16,128]{1,0:T(8,128)}', space=vmem, size = 0x2000, scoped, tag = 'scratch operand']
  %s0 = inlined_call_operand.vmem [shape: bf16[16,128], index: 0, kind: input, shape index: {}]
  %s1 = inlined_call_operand.vmem [shape: bf16[128,128], index: 1, kind: input, shape index: {}]
  %s2 = inlined_call_operand.vmem [shape: f32[1,128], index: 2, kind: input, shape index: {}]
  %s3 = inlined_call_operand.vmem [shape: bf16[16,128], index: 3, kind: output, shape index: {}]
  %s4 = sld [smem:[#allocation0]]
  $region30: #{seq2seq_forward.134} parent=0
    _
  %s6 = ssub.s32 1, %s4
  %s7 = scalar_select 0, %s6, %s4
  // Predicated region
  $region2: #{seq2seq_forward.134} parent=0 // pred_check
    _
  $region3: #{seq2seq_forward.134} parent=0 // pred_check_branch
    %9 = sbr.rel (0) target = $region5
  $region4: #{seq2seq_forward.134} parent=0 // pred_region
    _
  $region5: #{seq2seq_forward.134} parent=0 // pred_fallthru
    _
  // Predicated region
  $region6: #{seq2seq_forward.134} parent=0 // pred_check
    _
  $region7: #{seq2seq_forward.134} parent=0 // pred_check_branch
    %11 = sbr.rel (0) target = $region9
  $region8: #{seq2seq_forward.134} parent=0 // pred_region
    _
  $region9: #{seq2seq_forward.134} parent=0 // pred_fallthru
    _
  // Predicated region
  $region10: #{seq2seq_forward.134} parent=0 // pred_check
    _
  $region11: #{seq2seq_forward.134} parent=0 // pred_check_branch
    %13 = sbr.rel (0) target = $region13
  $region12: #{seq2seq_forward.134} parent=0 // pred_region
    _
  $region13: #{seq2seq_forward.134} parent=0 // pred_fallthru
    _
  %p15 = scmp.eq.s32.totalorder 0, 0
  // Predicated region
  $region14: #{seq2seq_forward.134} parent=0 // pred_check
    %p16 = pneg %p15
  $region15: #{seq2seq_forward.134} parent=0 // pred_check_branch
    %18 = sbr.rel (%p16) target = $region17
  $region16: #{seq2seq_forward.134} parent=0 // pred_region
    %19 = vst [vmem:[#allocation2] sm:$0xff] 0.0
    %20 = vst [vmem:[#allocation2 + $0x8] sm:$0xff] 0.0
  $region17: #{seq2seq_forward.134} parent=0 // pred_fallthru
    _
  %v21 = vld [vmem:[#allocation2] sm:$0xff]
  %v22 = vld [vmem:[#allocation2 + $0x8] sm:$0xff]
  %v23 = vld [vmem:[%s0] sm:$0xf]
  %v24 = vld [vmem:[%s0 + $0x4] sm:$0xf]
  %v25 = vld [vmem:[%s1] sm:$0xf]
  %v26 = vld [vmem:[%s1 + $0x4] sm:$0xf]
  %v27 = vld [vmem:[%s1 + $0x8] sm:$0xf]
  %v28 = vld [vmem:[%s1 + $0xc] sm:$0xf]
  %v29 = vld [vmem:[%s1 + $0x10] sm:$0xf]
  %v30 = vld [vmem:[%s1 + $0x14] sm:$0xf]
  %v31 = vld [vmem:[%s1 + $0x18] sm:$0xf]
  %v32 = vld [vmem:[%s1 + $0x1c] sm:$0xf]
  %v33 = vld [vmem:[%s1 + $0x20] sm:$0xf]
  %v34 = vld [vmem:[%s1 + $0x24] sm:$0xf]
  %v35 = vld [vmem:[%s1 + $0x28] sm:$0xf]
  %v36 = vld [vmem:[%s1 + $0x2c] sm:$0xf]
  %v37 = vld [vmem:[%s1 + $0x30] sm:$0xf]
  %v38 = vld [vmem:[%s1 + $0x34] sm:$0xf]
  %v39 = vld [vmem:[%s1 + $0x38] sm:$0xf]
  %v40 = vld [vmem:[%s1 + $0x3c] sm:$0xf]
  %v43 = vunpack.c.l.b16 %v23
  %v44 = vunpack.c.l.b16 %v24
  %v45 = vpack.c.b16 %v44, %v43
  %v63 = vunpack.c.l.b16 %v25
  %v64 = vunpack.c.l.b16 %v26
  %v65 = vunpack.c.l.b16 %v27
  %v66 = vunpack.c.l.b16 %v28
  %v67 = vunpack.c.l.b16 %v29
  %v68 = vunpack.c.l.b16 %v30
  %v69 = vunpack.c.l.b16 %v31
  %v70 = vunpack.c.l.b16 %v32
  %v71 = vunpack.c.l.b16 %v33
  %v72 = vunpack.c.l.b16 %v34
  %v73 = vunpack.c.l.b16 %v35
  %v74 = vunpack.c.l.b16 %v36
  %v75 = vunpack.c.l.b16 %v37
  %v76 = vunpack.c.l.b16 %v38
  %v77 = vunpack.c.l.b16 %v39
  %v78 = vunpack.c.l.b16 %v40
  %v79 = vpack.c.b16 %v64, %v63
  %v80 = vpack.c.b16 %v66, %v65
  %v81 = vpack.c.b16 %v68, %v67
  %v82 = vpack.c.b16 %v70, %v69
  %v83 = vpack.c.b16 %v72, %v71
  %v84 = vpack.c.b16 %v74, %v73
  %v85 = vpack.c.b16 %v76, %v75
  %v86 = vpack.c.b16 %v78, %v77
  %95 = vmatprep.subr.bf16.mxu0 0
  %96 = vmatpush1.bf16.msra.mxu0 %v86
  %97 = vmatprep.subr.bf16.mxu0 0
  %98 = vmatpush1.bf16.msra.mxu0 %v85
  %99 = vmatprep.subr.bf16.mxu0 0
  %100 = vmatpush1.bf16.msra.mxu0 %v84
  %101 = vmatprep.subr.bf16.mxu0 0
  %102 = vmatpush1.bf16.msra.mxu0 %v83
  %103 = vmatprep.subr.bf16.mxu0 0
  %104 = vmatpush1.bf16.msra.mxu0 %v82
  %105 = vmatprep.subr.bf16.mxu0 0
  %106 = vmatpush1.bf16.msra.mxu0 %v81
  %107 = vmatprep.subr.bf16.mxu0 0
  %108 = vmatpush1.bf16.msra.mxu0 %v80
  %109 = vmatprep.subr.bf16.mxu0 0
  %110 = vmatpush1.bf16.msra.mxu0 %v79
  %111 = vmatprep.subr.bf16.mxu0 0
  %112 = vmatpush2.bf16.msra.mxu0 0
  %113 = vmatprep.subr.bf16.mxu0 0
  %114 = vmatpush2.bf16.msra.mxu0 0
  %115 = vmatprep.subr.bf16.mxu0 0
  %116 = vmatpush2.bf16.msra.mxu0 0
  %117 = vmatprep.subr.bf16.mxu0 0
  %118 = vmatpush2.bf16.msra.mxu0 0
  %119 = vmatprep.subr.bf16.mxu0 0
  %120 = vmatpush2.bf16.msra.mxu0 0
  %121 = vmatprep.subr.bf16.mxu0 0
  %122 = vmatpush2.bf16.msra.mxu0 0
  %123 = vmatprep.subr.bf16.mxu0 0
  %124 = vmatpush2.bf16.msra.mxu0 0
  %125 = vmatprep.subr.bf16.mxu0 0
  %126 = vmatpush2.bf16.msra.mxu0 0
  %127 = vmatprep.mubr.bf16.mxu0 0
  %128 = vmatmul.mubr.bf16.gmra.mxu0 %v45
  %v129 = vpop.f32.mrf.mxu0
  %v130 = vadd.f32 0.0, %v129
  %v131 = vpop.f32.mrf.mxu0
  %v132 = vpop.f32.mrf.mxu0
  %v133 = vadd.f32 0.0, %v132
  %v134 = vpop.f32.mrf.mxu0
  %135 = vdwg.mxu0
  %v136 = vadd.f32 %v21, %v130
  %v137 = vadd.f32 %v22, %v133
  %138 = vst [vmem:[#allocation2] sm:$0xff] %v136
  %139 = vst [vmem:[#allocation2 + $0x8] sm:$0xff] %v137
  // Predicated region
  $region18: #{seq2seq_forward.134} parent=0 // pred_check
    %p140 = pneg %p15
  $region19: #{seq2seq_forward.134} parent=0 // pred_check_branch
    %142 = sbr.rel (%p140) target = $region21
  $region20: #{seq2seq_forward.134} parent=0 // pred_region
    %v143 = vld [vmem:[#allocation2] sm:$0xff]
    %v144 = vld [vmem:[#allocation2 + $0x8] sm:$0xff]
    %v145 = vld [vmem:[%s2] sm:$0x1]
    %v147 = vlaneseq
    %v148 = vshrl.u32 %v147, 7
    %v149 = vsub.s32 0, %v148
    %v150 = vrot.slane %v145, %v149
    %v152 = vadd.f32 %v143, %v150
    %v153 = vadd.f32 %v144, %v150
    %v154 = vtanh.pop %v152
    %v155 = vtanh.pop %v153
    %v156 = vpack.c.bf16 %v155, %v154
    %v158 = vunpack.c.l.b16 %v156
    %v159 = vunpack.c.h.b16 %v156
    %v160 = vpack.c.b16 %v158, %v158
    %v161 = vpack.c.b16 %v159, %v159
    %164 = vst [vmem:[%s3] sm:$0xf] %v160
    %165 = vst [vmem:[%s3 + $0x4] sm:$0xf] %v161
  $region21: #{seq2seq_forward.134} parent=0 // pred_fallthru
    _
  // Predicated region
  $region22: #{seq2seq_forward.134} parent=0 // pred_check
    _
  $region23: #{seq2seq_forward.134} parent=0 // pred_check_branch
    %167 = sbr.rel (0) target = $region25
  $region24: #{seq2seq_forward.134} parent=0 // pred_region
    _
  $region25: #{seq2seq_forward.134} parent=0 // pred_fallthru
    _
  // Predicated region
  $region26: #{seq2seq_forward.134} parent=0 // pred_check
    _
  $region27: #{seq2seq_forward.134} parent=0 // pred_check_branch
    %169 = sbr.rel (0) target = $region29
  $region28: #{seq2seq_forward.134} parent=0 // pred_region
    _
  $region29: #{seq2seq_forward.134} parent=0 // pred_fallthru
    _

// kernel: seq2seq_forward.85
$region0: #{seq2seq_forward.85}
  #allocation0 [shape = 'u32[]', space=smem, size = 0x4, offset = 0x4, fixed_abs, tag = 'smem constant byte address 0x4 - core index']
  #allocation1 [shape = 'u32[144,128]{1,0:T(1,128)}', space=vmem, size = 0x12000, scoped, tag = 'internal scratch']
  #allocation2 [shape = 'f32[4,8,1]{2,1,0:T(8,128)}', space=vmem, size = 0x4000, scoped, tag = 'scratch operand']
  #allocation3 [shape = 'f32[4,8,1]{2,1,0:T(8,128)}', space=vmem, size = 0x4000, scoped, tag = 'scratch operand']
  #allocation4 [shape = 'f32[4,8,16]{2,1,0:T(8,128)}', space=vmem, size = 0x4000, scoped, tag = 'scratch operand']
  %s0 = inlined_call_operand.vmem [shape: bf16[8,8,16], index: 0, kind: input, shape index: {}]
  %s1 = inlined_call_operand.vmem [shape: bf16[8,16,16], index: 1, kind: input, shape index: {}]
  %s2 = inlined_call_operand.vmem [shape: bf16[8,16,16], index: 2, kind: input, shape index: {}]
  %s3 = inlined_call_operand.vmem [shape: f32[2,1,16], index: 3, kind: input, shape index: {}]
  %s4 = inlined_call_operand.vmem [shape: bf16[8,8,16], index: 4, kind: output, shape index: {}]
  %s5 = sld [smem:[#allocation0]]
  $region57: #{seq2seq_forward.85} parent=0
    _
  %s7 = ssub.s32 1, %s5
  %s8 = scalar_select 0, %s7, %s5
  loop: start=0, step=1, limit=4
  $region2: #{seq2seq_forward.85} parent=0 // loop_pre_header
    _
  $region3: #{seq2seq_forward.85} parent=0 // loop_header
    %s10 = sphi 0, %s14
    %p11 = scmp.ge.s32.totalorder %s10, 4
    %s17 = sphi 0, %s36
    %s18 = sphi 0, %s32
    %s19 = sphi 0, %s28
    %s20 = sphi 0, %s17
    %s21 = sphi 0, %s18
    %s22 = sphi 0, %s19
    %s23 = sphi 0, %s20
    %s24 = sphi 0, %s21
    %s25 = sphi 0, %s22
    %s41 = sphi 0, %s43
    %s44 = sphi 0, %s41
    %s45 = sphi 0, %s44
    %s61 = sphi 0, %s45
    %s69 = sphi 0, %s71
    %s72 = sphi 0, %s69
    %s73 = sphi 0, %s72
    %s89 = sphi 0, %s73
    %s97 = sphi 0, %s99
    %s100 = sphi 0, %s97
    %s101 = sphi 0, %s100
    %s117 = sphi 0, %s101
    %s125 = sphi 0, %s127
    %s128 = sphi 0, %s125
    %s129 = sphi 0, %s128
    %s145 = sphi 0, %s129
    %s153 = sphi 0, %s155
    %s156 = sphi 0, %s153
    %s157 = sphi 0, %s156
    %s173 = sphi 0, %s157
  $region4: #{seq2seq_forward.85} parent=0 // loop_header_branch
    %13 = sbr.rel (%p11) target = $region8
  $region5: #{seq2seq_forward.85} parent=0 // loop_body
    %s15 = ssub.s32 %s10, 1
    %s16 = ssub.s32 %s10, 2
    %s26 = sadd.s32 1, %s19
    %p27 = scmp.ge.s32.totalorder %s26, 1
    %s28 = scalar_select %p27, 0, %s26
    %s29 = sadd.s32 1, %s18
    %s30 = scalar_select %p27, %s29, %s18
    %p31 = scmp.ge.s32.totalorder %s30, 1
    %s32 = scalar_select %p31, 0, %s30
    %s33 = sadd.s32 1, %s17
    %s34 = scalar_select %p31, %s33, %s17
    %p35 = scmp.ge.s32.totalorder %s34, 2
    %s36 = scalar_select %p35, 0, %s34
    %s37 = ssub.s32 %s17, %s36
    %s38 = ssub.s32 %s18, %s32
    %s39 = sor.u32 %s37, %s38
    %p40 = scmp.eq.s32.totalorder %s39, 0
    %s42 = sadd.s32 %s41, 1
    %s43 = scalar_select %p40, %s41, %s42
    %p46 = pneg %p40
    %p47 = scmp.eq.s32.totalorder %s10, 1
    %p48 = por %p46, %p47
    %p49 = scmp.ne.s32.totalorder %s41, %s44
    %p50 = scmp.eq.s32.totalorder %s10, 0
    %p51 = por %p49, %p50
    %p52 = scmp.ne.s32.totalorder %s41, %s44
    %p53 = scmp.eq.s32.totalorder %s15, 1
    %p54 = por %p52, %p53
    %p55 = scmp.ne.s32.totalorder %s44, %s45
    %p56 = scmp.eq.s32.totalorder %s15, 0
    %p57 = por %p55, %p56
    %p58 = scmp.ne.s32.totalorder %s44, %s45
    %p59 = scmp.eq.s32.totalorder %s16, 1
    %p60 = por %p58, %p59
    %p62 = scmp.ne.s32.totalorder %s45, %s61
    %p63 = scmp.eq.s32.totalorder %s16, 0
    %p64 = por %p62, %p63
    %s65 = ssub.s32 %s17, %s36
    %s66 = ssub.s32 %s19, %s28
    %s67 = sor.u32 %s65, %s66
    %p68 = scmp.eq.s32.totalorder %s67, 0
    %s70 = sadd.s32 %s69, 1
    %s71 = scalar_select %p68, %s69, %s70
    %p74 = pneg %p68
    %p75 = scmp.eq.s32.totalorder %s10, 1
    %p76 = por %p74, %p75
    %p77 = scmp.ne.s32.totalorder %s69, %s72
    %p78 = scmp.eq.s32.totalorder %s10, 0
    %p79 = por %p77, %p78
    %p80 = scmp.ne.s32.totalorder %s69, %s72
    %p81 = scmp.eq.s32.totalorder %s15, 1
    %p82 = por %p80, %p81
    %p83 = scmp.ne.s32.totalorder %s72, %s73
    %p84 = scmp.eq.s32.totalorder %s15, 0
    %p85 = por %p83, %p84
    %p86 = scmp.ne.s32.totalorder %s72, %s73
    %p87 = scmp.eq.s32.totalorder %s16, 1
    %p88 = por %p86, %p87
    %p90 = scmp.ne.s32.totalorder %s73, %s89
    %p91 = scmp.eq.s32.totalorder %s16, 0
    %p92 = por %p90, %p91
    %s93 = ssub.s32 %s17, %s36
    %s94 = ssub.s32 %s19, %s28
    %s95 = sor.u32 %s93, %s94
    %p96 = scmp.eq.s32.totalorder %s95, 0
    %s98 = sadd.s32 %s97, 1
    %s99 = scalar_select %p96, %s97, %s98
    %p102 = pneg %p96
    %p103 = scmp.eq.s32.totalorder %s10, 1
    %p104 = por %p102, %p103
    %p105 = scmp.ne.s32.totalorder %s97, %s100
    %p106 = scmp.eq.s32.totalorder %s10, 0
    %p107 = por %p105, %p106
    %p108 = scmp.ne.s32.totalorder %s97, %s100
    %p109 = scmp.eq.s32.totalorder %s15, 1
    %p110 = por %p108, %p109
    %p111 = scmp.ne.s32.totalorder %s100, %s101
    %p112 = scmp.eq.s32.totalorder %s15, 0
    %p113 = por %p111, %p112
    %p114 = scmp.ne.s32.totalorder %s100, %s101
    %p115 = scmp.eq.s32.totalorder %s16, 1
    %p116 = por %p114, %p115
    %p118 = scmp.ne.s32.totalorder %s101, %s117
    %p119 = scmp.eq.s32.totalorder %s16, 0
    %p120 = por %p118, %p119
    %s121 = ssub.s32 %s17, %s36
    %s122 = ssub.s32 %s19, %s28
    %s123 = sor.u32 %s121, %s122
    %p124 = scmp.eq.s32.totalorder %s123, 0
    %s126 = sadd.s32 %s125, 1
    %s127 = scalar_select %p124, %s125, %s126
    %p130 = pneg %p124
    %p131 = scmp.eq.s32.totalorder %s10, 1
    %p132 = por %p130, %p131
    %p133 = scmp.ne.s32.totalorder %s125, %s128
    %p134 = scmp.eq.s32.totalorder %s10, 0
    %p135 = por %p133, %p134
    %p136 = scmp.ne.s32.totalorder %s125, %s128
    %p137 = scmp.eq.s32.totalorder %s15, 1
    %p138 = por %p136, %p137
    %p139 = scmp.ne.s32.totalorder %s128, %s129
    %p140 = scmp.eq.s32.totalorder %s15, 0
    %p141 = por %p139, %p140
    %p142 = scmp.ne.s32.totalorder %s128, %s129
    %p143 = scmp.eq.s32.totalorder %s16, 1
    %p144 = por %p142, %p143
    %p146 = scmp.ne.s32.totalorder %s129, %s145
    %p147 = scmp.eq.s32.totalorder %s16, 0
    %p148 = por %p146, %p147
    %s149 = ssub.s32 %s17, %s36
    %s150 = ssub.s32 %s18, %s32
    %s151 = sor.u32 %s149, %s150
    %p152 = scmp.eq.s32.totalorder %s151, 0
    %s154 = sadd.s32 %s153, 1
    %s155 = scalar_select %p152, %s153, %s154
    %p158 = pneg %p152
    %p159 = scmp.eq.s32.totalorder %s10, 1
    %p160 = por %p158, %p159
    %p161 = scmp.ne.s32.totalorder %s153, %s156
    %p162 = scmp.eq.s32.totalorder %s10, 0
    %p163 = por %p161, %p162
    %p164 = scmp.ne.s32.totalorder %s153, %s156
    %p165 = scmp.eq.s32.totalorder %s15, 1
    %p166 = por %p164, %p165
    %p167 = scmp.ne.s32.totalorder %s156, %s157
    %p168 = scmp.eq.s32.totalorder %s15, 0
    %p169 = por %p167, %p168
    %p170 = scmp.ne.s32.totalorder %s156, %s157
    %p171 = scmp.eq.s32.totalorder %s16, 1
    %p172 = por %p170, %p171
    %p174 = scmp.ne.s32.totalorder %s157, %s173
    %p175 = scmp.eq.s32.totalorder %s16, 0
    %p176 = por %p174, %p175
    %p177 = scmp.le.s32.totalorder 1, %s10
    %p178 = scmp.lt.s32.totalorder %s10, 3
    %p179 = pnand %p177, %p178
    %p180 = pneg %p179
    // Predicated region
    $region9: #{seq2seq_forward.85} parent=5 // pred_check
      _
    $region10: #{seq2seq_forward.85} parent=5 // pred_check_branch
      %182 = sbr.rel (%p179) target = $region12
    $region11: #{seq2seq_forward.85} parent=5 // pred_region
      %s183 = ssub.s32 %s10, 1
    $region12: #{seq2seq_forward.85} parent=5 // pred_fallthru
      _
    %p184 = scmp.lt.s32.totalorder %s10, 2
    // Predicated region
    $region13: #{seq2seq_forward.85} parent=5 // pred_check
      %p185 = pneg %p184
    $region14: #{seq2seq_forward.85} parent=5 // pred_check_branch
      %187 = sbr.rel (%p185) target = $region16
    $region15: #{seq2seq_forward.85} parent=5 // pred_region
      // Predicated region
      $region17: #{seq2seq_forward.85} parent=15 // pred_check
        %p188 = pneg %p51
      $region18: #{seq2seq_forward.85} parent=15 // pred_check_branch
        %190 = sbr.rel (%p188) target = $region20
      $region19: #{seq2seq_forward.85} parent=15 // pred_region
        %s191 = smul.u32 4, %s17
        %p192 = scmp.lt.s32.totalorder %s191, 7
        %s193 = scalar_select %p192, %s191, 7
        %p194 = scmp.lt.s32.totalorder %s18, 0
        %s195 = scalar_select %p194, %s18, 0
        %s196 = sadd.s32 %s195, %s193
        %s197 = smul.addr %s196, 4
        %s198 = scalar_lea.vmem %s0, %s197
        %s199 = smul.u32 4, %s17
      $region20: #{seq2seq_forward.85} parent=15 // pred_fallthru
        _
      // Predicated region
      $region21: #{seq2seq_forward.85} parent=15 // pred_check
        %p200 = pneg %p79
      $region22: #{seq2seq_forward.85} parent=15 // pred_check_branch
        %202 = sbr.rel (%p200) target = $region24
      $region23: #{seq2seq_forward.85} parent=15 // pred_region
        %s203 = smul.u32 4, %s17
        %s204 = smul.u32 2, %s19
        %p205 = scmp.lt.s32.totalorder %s203, 7
        %s206 = scalar_select %p205, %s203, 7
        %p207 = scmp.lt.s32.totalorder %s204, 1
        %s208 = scalar_select %p207, %s204, 1
        %s209 = smul.addr %s206, 2
        %s210 = sadd.s32 %s208, %s209
        %s211 = smul.addr %s210, 4
        %s212 = scalar_lea.vmem %s1, %s211
        %s213 = smul.u32 4, %s17
        %s214 = smul.u32 2, %s19
      $region24: #{seq2seq_forward.85} parent=15 // pred_fallthru
        _
      // Predicated region
      $region25: #{seq2seq_forward.85} parent=15 // pred_check
        %p215 = pneg %p107
      $region26: #{seq2seq_forward.85} parent=15 // pred_check_branch
        %217 = sbr.rel (%p215) target = $region28
      $region27: #{seq2seq_forward.85} parent=15 // pred_region
        %s218 = smul.u32 4, %s17
        %s219 = smul.u32 2, %s19
        %p220 = scmp.lt.s32.totalorder %s218, 7
        %s221 = scalar_select %p220, %s218, 7
        %p222 = scmp.lt.s32.totalorder %s219, 1
        %s223 = scalar_select %p222, %s219, 1
        %s224 = smul.addr %s221, 2
        %s225 = sadd.s32 %s223, %s224
        %s226 = smul.addr %s225, 4
        %s227 = scalar_lea.vmem %s2, %s226
        %s228 = smul.u32 4, %s17
        %s229 = smul.u32 2, %s19
      $region28: #{seq2seq_forward.85} parent=15 // pred_fallthru
        _
      // Predicated region
      $region29: #{seq2seq_forward.85} parent=15 // pred_check
        %p230 = pneg %p135
      $region30: #{seq2seq_forward.85} parent=15 // pred_check_branch
        %232 = sbr.rel (%p230) target = $region32
      $region31: #{seq2seq_forward.85} parent=15 // pred_region
        %p233 = scmp.lt.s32.totalorder %s17, 1
        %s234 = scalar_select %p233, %s17, 1
        %p235 = scmp.lt.s32.totalorder %s19, 0
        %s236 = scalar_select %p235, %s19, 0
        %s237 = sadd.s32 %s236, %s234
        %s238 = scalar_lea.vmem %s3, %s237
      $region32: #{seq2seq_forward.85} parent=15 // pred_fallthru
        _
    $region16: #{seq2seq_forward.85} parent=5 // pred_fallthru
      _
    %p239 = scmp.le.s32.totalorder 1, %s10
    %p240 = scmp.lt.s32.totalorder %s10, 3
    %p241 = pnand %p239, %p240
    %p242 = pneg %p241
    // Predicated region
    $region33: #{seq2seq_forward.85} parent=5 // pred_check
      _
    $region34: #{seq2seq_forward.85} parent=5 // pred_check_branch
      %244 = sbr.rel (%p241) target = $region36
    $region35: #{seq2seq_forward.85} parent=5 // pred_region
      %s245 = ssub.s32 %s10, 1
      %s246 = smul.u32 4, %s20
      %p247 = scmp.lt.s32.totalorder %s246, 7
      %s248 = scalar_select %p247, %s246, 7
      %p249 = scmp.lt.s32.totalorder %s21, 0
      %s250 = scalar_select %p249, %s21, 0
      %s251 = sadd.s32 %s250, %s248
      %s252 = smul.addr %s251, 4
      %s253 = scalar_lea.vmem %s0, %s252
      %p254 = pneg %p57
      %p255 = pneg %p54
      %s256 = smul.u32 4, %s20
      %s257 = smul.u32 2, %s22
      %p258 = scmp.lt.s32.totalorder %s256, 7
      %s259 = scalar_select %p258, %s256, 7
      %p260 = scmp.lt.s32.totalorder %s257, 1
      %s261 = scalar_select %p260, %s257, 1
      %s262 = smul.addr %s259, 2
      %s263 = sadd.s32 %s261, %s262
      %s264 = smul.addr %s263, 4
      %s265 = scalar_lea.vmem %s1, %s264
      %p266 = pneg %p85
      %p267 = pneg %p82
      %s268 = smul.u32 4, %s20
      %s269 = smul.u32 2, %s22
      %p270 = scmp.lt.s32.totalorder %s268, 7
      %s271 = scalar_select %p270, %s268, 7
      %p272 = scmp.lt.s32.totalorder %s269, 1
      %s273 = scalar_select %p272, %s269, 1
      %s274 = smul.addr %s271, 2
      %s275 = sadd.s32 %s273, %s274
      %s276 = smul.addr %s275, 4
      %s277 = scalar_lea.vmem %s2, %s276
      %p278 = pneg %p113
      %p279 = pneg %p110
      %p280 = scmp.lt.s32.totalorder %s20, 1
      %s281 = scalar_select %p280, %s20, 1
      %p282 = scmp.lt.s32.totalorder %s22, 0
      %s283 = scalar_select %p282, %s22, 0
      %s284 = sadd.s32 %s283, %s281
      %s285 = scalar_lea.vmem %s3, %s284
      %p286 = pneg %p141
      %p287 = pneg %p138
      %p288 = pneg %p169
      %p289 = pneg %p166
      %s290 = smul.u32 4, %s20
      %p291 = scmp.lt.s32.totalorder %s290, 7
      %s292 = scalar_select %p291, %s290, 7
      %p293 = scmp.lt.s32.totalorder %s21, 0
      %s294 = scalar_select %p293, %s21, 0
      %s295 = sadd.s32 %s294, %s292
      %s296 = smul.addr %s295, 4
      %s297 = scalar_lea.vmem %s4, %s296
      %s298 = smul.u32 4, %s20
      %p299 = scmp.lt.s32.totalorder %s298, 7
      %s300 = scalar_select %p299, %s298, 7
      %p301 = scmp.lt.s32.totalorder %s21, 0
      %s302 = scalar_select %p301, %s21, 0
      %s303 = sadd.s32 %s302, %s300
      %s304 = smul.addr %s303, 4
      %s305 = scalar_lea.vmem %s0, %s304
      %s306 = smul.u32 4, %s20
      %s307 = smul.u32 4, %s20
      %s308 = smul.u32 2, %s22
      %p309 = scmp.lt.s32.totalorder %s307, 7
      %s310 = scalar_select %p309, %s307, 7
      %p311 = scmp.lt.s32.totalorder %s308, 1
      %s312 = scalar_select %p311, %s308, 1
      %s313 = smul.addr %s310, 2
      %s314 = sadd.s32 %s312, %s313
      %s315 = smul.addr %s314, 4
      %s316 = scalar_lea.vmem %s1, %s315
      %s317 = smul.u32 4, %s20
      %s318 = smul.u32 2, %s22
      %s319 = smul.u32 4, %s20
      %s320 = smul.u32 2, %s22
      %p321 = scmp.lt.s32.totalorder %s319, 7
      %s322 = scalar_select %p321, %s319, 7
      %p323 = scmp.lt.s32.totalorder %s320, 1
      %s324 = scalar_select %p323, %s320, 1
      %s325 = smul.addr %s322, 2
      %s326 = sadd.s32 %s324, %s325
      %s327 = smul.addr %s326, 4
      %s328 = scalar_lea.vmem %s2, %s327
      %s329 = smul.u32 4, %s20
      %s330 = smul.u32 2, %s22
      %p331 = scmp.lt.s32.totalorder %s20, 1
      %s332 = scalar_select %p331, %s20, 1
      %p333 = scmp.lt.s32.totalorder %s22, 0
      %s334 = scalar_select %p333, %s22, 0
      %s335 = sadd.s32 %s334, %s332
      %s336 = scalar_lea.vmem %s3, %s335
      %s337 = smul.u32 4, %s20
      %p338 = scmp.lt.s32.totalorder %s337, 7
      %s339 = scalar_select %p338, %s337, 7
      %p340 = scmp.lt.s32.totalorder %s21, 0
      %s341 = scalar_select %p340, %s21, 0
      %s342 = sadd.s32 %s341, %s339
      %s343 = smul.addr %s342, 4
      %s344 = scalar_lea.vmem %s4, %s343
      %s345 = smul.u32 4, %s20
      %p347 = scmp.eq.s32.totalorder %s22, 0
      // Predicated region
      $region37: #{seq2seq_forward.85} parent=35 // pred_check
        %p348 = pneg %p347
      $region38: #{seq2seq_forward.85} parent=35 // pred_check_branch
        %350 = sbr.rel (%p348) target = $region40
      $region39: #{seq2seq_forward.85} parent=35 // pred_region
        %vm351 = vcmask 7168
        %352 = vst.msk [vmem:[#allocation2] sm:$0xff] %vm351, -1e+30
        %353 = vst.msk [vmem:[#allocation2 + $0x8] sm:$0xff] %vm351, -1e+30
        %354 = vst.msk [vmem:[#allocation2 + $0x10] sm:$0xff] %vm351, -1e+30
        %355 = vst.msk [vmem:[#allocation2 + $0x18] sm:$0xff] %vm351, -1e+30
        %356 = vst.msk [vmem:[#allocation3] sm:$0xff] %vm351, 0.0
        %357 = vst.msk [vmem:[#allocation3 + $0x8] sm:$0xff] %vm351, 0.0
        %358 = vst.msk [vmem:[#allocation3 + $0x10] sm:$0xff] %vm351, 0.0
        %359 = vst.msk [vmem:[#allocation3 + $0x18] sm:$0xff] %vm351, 0.0
        %vm360 = vcmask 130048
        %361 = vst.msk [vmem:[#allocation4] sm:$0xff] %vm360, 0.0
        %362 = vst.msk [vmem:[#allocation4 + $0x8] sm:$0xff] %vm360, 0.0
        %363 = vst.msk [vmem:[#allocation4 + $0x10] sm:$0xff] %vm360, 0.0
        %364 = vst.msk [vmem:[#allocation4 + $0x18] sm:$0xff] %vm360, 0.0
      $region40: #{seq2seq_forward.85} parent=35 // pred_fallthru
        _
      %v365 = vld [vmem:[%s305] sm:$0xf]
      %v366 = vld [vmem:[%s305 + $0x4] sm:$0xf]
      %v367 = vld [vmem:[%s305 + $0x8] sm:$0xf]
      %v368 = vld [vmem:[%s305 + $0xc] sm:$0xf]
      %v369 = vld [vmem:[%s316] sm:$0xf]
      %v370 = vld [vmem:[%s316 + $0x4] sm:$0xf]
      %v371 = vld [vmem:[%s316 + $0x8] sm:$0xf]
      %v372 = vld [vmem:[%s316 + $0xc] sm:$0xf]
      %v373 = vld [vmem:[%s316 + $0x10] sm:$0xf]
      %v374 = vld [vmem:[%s316 + $0x14] sm:$0xf]
      %v375 = vld [vmem:[%s316 + $0x18] sm:$0xf]
      %v376 = vld [vmem:[%s316 + $0x1c] sm:$0xf]
      %v379 = vunpack.c.l.b16 %v369
      %v380 = vunpack.c.l.b16 %v370
      %v381 = vpack.c.b16 %v380, %v379
      %vm382 = vcmask 130048
      %v384 = vsel %vm382, %v365, 0
      %v387 = vsel %vm382, %v381, 0
      %389 = vmatprep.subr.bf16.mxu0 0
      %390 = vmatpush1.bf16.xpose.msra.mxu0 0
      %391 = vmatprep.subr.bf16.mxu0 0
      %392 = vmatpush1.bf16.xpose.msra.mxu0 0
      %393 = vmatprep.subr.bf16.mxu0 0
      %394 = vmatpush1.bf16.xpose.msra.mxu0 0
      %395 = vmatprep.subr.bf16.mxu0 0
      %396 = vmatpush1.bf16.xpose.msra.mxu0 0
      %397 = vmatprep.subr.bf16.mxu0 0
      %398 = vmatpush1.bf16.xpose.msra.mxu0 0
      %399 = vmatprep.subr.bf16.mxu0 0
      %400 = vmatpush1.bf16.xpose.msra.mxu0 0
      %401 = vmatprep.subr.bf16.mxu0 0
      %402 = vmatpush1.bf16.xpose.msra.mxu0 0
      %403 = vmatprep.subr.bf16.mxu0 0
      %404 = vmatpush1.bf16.xpose.msra.mxu0 %v387
      %405 = vmatprep.subr.bf16.mxu0 0
      %406 = vmatpush2.bf16.xpose.msra.mxu0 0
      %407 = vmatprep.subr.bf16.mxu0 0
      %408 = vmatpush2.bf16.xpose.msra.mxu0 0
      %409 = vmatprep.subr.bf16.mxu0 0
      %410 = vmatpush2.bf16.xpose.msra.mxu0 0
      %411 = vmatprep.subr.bf16.mxu0 0
      %412 = vmatpush2.bf16.xpose.msra.mxu0 0
      %413 = vmatprep.subr.bf16.mxu0 0
      %414 = vmatpush2.bf16.xpose.msra.mxu0 0
      %415 = vmatprep.subr.bf16.mxu0 0
      %416 = vmatpush2.bf16.xpose.msra.mxu0 0
      %417 = vmatprep.subr.bf16.mxu0 0
      %418 = vmatpush2.bf16.xpose.msra.mxu0 0
      %419 = vmatprep.subr.bf16.mxu0 0
      %420 = vmatpush2.bf16.xpose.msra.mxu0 0
      %421 = vmatprep.mubr.bf16.mxu0 0
      %422 = vmatmul.mubr.bf16.gmra.mxu0 %v384
      %v423 = vpop.f32.mrf.mxu0
      %v424 = vadd.f32 0.0, %v423
      %v425 = vpop.f32.mrf.mxu0
      %v426 = vpop.f32.mrf.mxu0
      %v427 = vpop.f32.mrf.mxu0
      %428 = vdwg.mxu0
      %v431 = vunpack.c.l.b16 %v371
      %v432 = vunpack.c.l.b16 %v372
      %v433 = vpack.c.b16 %v432, %v431
      %v435 = vsel %vm382, %v366, 0
      %v438 = vsel %vm382, %v433, 0
      %440 = vmatprep.subr.bf16.mxu0 0
      %441 = vmatpush1.bf16.xpose.msra.mxu0 0
      %442 = vmatprep.subr.bf16.mxu0 0
      %443 = vmatpush1.bf16.xpose.msra.mxu0 0
      %444 = vmatprep.subr.bf16.mxu0 0
      %445 = vmatpush1.bf16.xpose.msra.mxu0 0
      %446 = vmatprep.subr.bf16.mxu0 0
      %447 = vmatpush1.bf16.xpose.msra.mxu0 0
      %448 = vmatprep.subr.bf16.mxu0 0
      %449 = vmatpush1.bf16.xpose.msra.mxu0 0
      %450 = vmatprep.subr.bf16.mxu0 0
      %451 = vmatpush1.bf16.xpose.msra.mxu0 0
      %452 = vmatprep.subr.bf16.mxu0 0
      %453 = vmatpush1.bf16.xpose.msra.mxu0 0
      %454 = vmatprep.subr.bf16.mxu0 0
      %455 = vmatpush1.bf16.xpose.msra.mxu0 %v438
      %456 = vmatprep.subr.bf16.mxu0 0
      %457 = vmatpush2.bf16.xpose.msra.mxu0 0
      %458 = vmatprep.subr.bf16.mxu0 0
      %459 = vmatpush2.bf16.xpose.msra.mxu0 0
      %460 = vmatprep.subr.bf16.mxu0 0
      %461 = vmatpush2.bf16.xpose.msra.mxu0 0
      %462 = vmatprep.subr.bf16.mxu0 0
      %463 = vmatpush2.bf16.xpose.msra.mxu0 0
      %464 = vmatprep.subr.bf16.mxu0 0
      %465 = vmatpush2.bf16.xpose.msra.mxu0 0
      %466 = vmatprep.subr.bf16.mxu0 0
      %467 = vmatpush2.bf16.xpose.msra.mxu0 0
      %468 = vmatprep.subr.bf16.mxu0 0
      %469 = vmatpush2.bf16.xpose.msra.mxu0 0
      %470 = vmatprep.subr.bf16.mxu0 0
      %471 = vmatpush2.bf16.xpose.msra.mxu0 0
      %472 = vmatprep.mubr.bf16.mxu0 0
      %473 = vmatmul.mubr.bf16.gmra.mxu0 %v435
      %v474 = vpop.f32.mrf.mxu0
      %v475 = vadd.f32 0.0, %v474
      %v476 = vpop.f32.mrf.mxu0
      %v477 = vpop.f32.mrf.mxu0
      %v478 = vpop.f32.mrf.mxu0
      %479 = vdwg.mxu0
      %v482 = vunpack.c.l.b16 %v373
      %v483 = vunpack.c.l.b16 %v374
      %v484 = vpack.c.b16 %v483, %v482
      %v486 = vsel %vm382, %v367, 0
      %v489 = vsel %vm382, %v484, 0
      %491 = vmatprep.subr.bf16.mxu0 0
      %492 = vmatpush1.bf16.xpose.msra.mxu0 0
      %493 = vmatprep.subr.bf16.mxu0 0
      %494 = vmatpush1.bf16.xpose.msra.mxu0 0
      %495 = vmatprep.subr.bf16.mxu0 0
      %496 = vmatpush1.bf16.xpose.msra.mxu0 0
      %497 = vmatprep.subr.bf16.mxu0 0
      %498 = vmatpush1.bf16.xpose.msra.mxu0 0
      %499 = vmatprep.subr.bf16.mxu0 0
      %500 = vmatpush1.bf16.xpose.msra.mxu0 0
      %501 = vmatprep.subr.bf16.mxu0 0
      %502 = vmatpush1.bf16.xpose.msra.mxu0 0
      %503 = vmatprep.subr.bf16.mxu0 0
      %504 = vmatpush1.bf16.xpose.msra.mxu0 0
      %505 = vmatprep.subr.bf16.mxu0 0
      %506 = vmatpush1.bf16.xpose.msra.mxu0 %v489
      %507 = vmatprep.subr.bf16.mxu0 0
      %508 = vmatpush2.bf16.xpose.msra.mxu0 0
      %509 = vmatprep.subr.bf16.mxu0 0
      %510 = vmatpush2.bf16.xpose.msra.mxu0 0
      %511 = vmatprep.subr.bf16.mxu0 0
      %512 = vmatpush2.bf16.xpose.msra.mxu0 0
      %513 = vmatprep.subr.bf16.mxu0 0
      %514 = vmatpush2.bf16.xpose.msra.mxu0 0
      %515 = vmatprep.subr.bf16.mxu0 0
      %516 = vmatpush2.bf16.xpose.msra.mxu0 0
      %517 = vmatprep.subr.bf16.mxu0 0
      %518 = vmatpush2.bf16.xpose.msra.mxu0 0
      %519 = vmatprep.subr.bf16.mxu0 0
      %520 = vmatpush2.bf16.xpose.msra.mxu0 0
      %521 = vmatprep.subr.bf16.mxu0 0
      %522 = vmatpush2.bf16.xpose.msra.mxu0 0
      %523 = vmatprep.mubr.bf16.mxu0 0
      %524 = vmatmul.mubr.bf16.gmra.mxu0 %v486
      %v525 = vpop.f32.mrf.mxu0
      %v526 = vadd.f32 0.0, %v525
      %v527 = vpop.f32.mrf.mxu0
      %v528 = vpop.f32.mrf.mxu0
      %v529 = vpop.f32.mrf.mxu0
      %530 = vdwg.mxu0
      %v533 = vunpack.c.l.b16 %v375
      %v534 = vunpack.c.l.b16 %v376
      %v535 = vpack.c.b16 %v534, %v533
      %v537 = vsel %vm382, %v368, 0
      %v540 = vsel %vm382, %v535, 0
      %542 = vmatprep.subr.bf16.mxu0 0
      %543 = vmatpush1.bf16.xpose.msra.mxu0 0
      %544 = vmatprep.subr.bf16.mxu0 0
      %545 = vmatpush1.bf16.xpose.msra.mxu0 0
      %546 = vmatprep.subr.bf16.mxu0 0
      %547 = vmatpush1.bf16.xpose.msra.mxu0 0
      %548 = vmatprep.subr.bf16.mxu0 0
      %549 = vmatpush1.bf16.xpose.msra.mxu0 0
      %550 = vmatprep.subr.bf16.mxu0 0
      %551 = vmatpush1.bf16.xpose.msra.mxu0 0
      %552 = vmatprep.subr.bf16.mxu0 0
      %553 = vmatpush1.bf16.xpose.msra.mxu0 0
      %554 = vmatprep.subr.bf16.mxu0 0
      %555 = vmatpush1.bf16.xpose.msra.mxu0 0
      %556 = vmatprep.subr.bf16.mxu0 0
      %557 = vmatpush1.bf16.xpose.msra.mxu0 %v540
      %558 = vmatprep.subr.bf16.mxu0 0
      %559 = vmatpush2.bf16.xpose.msra.mxu0 0
      %560 = vmatprep.subr.bf16.mxu0 0
      %561 = vmatpush2.bf16.xpose.msra.mxu0 0
      %562 = vmatprep.subr.bf16.mxu0 0
      %563 = vmatpush2.bf16.xpose.msra.mxu0 0
      %564 = vmatprep.subr.bf16.mxu0 0
      %565 = vmatpush2.bf16.xpose.msra.mxu0 0
      %566 = vmatprep.subr.bf16.mxu0 0
      %567 = vmatpush2.bf16.xpose.msra.mxu0 0
      %568 = vmatprep.subr.bf16.mxu0 0
      %569 = vmatpush2.bf16.xpose.msra.mxu0 0
      %570 = vmatprep.subr.bf16.mxu0 0
      %571 = vmatpush2.bf16.xpose.msra.mxu0 0
      %572 = vmatprep.subr.bf16.mxu0 0
      %573 = vmatpush2.bf16.xpose.msra.mxu0 0
      %574 = vmatprep.mubr.bf16.mxu0 0
      %575 = vmatmul.mubr.bf16.gmra.mxu0 %v537
      %v576 = vpop.f32.mrf.mxu0
      %v577 = vadd.f32 0.0, %v576
      %v578 = vpop.f32.mrf.mxu0
      %v579 = vpop.f32.mrf.mxu0
      %v580 = vpop.f32.mrf.mxu0
      %581 = vdwg.mxu0
      %v582 = vmul.f32 %v424, 0.25
      %v583 = vmul.f32 %v475, 0.25
      %v584 = vmul.f32 %v526, 0.25
      %v585 = vmul.f32 %v577, 0.25
      %v586 = vld [vmem:[%s336] sm:$0x1]
      %v588 = vlaneseq
      %v589 = vshrl.u32 %v588, 7
      %v590 = vsub.s32 0, %v589
      %v591 = vrot.slane %v586, %v590
      %v593 = vadd.f32 %v582, %v591
      %v594 = vadd.f32 %v583, %v591
      %v595 = vadd.f32 %v584, %v591
      %v596 = vadd.f32 %v585, %v591
      %v597 = vld [vmem:[#allocation2] sm:$0xff]
      %v598 = vld [vmem:[#allocation2 + $0x8] sm:$0xff]
      %v599 = vld [vmem:[#allocation2 + $0x10] sm:$0xff]
      %v600 = vld [vmem:[#allocation2 + $0x18] sm:$0xff]
      %v601 = vsel %vm382, %v593, -inf
      %602 = vmax.xlane.f32.xlu0 %v601
      %v603 = vpop.xlane.xlu0 %602
      %v604 = vsel %vm382, %v594, -inf
      %605 = vmax.xlane.f32.xlu0 %v604
      %v606 = vpop.xlane.xlu0 %605
      %v607 = vsel %vm382, %v595, -inf
      %608 = vmax.xlane.f32.xlu0 %v607
      %v609 = vpop.xlane.xlu0 %608
      %v610 = vsel %vm382, %v596, -inf
      %611 = vmax.xlane.f32.xlu0 %v610
      %v612 = vpop.xlane.xlu0 %611
      %v613 = vmax.f32 %v597, %v603
      %v614 = vmax.f32 %v598, %v606
      %v615 = vmax.f32 %v599, %v609
      %v616 = vmax.f32 %v600, %v612
      %v617 = vsub.f32 %v597, %v613
      %v618 = vsub.f32 %v598, %v614
      %v619 = vsub.f32 %v599, %v615
      %v620 = vsub.f32 %v600, %v616
      %v621 = vmul.f32 %v617, 1.442695
      %v622 = vpow.pop %v621
      %v623 = vmul.f32 %v618, 1.442695
      %v624 = vpow.pop %v623
      %v625 = vmul.f32 %v619, 1.442695
      %v626 = vpow.pop %v625
      %v627 = vmul.f32 %v620, 1.442695
      %v628 = vpow.pop %v627
      %630 = vset.pattern.permute.xlu0 0
      %631 = vperm.xlu0 %630, %v613
      %v632 = vpop.permute.xlu0 %631
      %635 = vset.pattern.permute.xlu0 0
      %636 = vperm.xlu0 %635, %v614
      %v637 = vpop.permute.xlu0 %636
      %640 = vset.pattern.permute.xlu0 0
      %641 = vperm.xlu0 %640, %v615
      %v642 = vpop.permute.xlu0 %641
      %645 = vset.pattern.permute.xlu0 0
      %646 = vperm.xlu0 %645, %v616
      %v647 = vpop.permute.xlu0 %646
      %v649 = vsub.f32 %v593, %v632
      %v650 = vsub.f32 %v594, %v637
      %v651 = vsub.f32 %v595, %v642
      %v652 = vsub.f32 %v596, %v647
      %v653 = vmul.f32 %v649, 1.442695
      %v654 = vpow.pop %v653
      %v655 = vmul.f32 %v650, 1.442695
      %v656 = vpow.pop %v655
      %v657 = vmul.f32 %v651, 1.442695
      %v658 = vpow.pop %v657
      %v659 = vmul.f32 %v652, 1.442695
      %v660 = vpow.pop %v659
      %v661 = vld [vmem:[#allocation3] sm:$0xff]
      %v662 = vld [vmem:[#allocation3 + $0x8] sm:$0xff]
      %v663 = vld [vmem:[#allocation3 + $0x10] sm:$0xff]
      %v664 = vld [vmem:[#allocation3 + $0x18] sm:$0xff]
      %v665 = vmul.f32 %v622, %v661
      %v666 = vmul.f32 %v624, %v662
      %v667 = vmul.f32 %v626, %v663
      %v668 = vmul.f32 %v628, %v664
      %v669 = vsel %vm382, %v654, 0.0
      %670 = vadd.xlane.f32.xlu0 %v669
      %v671 = vpop.xlane.xlu0 %670
      %v672 = vsel %vm382, %v656, 0.0
      %673 = vadd.xlane.f32.xlu0 %v672
      %v674 = vpop.xlane.xlu0 %673
      %v675 = vsel %vm382, %v658, 0.0
      %676 = vadd.xlane.f32.xlu0 %v675
      %v677 = vpop.xlane.xlu0 %676
      %v678 = vsel %vm382, %v660, 0.0
      %679 = vadd.xlane.f32.xlu0 %v678
      %v680 = vpop.xlane.xlu0 %679
      %v681 = vadd.f32 %v665, %v671
      %v682 = vadd.f32 %v666, %v674
      %v683 = vadd.f32 %v667, %v677
      %v684 = vadd.f32 %v668, %v680
      %vm685 = vcmask 7168
      %686 = vst.msk [vmem:[#allocation3] sm:$0xff] %vm685, %v681
      %687 = vst.msk [vmem:[#allocation3 + $0x8] sm:$0xff] %vm685, %v682
      %688 = vst.msk [vmem:[#allocation3 + $0x10] sm:$0xff] %vm685, %v683
      %689 = vst.msk [vmem:[#allocation3 + $0x18] sm:$0xff] %vm685, %v684
      %v690 = vld [vmem:[#allocation4] sm:$0xff]
      %v691 = vld [vmem:[#allocation4 + $0x8] sm:$0xff]
      %v692 = vld [vmem:[#allocation4 + $0x10] sm:$0xff]
      %v693 = vld [vmem:[#allocation4 + $0x18] sm:$0xff]
      %695 = vset.pattern.permute.xlu0 0
      %696 = vperm.xlu0 %695, %v622
      %v697 = vpop.permute.xlu0 %696
      %700 = vset.pattern.permute.xlu0 0
      %701 = vperm.xlu0 %700, %v624
      %v702 = vpop.permute.xlu0 %701
      %705 = vset.pattern.permute.xlu0 0
      %706 = vperm.xlu0 %705, %v626
      %v707 = vpop.permute.xlu0 %706
      %710 = vset.pattern.permute.xlu0 0
      %711 = vperm.xlu0 %710, %v628
      %v712 = vpop.permute.xlu0 %711
      %v714 = vmul.f32 %v697, %v690
      %v715 = vmul.f32 %v702, %v691
      %v716 = vmul.f32 %v707, %v692
      %v717 = vmul.f32 %v712, %v693
      %v718 = vpack.c.bf16 %v654, %v654
      %v719 = vpack.c.bf16 %v656, %v656
      %v720 = vpack.c.bf16 %v658, %v658
      %v721 = vpack.c.bf16 %v660, %v660
      %v722 = vld [vmem:[%s328] sm:$0xf]
      %v723 = vld [vmem:[%s328 + $0x4] sm:$0xf]
      %v724 = vld [vmem:[%s328 + $0x8] sm:$0xf]
      %v725 = vld [vmem:[%s328 + $0xc] sm:$0xf]
      %v726 = vld [vmem:[%s328 + $0x10] sm:$0xf]
      %v727 = vld [vmem:[%s328 + $0x14] sm:$0xf]
      %v728 = vld [vmem:[%s328 + $0x18] sm:$0xf]
      %v729 = vld [vmem:[%s328 + $0x1c] sm:$0xf]
      %v732 = vunpack.c.l.b16 %v722
      %v733 = vunpack.c.l.b16 %v723
      %v734 = vpack.c.b16 %v733, %v732
      %v737 = vsel %vm382, %v718, 0
      %739 = vmatprep.subr.bf16.mxu0 0
      %740 = vmatpush1.bf16.msra.mxu0 0
      %741 = vmatprep.subr.bf16.mxu0 0
      %742 = vmatpush1.bf16.msra.mxu0 0
      %743 = vmatprep.subr.bf16.mxu0 0
      %744 = vmatpush1.bf16.msra.mxu0 0
      %745 = vmatprep.subr.bf16.mxu0 0
      %746 = vmatpush1.bf16.msra.mxu0 0
      %747 = vmatprep.subr.bf16.mxu0 0
      %748 = vmatpush1.bf16.msra.mxu0 0
      %749 = vmatprep.subr.bf16.mxu0 0
      %750 = vmatpush1.bf16.msra.mxu0 0
      %751 = vmatprep.subr.bf16.mxu0 0
      %752 = vmatpush1.bf16.msra.mxu0 0
      %753 = vmatprep.subr.bf16.mxu0 0
      %754 = vmatpush1.bf16.msra.mxu0 %v734
      %755 = vmatprep.subr.bf16.mxu0 0
      %756 = vmatpush2.bf16.msra.mxu0 0
      %757 = vmatprep.subr.bf16.mxu0 0
      %758 = vmatpush2.bf16.msra.mxu0 0
      %759 = vmatprep.subr.bf16.mxu0 0
      %760 = vmatpush2.bf16.msra.mxu0 0
      %761 = vmatprep.subr.bf16.mxu0 0
      %762 = vmatpush2.bf16.msra.mxu0 0
      %763 = vmatprep.subr.bf16.mxu0 0
      %764 = vmatpush2.bf16.msra.mxu0 0
      %765 = vmatprep.subr.bf16.mxu0 0
      %766 = vmatpush2.bf16.msra.mxu0 0
      %767 = vmatprep.subr.bf16.mxu0 0
      %768 = vmatpush2.bf16.msra.mxu0 0
      %769 = vmatprep.subr.bf16.mxu0 0
      %770 = vmatpush2.bf16.msra.mxu0 0
      %771 = vmatprep.mubr.bf16.mxu0 0
      %772 = vmatmul.mubr.bf16.gmra.mxu0 %v737
      %v773 = vpop.f32.mrf.mxu0
      %v774 = vadd.f32 0.0, %v773
      %v775 = vpop.f32.mrf.mxu0
      %v776 = vpop.f32.mrf.mxu0
      %v777 = vpop.f32.mrf.mxu0
      %778 = vdwg.mxu0
      %v781 = vunpack.c.l.b16 %v724
      %v782 = vunpack.c.l.b16 %v725
      %v783 = vpack.c.b16 %v782, %v781
      %v786 = vsel %vm382, %v719, 0
      %788 = vmatprep.subr.bf16.mxu0 0
      %789 = vmatpush1.bf16.msra.mxu0 0
      %790 = vmatprep.subr.bf16.mxu0 0
      %791 = vmatpush1.bf16.msra.mxu0 0
      %792 = vmatprep.subr.bf16.mxu0 0
      %793 = vmatpush1.bf16.msra.mxu0 0
      %794 = vmatprep.subr.bf16.mxu0 0
      %795 = vmatpush1.bf16.msra.mxu0 0
      %796 = vmatprep.subr.bf16.mxu0 0
      %797 = vmatpush1.bf16.msra.mxu0 0
      %798 = vmatprep.subr.bf16.mxu0 0
      %799 = vmatpush1.bf16.msra.mxu0 0
      %800 = vmatprep.subr.bf16.mxu0 0
      %801 = vmatpush1.bf16.msra.mxu0 0
      %802 = vmatprep.subr.bf16.mxu0 0
      %803 = vmatpush1.bf16.msra.mxu0 %v783
      %804 = vmatprep.subr.bf16.mxu0 0
      %805 = vmatpush2.bf16.msra.mxu0 0
      %806 = vmatprep.subr.bf16.mxu0 0
      %807 = vmatpush2.bf16.msra.mxu0 0
      %808 = vmatprep.subr.bf16.mxu0 0
      %809 = vmatpush2.bf16.msra.mxu0 0
      %810 = vmatprep.subr.bf16.mxu0 0
      %811 = vmatpush2.bf16.msra.mxu0 0
      %812 = vmatprep.subr.bf16.mxu0 0
      %813 = vmatpush2.bf16.msra.mxu0 0
      %814 = vmatprep.subr.bf16.mxu0 0
      %815 = vmatpush2.bf16.msra.mxu0 0
      %816 = vmatprep.subr.bf16.mxu0 0
      %817 = vmatpush2.bf16.msra.mxu0 0
      %818 = vmatprep.subr.bf16.mxu0 0
      %819 = vmatpush2.bf16.msra.mxu0 0
      %820 = vmatprep.mubr.bf16.mxu0 0
      %821 = vmatmul.mubr.bf16.gmra.mxu0 %v786
      %v822 = vpop.f32.mrf.mxu0
      %v823 = vadd.f32 0.0, %v822
      %v824 = vpop.f32.mrf.mxu0
      %v825 = vpop.f32.mrf.mxu0
      %v826 = vpop.f32.mrf.mxu0
      %827 = vdwg.mxu0
      %v830 = vunpack.c.l.b16 %v726
      %v831 = vunpack.c.l.b16 %v727
      %v832 = vpack.c.b16 %v831, %v830
      %v835 = vsel %vm382, %v720, 0
      %837 = vmatprep.subr.bf16.mxu0 0
      %838 = vmatpush1.bf16.msra.mxu0 0
      %839 = vmatprep.subr.bf16.mxu0 0
      %840 = vmatpush1.bf16.msra.mxu0 0
      %841 = vmatprep.subr.bf16.mxu0 0
      %842 = vmatpush1.bf16.msra.mxu0 0
      %843 = vmatprep.subr.bf16.mxu0 0
      %844 = vmatpush1.bf16.msra.mxu0 0
      %845 = vmatprep.subr.bf16.mxu0 0
      %846 = vmatpush1.bf16.msra.mxu0 0
      %847 = vmatprep.subr.bf16.mxu0 0
      %848 = vmatpush1.bf16.msra.mxu0 0
      %849 = vmatprep.subr.bf16.mxu0 0
      %850 = vmatpush1.bf16.msra.mxu0 0
      %851 = vmatprep.subr.bf16.mxu0 0
      %852 = vmatpush1.bf16.msra.mxu0 %v832
      %853 = vmatprep.subr.bf16.mxu0 0
      %854 = vmatpush2.bf16.msra.mxu0 0
      %855 = vmatprep.subr.bf16.mxu0 0
      %856 = vmatpush2.bf16.msra.mxu0 0
      %857 = vmatprep.subr.bf16.mxu0 0
      %858 = vmatpush2.bf16.msra.mxu0 0
      %859 = vmatprep.subr.bf16.mxu0 0
      %860 = vmatpush2.bf16.msra.mxu0 0
      %861 = vmatprep.subr.bf16.mxu0 0
      %862 = vmatpush2.bf16.msra.mxu0 0
      %863 = vmatprep.subr.bf16.mxu0 0
      %864 = vmatpush2.bf16.msra.mxu0 0
      %865 = vmatprep.subr.bf16.mxu0 0
      %866 = vmatpush2.bf16.msra.mxu0 0
      %867 = vmatprep.subr.bf16.mxu0 0
      %868 = vmatpush2.bf16.msra.mxu0 0
      %869 = vmatprep.mubr.bf16.mxu0 0
      %870 = vmatmul.mubr.bf16.gmra.mxu0 %v835
      %v871 = vpop.f32.mrf.mxu0
      %v872 = vadd.f32 0.0, %v871
      %v873 = vpop.f32.mrf.mxu0
      %v874 = vpop.f32.mrf.mxu0
      %v875 = vpop.f32.mrf.mxu0
      %876 = vdwg.mxu0
      %v879 = vunpack.c.l.b16 %v728
      %v880 = vunpack.c.l.b16 %v729
      %v881 = vpack.c.b16 %v880, %v879
      %v884 = vsel %vm382, %v721, 0
      %886 = vmatprep.subr.bf16.mxu0 0
      %887 = vmatpush1.bf16.msra.mxu0 0
      %888 = vmatprep.subr.bf16.mxu0 0
      %889 = vmatpush1.bf16.msra.mxu0 0
      %890 = vmatprep.subr.bf16.mxu0 0
      %891 = vmatpush1.bf16.msra.mxu0 0
      %892 = vmatprep.subr.bf16.mxu0 0
      %893 = vmatpush1.bf16.msra.mxu0 0
      %894 = vmatprep.subr.bf16.mxu0 0
      %895 = vmatpush1.bf16.msra.mxu0 0
      %896 = vmatprep.subr.bf16.mxu0 0
      %897 = vmatpush1.bf16.msra.mxu0 0
      %898 = vmatprep.subr.bf16.mxu0 0
      %899 = vmatpush1.bf16.msra.mxu0 0
      %900 = vmatprep.subr.bf16.mxu0 0
      %901 = vmatpush1.bf16.msra.mxu0 %v881
      %902 = vmatprep.subr.bf16.mxu0 0
      %903 = vmatpush2.bf16.msra.mxu0 0
      %904 = vmatprep.subr.bf16.mxu0 0
      %905 = vmatpush2.bf16.msra.mxu0 0
      %906 = vmatprep.subr.bf16.mxu0 0
      %907 = vmatpush2.bf16.msra.mxu0 0
      %908 = vmatprep.subr.bf16.mxu0 0
      %909 = vmatpush2.bf16.msra.mxu0 0
      %910 = vmatprep.subr.bf16.mxu0 0
      %911 = vmatpush2.bf16.msra.mxu0 0
      %912 = vmatprep.subr.bf16.mxu0 0
      %913 = vmatpush2.bf16.msra.mxu0 0
      %914 = vmatprep.subr.bf16.mxu0 0
      %915 = vmatpush2.bf16.msra.mxu0 0
      %916 = vmatprep.subr.bf16.mxu0 0
      %917 = vmatpush2.bf16.msra.mxu0 0
      %918 = vmatprep.mubr.bf16.mxu0 0
      %919 = vmatmul.mubr.bf16.gmra.mxu0 %v884
      %v920 = vpop.f32.mrf.mxu0
      %v921 = vadd.f32 0.0, %v920
      %v922 = vpop.f32.mrf.mxu0
      %v923 = vpop.f32.mrf.mxu0
      %v924 = vpop.f32.mrf.mxu0
      %925 = vdwg.mxu0
      %v926 = vadd.f32 %v714, %v774
      %v927 = vadd.f32 %v715, %v823
      %v928 = vadd.f32 %v716, %v872
      %v929 = vadd.f32 %v717, %v921
      %930 = vst.msk [vmem:[#allocation4] sm:$0xff] %vm382, %v926
      %931 = vst.msk [vmem:[#allocation4 + $0x8] sm:$0xff] %vm382, %v927
      %932 = vst.msk [vmem:[#allocation4 + $0x10] sm:$0xff] %vm382, %v928
      %933 = vst.msk [vmem:[#allocation4 + $0x18] sm:$0xff] %vm382, %v929
      %934 = vst.msk [vmem:[#allocation2] sm:$0xff] %vm685, %v613
      %935 = vst.msk [vmem:[#allocation2 + $0x8] sm:$0xff] %vm685, %v614
      %936 = vst.msk [vmem:[#allocation2 + $0x10] sm:$0xff] %vm685, %v615
      %937 = vst.msk [vmem:[#allocation2 + $0x18] sm:$0xff] %vm685, %v616
      // Predicated region
      $region41: #{seq2seq_forward.85} parent=35 // pred_check
        %p938 = pneg %p347
      $region42: #{seq2seq_forward.85} parent=35 // pred_check_branch
        %940 = sbr.rel (%p938) target = $region44
      $region43: #{seq2seq_forward.85} parent=35 // pred_region
        %v941 = vld [vmem:[#allocation4] sm:$0xff]
        %v942 = vld [vmem:[#allocation4 + $0x8] sm:$0xff]
        %v943 = vld [vmem:[#allocation4 + $0x10] sm:$0xff]
        %v944 = vld [vmem:[#allocation4 + $0x18] sm:$0xff]
        %v945 = vld [vmem:[#allocation3] sm:$0xff]
        %v946 = vld [vmem:[#allocation3 + $0x8] sm:$0xff]
        %v947 = vld [vmem:[#allocation3 + $0x10] sm:$0xff]
        %v948 = vld [vmem:[#allocation3 + $0x18] sm:$0xff]
        %v949 = vrcp.pop %v945
        %v950 = vrcp.pop %v946
        %v951 = vrcp.pop %v947
        %v952 = vrcp.pop %v948
        %954 = vset.pattern.permute.xlu0 0
        %955 = vperm.xlu0 %954, %v949
        %v956 = vpop.permute.xlu0 %955
        %959 = vset.pattern.permute.xlu0 0
        %960 = vperm.xlu0 %959, %v950
        %v961 = vpop.permute.xlu0 %960
        %964 = vset.pattern.permute.xlu0 0
        %965 = vperm.xlu0 %964, %v951
        %v966 = vpop.permute.xlu0 %965
        %969 = vset.pattern.permute.xlu0 0
        %970 = vperm.xlu0 %969, %v952
        %v971 = vpop.permute.xlu0 %970
        %v973 = vmul.f32 %v941, %v956
        %v974 = vmul.f32 %v942, %v961
        %v975 = vmul.f32 %v943, %v966
        %v976 = vmul.f32 %v944, %v971
        %v977 = vpack.c.bf16 %v973, %v973
        %v978 = vpack.c.bf16 %v974, %v974
        %v979 = vpack.c.bf16 %v975, %v975
        %v980 = vpack.c.bf16 %v976, %v976
        %vm981 = vcmask 125952
        %982 = vst.msk [vmem:[%s344] sm:$0xf] %vm981, %v977
        %983 = vst.msk [vmem:[%s344 + $0x4] sm:$0xf] %vm981, %v978
        %984 = vst.msk [vmem:[%s344 + $0x8] sm:$0xf] %vm981, %v979
        %985 = vst.msk [vmem:[%s344 + $0xc] sm:$0xf] %vm981, %v980
      $region44: #{seq2seq_forward.85} parent=35 // pred_fallthru
        _
      %s986 = smul.u32 4, %s20
      %p987 = scmp.lt.s32.totalorder %s986, 7
      %s988 = scalar_select %p987, %s986, 7
      %p989 = scmp.lt.s32.totalorder %s21, 0
      %s990 = scalar_select %p989, %s21, 0
      %s991 = sadd.s32 %s990, %s988
      %s992 = smul.addr %s991, 4
      %s993 = scalar_lea.vmem %s4, %s992
      // Predicated region
      $region45: #{seq2seq_forward.85} parent=35 // pred_check
        %p994 = pneg %p166
      $region46: #{seq2seq_forward.85} parent=35 // pred_check_branch
        %996 = sbr.rel (%p994) target = $region48
      $region47: #{seq2seq_forward.85} parent=35 // pred_region
        %s997 = smul.u32 4, %s20
      $region48: #{seq2seq_forward.85} parent=35 // pred_fallthru
        _
    $region36: #{seq2seq_forward.85} parent=5 // pred_fallthru
      _
    %p998 = scmp.le.s32.totalorder 2, %s10
    // Predicated region
    $region49: #{seq2seq_forward.85} parent=5 // pred_check
      %p999 = pneg %p998
    $region50: #{seq2seq_forward.85} parent=5 // pred_check_branch
      %1001 = sbr.rel (%p999) target = $region52
    $region51: #{seq2seq_forward.85} parent=5 // pred_region
      %s1002 = ssub.s32 %s10, 2
      // Predicated region
      $region53: #{seq2seq_forward.85} parent=51 // pred_check
        %p1003 = pneg %p172
      $region54: #{seq2seq_forward.85} parent=51 // pred_check_branch
        %1005 = sbr.rel (%p1003) target = $region56
      $region55: #{seq2seq_forward.85} parent=51 // pred_region
        %s1006 = smul.u32 4, %s23
        %p1007 = scmp.lt.s32.totalorder %s1006, 7
        %s1008 = scalar_select %p1007, %s1006, 7
        %p1009 = scmp.lt.s32.totalorder %s24, 0
        %s1010 = scalar_select %p1009, %s24, 0
        %s1011 = sadd.s32 %s1010, %s1008
        %s1012 = smul.addr %s1011, 4
        %s1013 = scalar_lea.vmem %s4, %s1012
      $region56: #{seq2seq_forward.85} parent=51 // pred_fallthru
        _
    $region52: #{seq2seq_forward.85} parent=5 // pred_fallthru
      _
  $region6: #{seq2seq_forward.85} parent=0 // loop_footer
    %s14 = sadd.s32 1, %s10
  $region7: #{seq2seq_forward.85} parent=0 // loop_footer_branch
    %9 = sbr.rel target = $region3
  $region8: #{seq2seq_forward.85} parent=0 // loop_exit
    _

// kernel: seq2seq_forward.87
$region0: #{seq2seq_forward.87}
  #allocation0 [shape = 'u32[]', space=smem, size = 0x4, offset = 0x4, fixed_abs, tag = 'smem constant byte address 0x4 - core index']
  #allocation1 [shape = 'u32[144,128]{1,0:T(1,128)}', space=vmem, size = 0x12000, scoped, tag = 'internal scratch']
  #allocation2 [shape = 'f32[16,128]{1,0:T(8,128)}', space=vmem, size = 0x2000, scoped, tag = 'scratch operand']
  %s0 = inlined_call_operand.vmem [shape: bf16[16,128], index: 0, kind: input, shape index: {}]
  %s1 = inlined_call_operand.vmem [shape: bf16[128,128], index: 1, kind: input, shape index: {}]
  %s2 = inlined_call_operand.vmem [shape: f32[1,128], index: 2, kind: input, shape index: {}]
  %s3 = inlined_call_operand.vmem [shape: bf16[16,128], index: 3, kind: output, shape index: {}]
  %s4 = sld [smem:[#allocation0]]
  $region30: #{seq2seq_forward.87} parent=0
    _
  %s6 = ssub.s32 1, %s4
  %s7 = scalar_select 0, %s6, %s4
  // Predicated region
  $region2: #{seq2seq_forward.87} parent=0 // pred_check
    _
  $region3: #{seq2seq_forward.87} parent=0 // pred_check_branch
    %9 = sbr.rel (0) target = $region5
  $region4: #{seq2seq_forward.87} parent=0 // pred_region
    _
  $region5: #{seq2seq_forward.87} parent=0 // pred_fallthru
    _
  // Predicated region
  $region6: #{seq2seq_forward.87} parent=0 // pred_check
    _
  $region7: #{seq2seq_forward.87} parent=0 // pred_check_branch
    %11 = sbr.rel (0) target = $region9
  $region8: #{seq2seq_forward.87} parent=0 // pred_region
    _
  $region9: #{seq2seq_forward.87} parent=0 // pred_fallthru
    _
  // Predicated region
  $region10: #{seq2seq_forward.87} parent=0 // pred_check
    _
  $region11: #{seq2seq_forward.87} parent=0 // pred_check_branch
    %13 = sbr.rel (0) target = $region13
  $region12: #{seq2seq_forward.87} parent=0 // pred_region
    _
  $region13: #{seq2seq_forward.87} parent=0 // pred_fallthru
    _
  %p15 = scmp.eq.s32.totalorder 0, 0
  // Predicated region
  $region14: #{seq2seq_forward.87} parent=0 // pred_check
    %p16 = pneg %p15
  $region15: #{seq2seq_forward.87} parent=0 // pred_check_branch
    %18 = sbr.rel (%p16) target = $region17
  $region16: #{seq2seq_forward.87} parent=0 // pred_region
    %19 = vst [vmem:[#allocation2] sm:$0xff] 0.0
    %20 = vst [vmem:[#allocation2 + $0x8] sm:$0xff] 0.0
  $region17: #{seq2seq_forward.87} parent=0 // pred_fallthru
    _
  %v21 = vld [vmem:[#allocation2] sm:$0xff]
  %v22 = vld [vmem:[#allocation2 + $0x8] sm:$0xff]
  %v23 = vld [vmem:[%s0] sm:$0xf]
  %v24 = vld [vmem:[%s0 + $0x4] sm:$0xf]
  %v25 = vld [vmem:[%s1] sm:$0xf]
  %v26 = vld [vmem:[%s1 + $0x4] sm:$0xf]
  %v27 = vld [vmem:[%s1 + $0x8] sm:$0xf]
  %v28 = vld [vmem:[%s1 + $0xc] sm:$0xf]
  %v29 = vld [vmem:[%s1 + $0x10] sm:$0xf]
  %v30 = vld [vmem:[%s1 + $0x14] sm:$0xf]
  %v31 = vld [vmem:[%s1 + $0x18] sm:$0xf]
  %v32 = vld [vmem:[%s1 + $0x1c] sm:$0xf]
  %v33 = vld [vmem:[%s1 + $0x20] sm:$0xf]
  %v34 = vld [vmem:[%s1 + $0x24] sm:$0xf]
  %v35 = vld [vmem:[%s1 + $0x28] sm:$0xf]
  %v36 = vld [vmem:[%s1 + $0x2c] sm:$0xf]
  %v37 = vld [vmem:[%s1 + $0x30] sm:$0xf]
  %v38 = vld [vmem:[%s1 + $0x34] sm:$0xf]
  %v39 = vld [vmem:[%s1 + $0x38] sm:$0xf]
  %v40 = vld [vmem:[%s1 + $0x3c] sm:$0xf]
  %v43 = vunpack.c.l.b16 %v23
  %v44 = vunpack.c.l.b16 %v24
  %v45 = vpack.c.b16 %v44, %v43
  %v63 = vunpack.c.l.b16 %v25
  %v64 = vunpack.c.l.b16 %v26
  %v65 = vunpack.c.l.b16 %v27
  %v66 = vunpack.c.l.b16 %v28
  %v67 = vunpack.c.l.b16 %v29
  %v68 = vunpack.c.l.b16 %v30
  %v69 = vunpack.c.l.b16 %v31
  %v70 = vunpack.c.l.b16 %v32
  %v71 = vunpack.c.l.b16 %v33
  %v72 = vunpack.c.l.b16 %v34
  %v73 = vunpack.c.l.b16 %v35
  %v74 = vunpack.c.l.b16 %v36
  %v75 = vunpack.c.l.b16 %v37
  %v76 = vunpack.c.l.b16 %v38
  %v77 = vunpack.c.l.b16 %v39
  %v78 = vunpack.c.l.b16 %v40
  %v79 = vpack.c.b16 %v64, %v63
  %v80 = vpack.c.b16 %v66, %v65
  %v81 = vpack.c.b16 %v68, %v67
  %v82 = vpack.c.b16 %v70, %v69
  %v83 = vpack.c.b16 %v72, %v71
  %v84 = vpack.c.b16 %v74, %v73
  %v85 = vpack.c.b16 %v76, %v75
  %v86 = vpack.c.b16 %v78, %v77
  %95 = vmatprep.subr.bf16.mxu0 0
  %96 = vmatpush1.bf16.msra.mxu0 %v86
  %97 = vmatprep.subr.bf16.mxu0 0
  %98 = vmatpush1.bf16.msra.mxu0 %v85
  %99 = vmatprep.subr.bf16.mxu0 0
  %100 = vmatpush1.bf16.msra.mxu0 %v84
  %101 = vmatprep.subr.bf16.mxu0 0
  %102 = vmatpush1.bf16.msra.mxu0 %v83
  %103 = vmatprep.subr.bf16.mxu0 0
  %104 = vmatpush1.bf16.msra.mxu0 %v82
  %105 = vmatprep.subr.bf16.mxu0 0
  %106 = vmatpush1.bf16.msra.mxu0 %v81
  %107 = vmatprep.subr.bf16.mxu0 0
  %108 = vmatpush1.bf16.msra.mxu0 %v80
  %109 = vmatprep.subr.bf16.mxu0 0
  %110 = vmatpush1.bf16.msra.mxu0 %v79
  %111 = vmatprep.subr.bf16.mxu0 0
  %112 = vmatpush2.bf16.msra.mxu0 0
  %113 = vmatprep.subr.bf16.mxu0 0
  %114 = vmatpush2.bf16.msra.mxu0 0
  %115 = vmatprep.subr.bf16.mxu0 0
  %116 = vmatpush2.bf16.msra.mxu0 0
  %117 = vmatprep.subr.bf16.mxu0 0
  %118 = vmatpush2.bf16.msra.mxu0 0
  %119 = vmatprep.subr.bf16.mxu0 0
  %120 = vmatpush2.bf16.msra.mxu0 0
  %121 = vmatprep.subr.bf16.mxu0 0
  %122 = vmatpush2.bf16.msra.mxu0 0
  %123 = vmatprep.subr.bf16.mxu0 0
  %124 = vmatpush2.bf16.msra.mxu0 0
  %125 = vmatprep.subr.bf16.mxu0 0
  %126 = vmatpush2.bf16.msra.mxu0 0
  %127 = vmatprep.mubr.bf16.mxu0 0
  %128 = vmatmul.mubr.bf16.gmra.mxu0 %v45
  %v129 = vpop.f32.mrf.mxu0
  %v130 = vadd.f32 0.0, %v129
  %v131 = vpop.f32.mrf.mxu0
  %v132 = vpop.f32.mrf.mxu0
  %v133 = vadd.f32 0.0, %v132
  %v134 = vpop.f32.mrf.mxu0
  %135 = vdwg.mxu0
  %v136 = vadd.f32 %v21, %v130
  %v137 = vadd.f32 %v22, %v133
  %138 = vst [vmem:[#allocation2] sm:$0xff] %v136
  %139 = vst [vmem:[#allocation2 + $0x8] sm:$0xff] %v137
  // Predicated region
  $region18: #{seq2seq_forward.87} parent=0 // pred_check
    %p140 = pneg %p15
  $region19: #{seq2seq_forward.87} parent=0 // pred_check_branch
    %142 = sbr.rel (%p140) target = $region21
  $region20: #{seq2seq_forward.87} parent=0 // pred_region
    %v143 = vld [vmem:[#allocation2] sm:$0xff]
    %v144 = vld [vmem:[#allocation2 + $0x8] sm:$0xff]
    %v145 = vld [vmem:[%s2] sm:$0x1]
    %v147 = vlaneseq
    %v148 = vshrl.u32 %v147, 7
    %v149 = vsub.s32 0, %v148
    %v150 = vrot.slane %v145, %v149
    %v152 = vadd.f32 %v143, %v150
    %v153 = vadd.f32 %v144, %v150
    %v154 = vmax.f32 %v152, 0.0
    %v155 = vmax.f32 %v153, 0.0
    %v156 = vpack.c.bf16 %v155, %v154
    %v158 = vunpack.c.l.b16 %v156
    %v159 = vunpack.c.h.b16 %v156
    %v160 = vpack.c.b16 %v158, %v158
    %v161 = vpack.c.b16 %v159, %v159
    %164 = vst [vmem:[%s3] sm:$0xf] %v160
    %165 = vst [vmem:[%s3 + $0x4] sm:$0xf] %v161
  $region21: #{seq2seq_forward.87} parent=0 // pred_fallthru
    _
  // Predicated region
  $region22: #{seq2seq_forward.87} parent=0 // pred_check
    _
  $region23: #{seq2seq_forward.87} parent=0 // pred_check_branch
    %167 = sbr.rel (0) target = $region25
  $region24: #{seq2seq_forward.87} parent=0 // pred_region
    _
  $region25: #{seq2seq_forward.87} parent=0 // pred_fallthru
    _
  // Predicated region
  $region26: #{seq2seq_forward.87} parent=0 // pred_check
    _
  $region27: #{seq2seq_forward.87} parent=0 // pred_check_branch
    %169 = sbr.rel (0) target = $region29
  $region28: #{seq2seq_forward.87} parent=0 // pred_region
    _
  $region29: #{seq2seq_forward.87} parent=0 // pred_fallthru
    _

// kernel: seq2seq_forward.135
$region0: #{seq2seq_forward.135}
  #allocation0 [shape = 'u32[]', space=smem, size = 0x4, offset = 0x4, fixed_abs, tag = 'smem constant byte address 0x4 - core index']
  #allocation1 [shape = 'u32[144,128]{1,0:T(1,128)}', space=vmem, size = 0x12000, scoped, tag = 'internal scratch']
  #allocation2 [shape = 'f32[16,1]{1,0:T(8,128)}', space=vmem, size = 0x2000, scoped, tag = 'scratch operand']
  #allocation3 [shape = 'f32[16,1]{1,0:T(8,128)}', space=vmem, size = 0x2000, scoped, tag = 'scratch operand']
  #allocation4 [shape = 'f32[16,1]{1,0:T(8,128)}', space=vmem, size = 0x2000, scoped, tag = 'scratch operand']
  %s0 = inlined_call_operand.vmem [shape: bf16[16,128], index: 0, kind: input, shape index: {}]
  %s1 = inlined_call_operand.vmem [shape: bf16[128,128], index: 1, kind: input, shape index: {}]
  %s2 = inlined_call_operand.vmem [shape: s32[16,1], index: 2, kind: input, shape index: {}]
  %s3 = inlined_call_operand.vmem [shape: f32[16,1], index: 3, kind: input, shape index: {}]
  %s4 = inlined_call_operand.vmem [shape: f32[16,1], index: 4, kind: output, shape index: {}]
  %s5 = sld [smem:[#allocation0]]
  $region34: #{seq2seq_forward.135} parent=0
    _
  %s7 = ssub.s32 1, %s5
  %s8 = scalar_select 0, %s7, %s5
  // Predicated region
  $region2: #{seq2seq_forward.135} parent=0 // pred_check
    _
  $region3: #{seq2seq_forward.135} parent=0 // pred_check_branch
    %10 = sbr.rel (0) target = $region5
  $region4: #{seq2seq_forward.135} parent=0 // pred_region
    _
  $region5: #{seq2seq_forward.135} parent=0 // pred_fallthru
    _
  // Predicated region
  $region6: #{seq2seq_forward.135} parent=0 // pred_check
    _
  $region7: #{seq2seq_forward.135} parent=0 // pred_check_branch
    %12 = sbr.rel (0) target = $region9
  $region8: #{seq2seq_forward.135} parent=0 // pred_region
    _
  $region9: #{seq2seq_forward.135} parent=0 // pred_fallthru
    _
  // Predicated region
  $region10: #{seq2seq_forward.135} parent=0 // pred_check
    _
  $region11: #{seq2seq_forward.135} parent=0 // pred_check_branch
    %14 = sbr.rel (0) target = $region13
  $region12: #{seq2seq_forward.135} parent=0 // pred_region
    _
  $region13: #{seq2seq_forward.135} parent=0 // pred_fallthru
    _
  // Predicated region
  $region14: #{seq2seq_forward.135} parent=0 // pred_check
    _
  $region15: #{seq2seq_forward.135} parent=0 // pred_check_branch
    %16 = sbr.rel (0) target = $region17
  $region16: #{seq2seq_forward.135} parent=0 // pred_region
    _
  $region17: #{seq2seq_forward.135} parent=0 // pred_fallthru
    _
  %p18 = scmp.eq.s32.totalorder 0, 0
  // Predicated region
  $region18: #{seq2seq_forward.135} parent=0 // pred_check
    %p19 = pneg %p18
  $region19: #{seq2seq_forward.135} parent=0 // pred_check_branch
    %21 = sbr.rel (%p19) target = $region21
  $region20: #{seq2seq_forward.135} parent=0 // pred_region
    %vm22 = vcmask 7168
    %23 = vst.msk [vmem:[#allocation2] sm:$0xff] %vm22, -1e+30
    %24 = vst.msk [vmem:[#allocation2 + $0x8] sm:$0xff] %vm22, -1e+30
    %25 = vst.msk [vmem:[#allocation3] sm:$0xff] %vm22, 0.0
    %26 = vst.msk [vmem:[#allocation3 + $0x8] sm:$0xff] %vm22, 0.0
    %27 = vst.msk [vmem:[#allocation4] sm:$0xff] %vm22, 0.0
    %28 = vst.msk [vmem:[#allocation4 + $0x8] sm:$0xff] %vm22, 0.0
  $region21: #{seq2seq_forward.135} parent=0 // pred_fallthru
    _
  %v29 = vld [vmem:[%s0] sm:$0xf]
  %v30 = vld [vmem:[%s0 + $0x4] sm:$0xf]
  %v31 = vld [vmem:[%s1] sm:$0xf]
  %v32 = vld [vmem:[%s1 + $0x4] sm:$0xf]
  %v33 = vld [vmem:[%s1 + $0x8] sm:$0xf]
  %v34 = vld [vmem:[%s1 + $0xc] sm:$0xf]
  %v35 = vld [vmem:[%s1 + $0x10] sm:$0xf]
  %v36 = vld [vmem:[%s1 + $0x14] sm:$0xf]
  %v37 = vld [vmem:[%s1 + $0x18] sm:$0xf]
  %v38 = vld [vmem:[%s1 + $0x1c] sm:$0xf]
  %v39 = vld [vmem:[%s1 + $0x20] sm:$0xf]
  %v40 = vld [vmem:[%s1 + $0x24] sm:$0xf]
  %v41 = vld [vmem:[%s1 + $0x28] sm:$0xf]
  %v42 = vld [vmem:[%s1 + $0x2c] sm:$0xf]
  %v43 = vld [vmem:[%s1 + $0x30] sm:$0xf]
  %v44 = vld [vmem:[%s1 + $0x34] sm:$0xf]
  %v45 = vld [vmem:[%s1 + $0x38] sm:$0xf]
  %v46 = vld [vmem:[%s1 + $0x3c] sm:$0xf]
  %v49 = vunpack.c.l.b16 %v29
  %v50 = vunpack.c.l.b16 %v30
  %v51 = vpack.c.b16 %v50, %v49
  %v69 = vunpack.c.l.b16 %v31
  %v70 = vunpack.c.l.b16 %v32
  %v71 = vunpack.c.l.b16 %v33
  %v72 = vunpack.c.l.b16 %v34
  %v73 = vunpack.c.l.b16 %v35
  %v74 = vunpack.c.l.b16 %v36
  %v75 = vunpack.c.l.b16 %v37
  %v76 = vunpack.c.l.b16 %v38
  %v77 = vunpack.c.l.b16 %v39
  %v78 = vunpack.c.l.b16 %v40
  %v79 = vunpack.c.l.b16 %v41
  %v80 = vunpack.c.l.b16 %v42
  %v81 = vunpack.c.l.b16 %v43
  %v82 = vunpack.c.l.b16 %v44
  %v83 = vunpack.c.l.b16 %v45
  %v84 = vunpack.c.l.b16 %v46
  %v85 = vpack.c.b16 %v70, %v69
  %v86 = vpack.c.b16 %v72, %v71
  %v87 = vpack.c.b16 %v74, %v73
  %v88 = vpack.c.b16 %v76, %v75
  %v89 = vpack.c.b16 %v78, %v77
  %v90 = vpack.c.b16 %v80, %v79
  %v91 = vpack.c.b16 %v82, %v81
  %v92 = vpack.c.b16 %v84, %v83
  %101 = vmatprep.subr.bf16.mxu0 0
  %102 = vmatpush1.bf16.msra.mxu0 %v92
  %103 = vmatprep.subr.bf16.mxu0 0
  %104 = vmatpush1.bf16.msra.mxu0 %v91
  %105 = vmatprep.subr.bf16.mxu0 0
  %106 = vmatpush1.bf16.msra.mxu0 %v90
  %107 = vmatprep.subr.bf16.mxu0 0
  %108 = vmatpush1.bf16.msra.mxu0 %v89
  %109 = vmatprep.subr.bf16.mxu0 0
  %110 = vmatpush1.bf16.msra.mxu0 %v88
  %111 = vmatprep.subr.bf16.mxu0 0
  %112 = vmatpush1.bf16.msra.mxu0 %v87
  %113 = vmatprep.subr.bf16.mxu0 0
  %114 = vmatpush1.bf16.msra.mxu0 %v86
  %115 = vmatprep.subr.bf16.mxu0 0
  %116 = vmatpush1.bf16.msra.mxu0 %v85
  %117 = vmatprep.subr.bf16.mxu0 0
  %118 = vmatpush2.bf16.msra.mxu0 0
  %119 = vmatprep.subr.bf16.mxu0 0
  %120 = vmatpush2.bf16.msra.mxu0 0
  %121 = vmatprep.subr.bf16.mxu0 0
  %122 = vmatpush2.bf16.msra.mxu0 0
  %123 = vmatprep.subr.bf16.mxu0 0
  %124 = vmatpush2.bf16.msra.mxu0 0
  %125 = vmatprep.subr.bf16.mxu0 0
  %126 = vmatpush2.bf16.msra.mxu0 0
  %127 = vmatprep.subr.bf16.mxu0 0
  %128 = vmatpush2.bf16.msra.mxu0 0
  %129 = vmatprep.subr.bf16.mxu0 0
  %130 = vmatpush2.bf16.msra.mxu0 0
  %131 = vmatprep.subr.bf16.mxu0 0
  %132 = vmatpush2.bf16.msra.mxu0 0
  %133 = vmatprep.mubr.bf16.mxu0 0
  %134 = vmatmul.mubr.bf16.gmra.mxu0 %v51
  %v135 = vpop.f32.mrf.mxu0
  %v136 = vadd.f32 0.0, %v135
  %v137 = vpop.f32.mrf.mxu0
  %v138 = vpop.f32.mrf.mxu0
  %v139 = vadd.f32 0.0, %v138
  %v140 = vpop.f32.mrf.mxu0
  %141 = vdwg.mxu0
  %v142 = vlaneseq
  %v143 = vand.u32 %v142, 127
  %s144 = smul.u32 0, 128
  %v145 = vstv %s144
  %v146 = vadd.s32 %v143, %v145
  %vm147 = vcmp.lt.s32.totalorder %v146, 128
  %v148 = vsel %vm147, %v136, -1e+30
  %v149 = vsel %vm147, %v139, -1e+30
  %v150 = vld [vmem:[#allocation2] sm:$0xff]
  %v151 = vld [vmem:[#allocation2 + $0x8] sm:$0xff]
  %152 = vmax.xlane.f32.xlu0 %v148
  %v153 = vpop.xlane.xlu0 %152
  %154 = vmax.xlane.f32.xlu0 %v149
  %v155 = vpop.xlane.xlu0 %154
  %v156 = vmax.f32 %v150, %v153
  %v157 = vmax.f32 %v151, %v155
  %v158 = vsub.f32 %v150, %v156
  %v159 = vsub.f32 %v151, %v157
  %v160 = vmul.f32 %v158, 1.442695
  %v161 = vpow.pop %v160
  %v162 = vmul.f32 %v159, 1.442695
  %v163 = vpow.pop %v162
  %v164 = vld [vmem:[#allocation3] sm:$0xff]
  %v165 = vld [vmem:[#allocation3 + $0x8] sm:$0xff]
  %v166 = vmul.f32 %v161, %v164
  %v167 = vmul.f32 %v163, %v165
  %169 = vset.pattern.permute.xlu0 0
  %170 = vperm.xlu0 %169, %v156
  %v171 = vpop.permute.xlu0 %170
  %174 = vset.pattern.permute.xlu0 0
  %175 = vperm.xlu0 %174, %v157
  %v176 = vpop.permute.xlu0 %175
  %v178 = vsub.f32 %v148, %v171
  %v179 = vsub.f32 %v149, %v176
  %v180 = vmul.f32 %v178, 1.442695
  %v181 = vpow.pop %v180
  %v182 = vmul.f32 %v179, 1.442695
  %v183 = vpow.pop %v182
  %184 = vadd.xlane.f32.xlu0 %v181
  %v185 = vpop.xlane.xlu0 %184
  %186 = vadd.xlane.f32.xlu0 %v183
  %v187 = vpop.xlane.xlu0 %186
  %v188 = vadd.f32 %v166, %v185
  %v189 = vadd.f32 %v167, %v187
  %vm190 = vcmask 7168
  %191 = vst.msk [vmem:[#allocation3] sm:$0xff] %vm190, %v188
  %192 = vst.msk [vmem:[#allocation3 + $0x8] sm:$0xff] %vm190, %v189
  %193 = vst.msk [vmem:[#allocation2] sm:$0xff] %vm190, %v156
  %194 = vst.msk [vmem:[#allocation2 + $0x8] sm:$0xff] %vm190, %v157
  %v195 = vld [vmem:[#allocation4] sm:$0xff]
  %v196 = vld [vmem:[#allocation4 + $0x8] sm:$0xff]
  %v197 = vld [vmem:[%s2] sm:$0xff]
  %v198 = vld [vmem:[%s2 + $0x8] sm:$0xff]
  %199 = vset.pattern.permute.xlu0 0
  %200 = vperm.xlu0 %199, %v197
  %v201 = vpop.permute.xlu0 %200
  %202 = vset.pattern.permute.xlu0 0
  %203 = vperm.xlu0 %202, %v198
  %v204 = vpop.permute.xlu0 %203
  %vm205 = vcmp.eq.s32.totalorder %v146, %v201
  %vm206 = vcmp.eq.s32.totalorder %v146, %v204
  %v207 = vsel %vm205, %v148, 0.0
  %v208 = vsel %vm206, %v149, 0.0
  %209 = vadd.xlane.f32.xlu0 %v207
  %v210 = vpop.xlane.xlu0 %209
  %211 = vadd.xlane.f32.xlu0 %v208
  %v212 = vpop.xlane.xlu0 %211
  %v213 = vadd.f32 %v195, %v210
  %v214 = vadd.f32 %v196, %v212
  %215 = vst.msk [vmem:[#allocation4] sm:$0xff] %vm190, %v213
  %216 = vst.msk [vmem:[#allocation4 + $0x8] sm:$0xff] %vm190, %v214
  // Predicated region
  $region22: #{seq2seq_forward.135} parent=0 // pred_check
    %p217 = pneg %p18
  $region23: #{seq2seq_forward.135} parent=0 // pred_check_branch
    %219 = sbr.rel (%p217) target = $region25
  $region24: #{seq2seq_forward.135} parent=0 // pred_region
    %v220 = vld [vmem:[#allocation2] sm:$0xff]
    %v221 = vld [vmem:[#allocation2 + $0x8] sm:$0xff]
    %v222 = vld [vmem:[#allocation3] sm:$0xff]
    %v223 = vld [vmem:[#allocation3 + $0x8] sm:$0xff]
    %v224 = vlog2.pop %v222
    %v225 = vmul.f32 %v224, 0.6931472
    %v226 = vlog2.pop %v223
    %v227 = vmul.f32 %v226, 0.6931472
    %v228 = vadd.f32 %v220, %v225
    %v229 = vadd.f32 %v221, %v227
    %v230 = vld [vmem:[#allocation4] sm:$0xff]
    %v231 = vld [vmem:[#allocation4 + $0x8] sm:$0xff]
    %v232 = vsub.f32 %v228, %v230
    %v233 = vsub.f32 %v229, %v231
    %v234 = vld [vmem:[%s3] sm:$0xff]
    %v235 = vld [vmem:[%s3 + $0x8] sm:$0xff]
    %v236 = vmul.f32 %v232, %v234
    %v237 = vmul.f32 %v233, %v235
    %238 = vst.msk [vmem:[%s4] sm:$0xff] %vm190, %v236
    %239 = vst.msk [vmem:[%s4 + $0x8] sm:$0xff] %vm190, %v237
  $region25: #{seq2seq_forward.135} parent=0 // pred_fallthru
    _
  // Predicated region
  $region26: #{seq2seq_forward.135} parent=0 // pred_check
    _
  $region27: #{seq2seq_forward.135} parent=0 // pred_check_branch
    %241 = sbr.rel (0) target = $region29
  $region28: #{seq2seq_forward.135} parent=0 // pred_region
    _
  $region29: #{seq2seq_forward.135} parent=0 // pred_fallthru
    _
  // Predicated region
  $region30: #{seq2seq_forward.135} parent=0 // pred_check
    _
  $region31: #{seq2seq_forward.135} parent=0 // pred_check_branch
    %243 = sbr.rel (0) target = $region33
  $region32: #{seq2seq_forward.135} parent=0 // pred_region
    _
  $region33: #{seq2seq_forward.135} parent=0 // pred_fallthru
    _

</llo_original>
